<compile_context>
chip_gen: v7x
topology: tpu7x:2x2x1
jax: 0.10.0
libtpu: 0.0.40
codegen_flags: <defaults>
</compile_context>

<pallas_src>
import functools

import jax
import jax.numpy as jnp
from jax.experimental import pallas as pl
from jax.experimental.pallas import tpu as pltpu


def _round_up(x, m):
    return (x + m - 1) // m * m


def _shift_rows(slab, k, m):
    """result[q] = slab[q + k]  (rows move 'up' by k; k may be negative).

    Uses an XLU sublane rotation of the aligned slab instead of an unaligned
    row-slice (which would force a full sublane relayout of the slab).  The
    wrapped rows only ever land in junk pad positions (see kernel comments).
    """
    if k == 0:
        return slab
    return pltpu.roll(slab, shift=(-k) % m, axis=0)


# ---------------------------------------------------------------------------
# Fused kernel
# ---------------------------------------------------------------------------
def _basic_block_kernel(mask_ref, x_ref, w1_ref, b1_ref, w2_ref, b2_ref,
                        o_ref, y1_ref, cat_ref, *, M, Wp, G):
    # mask_ref: (M, Cp)    f32   1.0 on real image columns, 0.0 on pad columns
    # x_ref   : (1, Lp, Cp) f32  zero-padded image, flattened rows p = hp*Wp+wp
    # w*_ref  : (9*Cp, Cp) bf16  3x3 taps stacked on K, BN scale folded in
    # b*_ref  : (1, Cp)    f32   folded BN bias
    # o_ref   : (1, M, Cp) f32   output rows q = i*Wp + j (columns j >= W junk)
    # y1_ref  : (Lscr, Cp) f32   scratch: conv1 output with vertical zero halo
    # cat_ref : (M, 9*Cp)  bf16  shared im2col matmul operand
    Cp = o_ref.shape[-1]

    # ---- conv1: build the (M, 9*Cp) im2col operand, one MXU matmul ----------
    # tap (dh, dw) of conv1 for output row q reads x_flat[q + dh*Wp + dw].
    for dh in range(3):
        slab = x_ref[0, dh * Wp:dh * Wp + M, :]           # 8-aligned f32 (M, Cp)
        for dw in range(3):
            t = 3 * dh + dw
            cat_ref[:, t * Cp:(t + 1) * Cp] = (
                _shift_rows(slab, dw, M).astype(jnp.bfloat16))
    y1 = jnp.dot(cat_ref[...], w1_ref[...], preferred_element_type=jnp.float32)
    # bias + relu, then zero the horizontal-pad columns (they become conv2's
    # left/right spatial padding and also swallow the roll-wrap garbage rows).
    y1 = jnp.maximum(y1 + b1_ref[...], 0.0) * mask_ref[...]

    # ---- re-pad conv1 output in VMEM: zero ONLY the vertical halo strips ----
    # (interior [G, G+M) is fully overwritten every step; halos are tiny).
    y1_ref[0:G, :] = jnp.zeros((G, Cp), jnp.float32)
    y1_ref[G + M:G + M + Wp, :] = jnp.zeros((Wp, Cp), jnp.float32)
    y1_ref[G:G + M, :] = y1

    # ---- conv2: same im2col trick off the VMEM-resident conv1 output --------
    # tap (dh, dw) of conv2 for output row q reads y1_flat[q + (dh-1)*Wp + (dw-1)].
    for dh in range(3):
        start = G + (dh - 1) * Wp                          # 0, G, G+Wp: aligned
        slab = y1_ref[start:start + M, :]                  # f32 (M, Cp)
        for dw in range(3):
            t = 3 * dh + dw
            cat_ref[:, t * Cp:(t + 1) * Cp] = (
                _shift_rows(slab, dw - 1, M).astype(jnp.bfloat16))
    out = jnp.dot(cat_ref[...], w2_ref[...], preferred_element_type=jnp.float32)
    out = out + b2_ref[...]

    # identity residual: x[i, j] = x_flat[q + Wp + 1], read via the same
    # aligned-load + roll path (wrap row is a junk output row).
    res = _shift_rows(x_ref[0, Wp:Wp + M, :], 1, M)
    o_ref[0] = jnp.maximum(out + res, 0.0).astype(o_ref.dtype)


# ---------------------------------------------------------------------------
# JAX glue: BN folding, layout conversion, channel/spatial padding
# ---------------------------------------------------------------------------
def _fold_bn(gamma, beta, mean, var, eps=1e-5):
    scale = gamma / jnp.sqrt(var + eps)
    bias = beta - mean * scale
    return scale, bias


def _prep_weight(w_oihw, scale, c_in_pad, c_out_pad):
    """(Cout, Cin, 3, 3) -> (9*Cin_pad, Cout_pad) bf16, BN scale folded in."""
    cout, cin = w_oihw.shape[0], w_oihw.shape[1]
    w = jnp.transpose(w_oihw, (2, 3, 1, 0)).reshape(9, cin, cout)  # (tap, I, O)
    w = w * scale[None, None, :]
    w = jnp.pad(w, ((0, 0), (0, c_in_pad - cin), (0, c_out_pad - cout)))
    return w.reshape(9 * c_in_pad, c_out_pad).astype(jnp.bfloat16)


def basic_block_forward(x_nchw, params):
    assert params["stride"] == 1, "identity residual path requires stride == 1"
    # TODO(synk): implement the downsample / stride>1 residual branch.
    w1, w2 = params["w1"], params["w2"]
    planes, inplanes = w1.shape[0], w1.shape[1]
    assert inplanes == planes and w2.shape[0] == w2.shape[1] == planes

    N, C, H, W = x_nchw.shape
    Wp = _round_up(W + 2, 8)        # padded row pitch (sublane-aligned)
    Hp = H + 2
    Cp = _round_up(max(C, 1), 128)  # lane-dense channel padding
    M = H * Wp                      # conv output rows per image (multiple of 8)
    Lp = Hp * Wp                    # flattened padded-input rows
    G = Wp                          # top-halo rows in the conv1-output scratch
    Lscr = G + M + Wp               # scratch rows (covers conv2 vertical halo)

    # NCHW -> zero-padded NHWC (1 top/bottom, 1 left, Wp-W-1 right), channels
    # padded to Cp, spatial flattened to rows p = hp*Wp + wp.
    x = jnp.transpose(x_nchw, (0, 2, 3, 1)).astype(jnp.float32)
    xp = jnp.pad(x, ((0, 0), (1, 1), (1, Wp - W - 1), (0, Cp - C)))
    xflat = xp.reshape(N, Lp, Cp)

    # Horizontal-pad mask: 1.0 where (q % Wp) < W, else 0.0.  Grid-invariant
    # (constant index_map) so it stays resident in VMEM across the batch.
    col_valid = (jnp.arange(M, dtype=jnp.int32) % Wp) < W
    mask = jnp.broadcast_to(col_valid[:, None], (M, Cp)).astype(jnp.float32)

    s1, b1 = _fold_bn(params["bn1_gamma"], params["bn1_beta"],
                      params["bn1_mean"], params["bn1_var"])
    s2, b2 = _fold_bn(params["bn2_gamma"], params["bn2_beta"],
                      params["bn2_mean"], params["bn2_var"])
    w1m = _prep_weight(w1, s1, Cp, Cp)
    w2m = _prep_weight(w2, s2, Cp, Cp)
    b1p = jnp.pad(b1, (0, Cp - planes)).reshape(1, Cp).astype(jnp.float32)
    b2p = jnp.pad(b2, (0, Cp - planes)).reshape(1, Cp).astype(jnp.float32)

    # vmem limit from actual per-step footprint (x2 headroom, v7x-safe cap).
    est = (2 * Lp * Cp * 4            # input block (double-buffered)
           + 2 * M * Cp * 4           # output block
           + 2 * M * Cp * 4           # resident mask
           + 2 * 2 * 9 * Cp * Cp * 2  # two resident bf16 weight blocks
           + Lscr * Cp * 4            # conv1-output scratch
           + M * 9 * Cp * 2           # shared im2col scratch
           + 2 * M * Cp * 4)          # matmul-result temporaries
    vmem_limit = int(min(max(2 * est, 16 * 2 ** 20), 48 * 2 ** 20))

    kernel = functools.partial(_basic_block_kernel, M=M, Wp=Wp, G=G)
    out_flat = pl.pallas_call(
        kernel,
        out_shape=jax.ShapeDtypeStruct((N, M, Cp), jnp.float32),
        grid=(N,),
        in_specs=[
            pl.BlockSpec((M, Cp), lambda n: (0, 0)),          # mask (resident)
            pl.BlockSpec((1, Lp, Cp), lambda n: (n, 0, 0)),   # flat padded image
            pl.BlockSpec((9 * Cp, Cp), lambda n: (0, 0)),     # w1 (resident)
            pl.BlockSpec((1, Cp), lambda n: (0, 0)),          # bias1
            pl.BlockSpec((9 * Cp, Cp), lambda n: (0, 0)),     # w2 (resident)
            pl.BlockSpec((1, Cp), lambda n: (0, 0)),          # bias2
        ],
        out_specs=pl.BlockSpec((1, M, Cp), lambda n: (n, 0, 0)),
        scratch_shapes=[
            pltpu.VMEM((Lscr, Cp), jnp.float32),      # conv1 output + zero halo
            pltpu.VMEM((M, 9 * Cp), jnp.bfloat16),    # shared im2col operand
        ],
        compiler_params=pltpu.CompilerParams(
            dimension_semantics=("parallel",),
            vmem_limit_bytes=vmem_limit,
        ),
    )(mask, xflat, w1m, b1p, w2m, b2p)

    # Drop horizontal-pad columns and channel padding, back to NCHW.
    # TODO(synk): for chained blocks, fuse this crop into the next block's
    # input BlockSpec instead of a separate reshape/transpose pass.
    out = out_flat.reshape(N, H, Wp, Cp)[:, :, :W, :planes]
    return jnp.transpose(out, (0, 3, 1, 2))


# ---------------------------------------------------------------------------
# Pure-JAX reference (correctness check)
# ---------------------------------------------------------------------------
def reference_forward(x, params, eps=1e-5):
    def conv(x, w, stride):
        return jax.lax.conv_general_dilated(
            x, w, window_strides=(stride, stride), padding=((1, 1), (1, 1)),
            dimension_numbers=("NCHW", "OIHW", "NCHW"))

    def bn(x, g, b, m, v):
        g, b, m, v = (a[None, :, None, None] for a in (g, b, m, v))
        return (x - m) / jnp.sqrt(v + eps) * g + b

    out = conv(x, params["w1"], params["stride"])
    out = jnp.maximum(bn(out, params["bn1_gamma"], params["bn1_beta"],
                         params["bn1_mean"], params["bn1_var"]), 0.0)
    out = conv(out, params["w2"], 1)
    out = bn(out, params["bn2_gamma"], params["bn2_beta"],
             params["bn2_mean"], params["bn2_var"])
    out = out + x
    return jnp.maximum(out, 0.0)


# ---------------------------------------------------------------------------
def make_params(key, inplanes, planes):
    ks = jax.random.split(key, 8)
    return {
        "stride": 1,
        "w1": 0.1 * jax.random.normal(ks[0], (planes, inplanes, 3, 3), jnp.float32),
        "w2": 0.1 * jax.random.normal(ks[1], (planes, planes, 3, 3), jnp.float32),
        "bn1_gamma": 1.0 + 0.1 * jax.random.normal(ks[2], (planes,), jnp.float32),
        "bn1_beta": 0.1 * jax.random.normal(ks[3], (planes,), jnp.float32),
        "bn1_mean": 0.1 * jax.random.normal(ks[4], (planes,), jnp.float32),
        "bn1_var": jnp.abs(1.0 + 0.1 * jax.random.normal(ks[5], (planes,), jnp.float32)),
        "bn2_gamma": 1.0 + 0.1 * jax.random.normal(ks[6], (planes,), jnp.float32),
        "bn2_beta": 0.1 * jax.random.normal(ks[7], (planes,), jnp.float32),
        "bn2_mean": jnp.zeros((planes,), jnp.float32),
        "bn2_var": jnp.ones((planes,), jnp.float32),
    }


if __name__ == "__main__":
    key = jax.random.PRNGKey(0)
    k_x, k_p = jax.random.split(key)

    N, C, H, W = 2, 4, 16, 16          # inplanes = planes = 4, stride = 1
    x = jax.random.normal(k_x, (N, C, H, W), jnp.float32)
    params = make_params(k_p, C, C)

    out = jax.block_until_ready(basic_block_forward(x, params))
    ref = jax.block_until_ready(reference_forward(x, params))

    assert out.shape == (N, C, H, W)
    # bf16 matmul operands (f32 accumulation) -> slightly looser tolerance.
    assert jnp.allclose(out, ref, atol=5e-2, rtol=5e-2), "mismatch vs JAX reference"
    print("KERNEL_OK")
</pallas_src>

<mosaic_0001>
module attributes {stable_mosaic.version = 11 : i64} {
  func.func @_basic_block_kernel(%arg0: i32, %arg1: memref<384x128xf32, #tpu.memory_space<vmem>>, %arg2: memref<1x432x128xf32, #tpu.memory_space<vmem>>, %arg3: memref<1152x128xbf16, #tpu.memory_space<vmem>>, %arg4: memref<1x128xf32, #tpu.memory_space<vmem>>, %arg5: memref<1152x128xbf16, #tpu.memory_space<vmem>>, %arg6: memref<1x128xf32, #tpu.memory_space<vmem>>, %arg7: memref<1x384x128xf32, #tpu.memory_space<vmem>>, %arg8: memref<432x128xf32, #tpu.memory_space<vmem>>, %arg9: memref<384x1152xbf16, #tpu.memory_space<vmem>>) attributes {dimension_semantics = [#tpu.dimension_semantics<parallel>], iteration_bounds = array<i64: 2>, scalar_prefetch = 0 : i64, scratch_operands = 2 : i64, tpu.core_type = #tpu.core_type<tc>, window_params = [{pipeline_mode = #tpu.pipeline_mode<synchronous>, transform_indices = @transform_0, window_bounds = array<i64: 384, 128>}, {transform_indices = @transform_1, window_bounds = array<i64: 1, 432, 128>}, {pipeline_mode = #tpu.pipeline_mode<synchronous>, transform_indices = @transform_2, window_bounds = array<i64: 1152, 128>}, {pipeline_mode = #tpu.pipeline_mode<synchronous>, transform_indices = @transform_3, window_bounds = array<i64: 1, 128>}, {pipeline_mode = #tpu.pipeline_mode<synchronous>, transform_indices = @transform_4, window_bounds = array<i64: 1152, 128>}, {pipeline_mode = #tpu.pipeline_mode<synchronous>, transform_indices = @transform_5, window_bounds = array<i64: 1, 128>}, {transform_indices = @transform_6, window_bounds = array<i64: 1, 384, 128>}]} {
    %c0 = arith.constant 0 : index
    %c0_0 = arith.constant 0 : index
    %c0_1 = arith.constant 0 : index
    %0 = vector.load %arg2[%c0, %c0_0, %c0_1] : memref<1x432x128xf32, #tpu.memory_space<vmem>>, vector<1x384x128xf32>
    %1 = vector.shape_cast %0 : vector<1x384x128xf32> to vector<384x128xf32>
    %2 = arith.truncf %1 : vector<384x128xf32> to vector<384x128xbf16>
    %c0_2 = arith.constant 0 : index
    %c0_3 = arith.constant 0 : index
    %3 = vector.load %arg9[%c0_2, %c0_3] : memref<384x1152xbf16, #tpu.memory_space<vmem>>, vector<384x128xbf16>
    tpu.vector_store %arg9[%c0_2, %c0_3], %2 {strides = array<i32>} : memref<384x1152xbf16, #tpu.memory_space<vmem>>, vector<384x128xbf16>,
    %c383_i32 = arith.constant 383 : i32
    %4 = tpu.dynamic_rotate %1 by %c383_i32 dim 0 : vector<384x128xf32>, i32 -> vector<384x128xf32>
    %5 = arith.truncf %4 : vector<384x128xf32> to vector<384x128xbf16>
    %c0_4 = arith.constant 0 : index
    %c128 = arith.constant 128 : index
    %6 = vector.load %arg9[%c0_4, %c128] : memref<384x1152xbf16, #tpu.memory_space<vmem>>, vector<384x128xbf16>
    tpu.vector_store %arg9[%c0_4, %c128], %5 {strides = array<i32>} : memref<384x1152xbf16, #tpu.memory_space<vmem>>, vector<384x128xbf16>,
    %c382_i32 = arith.constant 382 : i32
    %7 = tpu.dynamic_rotate %1 by %c382_i32 dim 0 : vector<384x128xf32>, i32 -> vector<384x128xf32>
    %8 = arith.truncf %7 : vector<384x128xf32> to vector<384x128xbf16>
    %c0_5 = arith.constant 0 : index
    %c256 = arith.constant 256 : index
    %9 = vector.load %arg9[%c0_5, %c256] : memref<384x1152xbf16, #tpu.memory_space<vmem>>, vector<384x128xbf16>
    tpu.vector_store %arg9[%c0_5, %c256], %8 {strides = array<i32>} : memref<384x1152xbf16, #tpu.memory_space<vmem>>, vector<384x128xbf16>,
    %c0_6 = arith.constant 0 : index
    %c24 = arith.constant 24 : index
    %c0_7 = arith.constant 0 : index
    %10 = vector.load %arg2[%c0_6, %c24, %c0_7] : memref<1x432x128xf32, #tpu.memory_space<vmem>>, vector<1x384x128xf32>
    %11 = vector.shape_cast %10 : vector<1x384x128xf32> to vector<384x128xf32>
    %12 = arith.truncf %11 : vector<384x128xf32> to vector<384x128xbf16>
    %c0_8 = arith.constant 0 : index
    %c384 = arith.constant 384 : index
    %13 = vector.load %arg9[%c0_8, %c384] : memref<384x1152xbf16, #tpu.memory_space<vmem>>, vector<384x128xbf16>
    tpu.vector_store %arg9[%c0_8, %c384], %12 {strides = array<i32>} : memref<384x1152xbf16, #tpu.memory_space<vmem>>, vector<384x128xbf16>,
    %c383_i32_9 = arith.constant 383 : i32
    %14 = tpu.dynamic_rotate %11 by %c383_i32_9 dim 0 : vector<384x128xf32>, i32 -> vector<384x128xf32>
    %15 = arith.truncf %14 : vector<384x128xf32> to vector<384x128xbf16>
    %c0_10 = arith.constant 0 : index
    %c512 = arith.constant 512 : index
    %16 = vector.load %arg9[%c0_10, %c512] : memref<384x1152xbf16, #tpu.memory_space<vmem>>, vector<384x128xbf16>
    tpu.vector_store %arg9[%c0_10, %c512], %15 {strides = array<i32>} : memref<384x1152xbf16, #tpu.memory_space<vmem>>, vector<384x128xbf16>,
    %c382_i32_11 = arith.constant 382 : i32
    %17 = tpu.dynamic_rotate %11 by %c382_i32_11 dim 0 : vector<384x128xf32>, i32 -> vector<384x128xf32>
    %18 = arith.truncf %17 : vector<384x128xf32> to vector<384x128xbf16>
    %c0_12 = arith.constant 0 : index
    %c640 = arith.constant 640 : index
    %19 = vector.load %arg9[%c0_12, %c640] : memref<384x1152xbf16, #tpu.memory_space<vmem>>, vector<384x128xbf16>
    tpu.vector_store %arg9[%c0_12, %c640], %18 {strides = array<i32>} : memref<384x1152xbf16, #tpu.memory_space<vmem>>, vector<384x128xbf16>,
    %c0_13 = arith.constant 0 : index
    %c48 = arith.constant 48 : index
    %c0_14 = arith.constant 0 : index
    %20 = vector.load %arg2[%c0_13, %c48, %c0_14] : memref<1x432x128xf32, #tpu.memory_space<vmem>>, vector<1x384x128xf32>
    %21 = vector.shape_cast %20 : vector<1x384x128xf32> to vector<384x128xf32>
    %22 = arith.truncf %21 : vector<384x128xf32> to vector<384x128xbf16>
    %c0_15 = arith.constant 0 : index
    %c768 = arith.constant 768 : index
    %23 = vector.load %arg9[%c0_15, %c768] : memref<384x1152xbf16, #tpu.memory_space<vmem>>, vector<384x128xbf16>
    tpu.vector_store %arg9[%c0_15, %c768], %22 {strides = array<i32>} : memref<384x1152xbf16, #tpu.memory_space<vmem>>, vector<384x128xbf16>,
    %c383_i32_16 = arith.constant 383 : i32
    %24 = tpu.dynamic_rotate %21 by %c383_i32_16 dim 0 : vector<384x128xf32>, i32 -> vector<384x128xf32>
    %25 = arith.truncf %24 : vector<384x128xf32> to vector<384x128xbf16>
    %c0_17 = arith.constant 0 : index
    %c896 = arith.constant 896 : index
    %26 = vector.load %arg9[%c0_17, %c896] : memref<384x1152xbf16, #tpu.memory_space<vmem>>, vector<384x128xbf16>
    tpu.vector_store %arg9[%c0_17, %c896], %25 {strides = array<i32>} : memref<384x1152xbf16, #tpu.memory_space<vmem>>, vector<384x128xbf16>,
    %c382_i32_18 = arith.constant 382 : i32
    %27 = tpu.dynamic_rotate %21 by %c382_i32_18 dim 0 : vector<384x128xf32>, i32 -> vector<384x128xf32>
    %28 = arith.truncf %27 : vector<384x128xf32> to vector<384x128xbf16>
    %c0_19 = arith.constant 0 : index
    %c1024 = arith.constant 1024 : index
    %29 = vector.load %arg9[%c0_19, %c1024] : memref<384x1152xbf16, #tpu.memory_space<vmem>>, vector<384x128xbf16>
    tpu.vector_store %arg9[%c0_19, %c1024], %28 {strides = array<i32>} : memref<384x1152xbf16, #tpu.memory_space<vmem>>, vector<384x128xbf16>,
    %c0_20 = arith.constant 0 : index
    %c0_21 = arith.constant 0 : index
    %30 = vector.load %arg9[%c0_20, %c0_21] : memref<384x1152xbf16, #tpu.memory_space<vmem>>, vector<384x1152xbf16>
    %c0_22 = arith.constant 0 : index
    %c0_23 = arith.constant 0 : index
    %31 = vector.load %arg3[%c0_22, %c0_23] : memref<1152x128xbf16, #tpu.memory_space<vmem>>, vector<1152x128xbf16>
    %cst = arith.constant dense<0.000000e+00> : vector<384x128xf32>
    %32 = tpu.matmul %30, %31, %cst {dimension_numbers = #tpu.dot_dimension_numbers<[1], [0], [0], [1], [0, 0, 1, 1], [], []>} : vector<384x1152xbf16>, vector<1152x128xbf16>, vector<384x128xf32> -> vector<384x128xf32>
    %c0_24 = arith.constant 0 : index
    %c0_25 = arith.constant 0 : index
    %33 = vector.load %arg4[%c0_24, %c0_25] : memref<1x128xf32, #tpu.memory_space<vmem>>, vector<1x128xf32>
    %34 = vector.broadcast %33 : vector<1x128xf32> to vector<384x128xf32>
    %35 = arith.addf %32, %34 : vector<384x128xf32>
    %cst_26 = arith.constant 0.000000e+00 : f32
    %36 = vector.broadcast %cst_26 : f32 to vector<384x128xf32>
    %37 = arith.maximumf %35, %36 : vector<384x128xf32>
    %c0_27 = arith.constant 0 : index
    %c0_28 = arith.constant 0 : index
    %38 = vector.load %arg1[%c0_27, %c0_28] : memref<384x128xf32, #tpu.memory_space<vmem>>, vector<384x128xf32>
    %39 = arith.mulf %37, %38 : vector<384x128xf32>
    %cst_29 = arith.constant 0.000000e+00 : f32
    %40 = vector.broadcast %cst_29 : f32 to vector<24x128xf32>
    %c0_30 = arith.constant 0 : index
    %c0_31 = arith.constant 0 : index
    %41 = vector.load %arg8[%c0_30, %c0_31] : memref<432x128xf32, #tpu.memory_space<vmem>>, vector<24x128xf32>
    tpu.vector_store %arg8[%c0_30, %c0_31], %40 {strides = array<i32>} : memref<432x128xf32, #tpu.memory_space<vmem>>, vector<24x128xf32>,
    %cst_32 = arith.constant 0.000000e+00 : f32
    %42 = vector.broadcast %cst_32 : f32 to vector<24x128xf32>
    %c408 = arith.constant 408 : index
    %c0_33 = arith.constant 0 : index
    %43 = vector.load %arg8[%c408, %c0_33] : memref<432x128xf32, #tpu.memory_space<vmem>>, vector<24x128xf32>
    tpu.vector_store %arg8[%c408, %c0_33], %42 {strides = array<i32>} : memref<432x128xf32, #tpu.memory_space<vmem>>, vector<24x128xf32>,
    %c24_34 = arith.constant 24 : index
    %c0_35 = arith.constant 0 : index
    %44 = vector.load %arg8[%c24_34, %c0_35] : memref<432x128xf32, #tpu.memory_space<vmem>>, vector<384x128xf32>
    tpu.vector_store %arg8[%c24_34, %c0_35], %39 {strides = array<i32>} : memref<432x128xf32, #tpu.memory_space<vmem>>, vector<384x128xf32>,
    %c0_36 = arith.constant 0 : index
    %c0_37 = arith.constant 0 : index
    %45 = vector.load %arg8[%c0_36, %c0_37] : memref<432x128xf32, #tpu.memory_space<vmem>>, vector<384x128xf32>
    %c1_i32 = arith.constant 1 : i32
    %46 = tpu.dynamic_rotate %45 by %c1_i32 dim 0 : vector<384x128xf32>, i32 -> vector<384x128xf32>
    %47 = arith.truncf %46 : vector<384x128xf32> to vector<384x128xbf16>
    %c0_38 = arith.constant 0 : index
    %c0_39 = arith.constant 0 : index
    %48 = vector.load %arg9[%c0_38, %c0_39] : memref<384x1152xbf16, #tpu.memory_space<vmem>>, vector<384x128xbf16>
    tpu.vector_store %arg9[%c0_38, %c0_39], %47 {strides = array<i32>} : memref<384x1152xbf16, #tpu.memory_space<vmem>>, vector<384x128xbf16>,
    %49 = arith.truncf %45 : vector<384x128xf32> to vector<384x128xbf16>
    %c0_40 = arith.constant 0 : index
    %c128_41 = arith.constant 128 : index
    %50 = vector.load %arg9[%c0_40, %c128_41] : memref<384x1152xbf16, #tpu.memory_space<vmem>>, vector<384x128xbf16>
    tpu.vector_store %arg9[%c0_40, %c128_41], %49 {strides = array<i32>} : memref<384x1152xbf16, #tpu.memory_space<vmem>>, vector<384x128xbf16>,
    %c383_i32_42 = arith.constant 383 : i32
    %51 = tpu.dynamic_rotate %45 by %c383_i32_42 dim 0 : vector<384x128xf32>, i32 -> vector<384x128xf32>
    %52 = arith.truncf %51 : vector<384x128xf32> to vector<384x128xbf16>
    %c0_43 = arith.constant 0 : index
    %c256_44 = arith.constant 256 : index
    %53 = vector.load %arg9[%c0_43, %c256_44] : memref<384x1152xbf16, #tpu.memory_space<vmem>>, vector<384x128xbf16>
    tpu.vector_store %arg9[%c0_43, %c256_44], %52 {strides = array<i32>} : memref<384x1152xbf16, #tpu.memory_space<vmem>>, vector<384x128xbf16>,
    %c24_45 = arith.constant 24 : index
    %c0_46 = arith.constant 0 : index
    %54 = vector.load %arg8[%c24_45, %c0_46] : memref<432x128xf32, #tpu.memory_space<vmem>>, vector<384x128xf32>
    %c1_i32_47 = arith.constant 1 : i32
    %55 = tpu.dynamic_rotate %54 by %c1_i32_47 dim 0 : vector<384x128xf32>, i32 -> vector<384x128xf32>
    %56 = arith.truncf %55 : vector<384x128xf32> to vector<384x128xbf16>
    %c0_48 = arith.constant 0 : index
    %c384_49 = arith.constant 384 : index
    %57 = vector.load %arg9[%c0_48, %c384_49] : memref<384x1152xbf16, #tpu.memory_space<vmem>>, vector<384x128xbf16>
    tpu.vector_store %arg9[%c0_48, %c384_49], %56 {strides = array<i32>} : memref<384x1152xbf16, #tpu.memory_space<vmem>>, vector<384x128xbf16>,
    %58 = arith.truncf %54 : vector<384x128xf32> to vector<384x128xbf16>
    %c0_50 = arith.constant 0 : index
    %c512_51 = arith.constant 512 : index
    %59 = vector.load %arg9[%c0_50, %c512_51] : memref<384x1152xbf16, #tpu.memory_space<vmem>>, vector<384x128xbf16>
    tpu.vector_store %arg9[%c0_50, %c512_51], %58 {strides = array<i32>} : memref<384x1152xbf16, #tpu.memory_space<vmem>>, vector<384x128xbf16>,
    %c383_i32_52 = arith.constant 383 : i32
    %60 = tpu.dynamic_rotate %54 by %c383_i32_52 dim 0 : vector<384x128xf32>, i32 -> vector<384x128xf32>
    %61 = arith.truncf %60 : vector<384x128xf32> to vector<384x128xbf16>
    %c0_53 = arith.constant 0 : index
    %c640_54 = arith.constant 640 : index
    %62 = vector.load %arg9[%c0_53, %c640_54] : memref<384x1152xbf16, #tpu.memory_space<vmem>>, vector<384x128xbf16>
    tpu.vector_store %arg9[%c0_53, %c640_54], %61 {strides = array<i32>} : memref<384x1152xbf16, #tpu.memory_space<vmem>>, vector<384x128xbf16>,
    %c48_55 = arith.constant 48 : index
    %c0_56 = arith.constant 0 : index
    %63 = vector.load %arg8[%c48_55, %c0_56] : memref<432x128xf32, #tpu.memory_space<vmem>>, vector<384x128xf32>
    %c1_i32_57 = arith.constant 1 : i32
    %64 = tpu.dynamic_rotate %63 by %c1_i32_57 dim 0 : vector<384x128xf32>, i32 -> vector<384x128xf32>
    %65 = arith.truncf %64 : vector<384x128xf32> to vector<384x128xbf16>
    %c0_58 = arith.constant 0 : index
    %c768_59 = arith.constant 768 : index
    %66 = vector.load %arg9[%c0_58, %c768_59] : memref<384x1152xbf16, #tpu.memory_space<vmem>>, vector<384x128xbf16>
    tpu.vector_store %arg9[%c0_58, %c768_59], %65 {strides = array<i32>} : memref<384x1152xbf16, #tpu.memory_space<vmem>>, vector<384x128xbf16>,
    %67 = arith.truncf %63 : vector<384x128xf32> to vector<384x128xbf16>
    %c0_60 = arith.constant 0 : index
    %c896_61 = arith.constant 896 : index
    %68 = vector.load %arg9[%c0_60, %c896_61] : memref<384x1152xbf16, #tpu.memory_space<vmem>>, vector<384x128xbf16>
    tpu.vector_store %arg9[%c0_60, %c896_61], %67 {strides = array<i32>} : memref<384x1152xbf16, #tpu.memory_space<vmem>>, vector<384x128xbf16>,
    %c383_i32_62 = arith.constant 383 : i32
    %69 = tpu.dynamic_rotate %63 by %c383_i32_62 dim 0 : vector<384x128xf32>, i32 -> vector<384x128xf32>
    %70 = arith.truncf %69 : vector<384x128xf32> to vector<384x128xbf16>
    %c0_63 = arith.constant 0 : index
    %c1024_64 = arith.constant 1024 : index
    %71 = vector.load %arg9[%c0_63, %c1024_64] : memref<384x1152xbf16, #tpu.memory_space<vmem>>, vector<384x128xbf16>
    tpu.vector_store %arg9[%c0_63, %c1024_64], %70 {strides = array<i32>} : memref<384x1152xbf16, #tpu.memory_space<vmem>>, vector<384x128xbf16>,
    %c0_65 = arith.constant 0 : index
    %c0_66 = arith.constant 0 : index
    %72 = vector.load %arg9[%c0_65, %c0_66] : memref<384x1152xbf16, #tpu.memory_space<vmem>>, vector<384x1152xbf16>
    %c0_67 = arith.constant 0 : index
    %c0_68 = arith.constant 0 : index
    %73 = vector.load %arg5[%c0_67, %c0_68] : memref<1152x128xbf16, #tpu.memory_space<vmem>>, vector<1152x128xbf16>
    %cst_69 = arith.constant dense<0.000000e+00> : vector<384x128xf32>
    %74 = tpu.matmul %72, %73, %cst_69 {dimension_numbers = #tpu.dot_dimension_numbers<[1], [0], [0], [1], [0, 0, 1, 1], [], []>} : vector<384x1152xbf16>, vector<1152x128xbf16>, vector<384x128xf32> -> vector<384x128xf32>
    %c0_70 = arith.constant 0 : index
    %c0_71 = arith.constant 0 : index
    %75 = vector.load %arg6[%c0_70, %c0_71] : memref<1x128xf32, #tpu.memory_space<vmem>>, vector<1x128xf32>
    %76 = vector.broadcast %75 : vector<1x128xf32> to vector<384x128xf32>
    %77 = arith.addf %74, %76 : vector<384x128xf32>
    %c0_72 = arith.constant 0 : index
    %c24_73 = arith.constant 24 : index
    %c0_74 = arith.constant 0 : index
    %78 = vector.load %arg2[%c0_72, %c24_73, %c0_74] : memref<1x432x128xf32, #tpu.memory_space<vmem>>, vector<1x384x128xf32>
    %79 = vector.shape_cast %78 : vector<1x384x128xf32> to vector<384x128xf32>
    %c383_i32_75 = arith.constant 383 : i32
    %80 = tpu.dynamic_rotate %79 by %c383_i32_75 dim 0 : vector<384x128xf32>, i32 -> vector<384x128xf32>
    %81 = arith.addf %77, %80 : vector<384x128xf32>
    %cst_76 = arith.constant 0.000000e+00 : f32
    %82 = vector.broadcast %cst_76 : f32 to vector<384x128xf32>
    %83 = arith.maximumf %81, %82 : vector<384x128xf32>
    %c0_77 = arith.constant 0 : index
    %c0_78 = arith.constant 0 : index
    %c0_79 = arith.constant 0 : index
    %84 = vector.load %arg7[%c0_77, %c0_78, %c0_79] : memref<1x384x128xf32, #tpu.memory_space<vmem>>, vector<1x384x128xf32>
    %85 = vector.shape_cast %84 : vector<1x384x128xf32> to vector<384x128xf32>
    %86 = vector.shape_cast %83 : vector<384x128xf32> to vector<1x384x128xf32>
    tpu.vector_store %arg7[%c0_77, %c0_78, %c0_79], %86 {strides = array<i32>} : memref<1x384x128xf32, #tpu.memory_space<vmem>>, vector<1x384x128xf32>,
    return
  }
  func.func @transform_0(%arg0: i32) -> (i32, i32) {
    %c0_i32 = arith.constant 0 : i32
    %c0_i32_0 = arith.constant 0 : i32
    %c0_i32_1 = arith.constant 0 : i32
    return %c0_i32, %c0_i32_0 : i32, i32
  }
  func.func @transform_1(%arg0: i32) -> (i32, i32, i32) {
    %c0_i32 = arith.constant 0 : i32
    %c0_i32_0 = arith.constant 0 : i32
    %c0_i32_1 = arith.constant 0 : i32
    return %arg0, %c0_i32, %c0_i32_0 : i32, i32, i32
  }
  func.func @transform_2(%arg0: i32) -> (i32, i32) {
    %c0_i32 = arith.constant 0 : i32
    %c0_i32_0 = arith.constant 0 : i32
    %c0_i32_1 = arith.constant 0 : i32
    return %c0_i32, %c0_i32_0 : i32, i32
  }
  func.func @transform_3(%arg0: i32) -> (i32, i32) {
    %c0_i32 = arith.constant 0 : i32
    %c0_i32_0 = arith.constant 0 : i32
    %c0_i32_1 = arith.constant 0 : i32
    return %c0_i32, %c0_i32_0 : i32, i32
  }
  func.func @transform_4(%arg0: i32) -> (i32, i32) {
    %c0_i32 = arith.constant 0 : i32
    %c0_i32_0 = arith.constant 0 : i32
    %c0_i32_1 = arith.constant 0 : i32
    return %c0_i32, %c0_i32_0 : i32, i32
  }
  func.func @transform_5(%arg0: i32) -> (i32, i32) {
    %c0_i32 = arith.constant 0 : i32
    %c0_i32_0 = arith.constant 0 : i32
    %c0_i32_1 = arith.constant 0 : i32
    return %c0_i32, %c0_i32_0 : i32, i32
  }
  func.func @transform_6(%arg0: i32) -> (i32, i32, i32) {
    %c0_i32 = arith.constant 0 : i32
    %c0_i32_0 = arith.constant 0 : i32
    %c0_i32_1 = arith.constant 0 : i32
    return %arg0, %c0_i32, %c0_i32_0 : i32, i32, i32
  }
}

</mosaic_0001>

<llo_original>
// kernel: tpu_custom_call.1
$region0: #{tpu_custom_call.1}
  #allocation0 [shape = 'u32[]', space=smem, size = 0x4, offset = 0x4, fixed_abs, tag = 'smem constant byte address 0x4 - core index']
  #allocation1 [shape = 'u32[144,128]{1,0:T(1,128)}', space=vmem, size = 0x12000, scoped, tag = 'internal scratch']
  #allocation2 [shape = 'f32[432,128]{1,0:T(8,128)}', space=vmem, size = 0x36000, scoped, tag = 'scratch operand']
  #allocation3 [shape = 'bf16[384,1152]{1,0:T(16,128)(2,1)}', space=vmem, size = 0xd8000, scoped, tag = 'scratch operand']
  %s0 = inlined_call_operand.hbm [shape: f32[384,128], index: 0, kind: input, shape index: {}]
  %s1 = inlined_call_operand.hbm [shape: f32[2,432,128], index: 1, kind: input, shape index: {}]
  %s2 = inlined_call_operand.hbm [shape: bf16[1152,128], index: 2, kind: input, shape index: {}]
  %s3 = inlined_call_operand.vmem [shape: f32[1,128], index: 3, kind: input, shape index: {}]
  %s4 = inlined_call_operand.hbm [shape: bf16[1152,128], index: 4, kind: input, shape index: {}]
  %s5 = inlined_call_operand.vmem [shape: f32[1,128], index: 5, kind: input, shape index: {}]
  %s6 = inlined_call_operand.hbm [shape: f32[2,384,128], index: 6, kind: output, shape index: {}]
  %s7 = sld [smem:[#allocation0]]
  $region73: #{tpu_custom_call.1} parent=0
    _
  %s9 = ssub.s32 1, %s7
  %s10 = scalar_select 0, %s9, %s7
  $region1: #{tpu_custom_call.1} parent=0
    #allocation4 [shape = 'u8[196608]{0}', space=vmem, size = 0x30000, scoped, tag = 'input window, operand 0, single buffered']
    #allocation5 [shape = 's32[2]{0}', space=sflag, size = 0x8, scoped, tag = 'scoped memory for tpu_custom_call.1']
    #allocation6 [shape = 's32[2]{0}', space=sflag, size = 0x8, scoped, tag = 'scoped memory for tpu_custom_call.1']
    #allocation7 [shape = 'u8[442368]{0}', space=vmem, size = 0x6c000, scoped, tag = 'input window, operand 1']
    #allocation8 [shape = 's32[2]{0}', space=sflag, size = 0x8, scoped, tag = 'scoped memory for tpu_custom_call.1']
    #allocation9 [shape = 'u8[294912]{0}', space=vmem, size = 0x48000, scoped, tag = 'input window, operand 2, single buffered']
    #allocation10 [shape = 'u8[294912]{0}', space=vmem, size = 0x48000, scoped, tag = 'input window, operand 4, single buffered']
    #allocation11 [shape = 's32[1]{0}', space=sflag, size = 0x4, scoped, tag = 'scoped memory for tpu_custom_call.1']
    #allocation12 [shape = 'u8[393216]{0}', space=vmem, size = 0x60000, scoped, tag = 'output window, operand 0']
    %11 = vsyncpa [#allocation5], 0
    %12 = vsyncpa [#allocation8], 0
    %s13 = scalar_lea.sflag [#allocation8], 1
    %14 = vsyncpa %s13, 0
    %15 = vsyncpa [#allocation11], 0
    %16 = vsyncpa [#allocation6], 0
    %s17 = scalar_lea.sflag [#allocation6], 1
    %18 = vsyncpa %s17, 0
    loop: start=0, step=1, limit=4
    $region2: #{tpu_custom_call.1} parent=1 // loop_pre_header
      _
    $region3: #{tpu_custom_call.1} parent=1 // loop_header
      %s20 = sphi 0, %s24
      %p21 = scmp.ge.s32.totalorder %s20, 4
      %s28 = sphi 0, %s28
      %s30 = sphi 0, %s28
      %s31 = sphi 0, %s30
      %s45 = sphi 0, %s31
      %s51 = sphi 0, %s53
      %s54 = sphi 0, %s51
      %s55 = sphi 0, %s54
      %s71 = sphi 0, %s55
      %s75 = sphi 0, %s75
      %s77 = sphi 0, %s75
      %s78 = sphi 0, %s77
      %s92 = sphi 0, %s78
      %s96 = sphi 0, %s96
      %s98 = sphi 0, %s96
      %s99 = sphi 0, %s98
      %s113 = sphi 0, %s99
      %s117 = sphi 0, %s117
      %s119 = sphi 0, %s117
      %s120 = sphi 0, %s119
      %s134 = sphi 0, %s120
      %s138 = sphi 0, %s138
      %s140 = sphi 0, %s138
      %s141 = sphi 0, %s140
      %s155 = sphi 0, %s141
      %s161 = sphi 0, %s163
      %s164 = sphi 0, %s161
      %s165 = sphi 0, %s164
      %s181 = sphi 0, %s165
    $region4: #{tpu_custom_call.1} parent=1 // loop_header_branch
      %23 = sbr.rel (%p21) target = $region8
    $region5: #{tpu_custom_call.1} parent=1 // loop_body
      %s25 = ssub.s32 %s20, 1
      %s26 = ssub.s32 %s20, 2
      %s27 = sadd.s32 %s20, 1
      %s29 = sadd.s32 %s28, 1
      %p32 = scmp.eq.s32.totalorder %s20, 1
      %p33 = scmp.ne.s32.totalorder %s28, %s30
      %p34 = scmp.eq.s32.totalorder %s20, 0
      %p35 = por %p33, %p34
      %p36 = scmp.ne.s32.totalorder %s28, %s30
      %p37 = scmp.eq.s32.totalorder %s25, 1
      %p38 = por %p36, %p37
      %p39 = scmp.ne.s32.totalorder %s30, %s31
      %p40 = scmp.eq.s32.totalorder %s25, 0
      %p41 = por %p39, %p40
      %p42 = scmp.ne.s32.totalorder %s30, %s31
      %p43 = scmp.eq.s32.totalorder %s26, 1
      %p44 = por %p42, %p43
      %p46 = scmp.ne.s32.totalorder %s31, %s45
      %p47 = scmp.eq.s32.totalorder %s26, 0
      %p48 = por %p46, %p47
      %s49 = ssub.s32 %s20, %s27
      %p50 = scmp.eq.s32.totalorder %s49, 0
      %s52 = sadd.s32 %s51, 1
      %s53 = scalar_select %p50, %s51, %s52
      %p56 = pneg %p50
      %p57 = scmp.eq.s32.totalorder %s20, 1
      %p58 = por %p56, %p57
      %p59 = scmp.ne.s32.totalorder %s51, %s54
      %p60 = scmp.eq.s32.totalorder %s20, 0
      %p61 = por %p59, %p60
      %p62 = scmp.ne.s32.totalorder %s51, %s54
      %p63 = scmp.eq.s32.totalorder %s25, 1
      %p64 = por %p62, %p63
      %p65 = scmp.ne.s32.totalorder %s54, %s55
      %p66 = scmp.eq.s32.totalorder %s25, 0
      %p67 = por %p65, %p66
      %p68 = scmp.ne.s32.totalorder %s54, %s55
      %p69 = scmp.eq.s32.totalorder %s26, 1
      %p70 = por %p68, %p69
      %p72 = scmp.ne.s32.totalorder %s55, %s71
      %p73 = scmp.eq.s32.totalorder %s26, 0
      %p74 = por %p72, %p73
      %s76 = sadd.s32 %s75, 1
      %p79 = scmp.eq.s32.totalorder %s20, 1
      %p80 = scmp.ne.s32.totalorder %s75, %s77
      %p81 = scmp.eq.s32.totalorder %s20, 0
      %p82 = por %p80, %p81
      %p83 = scmp.ne.s32.totalorder %s75, %s77
      %p84 = scmp.eq.s32.totalorder %s25, 1
      %p85 = por %p83, %p84
      %p86 = scmp.ne.s32.totalorder %s77, %s78
      %p87 = scmp.eq.s32.totalorder %s25, 0
      %p88 = por %p86, %p87
      %p89 = scmp.ne.s32.totalorder %s77, %s78
      %p90 = scmp.eq.s32.totalorder %s26, 1
      %p91 = por %p89, %p90
      %p93 = scmp.ne.s32.totalorder %s78, %s92
      %p94 = scmp.eq.s32.totalorder %s26, 0
      %p95 = por %p93, %p94
      %s97 = sadd.s32 %s96, 1
      %p100 = scmp.eq.s32.totalorder %s20, 1
      %p101 = scmp.ne.s32.totalorder %s96, %s98
      %p102 = scmp.eq.s32.totalorder %s20, 0
      %p103 = por %p101, %p102
      %p104 = scmp.ne.s32.totalorder %s96, %s98
      %p105 = scmp.eq.s32.totalorder %s25, 1
      %p106 = por %p104, %p105
      %p107 = scmp.ne.s32.totalorder %s98, %s99
      %p108 = scmp.eq.s32.totalorder %s25, 0
      %p109 = por %p107, %p108
      %p110 = scmp.ne.s32.totalorder %s98, %s99
      %p111 = scmp.eq.s32.totalorder %s26, 1
      %p112 = por %p110, %p111
      %p114 = scmp.ne.s32.totalorder %s99, %s113
      %p115 = scmp.eq.s32.totalorder %s26, 0
      %p116 = por %p114, %p115
      %s118 = sadd.s32 %s117, 1
      %p121 = scmp.eq.s32.totalorder %s20, 1
      %p122 = scmp.ne.s32.totalorder %s117, %s119
      %p123 = scmp.eq.s32.totalorder %s20, 0
      %p124 = por %p122, %p123
      %p125 = scmp.ne.s32.totalorder %s117, %s119
      %p126 = scmp.eq.s32.totalorder %s25, 1
      %p127 = por %p125, %p126
      %p128 = scmp.ne.s32.totalorder %s119, %s120
      %p129 = scmp.eq.s32.totalorder %s25, 0
      %p130 = por %p128, %p129
      %p131 = scmp.ne.s32.totalorder %s119, %s120
      %p132 = scmp.eq.s32.totalorder %s26, 1
      %p133 = por %p131, %p132
      %p135 = scmp.ne.s32.totalorder %s120, %s134
      %p136 = scmp.eq.s32.totalorder %s26, 0
      %p137 = por %p135, %p136
      %s139 = sadd.s32 %s138, 1
      %p142 = scmp.eq.s32.totalorder %s20, 1
      %p143 = scmp.ne.s32.totalorder %s138, %s140
      %p144 = scmp.eq.s32.totalorder %s20, 0
      %p145 = por %p143, %p144
      %p146 = scmp.ne.s32.totalorder %s138, %s140
      %p147 = scmp.eq.s32.totalorder %s25, 1
      %p148 = por %p146, %p147
      %p149 = scmp.ne.s32.totalorder %s140, %s141
      %p150 = scmp.eq.s32.totalorder %s25, 0
      %p151 = por %p149, %p150
      %p152 = scmp.ne.s32.totalorder %s140, %s141
      %p153 = scmp.eq.s32.totalorder %s26, 1
      %p154 = por %p152, %p153
      %p156 = scmp.ne.s32.totalorder %s141, %s155
      %p157 = scmp.eq.s32.totalorder %s26, 0
      %p158 = por %p156, %p157
      %s159 = ssub.s32 %s20, %s27
      %p160 = scmp.eq.s32.totalorder %s159, 0
      %s162 = sadd.s32 %s161, 1
      %s163 = scalar_select %p160, %s161, %s162
      %p166 = pneg %p160
      %p167 = scmp.eq.s32.totalorder %s20, 1
      %p168 = por %p166, %p167
      %p169 = scmp.ne.s32.totalorder %s161, %s164
      %p170 = scmp.eq.s32.totalorder %s20, 0
      %p171 = por %p169, %p170
      %p172 = scmp.ne.s32.totalorder %s161, %s164
      %p173 = scmp.eq.s32.totalorder %s25, 1
      %p174 = por %p172, %p173
      %p175 = scmp.ne.s32.totalorder %s164, %s165
      %p176 = scmp.eq.s32.totalorder %s25, 0
      %p177 = por %p175, %p176
      %p178 = scmp.ne.s32.totalorder %s164, %s165
      %p179 = scmp.eq.s32.totalorder %s26, 1
      %p180 = por %p178, %p179
      %p182 = scmp.ne.s32.totalorder %s165, %s181
      %p183 = scmp.eq.s32.totalorder %s26, 0
      %p184 = por %p182, %p183
      %p185 = scmp.le.s32.totalorder 1, %s20
      %p186 = scmp.lt.s32.totalorder %s20, 3
      %p187 = pnand %p185, %p186
      %p188 = pneg %p187
      // Predicated region
      $region9: #{tpu_custom_call.1} parent=5 // pred_check
        _
      $region10: #{tpu_custom_call.1} parent=5 // pred_check_branch
        %190 = sbr.rel (%p187) target = $region12
      $region11: #{tpu_custom_call.1} parent=5 // pred_region
        %s191 = ssub.s32 %s20, 1
        // Predicated region
        $region13: #{tpu_custom_call.1} parent=11 // pred_check
          %p192 = pneg %p41
        $region14: #{tpu_custom_call.1} parent=11 // pred_check_branch
          %194 = sbr.rel (%p192) target = $region16
        $region15: #{tpu_custom_call.1} parent=11 // pred_region
          %s196 = ssub.s32 6144, 6144
          %197 = vsyncadd [#allocation5], %s196
          %s198 = sshll.u32 [#allocation4], 4
          %s199 = int_to_ptr.vmem [resolvable:$true] %s198
          %204 = dma.hbm_to_vmem [thread:$0]  %s0, 6144, %s199, [#allocation5], 128, 128, 8
        $region16: #{tpu_custom_call.1} parent=11 // pred_fallthru
          _
        // Predicated region
        $region17: #{tpu_custom_call.1} parent=11 // pred_check
          %p205 = pneg %p88
        $region18: #{tpu_custom_call.1} parent=11 // pred_check_branch
          %207 = sbr.rel (%p205) target = $region20
        $region19: #{tpu_custom_call.1} parent=11 // pred_region
          %s209 = ssub.s32 9216, 9216
          %210 = vsyncadd [#allocation8], %s209
          %s211 = sshll.u32 [#allocation9], 4
          %s212 = int_to_ptr.vmem [resolvable:$true] %s211
          %217 = dma.hbm_to_vmem [thread:$0]  %s2, 9216, %s212, [#allocation8], 64, 64, 4
        $region20: #{tpu_custom_call.1} parent=11 // pred_fallthru
          _
        // Predicated region
        $region21: #{tpu_custom_call.1} parent=11 // pred_check
          %p218 = pneg %p109
        $region22: #{tpu_custom_call.1} parent=11 // pred_check_branch
          %220 = sbr.rel (%p218) target = $region24
        $region23: #{tpu_custom_call.1} parent=11 // pred_region
          _
        $region24: #{tpu_custom_call.1} parent=11 // pred_fallthru
          _
        // Predicated region
        $region25: #{tpu_custom_call.1} parent=11 // pred_check
          %p221 = pneg %p130
        $region26: #{tpu_custom_call.1} parent=11 // pred_check_branch
          %223 = sbr.rel (%p221) target = $region28
        $region27: #{tpu_custom_call.1} parent=11 // pred_region
          %s225 = ssub.s32 9216, 9216
          %226 = vsyncadd [#allocation11], %s225
          %s227 = sshll.u32 [#allocation10], 4
          %s228 = int_to_ptr.vmem [resolvable:$true] %s227
          %233 = dma.hbm_to_vmem [thread:$0]  %s4, 9216, %s228, [#allocation11], 64, 64, 4
        $region28: #{tpu_custom_call.1} parent=11 // pred_fallthru
          _
        // Predicated region
        $region29: #{tpu_custom_call.1} parent=11 // pred_check
          %p234 = pneg %p151
        $region30: #{tpu_custom_call.1} parent=11 // pred_check_branch
          %236 = sbr.rel (%p234) target = $region32
        $region31: #{tpu_custom_call.1} parent=11 // pred_region
          _
        $region32: #{tpu_custom_call.1} parent=11 // pred_fallthru
          _
      $region12: #{tpu_custom_call.1} parent=5 // pred_fallthru
        _
      %p237 = scmp.lt.s32.totalorder %s20, 2
      // Predicated region
      $region33: #{tpu_custom_call.1} parent=5 // pred_check
        %p238 = pneg %p237
      $region34: #{tpu_custom_call.1} parent=5 // pred_check_branch
        %240 = sbr.rel (%p238) target = $region36
      $region35: #{tpu_custom_call.1} parent=5 // pred_region
        // Predicated region
        $region37: #{tpu_custom_call.1} parent=35 // pred_check
          %p241 = pneg %p61
        $region38: #{tpu_custom_call.1} parent=35 // pred_check_branch
          %243 = sbr.rel (%p241) target = $region40
        $region39: #{tpu_custom_call.1} parent=35 // pred_region
          %s244 = sand.u32 %s20, 1
          %s245 = scalar_lea.sflag [#allocation8], %s244
          %s246 = sand.u32 %s51, 1
          %s247 = smul.addr %s246, 432
          %s248 = scalar_lea.vmem [#allocation7], %s247
          %s250 = ssub.s32 6912, 6912
          %251 = vsyncadd %s245, %s250
          %s252 = smul.addr %s20, 54
          %s253 = smul.addr %s252, 128
          %s254 = scalar_lea.hbm %s1, %s253
          %s255 = sshll.u32 %s248, 4
          %s256 = int_to_ptr.vmem [resolvable:$true] %s255
          %261 = dma.hbm_to_vmem [thread:$0]  %s254, 6912, %s256, %s245, 128, 128, 8
        $region40: #{tpu_custom_call.1} parent=35 // pred_fallthru
          _
      $region36: #{tpu_custom_call.1} parent=5 // pred_fallthru
        _
      %p262 = scmp.le.s32.totalorder 1, %s20
      %p263 = scmp.lt.s32.totalorder %s20, 3
      %p264 = pnand %p262, %p263
      %p265 = pneg %p264
      // Predicated region
      $region41: #{tpu_custom_call.1} parent=5 // pred_check
        _
      $region42: #{tpu_custom_call.1} parent=5 // pred_check_branch
        %267 = sbr.rel (%p264) target = $region44
      $region43: #{tpu_custom_call.1} parent=5 // pred_region
        %s268 = ssub.s32 %s20, 1
        // Predicated region
        $region45: #{tpu_custom_call.1} parent=43 // pred_check
          %p269 = pneg %p41
        $region46: #{tpu_custom_call.1} parent=43 // pred_check_branch
          %271 = sbr.rel (%p269) target = $region48
        $region47: #{tpu_custom_call.1} parent=43 // pred_region
          %272 = dma.done [#allocation5], 6144
        $region48: #{tpu_custom_call.1} parent=43 // pred_fallthru
          _
        %s273 = sand.u32 %s25, 1
        %s274 = scalar_lea.sflag [#allocation8], %s273
        %s275 = sand.u32 %s54, 1
        %s276 = smul.addr %s275, 432
        %s277 = scalar_lea.vmem [#allocation7], %s276
        // Predicated region
        $region49: #{tpu_custom_call.1} parent=43 // pred_check
          %p278 = pneg %p67
        $region50: #{tpu_custom_call.1} parent=43 // pred_check_branch
          %280 = sbr.rel (%p278) target = $region52
        $region51: #{tpu_custom_call.1} parent=43 // pred_region
          %281 = dma.done %s274, 6912
        $region52: #{tpu_custom_call.1} parent=43 // pred_fallthru
          _
        // Predicated region
        $region53: #{tpu_custom_call.1} parent=43 // pred_check
          %p282 = pneg %p88
        $region54: #{tpu_custom_call.1} parent=43 // pred_check_branch
          %284 = sbr.rel (%p282) target = $region56
        $region55: #{tpu_custom_call.1} parent=43 // pred_region
          %285 = dma.done [#allocation8], 9216
        $region56: #{tpu_custom_call.1} parent=43 // pred_fallthru
          _
        // Predicated region
        $region57: #{tpu_custom_call.1} parent=43 // pred_check
          %p286 = pneg %p130
        $region58: #{tpu_custom_call.1} parent=43 // pred_check_branch
          %288 = sbr.rel (%p286) target = $region60
        $region59: #{tpu_custom_call.1} parent=43 // pred_region
          %289 = dma.done [#allocation11], 9216
        $region60: #{tpu_custom_call.1} parent=43 // pred_fallthru
          _
        %p290 = pneg %p41
        %p291 = pneg %p38
        %s292 = sand.u32 %s25, 1
        %s293 = scalar_lea.sflag [#allocation8], %s292
        %s294 = sand.u32 %s54, 1
        %s295 = smul.addr %s294, 432
        %s296 = scalar_lea.vmem [#allocation7], %s295
        %p297 = pneg %p67
        %p298 = pneg %p64
        %p299 = pneg %p88
        %p300 = pneg %p85
        %p301 = pneg %p109
        %p302 = pneg %p106
        %p303 = pneg %p130
        %p304 = pneg %p127
        %p305 = pneg %p151
        %p306 = pneg %p148
        %p307 = pneg %p177
        %p308 = pneg %p174
        %s309 = sand.u32 %s164, 1
        %s310 = scalar_lea.sflag [#allocation6], %s309
        %s311 = sand.u32 %s164, 1
        %s312 = smul.addr %s311, 384
        %s313 = scalar_lea.vmem [#allocation12], %s312
        %v315 = vld [vmem:[%s277] sm:$0xff]
        %v316 = vld [vmem:[%s277 + $0x8] sm:$0xff]
        %v317 = vld [vmem:[%s277 + $0x10] sm:$0xff]
        %v318 = vld [vmem:[%s277 + $0x18] sm:$0xff]
        %v319 = vld [vmem:[%s277 + $0x20] sm:$0xff]
        %v320 = vld [vmem:[%s277 + $0x28] sm:$0xff]
        %v321 = vld [vmem:[%s277 + $0x30] sm:$0xff]
        %v322 = vld [vmem:[%s277 + $0x38] sm:$0xff]
        %v323 = vld [vmem:[%s277 + $0x40] sm:$0xff]
        %v324 = vld [vmem:[%s277 + $0x48] sm:$0xff]
        %v325 = vld [vmem:[%s277 + $0x50] sm:$0xff]
        %v326 = vld [vmem:[%s277 + $0x58] sm:$0xff]
        %v327 = vld [vmem:[%s277 + $0x60] sm:$0xff]
        %v328 = vld [vmem:[%s277 + $0x68] sm:$0xff]
        %v329 = vld [vmem:[%s277 + $0x70] sm:$0xff]
        %v330 = vld [vmem:[%s277 + $0x78] sm:$0xff]
        %v331 = vld [vmem:[%s277 + $0x80] sm:$0xff]
        %v332 = vld [vmem:[%s277 + $0x88] sm:$0xff]
        %v333 = vld [vmem:[%s277 + $0x90] sm:$0xff]
        %v334 = vld [vmem:[%s277 + $0x98] sm:$0xff]
        %v335 = vld [vmem:[%s277 + $0xa0] sm:$0xff]
        %v336 = vld [vmem:[%s277 + $0xa8] sm:$0xff]
        %v337 = vld [vmem:[%s277 + $0xb0] sm:$0xff]
        %v338 = vld [vmem:[%s277 + $0xb8] sm:$0xff]
        %v339 = vld [vmem:[%s277 + $0xc0] sm:$0xff]
        %v340 = vld [vmem:[%s277 + $0xc8] sm:$0xff]
        %v341 = vld [vmem:[%s277 + $0xd0] sm:$0xff]
        %v342 = vld [vmem:[%s277 + $0xd8] sm:$0xff]
        %v343 = vld [vmem:[%s277 + $0xe0] sm:$0xff]
        %v344 = vld [vmem:[%s277 + $0xe8] sm:$0xff]
        %v345 = vld [vmem:[%s277 + $0xf0] sm:$0xff]
        %v346 = vld [vmem:[%s277 + $0xf8] sm:$0xff]
        %v347 = vld [vmem:[%s277 + $0x100] sm:$0xff]
        %v348 = vld [vmem:[%s277 + $0x108] sm:$0xff]
        %v349 = vld [vmem:[%s277 + $0x110] sm:$0xff]
        %v350 = vld [vmem:[%s277 + $0x118] sm:$0xff]
        %v351 = vld [vmem:[%s277 + $0x120] sm:$0xff]
        %v352 = vld [vmem:[%s277 + $0x128] sm:$0xff]
        %v353 = vld [vmem:[%s277 + $0x130] sm:$0xff]
        %v354 = vld [vmem:[%s277 + $0x138] sm:$0xff]
        %v355 = vld [vmem:[%s277 + $0x140] sm:$0xff]
        %v356 = vld [vmem:[%s277 + $0x148] sm:$0xff]
        %v357 = vld [vmem:[%s277 + $0x150] sm:$0xff]
        %v358 = vld [vmem:[%s277 + $0x158] sm:$0xff]
        %v359 = vld [vmem:[%s277 + $0x160] sm:$0xff]
        %v360 = vld [vmem:[%s277 + $0x168] sm:$0xff]
        %v361 = vld [vmem:[%s277 + $0x170] sm:$0xff]
        %v362 = vld [vmem:[%s277 + $0x178] sm:$0xff]
        %v363 = vpack.c.bf16 %v316, %v315
        %v364 = vpack.c.bf16 %v318, %v317
        %v365 = vpack.c.bf16 %v320, %v319
        %v366 = vpack.c.bf16 %v322, %v321
        %v367 = vpack.c.bf16 %v324, %v323
        %v368 = vpack.c.bf16 %v326, %v325
        %v369 = vpack.c.bf16 %v328, %v327
        %v370 = vpack.c.bf16 %v330, %v329
        %v371 = vpack.c.bf16 %v332, %v331
        %v372 = vpack.c.bf16 %v334, %v333
        %v373 = vpack.c.bf16 %v336, %v335
        %v374 = vpack.c.bf16 %v338, %v337
        %v375 = vpack.c.bf16 %v340, %v339
        %v376 = vpack.c.bf16 %v342, %v341
        %v377 = vpack.c.bf16 %v344, %v343
        %v378 = vpack.c.bf16 %v346, %v345
        %v379 = vpack.c.bf16 %v348, %v347
        %v380 = vpack.c.bf16 %v350, %v349
        %v381 = vpack.c.bf16 %v352, %v351
        %v382 = vpack.c.bf16 %v354, %v353
        %v383 = vpack.c.bf16 %v356, %v355
        %v384 = vpack.c.bf16 %v358, %v357
        %v385 = vpack.c.bf16 %v360, %v359
        %v386 = vpack.c.bf16 %v362, %v361
        %387 = vst [vmem:[#allocation3] sm:$0xff] %v363
        %388 = vst [vmem:[#allocation3 + $0x48] sm:$0xff] %v364
        %389 = vst [vmem:[#allocation3 + $0x90] sm:$0xff] %v365
        %390 = vst [vmem:[#allocation3 + $0xd8] sm:$0xff] %v366
        %391 = vst [vmem:[#allocation3 + $0x120] sm:$0xff] %v367
        %392 = vst [vmem:[#allocation3 + $0x168] sm:$0xff] %v368
        %393 = vst [vmem:[#allocation3 + $0x1b0] sm:$0xff] %v369
        %394 = vst [vmem:[#allocation3 + $0x1f8] sm:$0xff] %v370
        %395 = vst [vmem:[#allocation3 + $0x240] sm:$0xff] %v371
        %396 = vst [vmem:[#allocation3 + $0x288] sm:$0xff] %v372
        %397 = vst [vmem:[#allocation3 + $0x2d0] sm:$0xff] %v373
        %398 = vst [vmem:[#allocation3 + $0x318] sm:$0xff] %v374
        %399 = vst [vmem:[#allocation3 + $0x360] sm:$0xff] %v375
        %400 = vst [vmem:[#allocation3 + $0x3a8] sm:$0xff] %v376
        %401 = vst [vmem:[#allocation3 + $0x3f0] sm:$0xff] %v377
        %402 = vst [vmem:[#allocation3 + $0x438] sm:$0xff] %v378
        %403 = vst [vmem:[#allocation3 + $0x480] sm:$0xff] %v379
        %404 = vst [vmem:[#allocation3 + $0x4c8] sm:$0xff] %v380
        %405 = vst [vmem:[#allocation3 + $0x510] sm:$0xff] %v381
        %406 = vst [vmem:[#allocation3 + $0x558] sm:$0xff] %v382
        %407 = vst [vmem:[#allocation3 + $0x5a0] sm:$0xff] %v383
        %408 = vst [vmem:[#allocation3 + $0x5e8] sm:$0xff] %v384
        %409 = vst [vmem:[#allocation3 + $0x630] sm:$0xff] %v385
        %410 = vst [vmem:[#allocation3 + $0x678] sm:$0xff] %v386
        %v411 = vrot.slane %v315, 1
        %v412 = vrot.slane %v316, 1
        %v413 = vrot.slane %v317, 1
        %v414 = vrot.slane %v318, 1
        %v415 = vrot.slane %v319, 1
        %v416 = vrot.slane %v320, 1
        %v417 = vrot.slane %v321, 1
        %v418 = vrot.slane %v322, 1
        %v419 = vrot.slane %v323, 1
        %v420 = vrot.slane %v324, 1
        %v421 = vrot.slane %v325, 1
        %v422 = vrot.slane %v326, 1
        %v423 = vrot.slane %v327, 1
        %v424 = vrot.slane %v328, 1
        %v425 = vrot.slane %v329, 1
        %v426 = vrot.slane %v330, 1
        %v427 = vrot.slane %v331, 1
        %v428 = vrot.slane %v332, 1
        %v429 = vrot.slane %v333, 1
        %v430 = vrot.slane %v334, 1
        %v431 = vrot.slane %v335, 1
        %v432 = vrot.slane %v336, 1
        %v433 = vrot.slane %v337, 1
        %v434 = vrot.slane %v338, 1
        %v435 = vrot.slane %v339, 1
        %v436 = vrot.slane %v340, 1
        %v437 = vrot.slane %v341, 1
        %v438 = vrot.slane %v342, 1
        %v439 = vrot.slane %v343, 1
        %v440 = vrot.slane %v344, 1
        %v441 = vrot.slane %v345, 1
        %v442 = vrot.slane %v346, 1
        %v443 = vrot.slane %v347, 1
        %v444 = vrot.slane %v348, 1
        %v445 = vrot.slane %v349, 1
        %v446 = vrot.slane %v350, 1
        %v447 = vrot.slane %v351, 1
        %v448 = vrot.slane %v352, 1
        %v449 = vrot.slane %v353, 1
        %v450 = vrot.slane %v354, 1
        %v451 = vrot.slane %v355, 1
        %v452 = vrot.slane %v356, 1
        %v453 = vrot.slane %v357, 1
        %v454 = vrot.slane %v358, 1
        %v455 = vrot.slane %v359, 1
        %v456 = vrot.slane %v360, 1
        %v457 = vrot.slane %v361, 1
        %v458 = vrot.slane %v362, 1
        %v459 = vlaneseq
        %v460 = vshrl.u32 %v459, 7
        %vm461 = vcmp.lt.s32.totalorder %v460, 7
        %v462 = vsel %vm461, %v457, %v458
        %v463 = vsel %vm461, %v456, %v457
        %v464 = vsel %vm461, %v455, %v456
        %v465 = vsel %vm461, %v454, %v455
        %v466 = vsel %vm461, %v453, %v454
        %v467 = vsel %vm461, %v452, %v453
        %v468 = vsel %vm461, %v451, %v452
        %v469 = vsel %vm461, %v450, %v451
        %v470 = vsel %vm461, %v449, %v450
        %v471 = vsel %vm461, %v448, %v449
        %v472 = vsel %vm461, %v447, %v448
        %v473 = vsel %vm461, %v446, %v447
        %v474 = vsel %vm461, %v445, %v446
        %v475 = vsel %vm461, %v444, %v445
        %v476 = vsel %vm461, %v443, %v444
        %v477 = vsel %vm461, %v442, %v443
        %v478 = vsel %vm461, %v441, %v442
        %v479 = vsel %vm461, %v440, %v441
        %v480 = vsel %vm461, %v439, %v440
        %v481 = vsel %vm461, %v438, %v439
        %v482 = vsel %vm461, %v437, %v438
        %v483 = vsel %vm461, %v436, %v437
        %v484 = vsel %vm461, %v435, %v436
        %v485 = vsel %vm461, %v434, %v435
        %v486 = vsel %vm461, %v433, %v434
        %v487 = vsel %vm461, %v432, %v433
        %v488 = vsel %vm461, %v431, %v432
        %v489 = vsel %vm461, %v430, %v431
        %v490 = vsel %vm461, %v429, %v430
        %v491 = vsel %vm461, %v428, %v429
        %v492 = vsel %vm461, %v427, %v428
        %v493 = vsel %vm461, %v426, %v427
        %v494 = vsel %vm461, %v425, %v426
        %v495 = vsel %vm461, %v424, %v425
        %v496 = vsel %vm461, %v423, %v424
        %v497 = vsel %vm461, %v422, %v423
        %v498 = vsel %vm461, %v421, %v422
        %v499 = vsel %vm461, %v420, %v421
        %v500 = vsel %vm461, %v419, %v420
        %v501 = vsel %vm461, %v418, %v419
        %v502 = vsel %vm461, %v417, %v418
        %v503 = vsel %vm461, %v416, %v417
        %v504 = vsel %vm461, %v415, %v416
        %v505 = vsel %vm461, %v414, %v415
        %v506 = vsel %vm461, %v413, %v414
        %v507 = vsel %vm461, %v412, %v413
        %v508 = vsel %vm461, %v411, %v412
        %v509 = vsel %vm461, %v458, %v411
        %v510 = vpack.c.bf16 %v507, %v508
        %v511 = vpack.c.bf16 %v505, %v506
        %v512 = vpack.c.bf16 %v503, %v504
        %v513 = vpack.c.bf16 %v501, %v502
        %v514 = vpack.c.bf16 %v499, %v500
        %v515 = vpack.c.bf16 %v497, %v498
        %v516 = vpack.c.bf16 %v495, %v496
        %v517 = vpack.c.bf16 %v493, %v494
        %v518 = vpack.c.bf16 %v491, %v492
        %v519 = vpack.c.bf16 %v489, %v490
        %v520 = vpack.c.bf16 %v487, %v488
        %v521 = vpack.c.bf16 %v485, %v486
        %v522 = vpack.c.bf16 %v483, %v484
        %v523 = vpack.c.bf16 %v481, %v482
        %v524 = vpack.c.bf16 %v479, %v480
        %v525 = vpack.c.bf16 %v477, %v478
        %v526 = vpack.c.bf16 %v475, %v476
        %v527 = vpack.c.bf16 %v473, %v474
        %v528 = vpack.c.bf16 %v471, %v472
        %v529 = vpack.c.bf16 %v469, %v470
        %v530 = vpack.c.bf16 %v467, %v468
        %v531 = vpack.c.bf16 %v465, %v466
        %v532 = vpack.c.bf16 %v463, %v464
        %v533 = vpack.c.bf16 %v509, %v462
        %534 = vst [vmem:[#allocation3 + $0x8] sm:$0xff] %v510
        %535 = vst [vmem:[#allocation3 + $0x50] sm:$0xff] %v511
        %536 = vst [vmem:[#allocation3 + $0x98] sm:$0xff] %v512
        %537 = vst [vmem:[#allocation3 + $0xe0] sm:$0xff] %v513
        %538 = vst [vmem:[#allocation3 + $0x128] sm:$0xff] %v514
        %539 = vst [vmem:[#allocation3 + $0x170] sm:$0xff] %v515
        %540 = vst [vmem:[#allocation3 + $0x1b8] sm:$0xff] %v516
        %541 = vst [vmem:[#allocation3 + $0x200] sm:$0xff] %v517
        %542 = vst [vmem:[#allocation3 + $0x248] sm:$0xff] %v518
        %543 = vst [vmem:[#allocation3 + $0x290] sm:$0xff] %v519
        %544 = vst [vmem:[#allocation3 + $0x2d8] sm:$0xff] %v520
        %545 = vst [vmem:[#allocation3 + $0x320] sm:$0xff] %v521
        %546 = vst [vmem:[#allocation3 + $0x368] sm:$0xff] %v522
        %547 = vst [vmem:[#allocation3 + $0x3b0] sm:$0xff] %v523
        %548 = vst [vmem:[#allocation3 + $0x3f8] sm:$0xff] %v524
        %549 = vst [vmem:[#allocation3 + $0x440] sm:$0xff] %v525
        %550 = vst [vmem:[#allocation3 + $0x488] sm:$0xff] %v526
        %551 = vst [vmem:[#allocation3 + $0x4d0] sm:$0xff] %v527
        %552 = vst [vmem:[#allocation3 + $0x518] sm:$0xff] %v528
        %553 = vst [vmem:[#allocation3 + $0x560] sm:$0xff] %v529
        %554 = vst [vmem:[#allocation3 + $0x5a8] sm:$0xff] %v530
        %555 = vst [vmem:[#allocation3 + $0x5f0] sm:$0xff] %v531
        %556 = vst [vmem:[#allocation3 + $0x638] sm:$0xff] %v532
        %557 = vst [vmem:[#allocation3 + $0x680] sm:$0xff] %v533
        %v558 = vrot.slane %v315, 2
        %v559 = vrot.slane %v316, 2
        %v560 = vrot.slane %v317, 2
        %v561 = vrot.slane %v318, 2
        %v562 = vrot.slane %v319, 2
        %v563 = vrot.slane %v320, 2
        %v564 = vrot.slane %v321, 2
        %v565 = vrot.slane %v322, 2
        %v566 = vrot.slane %v323, 2
        %v567 = vrot.slane %v324, 2
        %v568 = vrot.slane %v325, 2
        %v569 = vrot.slane %v326, 2
        %v570 = vrot.slane %v327, 2
        %v571 = vrot.slane %v328, 2
        %v572 = vrot.slane %v329, 2
        %v573 = vrot.slane %v330, 2
        %v574 = vrot.slane %v331, 2
        %v575 = vrot.slane %v332, 2
        %v576 = vrot.slane %v333, 2
        %v577 = vrot.slane %v334, 2
        %v578 = vrot.slane %v335, 2
        %v579 = vrot.slane %v336, 2
        %v580 = vrot.slane %v337, 2
        %v581 = vrot.slane %v338, 2
        %v582 = vrot.slane %v339, 2
        %v583 = vrot.slane %v340, 2
        %v584 = vrot.slane %v341, 2
        %v585 = vrot.slane %v342, 2
        %v586 = vrot.slane %v343, 2
        %v587 = vrot.slane %v344, 2
        %v588 = vrot.slane %v345, 2
        %v589 = vrot.slane %v346, 2
        %v590 = vrot.slane %v347, 2
        %v591 = vrot.slane %v348, 2
        %v592 = vrot.slane %v349, 2
        %v593 = vrot.slane %v350, 2
        %v594 = vrot.slane %v351, 2
        %v595 = vrot.slane %v352, 2
        %v596 = vrot.slane %v353, 2
        %v597 = vrot.slane %v354, 2
        %v598 = vrot.slane %v355, 2
        %v599 = vrot.slane %v356, 2
        %v600 = vrot.slane %v357, 2
        %v601 = vrot.slane %v358, 2
        %v602 = vrot.slane %v359, 2
        %v603 = vrot.slane %v360, 2
        %v604 = vrot.slane %v361, 2
        %v605 = vrot.slane %v362, 2
        %vm606 = vcmp.lt.s32.totalorder %v460, 6
        %v607 = vsel %vm606, %v604, %v605
        %v608 = vsel %vm606, %v603, %v604
        %v609 = vsel %vm606, %v602, %v603
        %v610 = vsel %vm606, %v601, %v602
        %v611 = vsel %vm606, %v600, %v601
        %v612 = vsel %vm606, %v599, %v600
        %v613 = vsel %vm606, %v598, %v599
        %v614 = vsel %vm606, %v597, %v598
        %v615 = vsel %vm606, %v596, %v597
        %v616 = vsel %vm606, %v595, %v596
        %v617 = vsel %vm606, %v594, %v595
        %v618 = vsel %vm606, %v593, %v594
        %v619 = vsel %vm606, %v592, %v593
        %v620 = vsel %vm606, %v591, %v592
        %v621 = vsel %vm606, %v590, %v591
        %v622 = vsel %vm606, %v589, %v590
        %v623 = vsel %vm606, %v588, %v589
        %v624 = vsel %vm606, %v587, %v588
        %v625 = vsel %vm606, %v586, %v587
        %v626 = vsel %vm606, %v585, %v586
        %v627 = vsel %vm606, %v584, %v585
        %v628 = vsel %vm606, %v583, %v584
        %v629 = vsel %vm606, %v582, %v583
        %v630 = vsel %vm606, %v581, %v582
        %v631 = vsel %vm606, %v580, %v581
        %v632 = vsel %vm606, %v579, %v580
        %v633 = vsel %vm606, %v578, %v579
        %v634 = vsel %vm606, %v577, %v578
        %v635 = vsel %vm606, %v576, %v577
        %v636 = vsel %vm606, %v575, %v576
        %v637 = vsel %vm606, %v574, %v575
        %v638 = vsel %vm606, %v573, %v574
        %v639 = vsel %vm606, %v572, %v573
        %v640 = vsel %vm606, %v571, %v572
        %v641 = vsel %vm606, %v570, %v571
        %v642 = vsel %vm606, %v569, %v570
        %v643 = vsel %vm606, %v568, %v569
        %v644 = vsel %vm606, %v567, %v568
        %v645 = vsel %vm606, %v566, %v567
        %v646 = vsel %vm606, %v565, %v566
        %v647 = vsel %vm606, %v564, %v565
        %v648 = vsel %vm606, %v563, %v564
        %v649 = vsel %vm606, %v562, %v563
        %v650 = vsel %vm606, %v561, %v562
        %v651 = vsel %vm606, %v560, %v561
        %v652 = vsel %vm606, %v559, %v560
        %v653 = vsel %vm606, %v558, %v559
        %v654 = vsel %vm606, %v605, %v558
        %v655 = vpack.c.bf16 %v652, %v653
        %v656 = vpack.c.bf16 %v650, %v651
        %v657 = vpack.c.bf16 %v648, %v649
        %v658 = vpack.c.bf16 %v646, %v647
        %v659 = vpack.c.bf16 %v644, %v645
        %v660 = vpack.c.bf16 %v642, %v643
        %v661 = vpack.c.bf16 %v640, %v641
        %v662 = vpack.c.bf16 %v638, %v639
        %v663 = vpack.c.bf16 %v636, %v637
        %v664 = vpack.c.bf16 %v634, %v635
        %v665 = vpack.c.bf16 %v632, %v633
        %v666 = vpack.c.bf16 %v630, %v631
        %v667 = vpack.c.bf16 %v628, %v629
        %v668 = vpack.c.bf16 %v626, %v627
        %v669 = vpack.c.bf16 %v624, %v625
        %v670 = vpack.c.bf16 %v622, %v623
        %v671 = vpack.c.bf16 %v620, %v621
        %v672 = vpack.c.bf16 %v618, %v619
        %v673 = vpack.c.bf16 %v616, %v617
        %v674 = vpack.c.bf16 %v614, %v615
        %v675 = vpack.c.bf16 %v612, %v613
        %v676 = vpack.c.bf16 %v610, %v611
        %v677 = vpack.c.bf16 %v608, %v609
        %v678 = vpack.c.bf16 %v654, %v607
        %679 = vst [vmem:[#allocation3 + $0x10] sm:$0xff] %v655
        %680 = vst [vmem:[#allocation3 + $0x58] sm:$0xff] %v656
        %681 = vst [vmem:[#allocation3 + $0xa0] sm:$0xff] %v657
        %682 = vst [vmem:[#allocation3 + $0xe8] sm:$0xff] %v658
        %683 = vst [vmem:[#allocation3 + $0x130] sm:$0xff] %v659
        %684 = vst [vmem:[#allocation3 + $0x178] sm:$0xff] %v660
        %685 = vst [vmem:[#allocation3 + $0x1c0] sm:$0xff] %v661
        %686 = vst [vmem:[#allocation3 + $0x208] sm:$0xff] %v662
        %687 = vst [vmem:[#allocation3 + $0x250] sm:$0xff] %v663
        %688 = vst [vmem:[#allocation3 + $0x298] sm:$0xff] %v664
        %689 = vst [vmem:[#allocation3 + $0x2e0] sm:$0xff] %v665
        %690 = vst [vmem:[#allocation3 + $0x328] sm:$0xff] %v666
        %691 = vst [vmem:[#allocation3 + $0x370] sm:$0xff] %v667
        %692 = vst [vmem:[#allocation3 + $0x3b8] sm:$0xff] %v668
        %693 = vst [vmem:[#allocation3 + $0x400] sm:$0xff] %v669
        %694 = vst [vmem:[#allocation3 + $0x448] sm:$0xff] %v670
        %695 = vst [vmem:[#allocation3 + $0x490] sm:$0xff] %v671
        %696 = vst [vmem:[#allocation3 + $0x4d8] sm:$0xff] %v672
        %697 = vst [vmem:[#allocation3 + $0x520] sm:$0xff] %v673
        %698 = vst [vmem:[#allocation3 + $0x568] sm:$0xff] %v674
        %699 = vst [vmem:[#allocation3 + $0x5b0] sm:$0xff] %v675
        %700 = vst [vmem:[#allocation3 + $0x5f8] sm:$0xff] %v676
        %701 = vst [vmem:[#allocation3 + $0x640] sm:$0xff] %v677
        %702 = vst [vmem:[#allocation3 + $0x688] sm:$0xff] %v678
        %v703 = vld [vmem:[%s277 + $0x18] sm:$0xff]
        %v704 = vld [vmem:[%s277 + $0x20] sm:$0xff]
        %v705 = vld [vmem:[%s277 + $0x28] sm:$0xff]
        %v706 = vld [vmem:[%s277 + $0x30] sm:$0xff]
        %v707 = vld [vmem:[%s277 + $0x38] sm:$0xff]
        %v708 = vld [vmem:[%s277 + $0x40] sm:$0xff]
        %v709 = vld [vmem:[%s277 + $0x48] sm:$0xff]
        %v710 = vld [vmem:[%s277 + $0x50] sm:$0xff]
        %v711 = vld [vmem:[%s277 + $0x58] sm:$0xff]
        %v712 = vld [vmem:[%s277 + $0x60] sm:$0xff]
        %v713 = vld [vmem:[%s277 + $0x68] sm:$0xff]
        %v714 = vld [vmem:[%s277 + $0x70] sm:$0xff]
        %v715 = vld [vmem:[%s277 + $0x78] sm:$0xff]
        %v716 = vld [vmem:[%s277 + $0x80] sm:$0xff]
        %v717 = vld [vmem:[%s277 + $0x88] sm:$0xff]
        %v718 = vld [vmem:[%s277 + $0x90] sm:$0xff]
        %v719 = vld [vmem:[%s277 + $0x98] sm:$0xff]
        %v720 = vld [vmem:[%s277 + $0xa0] sm:$0xff]
        %v721 = vld [vmem:[%s277 + $0xa8] sm:$0xff]
        %v722 = vld [vmem:[%s277 + $0xb0] sm:$0xff]
        %v723 = vld [vmem:[%s277 + $0xb8] sm:$0xff]
        %v724 = vld [vmem:[%s277 + $0xc0] sm:$0xff]
        %v725 = vld [vmem:[%s277 + $0xc8] sm:$0xff]
        %v726 = vld [vmem:[%s277 + $0xd0] sm:$0xff]
        %v727 = vld [vmem:[%s277 + $0xd8] sm:$0xff]
        %v728 = vld [vmem:[%s277 + $0xe0] sm:$0xff]
        %v729 = vld [vmem:[%s277 + $0xe8] sm:$0xff]
        %v730 = vld [vmem:[%s277 + $0xf0] sm:$0xff]
        %v731 = vld [vmem:[%s277 + $0xf8] sm:$0xff]
        %v732 = vld [vmem:[%s277 + $0x100] sm:$0xff]
        %v733 = vld [vmem:[%s277 + $0x108] sm:$0xff]
        %v734 = vld [vmem:[%s277 + $0x110] sm:$0xff]
        %v735 = vld [vmem:[%s277 + $0x118] sm:$0xff]
        %v736 = vld [vmem:[%s277 + $0x120] sm:$0xff]
        %v737 = vld [vmem:[%s277 + $0x128] sm:$0xff]
        %v738 = vld [vmem:[%s277 + $0x130] sm:$0xff]
        %v739 = vld [vmem:[%s277 + $0x138] sm:$0xff]
        %v740 = vld [vmem:[%s277 + $0x140] sm:$0xff]
        %v741 = vld [vmem:[%s277 + $0x148] sm:$0xff]
        %v742 = vld [vmem:[%s277 + $0x150] sm:$0xff]
        %v743 = vld [vmem:[%s277 + $0x158] sm:$0xff]
        %v744 = vld [vmem:[%s277 + $0x160] sm:$0xff]
        %v745 = vld [vmem:[%s277 + $0x168] sm:$0xff]
        %v746 = vld [vmem:[%s277 + $0x170] sm:$0xff]
        %v747 = vld [vmem:[%s277 + $0x178] sm:$0xff]
        %v748 = vld [vmem:[%s277 + $0x180] sm:$0xff]
        %v749 = vld [vmem:[%s277 + $0x188] sm:$0xff]
        %v750 = vld [vmem:[%s277 + $0x190] sm:$0xff]
        %v751 = vpack.c.bf16 %v704, %v703
        %v752 = vpack.c.bf16 %v706, %v705
        %v753 = vpack.c.bf16 %v708, %v707
        %v754 = vpack.c.bf16 %v710, %v709
        %v755 = vpack.c.bf16 %v712, %v711
        %v756 = vpack.c.bf16 %v714, %v713
        %v757 = vpack.c.bf16 %v716, %v715
        %v758 = vpack.c.bf16 %v718, %v717
        %v759 = vpack.c.bf16 %v720, %v719
        %v760 = vpack.c.bf16 %v722, %v721
        %v761 = vpack.c.bf16 %v724, %v723
        %v762 = vpack.c.bf16 %v726, %v725
        %v763 = vpack.c.bf16 %v728, %v727
        %v764 = vpack.c.bf16 %v730, %v729
        %v765 = vpack.c.bf16 %v732, %v731
        %v766 = vpack.c.bf16 %v734, %v733
        %v767 = vpack.c.bf16 %v736, %v735
        %v768 = vpack.c.bf16 %v738, %v737
        %v769 = vpack.c.bf16 %v740, %v739
        %v770 = vpack.c.bf16 %v742, %v741
        %v771 = vpack.c.bf16 %v744, %v743
        %v772 = vpack.c.bf16 %v746, %v745
        %v773 = vpack.c.bf16 %v748, %v747
        %v774 = vpack.c.bf16 %v750, %v749
        %775 = vst [vmem:[#allocation3 + $0x18] sm:$0xff] %v751
        %776 = vst [vmem:[#allocation3 + $0x60] sm:$0xff] %v752
        %777 = vst [vmem:[#allocation3 + $0xa8] sm:$0xff] %v753
        %778 = vst [vmem:[#allocation3 + $0xf0] sm:$0xff] %v754
        %779 = vst [vmem:[#allocation3 + $0x138] sm:$0xff] %v755
        %780 = vst [vmem:[#allocation3 + $0x180] sm:$0xff] %v756
        %781 = vst [vmem:[#allocation3 + $0x1c8] sm:$0xff] %v757
        %782 = vst [vmem:[#allocation3 + $0x210] sm:$0xff] %v758
        %783 = vst [vmem:[#allocation3 + $0x258] sm:$0xff] %v759
        %784 = vst [vmem:[#allocation3 + $0x2a0] sm:$0xff] %v760
        %785 = vst [vmem:[#allocation3 + $0x2e8] sm:$0xff] %v761
        %786 = vst [vmem:[#allocation3 + $0x330] sm:$0xff] %v762
        %787 = vst [vmem:[#allocation3 + $0x378] sm:$0xff] %v763
        %788 = vst [vmem:[#allocation3 + $0x3c0] sm:$0xff] %v764
        %789 = vst [vmem:[#allocation3 + $0x408] sm:$0xff] %v765
        %790 = vst [vmem:[#allocation3 + $0x450] sm:$0xff] %v766
        %791 = vst [vmem:[#allocation3 + $0x498] sm:$0xff] %v767
        %792 = vst [vmem:[#allocation3 + $0x4e0] sm:$0xff] %v768
        %793 = vst [vmem:[#allocation3 + $0x528] sm:$0xff] %v769
        %794 = vst [vmem:[#allocation3 + $0x570] sm:$0xff] %v770
        %795 = vst [vmem:[#allocation3 + $0x5b8] sm:$0xff] %v771
        %796 = vst [vmem:[#allocation3 + $0x600] sm:$0xff] %v772
        %797 = vst [vmem:[#allocation3 + $0x648] sm:$0xff] %v773
        %798 = vst [vmem:[#allocation3 + $0x690] sm:$0xff] %v774
        %v799 = vrot.slane %v703, 1
        %v800 = vrot.slane %v704, 1
        %v801 = vrot.slane %v705, 1
        %v802 = vrot.slane %v706, 1
        %v803 = vrot.slane %v707, 1
        %v804 = vrot.slane %v708, 1
        %v805 = vrot.slane %v709, 1
        %v806 = vrot.slane %v710, 1
        %v807 = vrot.slane %v711, 1
        %v808 = vrot.slane %v712, 1
        %v809 = vrot.slane %v713, 1
        %v810 = vrot.slane %v714, 1
        %v811 = vrot.slane %v715, 1
        %v812 = vrot.slane %v716, 1
        %v813 = vrot.slane %v717, 1
        %v814 = vrot.slane %v718, 1
        %v815 = vrot.slane %v719, 1
        %v816 = vrot.slane %v720, 1
        %v817 = vrot.slane %v721, 1
        %v818 = vrot.slane %v722, 1
        %v819 = vrot.slane %v723, 1
        %v820 = vrot.slane %v724, 1
        %v821 = vrot.slane %v725, 1
        %v822 = vrot.slane %v726, 1
        %v823 = vrot.slane %v727, 1
        %v824 = vrot.slane %v728, 1
        %v825 = vrot.slane %v729, 1
        %v826 = vrot.slane %v730, 1
        %v827 = vrot.slane %v731, 1
        %v828 = vrot.slane %v732, 1
        %v829 = vrot.slane %v733, 1
        %v830 = vrot.slane %v734, 1
        %v831 = vrot.slane %v735, 1
        %v832 = vrot.slane %v736, 1
        %v833 = vrot.slane %v737, 1
        %v834 = vrot.slane %v738, 1
        %v835 = vrot.slane %v739, 1
        %v836 = vrot.slane %v740, 1
        %v837 = vrot.slane %v741, 1
        %v838 = vrot.slane %v742, 1
        %v839 = vrot.slane %v743, 1
        %v840 = vrot.slane %v744, 1
        %v841 = vrot.slane %v745, 1
        %v842 = vrot.slane %v746, 1
        %v843 = vrot.slane %v747, 1
        %v844 = vrot.slane %v748, 1
        %v845 = vrot.slane %v749, 1
        %v846 = vrot.slane %v750, 1
        %v847 = vsel %vm461, %v845, %v846
        %v848 = vsel %vm461, %v844, %v845
        %v849 = vsel %vm461, %v843, %v844
        %v850 = vsel %vm461, %v842, %v843
        %v851 = vsel %vm461, %v841, %v842
        %v852 = vsel %vm461, %v840, %v841
        %v853 = vsel %vm461, %v839, %v840
        %v854 = vsel %vm461, %v838, %v839
        %v855 = vsel %vm461, %v837, %v838
        %v856 = vsel %vm461, %v836, %v837
        %v857 = vsel %vm461, %v835, %v836
        %v858 = vsel %vm461, %v834, %v835
        %v859 = vsel %vm461, %v833, %v834
        %v860 = vsel %vm461, %v832, %v833
        %v861 = vsel %vm461, %v831, %v832
        %v862 = vsel %vm461, %v830, %v831
        %v863 = vsel %vm461, %v829, %v830
        %v864 = vsel %vm461, %v828, %v829
        %v865 = vsel %vm461, %v827, %v828
        %v866 = vsel %vm461, %v826, %v827
        %v867 = vsel %vm461, %v825, %v826
        %v868 = vsel %vm461, %v824, %v825
        %v869 = vsel %vm461, %v823, %v824
        %v870 = vsel %vm461, %v822, %v823
        %v871 = vsel %vm461, %v821, %v822
        %v872 = vsel %vm461, %v820, %v821
        %v873 = vsel %vm461, %v819, %v820
        %v874 = vsel %vm461, %v818, %v819
        %v875 = vsel %vm461, %v817, %v818
        %v876 = vsel %vm461, %v816, %v817
        %v877 = vsel %vm461, %v815, %v816
        %v878 = vsel %vm461, %v814, %v815
        %v879 = vsel %vm461, %v813, %v814
        %v880 = vsel %vm461, %v812, %v813
        %v881 = vsel %vm461, %v811, %v812
        %v882 = vsel %vm461, %v810, %v811
        %v883 = vsel %vm461, %v809, %v810
        %v884 = vsel %vm461, %v808, %v809
        %v885 = vsel %vm461, %v807, %v808
        %v886 = vsel %vm461, %v806, %v807
        %v887 = vsel %vm461, %v805, %v806
        %v888 = vsel %vm461, %v804, %v805
        %v889 = vsel %vm461, %v803, %v804
        %v890 = vsel %vm461, %v802, %v803
        %v891 = vsel %vm461, %v801, %v802
        %v892 = vsel %vm461, %v800, %v801
        %v893 = vsel %vm461, %v799, %v800
        %v894 = vsel %vm461, %v846, %v799
        %v895 = vpack.c.bf16 %v892, %v893
        %v896 = vpack.c.bf16 %v890, %v891
        %v897 = vpack.c.bf16 %v888, %v889
        %v898 = vpack.c.bf16 %v886, %v887
        %v899 = vpack.c.bf16 %v884, %v885
        %v900 = vpack.c.bf16 %v882, %v883
        %v901 = vpack.c.bf16 %v880, %v881
        %v902 = vpack.c.bf16 %v878, %v879
        %v903 = vpack.c.bf16 %v876, %v877
        %v904 = vpack.c.bf16 %v874, %v875
        %v905 = vpack.c.bf16 %v872, %v873
        %v906 = vpack.c.bf16 %v870, %v871
        %v907 = vpack.c.bf16 %v868, %v869
        %v908 = vpack.c.bf16 %v866, %v867
        %v909 = vpack.c.bf16 %v864, %v865
        %v910 = vpack.c.bf16 %v862, %v863
        %v911 = vpack.c.bf16 %v860, %v861
        %v912 = vpack.c.bf16 %v858, %v859
        %v913 = vpack.c.bf16 %v856, %v857
        %v914 = vpack.c.bf16 %v854, %v855
        %v915 = vpack.c.bf16 %v852, %v853
        %v916 = vpack.c.bf16 %v850, %v851
        %v917 = vpack.c.bf16 %v848, %v849
        %v918 = vpack.c.bf16 %v894, %v847
        %919 = vst [vmem:[#allocation3 + $0x20] sm:$0xff] %v895
        %920 = vst [vmem:[#allocation3 + $0x68] sm:$0xff] %v896
        %921 = vst [vmem:[#allocation3 + $0xb0] sm:$0xff] %v897
        %922 = vst [vmem:[#allocation3 + $0xf8] sm:$0xff] %v898
        %923 = vst [vmem:[#allocation3 + $0x140] sm:$0xff] %v899
        %924 = vst [vmem:[#allocation3 + $0x188] sm:$0xff] %v900
        %925 = vst [vmem:[#allocation3 + $0x1d0] sm:$0xff] %v901
        %926 = vst [vmem:[#allocation3 + $0x218] sm:$0xff] %v902
        %927 = vst [vmem:[#allocation3 + $0x260] sm:$0xff] %v903
        %928 = vst [vmem:[#allocation3 + $0x2a8] sm:$0xff] %v904
        %929 = vst [vmem:[#allocation3 + $0x2f0] sm:$0xff] %v905
        %930 = vst [vmem:[#allocation3 + $0x338] sm:$0xff] %v906
        %931 = vst [vmem:[#allocation3 + $0x380] sm:$0xff] %v907
        %932 = vst [vmem:[#allocation3 + $0x3c8] sm:$0xff] %v908
        %933 = vst [vmem:[#allocation3 + $0x410] sm:$0xff] %v909
        %934 = vst [vmem:[#allocation3 + $0x458] sm:$0xff] %v910
        %935 = vst [vmem:[#allocation3 + $0x4a0] sm:$0xff] %v911
        %936 = vst [vmem:[#allocation3 + $0x4e8] sm:$0xff] %v912
        %937 = vst [vmem:[#allocation3 + $0x530] sm:$0xff] %v913
        %938 = vst [vmem:[#allocation3 + $0x578] sm:$0xff] %v914
        %939 = vst [vmem:[#allocation3 + $0x5c0] sm:$0xff] %v915
        %940 = vst [vmem:[#allocation3 + $0x608] sm:$0xff] %v916
        %941 = vst [vmem:[#allocation3 + $0x650] sm:$0xff] %v917
        %942 = vst [vmem:[#allocation3 + $0x698] sm:$0xff] %v918
        %v943 = vrot.slane %v703, 2
        %v944 = vrot.slane %v704, 2
        %v945 = vrot.slane %v705, 2
        %v946 = vrot.slane %v706, 2
        %v947 = vrot.slane %v707, 2
        %v948 = vrot.slane %v708, 2
        %v949 = vrot.slane %v709, 2
        %v950 = vrot.slane %v710, 2
        %v951 = vrot.slane %v711, 2
        %v952 = vrot.slane %v712, 2
        %v953 = vrot.slane %v713, 2
        %v954 = vrot.slane %v714, 2
        %v955 = vrot.slane %v715, 2
        %v956 = vrot.slane %v716, 2
        %v957 = vrot.slane %v717, 2
        %v958 = vrot.slane %v718, 2
        %v959 = vrot.slane %v719, 2
        %v960 = vrot.slane %v720, 2
        %v961 = vrot.slane %v721, 2
        %v962 = vrot.slane %v722, 2
        %v963 = vrot.slane %v723, 2
        %v964 = vrot.slane %v724, 2
        %v965 = vrot.slane %v725, 2
        %v966 = vrot.slane %v726, 2
        %v967 = vrot.slane %v727, 2
        %v968 = vrot.slane %v728, 2
        %v969 = vrot.slane %v729, 2
        %v970 = vrot.slane %v730, 2
        %v971 = vrot.slane %v731, 2
        %v972 = vrot.slane %v732, 2
        %v973 = vrot.slane %v733, 2
        %v974 = vrot.slane %v734, 2
        %v975 = vrot.slane %v735, 2
        %v976 = vrot.slane %v736, 2
        %v977 = vrot.slane %v737, 2
        %v978 = vrot.slane %v738, 2
        %v979 = vrot.slane %v739, 2
        %v980 = vrot.slane %v740, 2
        %v981 = vrot.slane %v741, 2
        %v982 = vrot.slane %v742, 2
        %v983 = vrot.slane %v743, 2
        %v984 = vrot.slane %v744, 2
        %v985 = vrot.slane %v745, 2
        %v986 = vrot.slane %v746, 2
        %v987 = vrot.slane %v747, 2
        %v988 = vrot.slane %v748, 2
        %v989 = vrot.slane %v749, 2
        %v990 = vrot.slane %v750, 2
        %v991 = vsel %vm606, %v989, %v990
        %v992 = vsel %vm606, %v988, %v989
        %v993 = vsel %vm606, %v987, %v988
        %v994 = vsel %vm606, %v986, %v987
        %v995 = vsel %vm606, %v985, %v986
        %v996 = vsel %vm606, %v984, %v985
        %v997 = vsel %vm606, %v983, %v984
        %v998 = vsel %vm606, %v982, %v983
        %v999 = vsel %vm606, %v981, %v982
        %v1000 = vsel %vm606, %v980, %v981
        %v1001 = vsel %vm606, %v979, %v980
        %v1002 = vsel %vm606, %v978, %v979
        %v1003 = vsel %vm606, %v977, %v978
        %v1004 = vsel %vm606, %v976, %v977
        %v1005 = vsel %vm606, %v975, %v976
        %v1006 = vsel %vm606, %v974, %v975
        %v1007 = vsel %vm606, %v973, %v974
        %v1008 = vsel %vm606, %v972, %v973
        %v1009 = vsel %vm606, %v971, %v972
        %v1010 = vsel %vm606, %v970, %v971
        %v1011 = vsel %vm606, %v969, %v970
        %v1012 = vsel %vm606, %v968, %v969
        %v1013 = vsel %vm606, %v967, %v968
        %v1014 = vsel %vm606, %v966, %v967
        %v1015 = vsel %vm606, %v965, %v966
        %v1016 = vsel %vm606, %v964, %v965
        %v1017 = vsel %vm606, %v963, %v964
        %v1018 = vsel %vm606, %v962, %v963
        %v1019 = vsel %vm606, %v961, %v962
        %v1020 = vsel %vm606, %v960, %v961
        %v1021 = vsel %vm606, %v959, %v960
        %v1022 = vsel %vm606, %v958, %v959
        %v1023 = vsel %vm606, %v957, %v958
        %v1024 = vsel %vm606, %v956, %v957
        %v1025 = vsel %vm606, %v955, %v956
        %v1026 = vsel %vm606, %v954, %v955
        %v1027 = vsel %vm606, %v953, %v954
        %v1028 = vsel %vm606, %v952, %v953
        %v1029 = vsel %vm606, %v951, %v952
        %v1030 = vsel %vm606, %v950, %v951
        %v1031 = vsel %vm606, %v949, %v950
        %v1032 = vsel %vm606, %v948, %v949
        %v1033 = vsel %vm606, %v947, %v948
        %v1034 = vsel %vm606, %v946, %v947
        %v1035 = vsel %vm606, %v945, %v946
        %v1036 = vsel %vm606, %v944, %v945
        %v1037 = vsel %vm606, %v943, %v944
        %v1038 = vsel %vm606, %v990, %v943
        %v1039 = vpack.c.bf16 %v1036, %v1037
        %v1040 = vpack.c.bf16 %v1034, %v1035
        %v1041 = vpack.c.bf16 %v1032, %v1033
        %v1042 = vpack.c.bf16 %v1030, %v1031
        %v1043 = vpack.c.bf16 %v1028, %v1029
        %v1044 = vpack.c.bf16 %v1026, %v1027
        %v1045 = vpack.c.bf16 %v1024, %v1025
        %v1046 = vpack.c.bf16 %v1022, %v1023
        %v1047 = vpack.c.bf16 %v1020, %v1021
        %v1048 = vpack.c.bf16 %v1018, %v1019
        %v1049 = vpack.c.bf16 %v1016, %v1017
        %v1050 = vpack.c.bf16 %v1014, %v1015
        %v1051 = vpack.c.bf16 %v1012, %v1013
        %v1052 = vpack.c.bf16 %v1010, %v1011
        %v1053 = vpack.c.bf16 %v1008, %v1009
        %v1054 = vpack.c.bf16 %v1006, %v1007
        %v1055 = vpack.c.bf16 %v1004, %v1005
        %v1056 = vpack.c.bf16 %v1002, %v1003
        %v1057 = vpack.c.bf16 %v1000, %v1001
        %v1058 = vpack.c.bf16 %v998, %v999
        %v1059 = vpack.c.bf16 %v996, %v997
        %v1060 = vpack.c.bf16 %v994, %v995
        %v1061 = vpack.c.bf16 %v992, %v993
        %v1062 = vpack.c.bf16 %v1038, %v991
        %1063 = vst [vmem:[#allocation3 + $0x28] sm:$0xff] %v1039
        %1064 = vst [vmem:[#allocation3 + $0x70] sm:$0xff] %v1040
        %1065 = vst [vmem:[#allocation3 + $0xb8] sm:$0xff] %v1041
        %1066 = vst [vmem:[#allocation3 + $0x100] sm:$0xff] %v1042
        %1067 = vst [vmem:[#allocation3 + $0x148] sm:$0xff] %v1043
        %1068 = vst [vmem:[#allocation3 + $0x190] sm:$0xff] %v1044
        %1069 = vst [vmem:[#allocation3 + $0x1d8] sm:$0xff] %v1045
        %1070 = vst [vmem:[#allocation3 + $0x220] sm:$0xff] %v1046
        %1071 = vst [vmem:[#allocation3 + $0x268] sm:$0xff] %v1047
        %1072 = vst [vmem:[#allocation3 + $0x2b0] sm:$0xff] %v1048
        %1073 = vst [vmem:[#allocation3 + $0x2f8] sm:$0xff] %v1049
        %1074 = vst [vmem:[#allocation3 + $0x340] sm:$0xff] %v1050
        %1075 = vst [vmem:[#allocation3 + $0x388] sm:$0xff] %v1051
        %1076 = vst [vmem:[#allocation3 + $0x3d0] sm:$0xff] %v1052
        %1077 = vst [vmem:[#allocation3 + $0x418] sm:$0xff] %v1053
        %1078 = vst [vmem:[#allocation3 + $0x460] sm:$0xff] %v1054
        %1079 = vst [vmem:[#allocation3 + $0x4a8] sm:$0xff] %v1055
        %1080 = vst [vmem:[#allocation3 + $0x4f0] sm:$0xff] %v1056
        %1081 = vst [vmem:[#allocation3 + $0x538] sm:$0xff] %v1057
        %1082 = vst [vmem:[#allocation3 + $0x580] sm:$0xff] %v1058
        %1083 = vst [vmem:[#allocation3 + $0x5c8] sm:$0xff] %v1059
        %1084 = vst [vmem:[#allocation3 + $0x610] sm:$0xff] %v1060
        %1085 = vst [vmem:[#allocation3 + $0x658] sm:$0xff] %v1061
        %1086 = vst [vmem:[#allocation3 + $0x6a0] sm:$0xff] %v1062
        %v1087 = vld [vmem:[%s277 + $0x30] sm:$0xff]
        %v1088 = vld [vmem:[%s277 + $0x38] sm:$0xff]
        %v1089 = vld [vmem:[%s277 + $0x40] sm:$0xff]
        %v1090 = vld [vmem:[%s277 + $0x48] sm:$0xff]
        %v1091 = vld [vmem:[%s277 + $0x50] sm:$0xff]
        %v1092 = vld [vmem:[%s277 + $0x58] sm:$0xff]
        %v1093 = vld [vmem:[%s277 + $0x60] sm:$0xff]
        %v1094 = vld [vmem:[%s277 + $0x68] sm:$0xff]
        %v1095 = vld [vmem:[%s277 + $0x70] sm:$0xff]
        %v1096 = vld [vmem:[%s277 + $0x78] sm:$0xff]
        %v1097 = vld [vmem:[%s277 + $0x80] sm:$0xff]
        %v1098 = vld [vmem:[%s277 + $0x88] sm:$0xff]
        %v1099 = vld [vmem:[%s277 + $0x90] sm:$0xff]
        %v1100 = vld [vmem:[%s277 + $0x98] sm:$0xff]
        %v1101 = vld [vmem:[%s277 + $0xa0] sm:$0xff]
        %v1102 = vld [vmem:[%s277 + $0xa8] sm:$0xff]
        %v1103 = vld [vmem:[%s277 + $0xb0] sm:$0xff]
        %v1104 = vld [vmem:[%s277 + $0xb8] sm:$0xff]
        %v1105 = vld [vmem:[%s277 + $0xc0] sm:$0xff]
        %v1106 = vld [vmem:[%s277 + $0xc8] sm:$0xff]
        %v1107 = vld [vmem:[%s277 + $0xd0] sm:$0xff]
        %v1108 = vld [vmem:[%s277 + $0xd8] sm:$0xff]
        %v1109 = vld [vmem:[%s277 + $0xe0] sm:$0xff]
        %v1110 = vld [vmem:[%s277 + $0xe8] sm:$0xff]
        %v1111 = vld [vmem:[%s277 + $0xf0] sm:$0xff]
        %v1112 = vld [vmem:[%s277 + $0xf8] sm:$0xff]
        %v1113 = vld [vmem:[%s277 + $0x100] sm:$0xff]
        %v1114 = vld [vmem:[%s277 + $0x108] sm:$0xff]
        %v1115 = vld [vmem:[%s277 + $0x110] sm:$0xff]
        %v1116 = vld [vmem:[%s277 + $0x118] sm:$0xff]
        %v1117 = vld [vmem:[%s277 + $0x120] sm:$0xff]
        %v1118 = vld [vmem:[%s277 + $0x128] sm:$0xff]
        %v1119 = vld [vmem:[%s277 + $0x130] sm:$0xff]
        %v1120 = vld [vmem:[%s277 + $0x138] sm:$0xff]
        %v1121 = vld [vmem:[%s277 + $0x140] sm:$0xff]
        %v1122 = vld [vmem:[%s277 + $0x148] sm:$0xff]
        %v1123 = vld [vmem:[%s277 + $0x150] sm:$0xff]
        %v1124 = vld [vmem:[%s277 + $0x158] sm:$0xff]
        %v1125 = vld [vmem:[%s277 + $0x160] sm:$0xff]
        %v1126 = vld [vmem:[%s277 + $0x168] sm:$0xff]
        %v1127 = vld [vmem:[%s277 + $0x170] sm:$0xff]
        %v1128 = vld [vmem:[%s277 + $0x178] sm:$0xff]
        %v1129 = vld [vmem:[%s277 + $0x180] sm:$0xff]
        %v1130 = vld [vmem:[%s277 + $0x188] sm:$0xff]
        %v1131 = vld [vmem:[%s277 + $0x190] sm:$0xff]
        %v1132 = vld [vmem:[%s277 + $0x198] sm:$0xff]
        %v1133 = vld [vmem:[%s277 + $0x1a0] sm:$0xff]
        %v1134 = vld [vmem:[%s277 + $0x1a8] sm:$0xff]
        %v1135 = vpack.c.bf16 %v1088, %v1087
        %v1136 = vpack.c.bf16 %v1090, %v1089
        %v1137 = vpack.c.bf16 %v1092, %v1091
        %v1138 = vpack.c.bf16 %v1094, %v1093
        %v1139 = vpack.c.bf16 %v1096, %v1095
        %v1140 = vpack.c.bf16 %v1098, %v1097
        %v1141 = vpack.c.bf16 %v1100, %v1099
        %v1142 = vpack.c.bf16 %v1102, %v1101
        %v1143 = vpack.c.bf16 %v1104, %v1103
        %v1144 = vpack.c.bf16 %v1106, %v1105
        %v1145 = vpack.c.bf16 %v1108, %v1107
        %v1146 = vpack.c.bf16 %v1110, %v1109
        %v1147 = vpack.c.bf16 %v1112, %v1111
        %v1148 = vpack.c.bf16 %v1114, %v1113
        %v1149 = vpack.c.bf16 %v1116, %v1115
        %v1150 = vpack.c.bf16 %v1118, %v1117
        %v1151 = vpack.c.bf16 %v1120, %v1119
        %v1152 = vpack.c.bf16 %v1122, %v1121
        %v1153 = vpack.c.bf16 %v1124, %v1123
        %v1154 = vpack.c.bf16 %v1126, %v1125
        %v1155 = vpack.c.bf16 %v1128, %v1127
        %v1156 = vpack.c.bf16 %v1130, %v1129
        %v1157 = vpack.c.bf16 %v1132, %v1131
        %v1158 = vpack.c.bf16 %v1134, %v1133
        %1159 = vst [vmem:[#allocation3 + $0x30] sm:$0xff] %v1135
        %1160 = vst [vmem:[#allocation3 + $0x78] sm:$0xff] %v1136
        %1161 = vst [vmem:[#allocation3 + $0xc0] sm:$0xff] %v1137
        %1162 = vst [vmem:[#allocation3 + $0x108] sm:$0xff] %v1138
        %1163 = vst [vmem:[#allocation3 + $0x150] sm:$0xff] %v1139
        %1164 = vst [vmem:[#allocation3 + $0x198] sm:$0xff] %v1140
        %1165 = vst [vmem:[#allocation3 + $0x1e0] sm:$0xff] %v1141
        %1166 = vst [vmem:[#allocation3 + $0x228] sm:$0xff] %v1142
        %1167 = vst [vmem:[#allocation3 + $0x270] sm:$0xff] %v1143
        %1168 = vst [vmem:[#allocation3 + $0x2b8] sm:$0xff] %v1144
        %1169 = vst [vmem:[#allocation3 + $0x300] sm:$0xff] %v1145
        %1170 = vst [vmem:[#allocation3 + $0x348] sm:$0xff] %v1146
        %1171 = vst [vmem:[#allocation3 + $0x390] sm:$0xff] %v1147
        %1172 = vst [vmem:[#allocation3 + $0x3d8] sm:$0xff] %v1148
        %1173 = vst [vmem:[#allocation3 + $0x420] sm:$0xff] %v1149
        %1174 = vst [vmem:[#allocation3 + $0x468] sm:$0xff] %v1150
        %1175 = vst [vmem:[#allocation3 + $0x4b0] sm:$0xff] %v1151
        %1176 = vst [vmem:[#allocation3 + $0x4f8] sm:$0xff] %v1152
        %1177 = vst [vmem:[#allocation3 + $0x540] sm:$0xff] %v1153
        %1178 = vst [vmem:[#allocation3 + $0x588] sm:$0xff] %v1154
        %1179 = vst [vmem:[#allocation3 + $0x5d0] sm:$0xff] %v1155
        %1180 = vst [vmem:[#allocation3 + $0x618] sm:$0xff] %v1156
        %1181 = vst [vmem:[#allocation3 + $0x660] sm:$0xff] %v1157
        %1182 = vst [vmem:[#allocation3 + $0x6a8] sm:$0xff] %v1158
        %v1183 = vrot.slane %v1087, 1
        %v1184 = vrot.slane %v1088, 1
        %v1185 = vrot.slane %v1089, 1
        %v1186 = vrot.slane %v1090, 1
        %v1187 = vrot.slane %v1091, 1
        %v1188 = vrot.slane %v1092, 1
        %v1189 = vrot.slane %v1093, 1
        %v1190 = vrot.slane %v1094, 1
        %v1191 = vrot.slane %v1095, 1
        %v1192 = vrot.slane %v1096, 1
        %v1193 = vrot.slane %v1097, 1
        %v1194 = vrot.slane %v1098, 1
        %v1195 = vrot.slane %v1099, 1
        %v1196 = vrot.slane %v1100, 1
        %v1197 = vrot.slane %v1101, 1
        %v1198 = vrot.slane %v1102, 1
        %v1199 = vrot.slane %v1103, 1
        %v1200 = vrot.slane %v1104, 1
        %v1201 = vrot.slane %v1105, 1
        %v1202 = vrot.slane %v1106, 1
        %v1203 = vrot.slane %v1107, 1
        %v1204 = vrot.slane %v1108, 1
        %v1205 = vrot.slane %v1109, 1
        %v1206 = vrot.slane %v1110, 1
        %v1207 = vrot.slane %v1111, 1
        %v1208 = vrot.slane %v1112, 1
        %v1209 = vrot.slane %v1113, 1
        %v1210 = vrot.slane %v1114, 1
        %v1211 = vrot.slane %v1115, 1
        %v1212 = vrot.slane %v1116, 1
        %v1213 = vrot.slane %v1117, 1
        %v1214 = vrot.slane %v1118, 1
        %v1215 = vrot.slane %v1119, 1
        %v1216 = vrot.slane %v1120, 1
        %v1217 = vrot.slane %v1121, 1
        %v1218 = vrot.slane %v1122, 1
        %v1219 = vrot.slane %v1123, 1
        %v1220 = vrot.slane %v1124, 1
        %v1221 = vrot.slane %v1125, 1
        %v1222 = vrot.slane %v1126, 1
        %v1223 = vrot.slane %v1127, 1
        %v1224 = vrot.slane %v1128, 1
        %v1225 = vrot.slane %v1129, 1
        %v1226 = vrot.slane %v1130, 1
        %v1227 = vrot.slane %v1131, 1
        %v1228 = vrot.slane %v1132, 1
        %v1229 = vrot.slane %v1133, 1
        %v1230 = vrot.slane %v1134, 1
        %v1231 = vsel %vm461, %v1229, %v1230
        %v1232 = vsel %vm461, %v1228, %v1229
        %v1233 = vsel %vm461, %v1227, %v1228
        %v1234 = vsel %vm461, %v1226, %v1227
        %v1235 = vsel %vm461, %v1225, %v1226
        %v1236 = vsel %vm461, %v1224, %v1225
        %v1237 = vsel %vm461, %v1223, %v1224
        %v1238 = vsel %vm461, %v1222, %v1223
        %v1239 = vsel %vm461, %v1221, %v1222
        %v1240 = vsel %vm461, %v1220, %v1221
        %v1241 = vsel %vm461, %v1219, %v1220
        %v1242 = vsel %vm461, %v1218, %v1219
        %v1243 = vsel %vm461, %v1217, %v1218
        %v1244 = vsel %vm461, %v1216, %v1217
        %v1245 = vsel %vm461, %v1215, %v1216
        %v1246 = vsel %vm461, %v1214, %v1215
        %v1247 = vsel %vm461, %v1213, %v1214
        %v1248 = vsel %vm461, %v1212, %v1213
        %v1249 = vsel %vm461, %v1211, %v1212
        %v1250 = vsel %vm461, %v1210, %v1211
        %v1251 = vsel %vm461, %v1209, %v1210
        %v1252 = vsel %vm461, %v1208, %v1209
        %v1253 = vsel %vm461, %v1207, %v1208
        %v1254 = vsel %vm461, %v1206, %v1207
        %v1255 = vsel %vm461, %v1205, %v1206
        %v1256 = vsel %vm461, %v1204, %v1205
        %v1257 = vsel %vm461, %v1203, %v1204
        %v1258 = vsel %vm461, %v1202, %v1203
        %v1259 = vsel %vm461, %v1201, %v1202
        %v1260 = vsel %vm461, %v1200, %v1201
        %v1261 = vsel %vm461, %v1199, %v1200
        %v1262 = vsel %vm461, %v1198, %v1199
        %v1263 = vsel %vm461, %v1197, %v1198
        %v1264 = vsel %vm461, %v1196, %v1197
        %v1265 = vsel %vm461, %v1195, %v1196
        %v1266 = vsel %vm461, %v1194, %v1195
        %v1267 = vsel %vm461, %v1193, %v1194
        %v1268 = vsel %vm461, %v1192, %v1193
        %v1269 = vsel %vm461, %v1191, %v1192
        %v1270 = vsel %vm461, %v1190, %v1191
        %v1271 = vsel %vm461, %v1189, %v1190
        %v1272 = vsel %vm461, %v1188, %v1189
        %v1273 = vsel %vm461, %v1187, %v1188
        %v1274 = vsel %vm461, %v1186, %v1187
        %v1275 = vsel %vm461, %v1185, %v1186
        %v1276 = vsel %vm461, %v1184, %v1185
        %v1277 = vsel %vm461, %v1183, %v1184
        %v1278 = vsel %vm461, %v1230, %v1183
        %v1279 = vpack.c.bf16 %v1276, %v1277
        %v1280 = vpack.c.bf16 %v1274, %v1275
        %v1281 = vpack.c.bf16 %v1272, %v1273
        %v1282 = vpack.c.bf16 %v1270, %v1271
        %v1283 = vpack.c.bf16 %v1268, %v1269
        %v1284 = vpack.c.bf16 %v1266, %v1267
        %v1285 = vpack.c.bf16 %v1264, %v1265
        %v1286 = vpack.c.bf16 %v1262, %v1263
        %v1287 = vpack.c.bf16 %v1260, %v1261
        %v1288 = vpack.c.bf16 %v1258, %v1259
        %v1289 = vpack.c.bf16 %v1256, %v1257
        %v1290 = vpack.c.bf16 %v1254, %v1255
        %v1291 = vpack.c.bf16 %v1252, %v1253
        %v1292 = vpack.c.bf16 %v1250, %v1251
        %v1293 = vpack.c.bf16 %v1248, %v1249
        %v1294 = vpack.c.bf16 %v1246, %v1247
        %v1295 = vpack.c.bf16 %v1244, %v1245
        %v1296 = vpack.c.bf16 %v1242, %v1243
        %v1297 = vpack.c.bf16 %v1240, %v1241
        %v1298 = vpack.c.bf16 %v1238, %v1239
        %v1299 = vpack.c.bf16 %v1236, %v1237
        %v1300 = vpack.c.bf16 %v1234, %v1235
        %v1301 = vpack.c.bf16 %v1232, %v1233
        %v1302 = vpack.c.bf16 %v1278, %v1231
        %1303 = vst [vmem:[#allocation3 + $0x38] sm:$0xff] %v1279
        %1304 = vst [vmem:[#allocation3 + $0x80] sm:$0xff] %v1280
        %1305 = vst [vmem:[#allocation3 + $0xc8] sm:$0xff] %v1281
        %1306 = vst [vmem:[#allocation3 + $0x110] sm:$0xff] %v1282
        %1307 = vst [vmem:[#allocation3 + $0x158] sm:$0xff] %v1283
        %1308 = vst [vmem:[#allocation3 + $0x1a0] sm:$0xff] %v1284
        %1309 = vst [vmem:[#allocation3 + $0x1e8] sm:$0xff] %v1285
        %1310 = vst [vmem:[#allocation3 + $0x230] sm:$0xff] %v1286
        %1311 = vst [vmem:[#allocation3 + $0x278] sm:$0xff] %v1287
        %1312 = vst [vmem:[#allocation3 + $0x2c0] sm:$0xff] %v1288
        %1313 = vst [vmem:[#allocation3 + $0x308] sm:$0xff] %v1289
        %1314 = vst [vmem:[#allocation3 + $0x350] sm:$0xff] %v1290
        %1315 = vst [vmem:[#allocation3 + $0x398] sm:$0xff] %v1291
        %1316 = vst [vmem:[#allocation3 + $0x3e0] sm:$0xff] %v1292
        %1317 = vst [vmem:[#allocation3 + $0x428] sm:$0xff] %v1293
        %1318 = vst [vmem:[#allocation3 + $0x470] sm:$0xff] %v1294
        %1319 = vst [vmem:[#allocation3 + $0x4b8] sm:$0xff] %v1295
        %1320 = vst [vmem:[#allocation3 + $0x500] sm:$0xff] %v1296
        %1321 = vst [vmem:[#allocation3 + $0x548] sm:$0xff] %v1297
        %1322 = vst [vmem:[#allocation3 + $0x590] sm:$0xff] %v1298
        %1323 = vst [vmem:[#allocation3 + $0x5d8] sm:$0xff] %v1299
        %1324 = vst [vmem:[#allocation3 + $0x620] sm:$0xff] %v1300
        %1325 = vst [vmem:[#allocation3 + $0x668] sm:$0xff] %v1301
        %1326 = vst [vmem:[#allocation3 + $0x6b0] sm:$0xff] %v1302
        %v1327 = vrot.slane %v1087, 2
        %v1328 = vrot.slane %v1088, 2
        %v1329 = vrot.slane %v1089, 2
        %v1330 = vrot.slane %v1090, 2
        %v1331 = vrot.slane %v1091, 2
        %v1332 = vrot.slane %v1092, 2
        %v1333 = vrot.slane %v1093, 2
        %v1334 = vrot.slane %v1094, 2
        %v1335 = vrot.slane %v1095, 2
        %v1336 = vrot.slane %v1096, 2
        %v1337 = vrot.slane %v1097, 2
        %v1338 = vrot.slane %v1098, 2
        %v1339 = vrot.slane %v1099, 2
        %v1340 = vrot.slane %v1100, 2
        %v1341 = vrot.slane %v1101, 2
        %v1342 = vrot.slane %v1102, 2
        %v1343 = vrot.slane %v1103, 2
        %v1344 = vrot.slane %v1104, 2
        %v1345 = vrot.slane %v1105, 2
        %v1346 = vrot.slane %v1106, 2
        %v1347 = vrot.slane %v1107, 2
        %v1348 = vrot.slane %v1108, 2
        %v1349 = vrot.slane %v1109, 2
        %v1350 = vrot.slane %v1110, 2
        %v1351 = vrot.slane %v1111, 2
        %v1352 = vrot.slane %v1112, 2
        %v1353 = vrot.slane %v1113, 2
        %v1354 = vrot.slane %v1114, 2
        %v1355 = vrot.slane %v1115, 2
        %v1356 = vrot.slane %v1116, 2
        %v1357 = vrot.slane %v1117, 2
        %v1358 = vrot.slane %v1118, 2
        %v1359 = vrot.slane %v1119, 2
        %v1360 = vrot.slane %v1120, 2
        %v1361 = vrot.slane %v1121, 2
        %v1362 = vrot.slane %v1122, 2
        %v1363 = vrot.slane %v1123, 2
        %v1364 = vrot.slane %v1124, 2
        %v1365 = vrot.slane %v1125, 2
        %v1366 = vrot.slane %v1126, 2
        %v1367 = vrot.slane %v1127, 2
        %v1368 = vrot.slane %v1128, 2
        %v1369 = vrot.slane %v1129, 2
        %v1370 = vrot.slane %v1130, 2
        %v1371 = vrot.slane %v1131, 2
        %v1372 = vrot.slane %v1132, 2
        %v1373 = vrot.slane %v1133, 2
        %v1374 = vrot.slane %v1134, 2
        %v1375 = vsel %vm606, %v1373, %v1374
        %v1376 = vsel %vm606, %v1372, %v1373
        %v1377 = vsel %vm606, %v1371, %v1372
        %v1378 = vsel %vm606, %v1370, %v1371
        %v1379 = vsel %vm606, %v1369, %v1370
        %v1380 = vsel %vm606, %v1368, %v1369
        %v1381 = vsel %vm606, %v1367, %v1368
        %v1382 = vsel %vm606, %v1366, %v1367
        %v1383 = vsel %vm606, %v1365, %v1366
        %v1384 = vsel %vm606, %v1364, %v1365
        %v1385 = vsel %vm606, %v1363, %v1364
        %v1386 = vsel %vm606, %v1362, %v1363
        %v1387 = vsel %vm606, %v1361, %v1362
        %v1388 = vsel %vm606, %v1360, %v1361
        %v1389 = vsel %vm606, %v1359, %v1360
        %v1390 = vsel %vm606, %v1358, %v1359
        %v1391 = vsel %vm606, %v1357, %v1358
        %v1392 = vsel %vm606, %v1356, %v1357
        %v1393 = vsel %vm606, %v1355, %v1356
        %v1394 = vsel %vm606, %v1354, %v1355
        %v1395 = vsel %vm606, %v1353, %v1354
        %v1396 = vsel %vm606, %v1352, %v1353
        %v1397 = vsel %vm606, %v1351, %v1352
        %v1398 = vsel %vm606, %v1350, %v1351
        %v1399 = vsel %vm606, %v1349, %v1350
        %v1400 = vsel %vm606, %v1348, %v1349
        %v1401 = vsel %vm606, %v1347, %v1348
        %v1402 = vsel %vm606, %v1346, %v1347
        %v1403 = vsel %vm606, %v1345, %v1346
        %v1404 = vsel %vm606, %v1344, %v1345
        %v1405 = vsel %vm606, %v1343, %v1344
        %v1406 = vsel %vm606, %v1342, %v1343
        %v1407 = vsel %vm606, %v1341, %v1342
        %v1408 = vsel %vm606, %v1340, %v1341
        %v1409 = vsel %vm606, %v1339, %v1340
        %v1410 = vsel %vm606, %v1338, %v1339
        %v1411 = vsel %vm606, %v1337, %v1338
        %v1412 = vsel %vm606, %v1336, %v1337
        %v1413 = vsel %vm606, %v1335, %v1336
        %v1414 = vsel %vm606, %v1334, %v1335
        %v1415 = vsel %vm606, %v1333, %v1334
        %v1416 = vsel %vm606, %v1332, %v1333
        %v1417 = vsel %vm606, %v1331, %v1332
        %v1418 = vsel %vm606, %v1330, %v1331
        %v1419 = vsel %vm606, %v1329, %v1330
        %v1420 = vsel %vm606, %v1328, %v1329
        %v1421 = vsel %vm606, %v1327, %v1328
        %v1422 = vsel %vm606, %v1374, %v1327
        %v1423 = vpack.c.bf16 %v1420, %v1421
        %v1424 = vpack.c.bf16 %v1418, %v1419
        %v1425 = vpack.c.bf16 %v1416, %v1417
        %v1426 = vpack.c.bf16 %v1414, %v1415
        %v1427 = vpack.c.bf16 %v1412, %v1413
        %v1428 = vpack.c.bf16 %v1410, %v1411
        %v1429 = vpack.c.bf16 %v1408, %v1409
        %v1430 = vpack.c.bf16 %v1406, %v1407
        %v1431 = vpack.c.bf16 %v1404, %v1405
        %v1432 = vpack.c.bf16 %v1402, %v1403
        %v1433 = vpack.c.bf16 %v1400, %v1401
        %v1434 = vpack.c.bf16 %v1398, %v1399
        %v1435 = vpack.c.bf16 %v1396, %v1397
        %v1436 = vpack.c.bf16 %v1394, %v1395
        %v1437 = vpack.c.bf16 %v1392, %v1393
        %v1438 = vpack.c.bf16 %v1390, %v1391
        %v1439 = vpack.c.bf16 %v1388, %v1389
        %v1440 = vpack.c.bf16 %v1386, %v1387
        %v1441 = vpack.c.bf16 %v1384, %v1385
        %v1442 = vpack.c.bf16 %v1382, %v1383
        %v1443 = vpack.c.bf16 %v1380, %v1381
        %v1444 = vpack.c.bf16 %v1378, %v1379
        %v1445 = vpack.c.bf16 %v1376, %v1377
        %v1446 = vpack.c.bf16 %v1422, %v1375
        %1447 = vst [vmem:[#allocation3 + $0x40] sm:$0xff] %v1423
        %1448 = vst [vmem:[#allocation3 + $0x88] sm:$0xff] %v1424
        %1449 = vst [vmem:[#allocation3 + $0xd0] sm:$0xff] %v1425
        %1450 = vst [vmem:[#allocation3 + $0x118] sm:$0xff] %v1426
        %1451 = vst [vmem:[#allocation3 + $0x160] sm:$0xff] %v1427
        %1452 = vst [vmem:[#allocation3 + $0x1a8] sm:$0xff] %v1428
        %1453 = vst [vmem:[#allocation3 + $0x1f0] sm:$0xff] %v1429
        %1454 = vst [vmem:[#allocation3 + $0x238] sm:$0xff] %v1430
        %1455 = vst [vmem:[#allocation3 + $0x280] sm:$0xff] %v1431
        %1456 = vst [vmem:[#allocation3 + $0x2c8] sm:$0xff] %v1432
        %1457 = vst [vmem:[#allocation3 + $0x310] sm:$0xff] %v1433
        %1458 = vst [vmem:[#allocation3 + $0x358] sm:$0xff] %v1434
        %1459 = vst [vmem:[#allocation3 + $0x3a0] sm:$0xff] %v1435
        %1460 = vst [vmem:[#allocation3 + $0x3e8] sm:$0xff] %v1436
        %1461 = vst [vmem:[#allocation3 + $0x430] sm:$0xff] %v1437
        %1462 = vst [vmem:[#allocation3 + $0x478] sm:$0xff] %v1438
        %1463 = vst [vmem:[#allocation3 + $0x4c0] sm:$0xff] %v1439
        %1464 = vst [vmem:[#allocation3 + $0x508] sm:$0xff] %v1440
        %1465 = vst [vmem:[#allocation3 + $0x550] sm:$0xff] %v1441
        %1466 = vst [vmem:[#allocation3 + $0x598] sm:$0xff] %v1442
        %1467 = vst [vmem:[#allocation3 + $0x5e0] sm:$0xff] %v1443
        %1468 = vst [vmem:[#allocation3 + $0x628] sm:$0xff] %v1444
        %1469 = vst [vmem:[#allocation3 + $0x670] sm:$0xff] %v1445
        %1470 = vst [vmem:[#allocation3 + $0x6b8] sm:$0xff] %v1446
        %v1471 = vld [vmem:[#allocation3] sm:$0xff]
        %v1472 = vld [vmem:[#allocation3 + $0x8] sm:$0xff]
        %v1473 = vld [vmem:[#allocation3 + $0x10] sm:$0xff]
        %v1474 = vld [vmem:[#allocation3 + $0x18] sm:$0xff]
        %v1475 = vld [vmem:[#allocation3 + $0x20] sm:$0xff]
        %v1476 = vld [vmem:[#allocation3 + $0x28] sm:$0xff]
        %v1477 = vld [vmem:[#allocation3 + $0x30] sm:$0xff]
        %v1478 = vld [vmem:[#allocation3 + $0x38] sm:$0xff]
        %v1479 = vld [vmem:[#allocation3 + $0x40] sm:$0xff]
        %v1480 = vld [vmem:[#allocation3 + $0x48] sm:$0xff]
        %v1481 = vld [vmem:[#allocation3 + $0x50] sm:$0xff]
        %v1482 = vld [vmem:[#allocation3 + $0x58] sm:$0xff]
        %v1483 = vld [vmem:[#allocation3 + $0x60] sm:$0xff]
        %v1484 = vld [vmem:[#allocation3 + $0x68] sm:$0xff]
        %v1485 = vld [vmem:[#allocation3 + $0x70] sm:$0xff]
        %v1486 = vld [vmem:[#allocation3 + $0x78] sm:$0xff]
        %v1487 = vld [vmem:[#allocation3 + $0x80] sm:$0xff]
        %v1488 = vld [vmem:[#allocation3 + $0x88] sm:$0xff]
        %v1489 = vld [vmem:[#allocation3 + $0x90] sm:$0xff]
        %v1490 = vld [vmem:[#allocation3 + $0x98] sm:$0xff]
        %v1491 = vld [vmem:[#allocation3 + $0xa0] sm:$0xff]
        %v1492 = vld [vmem:[#allocation3 + $0xa8] sm:$0xff]
        %v1493 = vld [vmem:[#allocation3 + $0xb0] sm:$0xff]
        %v1494 = vld [vmem:[#allocation3 + $0xb8] sm:$0xff]
        %v1495 = vld [vmem:[#allocation3 + $0xc0] sm:$0xff]
        %v1496 = vld [vmem:[#allocation3 + $0xc8] sm:$0xff]
        %v1497 = vld [vmem:[#allocation3 + $0xd0] sm:$0xff]
        %v1498 = vld [vmem:[#allocation3 + $0xd8] sm:$0xff]
        %v1499 = vld [vmem:[#allocation3 + $0xe0] sm:$0xff]
        %v1500 = vld [vmem:[#allocation3 + $0xe8] sm:$0xff]
        %v1501 = vld [vmem:[#allocation3 + $0xf0] sm:$0xff]
        %v1502 = vld [vmem:[#allocation3 + $0xf8] sm:$0xff]
        %v1503 = vld [vmem:[#allocation3 + $0x100] sm:$0xff]
        %v1504 = vld [vmem:[#allocation3 + $0x108] sm:$0xff]
        %v1505 = vld [vmem:[#allocation3 + $0x110] sm:$0xff]
        %v1506 = vld [vmem:[#allocation3 + $0x118] sm:$0xff]
        %v1507 = vld [vmem:[#allocation3 + $0x120] sm:$0xff]
        %v1508 = vld [vmem:[#allocation3 + $0x128] sm:$0xff]
        %v1509 = vld [vmem:[#allocation3 + $0x130] sm:$0xff]
        %v1510 = vld [vmem:[#allocation3 + $0x138] sm:$0xff]
        %v1511 = vld [vmem:[#allocation3 + $0x140] sm:$0xff]
        %v1512 = vld [vmem:[#allocation3 + $0x148] sm:$0xff]
        %v1513 = vld [vmem:[#allocation3 + $0x150] sm:$0xff]
        %v1514 = vld [vmem:[#allocation3 + $0x158] sm:$0xff]
        %v1515 = vld [vmem:[#allocation3 + $0x160] sm:$0xff]
        %v1516 = vld [vmem:[#allocation3 + $0x168] sm:$0xff]
        %v1517 = vld [vmem:[#allocation3 + $0x170] sm:$0xff]
        %v1518 = vld [vmem:[#allocation3 + $0x178] sm:$0xff]
        %v1519 = vld [vmem:[#allocation3 + $0x180] sm:$0xff]
        %v1520 = vld [vmem:[#allocation3 + $0x188] sm:$0xff]
        %v1521 = vld [vmem:[#allocation3 + $0x190] sm:$0xff]
        %v1522 = vld [vmem:[#allocation3 + $0x198] sm:$0xff]
        %v1523 = vld [vmem:[#allocation3 + $0x1a0] sm:$0xff]
        %v1524 = vld [vmem:[#allocation3 + $0x1a8] sm:$0xff]
        %v1525 = vld [vmem:[#allocation3 + $0x1b0] sm:$0xff]
        %v1526 = vld [vmem:[#allocation3 + $0x1b8] sm:$0xff]
        %v1527 = vld [vmem:[#allocation3 + $0x1c0] sm:$0xff]
        %v1528 = vld [vmem:[#allocation3 + $0x1c8] sm:$0xff]
        %v1529 = vld [vmem:[#allocation3 + $0x1d0] sm:$0xff]
        %v1530 = vld [vmem:[#allocation3 + $0x1d8] sm:$0xff]
        %v1531 = vld [vmem:[#allocation3 + $0x1e0] sm:$0xff]
        %v1532 = vld [vmem:[#allocation3 + $0x1e8] sm:$0xff]
        %v1533 = vld [vmem:[#allocation3 + $0x1f0] sm:$0xff]
        %v1534 = vld [vmem:[#allocation3 + $0x1f8] sm:$0xff]
        %v1535 = vld [vmem:[#allocation3 + $0x200] sm:$0xff]
        %v1536 = vld [vmem:[#allocation3 + $0x208] sm:$0xff]
        %v1537 = vld [vmem:[#allocation3 + $0x210] sm:$0xff]
        %v1538 = vld [vmem:[#allocation3 + $0x218] sm:$0xff]
        %v1539 = vld [vmem:[#allocation3 + $0x220] sm:$0xff]
        %v1540 = vld [vmem:[#allocation3 + $0x228] sm:$0xff]
        %v1541 = vld [vmem:[#allocation3 + $0x230] sm:$0xff]
        %v1542 = vld [vmem:[#allocation3 + $0x238] sm:$0xff]
        %v1543 = vld [vmem:[#allocation3 + $0x240] sm:$0xff]
        %v1544 = vld [vmem:[#allocation3 + $0x248] sm:$0xff]
        %v1545 = vld [vmem:[#allocation3 + $0x250] sm:$0xff]
        %v1546 = vld [vmem:[#allocation3 + $0x258] sm:$0xff]
        %v1547 = vld [vmem:[#allocation3 + $0x260] sm:$0xff]
        %v1548 = vld [vmem:[#allocation3 + $0x268] sm:$0xff]
        %v1549 = vld [vmem:[#allocation3 + $0x270] sm:$0xff]
        %v1550 = vld [vmem:[#allocation3 + $0x278] sm:$0xff]
        %v1551 = vld [vmem:[#allocation3 + $0x280] sm:$0xff]
        %v1552 = vld [vmem:[#allocation3 + $0x288] sm:$0xff]
        %v1553 = vld [vmem:[#allocation3 + $0x290] sm:$0xff]
        %v1554 = vld [vmem:[#allocation3 + $0x298] sm:$0xff]
        %v1555 = vld [vmem:[#allocation3 + $0x2a0] sm:$0xff]
        %v1556 = vld [vmem:[#allocation3 + $0x2a8] sm:$0xff]
        %v1557 = vld [vmem:[#allocation3 + $0x2b0] sm:$0xff]
        %v1558 = vld [vmem:[#allocation3 + $0x2b8] sm:$0xff]
        %v1559 = vld [vmem:[#allocation3 + $0x2c0] sm:$0xff]
        %v1560 = vld [vmem:[#allocation3 + $0x2c8] sm:$0xff]
        %v1561 = vld [vmem:[#allocation3 + $0x2d0] sm:$0xff]
        %v1562 = vld [vmem:[#allocation3 + $0x2d8] sm:$0xff]
        %v1563 = vld [vmem:[#allocation3 + $0x2e0] sm:$0xff]
        %v1564 = vld [vmem:[#allocation3 + $0x2e8] sm:$0xff]
        %v1565 = vld [vmem:[#allocation3 + $0x2f0] sm:$0xff]
        %v1566 = vld [vmem:[#allocation3 + $0x2f8] sm:$0xff]
        %v1567 = vld [vmem:[#allocation3 + $0x300] sm:$0xff]
        %v1568 = vld [vmem:[#allocation3 + $0x308] sm:$0xff]
        %v1569 = vld [vmem:[#allocation3 + $0x310] sm:$0xff]
        %v1570 = vld [vmem:[#allocation3 + $0x318] sm:$0xff]
        %v1571 = vld [vmem:[#allocation3 + $0x320] sm:$0xff]
        %v1572 = vld [vmem:[#allocation3 + $0x328] sm:$0xff]
        %v1573 = vld [vmem:[#allocation3 + $0x330] sm:$0xff]
        %v1574 = vld [vmem:[#allocation3 + $0x338] sm:$0xff]
        %v1575 = vld [vmem:[#allocation3 + $0x340] sm:$0xff]
        %v1576 = vld [vmem:[#allocation3 + $0x348] sm:$0xff]
        %v1577 = vld [vmem:[#allocation3 + $0x350] sm:$0xff]
        %v1578 = vld [vmem:[#allocation3 + $0x358] sm:$0xff]
        %v1579 = vld [vmem:[#allocation3 + $0x360] sm:$0xff]
        %v1580 = vld [vmem:[#allocation3 + $0x368] sm:$0xff]
        %v1581 = vld [vmem:[#allocation3 + $0x370] sm:$0xff]
        %v1582 = vld [vmem:[#allocation3 + $0x378] sm:$0xff]
        %v1583 = vld [vmem:[#allocation3 + $0x380] sm:$0xff]
        %v1584 = vld [vmem:[#allocation3 + $0x388] sm:$0xff]
        %v1585 = vld [vmem:[#allocation3 + $0x390] sm:$0xff]
        %v1586 = vld [vmem:[#allocation3 + $0x398] sm:$0xff]
        %v1587 = vld [vmem:[#allocation3 + $0x3a0] sm:$0xff]
        %v1588 = vld [vmem:[#allocation3 + $0x3a8] sm:$0xff]
        %v1589 = vld [vmem:[#allocation3 + $0x3b0] sm:$0xff]
        %v1590 = vld [vmem:[#allocation3 + $0x3b8] sm:$0xff]
        %v1591 = vld [vmem:[#allocation3 + $0x3c0] sm:$0xff]
        %v1592 = vld [vmem:[#allocation3 + $0x3c8] sm:$0xff]
        %v1593 = vld [vmem:[#allocation3 + $0x3d0] sm:$0xff]
        %v1594 = vld [vmem:[#allocation3 + $0x3d8] sm:$0xff]
        %v1595 = vld [vmem:[#allocation3 + $0x3e0] sm:$0xff]
        %v1596 = vld [vmem:[#allocation3 + $0x3e8] sm:$0xff]
        %v1597 = vld [vmem:[#allocation3 + $0x3f0] sm:$0xff]
        %v1598 = vld [vmem:[#allocation3 + $0x3f8] sm:$0xff]
        %v1599 = vld [vmem:[#allocation3 + $0x400] sm:$0xff]
        %v1600 = vld [vmem:[#allocation3 + $0x408] sm:$0xff]
        %v1601 = vld [vmem:[#allocation3 + $0x410] sm:$0xff]
        %v1602 = vld [vmem:[#allocation3 + $0x418] sm:$0xff]
        %v1603 = vld [vmem:[#allocation3 + $0x420] sm:$0xff]
        %v1604 = vld [vmem:[#allocation3 + $0x428] sm:$0xff]
        %v1605 = vld [vmem:[#allocation3 + $0x430] sm:$0xff]
        %v1606 = vld [vmem:[#allocation3 + $0x438] sm:$0xff]
        %v1607 = vld [vmem:[#allocation3 + $0x440] sm:$0xff]
        %v1608 = vld [vmem:[#allocation3 + $0x448] sm:$0xff]
        %v1609 = vld [vmem:[#allocation3 + $0x450] sm:$0xff]
        %v1610 = vld [vmem:[#allocation3 + $0x458] sm:$0xff]
        %v1611 = vld [vmem:[#allocation3 + $0x460] sm:$0xff]
        %v1612 = vld [vmem:[#allocation3 + $0x468] sm:$0xff]
        %v1613 = vld [vmem:[#allocation3 + $0x470] sm:$0xff]
        %v1614 = vld [vmem:[#allocation3 + $0x478] sm:$0xff]
        %v1615 = vld [vmem:[#allocation3 + $0x480] sm:$0xff]
        %v1616 = vld [vmem:[#allocation3 + $0x488] sm:$0xff]
        %v1617 = vld [vmem:[#allocation3 + $0x490] sm:$0xff]
        %v1618 = vld [vmem:[#allocation3 + $0x498] sm:$0xff]
        %v1619 = vld [vmem:[#allocation3 + $0x4a0] sm:$0xff]
        %v1620 = vld [vmem:[#allocation3 + $0x4a8] sm:$0xff]
        %v1621 = vld [vmem:[#allocation3 + $0x4b0] sm:$0xff]
        %v1622 = vld [vmem:[#allocation3 + $0x4b8] sm:$0xff]
        %v1623 = vld [vmem:[#allocation3 + $0x4c0] sm:$0xff]
        %v1624 = vld [vmem:[#allocation3 + $0x4c8] sm:$0xff]
        %v1625 = vld [vmem:[#allocation3 + $0x4d0] sm:$0xff]
        %v1626 = vld [vmem:[#allocation3 + $0x4d8] sm:$0xff]
        %v1627 = vld [vmem:[#allocation3 + $0x4e0] sm:$0xff]
        %v1628 = vld [vmem:[#allocation3 + $0x4e8] sm:$0xff]
        %v1629 = vld [vmem:[#allocation3 + $0x4f0] sm:$0xff]
        %v1630 = vld [vmem:[#allocation3 + $0x4f8] sm:$0xff]
        %v1631 = vld [vmem:[#allocation3 + $0x500] sm:$0xff]
        %v1632 = vld [vmem:[#allocation3 + $0x508] sm:$0xff]
        %v1633 = vld [vmem:[#allocation3 + $0x510] sm:$0xff]
        %v1634 = vld [vmem:[#allocation3 + $0x518] sm:$0xff]
        %v1635 = vld [vmem:[#allocation3 + $0x520] sm:$0xff]
        %v1636 = vld [vmem:[#allocation3 + $0x528] sm:$0xff]
        %v1637 = vld [vmem:[#allocation3 + $0x530] sm:$0xff]
        %v1638 = vld [vmem:[#allocation3 + $0x538] sm:$0xff]
        %v1639 = vld [vmem:[#allocation3 + $0x540] sm:$0xff]
        %v1640 = vld [vmem:[#allocation3 + $0x548] sm:$0xff]
        %v1641 = vld [vmem:[#allocation3 + $0x550] sm:$0xff]
        %v1642 = vld [vmem:[#allocation3 + $0x558] sm:$0xff]
        %v1643 = vld [vmem:[#allocation3 + $0x560] sm:$0xff]
        %v1644 = vld [vmem:[#allocation3 + $0x568] sm:$0xff]
        %v1645 = vld [vmem:[#allocation3 + $0x570] sm:$0xff]
        %v1646 = vld [vmem:[#allocation3 + $0x578] sm:$0xff]
        %v1647 = vld [vmem:[#allocation3 + $0x580] sm:$0xff]
        %v1648 = vld [vmem:[#allocation3 + $0x588] sm:$0xff]
        %v1649 = vld [vmem:[#allocation3 + $0x590] sm:$0xff]
        %v1650 = vld [vmem:[#allocation3 + $0x598] sm:$0xff]
        %v1651 = vld [vmem:[#allocation3 + $0x5a0] sm:$0xff]
        %v1652 = vld [vmem:[#allocation3 + $0x5a8] sm:$0xff]
        %v1653 = vld [vmem:[#allocation3 + $0x5b0] sm:$0xff]
        %v1654 = vld [vmem:[#allocation3 + $0x5b8] sm:$0xff]
        %v1655 = vld [vmem:[#allocation3 + $0x5c0] sm:$0xff]
        %v1656 = vld [vmem:[#allocation3 + $0x5c8] sm:$0xff]
        %v1657 = vld [vmem:[#allocation3 + $0x5d0] sm:$0xff]
        %v1658 = vld [vmem:[#allocation3 + $0x5d8] sm:$0xff]
        %v1659 = vld [vmem:[#allocation3 + $0x5e0] sm:$0xff]
        %v1660 = vld [vmem:[#allocation3 + $0x5e8] sm:$0xff]
        %v1661 = vld [vmem:[#allocation3 + $0x5f0] sm:$0xff]
        %v1662 = vld [vmem:[#allocation3 + $0x5f8] sm:$0xff]
        %v1663 = vld [vmem:[#allocation3 + $0x600] sm:$0xff]
        %v1664 = vld [vmem:[#allocation3 + $0x608] sm:$0xff]
        %v1665 = vld [vmem:[#allocation3 + $0x610] sm:$0xff]
        %v1666 = vld [vmem:[#allocation3 + $0x618] sm:$0xff]
        %v1667 = vld [vmem:[#allocation3 + $0x620] sm:$0xff]
        %v1668 = vld [vmem:[#allocation3 + $0x628] sm:$0xff]
        %v1669 = vld [vmem:[#allocation3 + $0x630] sm:$0xff]
        %v1670 = vld [vmem:[#allocation3 + $0x638] sm:$0xff]
        %v1671 = vld [vmem:[#allocation3 + $0x640] sm:$0xff]
        %v1672 = vld [vmem:[#allocation3 + $0x648] sm:$0xff]
        %v1673 = vld [vmem:[#allocation3 + $0x650] sm:$0xff]
        %v1674 = vld [vmem:[#allocation3 + $0x658] sm:$0xff]
        %v1675 = vld [vmem:[#allocation3 + $0x660] sm:$0xff]
        %v1676 = vld [vmem:[#allocation3 + $0x668] sm:$0xff]
        %v1677 = vld [vmem:[#allocation3 + $0x670] sm:$0xff]
        %v1678 = vld [vmem:[#allocation3 + $0x678] sm:$0xff]
        %v1679 = vld [vmem:[#allocation3 + $0x680] sm:$0xff]
        %v1680 = vld [vmem:[#allocation3 + $0x688] sm:$0xff]
        %v1681 = vld [vmem:[#allocation3 + $0x690] sm:$0xff]
        %v1682 = vld [vmem:[#allocation3 + $0x698] sm:$0xff]
        %v1683 = vld [vmem:[#allocation3 + $0x6a0] sm:$0xff]
        %v1684 = vld [vmem:[#allocation3 + $0x6a8] sm:$0xff]
        %v1685 = vld [vmem:[#allocation3 + $0x6b0] sm:$0xff]
        %v1686 = vld [vmem:[#allocation3 + $0x6b8] sm:$0xff]
        %v1687 = vld [vmem:[#allocation9] sm:$0xf]
        %v1688 = vld [vmem:[#allocation9 + $0x4] sm:$0xf]
        %v1689 = vld [vmem:[#allocation9 + $0x8] sm:$0xf]
        %v1690 = vld [vmem:[#allocation9 + $0xc] sm:$0xf]
        %v1691 = vld [vmem:[#allocation9 + $0x10] sm:$0xf]
        %v1692 = vld [vmem:[#allocation9 + $0x14] sm:$0xf]
        %v1693 = vld [vmem:[#allocation9 + $0x18] sm:$0xf]
        %v1694 = vld [vmem:[#allocation9 + $0x1c] sm:$0xf]
        %v1695 = vld [vmem:[#allocation9 + $0x20] sm:$0xf]
        %v1696 = vld [vmem:[#allocation9 + $0x24] sm:$0xf]
        %v1697 = vld [vmem:[#allocation9 + $0x28] sm:$0xf]
        %v1698 = vld [vmem:[#allocation9 + $0x2c] sm:$0xf]
        %v1699 = vld [vmem:[#allocation9 + $0x30] sm:$0xf]
        %v1700 = vld [vmem:[#allocation9 + $0x34] sm:$0xf]
        %v1701 = vld [vmem:[#allocation9 + $0x38] sm:$0xf]
        %v1702 = vld [vmem:[#allocation9 + $0x3c] sm:$0xf]
        %v1703 = vld [vmem:[#allocation9 + $0x40] sm:$0xf]
        %v1704 = vld [vmem:[#allocation9 + $0x44] sm:$0xf]
        %v1705 = vld [vmem:[#allocation9 + $0x48] sm:$0xf]
        %v1706 = vld [vmem:[#allocation9 + $0x4c] sm:$0xf]
        %v1707 = vld [vmem:[#allocation9 + $0x50] sm:$0xf]
        %v1708 = vld [vmem:[#allocation9 + $0x54] sm:$0xf]
        %v1709 = vld [vmem:[#allocation9 + $0x58] sm:$0xf]
        %v1710 = vld [vmem:[#allocation9 + $0x5c] sm:$0xf]
        %v1711 = vld [vmem:[#allocation9 + $0x60] sm:$0xf]
        %v1712 = vld [vmem:[#allocation9 + $0x64] sm:$0xf]
        %v1713 = vld [vmem:[#allocation9 + $0x68] sm:$0xf]
        %v1714 = vld [vmem:[#allocation9 + $0x6c] sm:$0xf]
        %v1715 = vld [vmem:[#allocation9 + $0x70] sm:$0xf]
        %v1716 = vld [vmem:[#allocation9 + $0x74] sm:$0xf]
        %v1717 = vld [vmem:[#allocation9 + $0x78] sm:$0xf]
        %v1718 = vld [vmem:[#allocation9 + $0x7c] sm:$0xf]
        %v1719 = vld [vmem:[#allocation9 + $0x80] sm:$0xf]
        %v1720 = vld [vmem:[#allocation9 + $0x84] sm:$0xf]
        %v1721 = vld [vmem:[#allocation9 + $0x88] sm:$0xf]
        %v1722 = vld [vmem:[#allocation9 + $0x8c] sm:$0xf]
        %v1723 = vld [vmem:[#allocation9 + $0x90] sm:$0xf]
        %v1724 = vld [vmem:[#allocation9 + $0x94] sm:$0xf]
        %v1725 = vld [vmem:[#allocation9 + $0x98] sm:$0xf]
        %v1726 = vld [vmem:[#allocation9 + $0x9c] sm:$0xf]
        %v1727 = vld [vmem:[#allocation9 + $0xa0] sm:$0xf]
        %v1728 = vld [vmem:[#allocation9 + $0xa4] sm:$0xf]
        %v1729 = vld [vmem:[#allocation9 + $0xa8] sm:$0xf]
        %v1730 = vld [vmem:[#allocation9 + $0xac] sm:$0xf]
        %v1731 = vld [vmem:[#allocation9 + $0xb0] sm:$0xf]
        %v1732 = vld [vmem:[#allocation9 + $0xb4] sm:$0xf]
        %v1733 = vld [vmem:[#allocation9 + $0xb8] sm:$0xf]
        %v1734 = vld [vmem:[#allocation9 + $0xbc] sm:$0xf]
        %v1735 = vld [vmem:[#allocation9 + $0xc0] sm:$0xf]
        %v1736 = vld [vmem:[#allocation9 + $0xc4] sm:$0xf]
        %v1737 = vld [vmem:[#allocation9 + $0xc8] sm:$0xf]
        %v1738 = vld [vmem:[#allocation9 + $0xcc] sm:$0xf]
        %v1739 = vld [vmem:[#allocation9 + $0xd0] sm:$0xf]
        %v1740 = vld [vmem:[#allocation9 + $0xd4] sm:$0xf]
        %v1741 = vld [vmem:[#allocation9 + $0xd8] sm:$0xf]
        %v1742 = vld [vmem:[#allocation9 + $0xdc] sm:$0xf]
        %v1743 = vld [vmem:[#allocation9 + $0xe0] sm:$0xf]
        %v1744 = vld [vmem:[#allocation9 + $0xe4] sm:$0xf]
        %v1745 = vld [vmem:[#allocation9 + $0xe8] sm:$0xf]
        %v1746 = vld [vmem:[#allocation9 + $0xec] sm:$0xf]
        %v1747 = vld [vmem:[#allocation9 + $0xf0] sm:$0xf]
        %v1748 = vld [vmem:[#allocation9 + $0xf4] sm:$0xf]
        %v1749 = vld [vmem:[#allocation9 + $0xf8] sm:$0xf]
        %v1750 = vld [vmem:[#allocation9 + $0xfc] sm:$0xf]
        %v1751 = vld [vmem:[#allocation9 + $0x100] sm:$0xf]
        %v1752 = vld [vmem:[#allocation9 + $0x104] sm:$0xf]
        %v1753 = vld [vmem:[#allocation9 + $0x108] sm:$0xf]
        %v1754 = vld [vmem:[#allocation9 + $0x10c] sm:$0xf]
        %v1755 = vld [vmem:[#allocation9 + $0x110] sm:$0xf]
        %v1756 = vld [vmem:[#allocation9 + $0x114] sm:$0xf]
        %v1757 = vld [vmem:[#allocation9 + $0x118] sm:$0xf]
        %v1758 = vld [vmem:[#allocation9 + $0x11c] sm:$0xf]
        %v1759 = vld [vmem:[#allocation9 + $0x120] sm:$0xf]
        %v1760 = vld [vmem:[#allocation9 + $0x124] sm:$0xf]
        %v1761 = vld [vmem:[#allocation9 + $0x128] sm:$0xf]
        %v1762 = vld [vmem:[#allocation9 + $0x12c] sm:$0xf]
        %v1763 = vld [vmem:[#allocation9 + $0x130] sm:$0xf]
        %v1764 = vld [vmem:[#allocation9 + $0x134] sm:$0xf]
        %v1765 = vld [vmem:[#allocation9 + $0x138] sm:$0xf]
        %v1766 = vld [vmem:[#allocation9 + $0x13c] sm:$0xf]
        %v1767 = vld [vmem:[#allocation9 + $0x140] sm:$0xf]
        %v1768 = vld [vmem:[#allocation9 + $0x144] sm:$0xf]
        %v1769 = vld [vmem:[#allocation9 + $0x148] sm:$0xf]
        %v1770 = vld [vmem:[#allocation9 + $0x14c] sm:$0xf]
        %v1771 = vld [vmem:[#allocation9 + $0x150] sm:$0xf]
        %v1772 = vld [vmem:[#allocation9 + $0x154] sm:$0xf]
        %v1773 = vld [vmem:[#allocation9 + $0x158] sm:$0xf]
        %v1774 = vld [vmem:[#allocation9 + $0x15c] sm:$0xf]
        %v1775 = vld [vmem:[#allocation9 + $0x160] sm:$0xf]
        %v1776 = vld [vmem:[#allocation9 + $0x164] sm:$0xf]
        %v1777 = vld [vmem:[#allocation9 + $0x168] sm:$0xf]
        %v1778 = vld [vmem:[#allocation9 + $0x16c] sm:$0xf]
        %v1779 = vld [vmem:[#allocation9 + $0x170] sm:$0xf]
        %v1780 = vld [vmem:[#allocation9 + $0x174] sm:$0xf]
        %v1781 = vld [vmem:[#allocation9 + $0x178] sm:$0xf]
        %v1782 = vld [vmem:[#allocation9 + $0x17c] sm:$0xf]
        %v1783 = vld [vmem:[#allocation9 + $0x180] sm:$0xf]
        %v1784 = vld [vmem:[#allocation9 + $0x184] sm:$0xf]
        %v1785 = vld [vmem:[#allocation9 + $0x188] sm:$0xf]
        %v1786 = vld [vmem:[#allocation9 + $0x18c] sm:$0xf]
        %v1787 = vld [vmem:[#allocation9 + $0x190] sm:$0xf]
        %v1788 = vld [vmem:[#allocation9 + $0x194] sm:$0xf]
        %v1789 = vld [vmem:[#allocation9 + $0x198] sm:$0xf]
        %v1790 = vld [vmem:[#allocation9 + $0x19c] sm:$0xf]
        %v1791 = vld [vmem:[#allocation9 + $0x1a0] sm:$0xf]
        %v1792 = vld [vmem:[#allocation9 + $0x1a4] sm:$0xf]
        %v1793 = vld [vmem:[#allocation9 + $0x1a8] sm:$0xf]
        %v1794 = vld [vmem:[#allocation9 + $0x1ac] sm:$0xf]
        %v1795 = vld [vmem:[#allocation9 + $0x1b0] sm:$0xf]
        %v1796 = vld [vmem:[#allocation9 + $0x1b4] sm:$0xf]
        %v1797 = vld [vmem:[#allocation9 + $0x1b8] sm:$0xf]
        %v1798 = vld [vmem:[#allocation9 + $0x1bc] sm:$0xf]
        %v1799 = vld [vmem:[#allocation9 + $0x1c0] sm:$0xf]
        %v1800 = vld [vmem:[#allocation9 + $0x1c4] sm:$0xf]
        %v1801 = vld [vmem:[#allocation9 + $0x1c8] sm:$0xf]
        %v1802 = vld [vmem:[#allocation9 + $0x1cc] sm:$0xf]
        %v1803 = vld [vmem:[#allocation9 + $0x1d0] sm:$0xf]
        %v1804 = vld [vmem:[#allocation9 + $0x1d4] sm:$0xf]
        %v1805 = vld [vmem:[#allocation9 + $0x1d8] sm:$0xf]
        %v1806 = vld [vmem:[#allocation9 + $0x1dc] sm:$0xf]
        %v1807 = vld [vmem:[#allocation9 + $0x1e0] sm:$0xf]
        %v1808 = vld [vmem:[#allocation9 + $0x1e4] sm:$0xf]
        %v1809 = vld [vmem:[#allocation9 + $0x1e8] sm:$0xf]
        %v1810 = vld [vmem:[#allocation9 + $0x1ec] sm:$0xf]
        %v1811 = vld [vmem:[#allocation9 + $0x1f0] sm:$0xf]
        %v1812 = vld [vmem:[#allocation9 + $0x1f4] sm:$0xf]
        %v1813 = vld [vmem:[#allocation9 + $0x1f8] sm:$0xf]
        %v1814 = vld [vmem:[#allocation9 + $0x1fc] sm:$0xf]
        %v1815 = vld [vmem:[#allocation9 + $0x200] sm:$0xf]
        %v1816 = vld [vmem:[#allocation9 + $0x204] sm:$0xf]
        %v1817 = vld [vmem:[#allocation9 + $0x208] sm:$0xf]
        %v1818 = vld [vmem:[#allocation9 + $0x20c] sm:$0xf]
        %v1819 = vld [vmem:[#allocation9 + $0x210] sm:$0xf]
        %v1820 = vld [vmem:[#allocation9 + $0x214] sm:$0xf]
        %v1821 = vld [vmem:[#allocation9 + $0x218] sm:$0xf]
        %v1822 = vld [vmem:[#allocation9 + $0x21c] sm:$0xf]
        %v1823 = vld [vmem:[#allocation9 + $0x220] sm:$0xf]
        %v1824 = vld [vmem:[#allocation9 + $0x224] sm:$0xf]
        %v1825 = vld [vmem:[#allocation9 + $0x228] sm:$0xf]
        %v1826 = vld [vmem:[#allocation9 + $0x22c] sm:$0xf]
        %v1827 = vld [vmem:[#allocation9 + $0x230] sm:$0xf]
        %v1828 = vld [vmem:[#allocation9 + $0x234] sm:$0xf]
        %v1829 = vld [vmem:[#allocation9 + $0x238] sm:$0xf]
        %v1830 = vld [vmem:[#allocation9 + $0x23c] sm:$0xf]
        %v1831 = vld [vmem:[%s3] sm:$0x1]
        %v1833 = vlaneseq
        %v1834 = vshrl.u32 %v1833, 7
        %v1835 = vsub.s32 0, %v1834
        %v1836 = vrot.slane %v1831, %v1835
        %v1982 = vunpack.c.l.b16 %v1687
        %v1983 = vunpack.c.l.b16 %v1688
        %v1984 = vunpack.c.l.b16 %v1689
        %v1985 = vunpack.c.l.b16 %v1690
        %v1986 = vunpack.c.l.b16 %v1691
        %v1987 = vunpack.c.l.b16 %v1692
        %v1988 = vunpack.c.l.b16 %v1693
        %v1989 = vunpack.c.l.b16 %v1694
        %v1990 = vunpack.c.l.b16 %v1695
        %v1991 = vunpack.c.l.b16 %v1696
        %v1992 = vunpack.c.l.b16 %v1697
        %v1993 = vunpack.c.l.b16 %v1698
        %v1994 = vunpack.c.l.b16 %v1699
        %v1995 = vunpack.c.l.b16 %v1700
        %v1996 = vunpack.c.l.b16 %v1701
        %v1997 = vunpack.c.l.b16 %v1702
        %v1998 = vunpack.c.l.b16 %v1703
        %v1999 = vunpack.c.l.b16 %v1704
        %v2000 = vunpack.c.l.b16 %v1705
        %v2001 = vunpack.c.l.b16 %v1706
        %v2002 = vunpack.c.l.b16 %v1707
        %v2003 = vunpack.c.l.b16 %v1708
        %v2004 = vunpack.c.l.b16 %v1709
        %v2005 = vunpack.c.l.b16 %v1710
        %v2006 = vunpack.c.l.b16 %v1711
        %v2007 = vunpack.c.l.b16 %v1712
        %v2008 = vunpack.c.l.b16 %v1713
        %v2009 = vunpack.c.l.b16 %v1714
        %v2010 = vunpack.c.l.b16 %v1715
        %v2011 = vunpack.c.l.b16 %v1716
        %v2012 = vunpack.c.l.b16 %v1717
        %v2013 = vunpack.c.l.b16 %v1718
        %v2014 = vunpack.c.l.b16 %v1719
        %v2015 = vunpack.c.l.b16 %v1720
        %v2016 = vunpack.c.l.b16 %v1721
        %v2017 = vunpack.c.l.b16 %v1722
        %v2018 = vunpack.c.l.b16 %v1723
        %v2019 = vunpack.c.l.b16 %v1724
        %v2020 = vunpack.c.l.b16 %v1725
        %v2021 = vunpack.c.l.b16 %v1726
        %v2022 = vunpack.c.l.b16 %v1727
        %v2023 = vunpack.c.l.b16 %v1728
        %v2024 = vunpack.c.l.b16 %v1729
        %v2025 = vunpack.c.l.b16 %v1730
        %v2026 = vunpack.c.l.b16 %v1731
        %v2027 = vunpack.c.l.b16 %v1732
        %v2028 = vunpack.c.l.b16 %v1733
        %v2029 = vunpack.c.l.b16 %v1734
        %v2030 = vunpack.c.l.b16 %v1735
        %v2031 = vunpack.c.l.b16 %v1736
        %v2032 = vunpack.c.l.b16 %v1737
        %v2033 = vunpack.c.l.b16 %v1738
        %v2034 = vunpack.c.l.b16 %v1739
        %v2035 = vunpack.c.l.b16 %v1740
        %v2036 = vunpack.c.l.b16 %v1741
        %v2037 = vunpack.c.l.b16 %v1742
        %v2038 = vunpack.c.l.b16 %v1743
        %v2039 = vunpack.c.l.b16 %v1744
        %v2040 = vunpack.c.l.b16 %v1745
        %v2041 = vunpack.c.l.b16 %v1746
        %v2042 = vunpack.c.l.b16 %v1747
        %v2043 = vunpack.c.l.b16 %v1748
        %v2044 = vunpack.c.l.b16 %v1749
        %v2045 = vunpack.c.l.b16 %v1750
        %v2046 = vunpack.c.l.b16 %v1751
        %v2047 = vunpack.c.l.b16 %v1752
        %v2048 = vunpack.c.l.b16 %v1753
        %v2049 = vunpack.c.l.b16 %v1754
        %v2050 = vunpack.c.l.b16 %v1755
        %v2051 = vunpack.c.l.b16 %v1756
        %v2052 = vunpack.c.l.b16 %v1757
        %v2053 = vunpack.c.l.b16 %v1758
        %v2054 = vunpack.c.l.b16 %v1759
        %v2055 = vunpack.c.l.b16 %v1760
        %v2056 = vunpack.c.l.b16 %v1761
        %v2057 = vunpack.c.l.b16 %v1762
        %v2058 = vunpack.c.l.b16 %v1763
        %v2059 = vunpack.c.l.b16 %v1764
        %v2060 = vunpack.c.l.b16 %v1765
        %v2061 = vunpack.c.l.b16 %v1766
        %v2062 = vunpack.c.l.b16 %v1767
        %v2063 = vunpack.c.l.b16 %v1768
        %v2064 = vunpack.c.l.b16 %v1769
        %v2065 = vunpack.c.l.b16 %v1770
        %v2066 = vunpack.c.l.b16 %v1771
        %v2067 = vunpack.c.l.b16 %v1772
        %v2068 = vunpack.c.l.b16 %v1773
        %v2069 = vunpack.c.l.b16 %v1774
        %v2070 = vunpack.c.l.b16 %v1775
        %v2071 = vunpack.c.l.b16 %v1776
        %v2072 = vunpack.c.l.b16 %v1777
        %v2073 = vunpack.c.l.b16 %v1778
        %v2074 = vunpack.c.l.b16 %v1779
        %v2075 = vunpack.c.l.b16 %v1780
        %v2076 = vunpack.c.l.b16 %v1781
        %v2077 = vunpack.c.l.b16 %v1782
        %v2078 = vunpack.c.l.b16 %v1783
        %v2079 = vunpack.c.l.b16 %v1784
        %v2080 = vunpack.c.l.b16 %v1785
        %v2081 = vunpack.c.l.b16 %v1786
        %v2082 = vunpack.c.l.b16 %v1787
        %v2083 = vunpack.c.l.b16 %v1788
        %v2084 = vunpack.c.l.b16 %v1789
        %v2085 = vunpack.c.l.b16 %v1790
        %v2086 = vunpack.c.l.b16 %v1791
        %v2087 = vunpack.c.l.b16 %v1792
        %v2088 = vunpack.c.l.b16 %v1793
        %v2089 = vunpack.c.l.b16 %v1794
        %v2090 = vunpack.c.l.b16 %v1795
        %v2091 = vunpack.c.l.b16 %v1796
        %v2092 = vunpack.c.l.b16 %v1797
        %v2093 = vunpack.c.l.b16 %v1798
        %v2094 = vunpack.c.l.b16 %v1799
        %v2095 = vunpack.c.l.b16 %v1800
        %v2096 = vunpack.c.l.b16 %v1801
        %v2097 = vunpack.c.l.b16 %v1802
        %v2098 = vunpack.c.l.b16 %v1803
        %v2099 = vunpack.c.l.b16 %v1804
        %v2100 = vunpack.c.l.b16 %v1805
        %v2101 = vunpack.c.l.b16 %v1806
        %v2102 = vunpack.c.l.b16 %v1807
        %v2103 = vunpack.c.l.b16 %v1808
        %v2104 = vunpack.c.l.b16 %v1809
        %v2105 = vunpack.c.l.b16 %v1810
        %v2106 = vunpack.c.l.b16 %v1811
        %v2107 = vunpack.c.l.b16 %v1812
        %v2108 = vunpack.c.l.b16 %v1813
        %v2109 = vunpack.c.l.b16 %v1814
        %v2110 = vunpack.c.l.b16 %v1815
        %v2111 = vunpack.c.l.b16 %v1816
        %v2112 = vunpack.c.l.b16 %v1817
        %v2113 = vunpack.c.l.b16 %v1818
        %v2114 = vunpack.c.l.b16 %v1819
        %v2115 = vunpack.c.l.b16 %v1820
        %v2116 = vunpack.c.l.b16 %v1821
        %v2117 = vunpack.c.l.b16 %v1822
        %v2118 = vunpack.c.l.b16 %v1823
        %v2119 = vunpack.c.l.b16 %v1824
        %v2120 = vunpack.c.l.b16 %v1825
        %v2121 = vunpack.c.l.b16 %v1826
        %v2122 = vunpack.c.l.b16 %v1827
        %v2123 = vunpack.c.l.b16 %v1828
        %v2124 = vunpack.c.l.b16 %v1829
        %v2125 = vunpack.c.l.b16 %v1830
        %v2126 = vpack.c.b16 %v1983, %v1982
        %v2127 = vpack.c.b16 %v1985, %v1984
        %v2128 = vpack.c.b16 %v1987, %v1986
        %v2129 = vpack.c.b16 %v1989, %v1988
        %v2130 = vpack.c.b16 %v1991, %v1990
        %v2131 = vpack.c.b16 %v1993, %v1992
        %v2132 = vpack.c.b16 %v1995, %v1994
        %v2133 = vpack.c.b16 %v1997, %v1996
        %v2134 = vpack.c.b16 %v1999, %v1998
        %v2135 = vpack.c.b16 %v2001, %v2000
        %v2136 = vpack.c.b16 %v2003, %v2002
        %v2137 = vpack.c.b16 %v2005, %v2004
        %v2138 = vpack.c.b16 %v2007, %v2006
        %v2139 = vpack.c.b16 %v2009, %v2008
        %v2140 = vpack.c.b16 %v2011, %v2010
        %v2141 = vpack.c.b16 %v2013, %v2012
        %v2142 = vpack.c.b16 %v2015, %v2014
        %v2143 = vpack.c.b16 %v2017, %v2016
        %v2144 = vpack.c.b16 %v2019, %v2018
        %v2145 = vpack.c.b16 %v2021, %v2020
        %v2146 = vpack.c.b16 %v2023, %v2022
        %v2147 = vpack.c.b16 %v2025, %v2024
        %v2148 = vpack.c.b16 %v2027, %v2026
        %v2149 = vpack.c.b16 %v2029, %v2028
        %v2150 = vpack.c.b16 %v2031, %v2030
        %v2151 = vpack.c.b16 %v2033, %v2032
        %v2152 = vpack.c.b16 %v2035, %v2034
        %v2153 = vpack.c.b16 %v2037, %v2036
        %v2154 = vpack.c.b16 %v2039, %v2038
        %v2155 = vpack.c.b16 %v2041, %v2040
        %v2156 = vpack.c.b16 %v2043, %v2042
        %v2157 = vpack.c.b16 %v2045, %v2044
        %v2158 = vpack.c.b16 %v2047, %v2046
        %v2159 = vpack.c.b16 %v2049, %v2048
        %v2160 = vpack.c.b16 %v2051, %v2050
        %v2161 = vpack.c.b16 %v2053, %v2052
        %v2162 = vpack.c.b16 %v2055, %v2054
        %v2163 = vpack.c.b16 %v2057, %v2056
        %v2164 = vpack.c.b16 %v2059, %v2058
        %v2165 = vpack.c.b16 %v2061, %v2060
        %v2166 = vpack.c.b16 %v2063, %v2062
        %v2167 = vpack.c.b16 %v2065, %v2064
        %v2168 = vpack.c.b16 %v2067, %v2066
        %v2169 = vpack.c.b16 %v2069, %v2068
        %v2170 = vpack.c.b16 %v2071, %v2070
        %v2171 = vpack.c.b16 %v2073, %v2072
        %v2172 = vpack.c.b16 %v2075, %v2074
        %v2173 = vpack.c.b16 %v2077, %v2076
        %v2174 = vpack.c.b16 %v2079, %v2078
        %v2175 = vpack.c.b16 %v2081, %v2080
        %v2176 = vpack.c.b16 %v2083, %v2082
        %v2177 = vpack.c.b16 %v2085, %v2084
        %v2178 = vpack.c.b16 %v2087, %v2086
        %v2179 = vpack.c.b16 %v2089, %v2088
        %v2180 = vpack.c.b16 %v2091, %v2090
        %v2181 = vpack.c.b16 %v2093, %v2092
        %v2182 = vpack.c.b16 %v2095, %v2094
        %v2183 = vpack.c.b16 %v2097, %v2096
        %v2184 = vpack.c.b16 %v2099, %v2098
        %v2185 = vpack.c.b16 %v2101, %v2100
        %v2186 = vpack.c.b16 %v2103, %v2102
        %v2187 = vpack.c.b16 %v2105, %v2104
        %v2188 = vpack.c.b16 %v2107, %v2106
        %v2189 = vpack.c.b16 %v2109, %v2108
        %v2190 = vpack.c.b16 %v2111, %v2110
        %v2191 = vpack.c.b16 %v2113, %v2112
        %v2192 = vpack.c.b16 %v2115, %v2114
        %v2193 = vpack.c.b16 %v2117, %v2116
        %v2194 = vpack.c.b16 %v2119, %v2118
        %v2195 = vpack.c.b16 %v2121, %v2120
        %v2196 = vpack.c.b16 %v2123, %v2122
        %v2197 = vpack.c.b16 %v2125, %v2124
        %2270 = vmatprep.subr.bf16.mxu0 0
        %2271 = vmatpush1.bf16.msra.mxu0 %v2126
        %2272 = vmatprep.subr.bf16.mxu0 0
        %2273 = vmatpush1.bf16.msra.mxu0 %v2127
        %2274 = vmatprep.subr.bf16.mxu0 0
        %2275 = vmatpush1.bf16.msra.mxu0 %v2128
        %2276 = vmatprep.subr.bf16.mxu0 0
        %2277 = vmatpush1.bf16.msra.mxu0 %v2129
        %2278 = vmatprep.subr.bf16.mxu0 0
        %2279 = vmatpush1.bf16.msra.mxu0 %v2130
        %2280 = vmatprep.subr.bf16.mxu0 0
        %2281 = vmatpush1.bf16.msra.mxu0 %v2131
        %2282 = vmatprep.subr.bf16.mxu0 0
        %2283 = vmatpush1.bf16.msra.mxu0 %v2132
        %2284 = vmatprep.subr.bf16.mxu0 0
        %2285 = vmatpush1.bf16.msra.mxu0 %v2133
        %2286 = vmatprep.subr.bf16.mxu0 0
        %2287 = vmatpush1.bf16.msra.mxu0 %v2134
        %2288 = vmatprep.subr.bf16.mxu0 0
        %2289 = vmatpush1.bf16.msra.mxu0 %v2135
        %2290 = vmatprep.subr.bf16.mxu0 0
        %2291 = vmatpush1.bf16.msra.mxu0 %v2136
        %2292 = vmatprep.subr.bf16.mxu0 0
        %2293 = vmatpush1.bf16.msra.mxu0 %v2137
        %2294 = vmatprep.subr.bf16.mxu0 0
        %2295 = vmatpush1.bf16.msra.mxu0 %v2138
        %2296 = vmatprep.subr.bf16.mxu0 0
        %2297 = vmatpush1.bf16.msra.mxu0 %v2139
        %2298 = vmatprep.subr.bf16.mxu0 0
        %2299 = vmatpush1.bf16.msra.mxu0 %v2140
        %2300 = vmatprep.subr.bf16.mxu0 0
        %2301 = vmatpush1.bf16.msra.mxu0 %v2141
        %2302 = vmatprep.mubr.bf16.mxu0 %v1472
        %2303 = vmatmul.mubr.bf16.gmra.mrb[0].mxu0 %v1471
        %v2304 = vpop.f32.mrb[0].mxu0
        %v2305 = vadd.f32 %v1836, %v2304
        %v2306 = vpop.f32.mrb[0].mxu0
        %v2307 = vpop.f32.mrb[0].mxu0
        %v2308 = vadd.f32 %v1836, %v2307
        %v2309 = vpop.f32.mrb[0].mxu0
        %2310 = vmatprep.mubr.bf16.mxu0 %v1481
        %2311 = vmatmul.mubr.bf16.gmra.mrb[0].mxu0 %v1480
        %v2312 = vpop.f32.mrb[0].mxu0
        %v2313 = vadd.f32 %v1836, %v2312
        %v2314 = vpop.f32.mrb[0].mxu0
        %v2315 = vpop.f32.mrb[0].mxu0
        %v2316 = vadd.f32 %v1836, %v2315
        %v2317 = vpop.f32.mrb[0].mxu0
        %2318 = vmatprep.mubr.bf16.mxu0 %v1490
        %2319 = vmatmul.mubr.bf16.gmra.mrb[0].mxu0 %v1489
        %v2320 = vpop.f32.mrb[0].mxu0
        %v2321 = vadd.f32 %v1836, %v2320
        %v2322 = vpop.f32.mrb[0].mxu0
        %v2323 = vpop.f32.mrb[0].mxu0
        %v2324 = vadd.f32 %v1836, %v2323
        %v2325 = vpop.f32.mrb[0].mxu0
        %2326 = vmatprep.mubr.bf16.mxu0 %v1499
        %2327 = vmatmul.mubr.bf16.gmra.mrb[0].mxu0 %v1498
        %v2328 = vpop.f32.mrb[0].mxu0
        %v2329 = vadd.f32 %v1836, %v2328
        %v2330 = vpop.f32.mrb[0].mxu0
        %v2331 = vpop.f32.mrb[0].mxu0
        %v2332 = vadd.f32 %v1836, %v2331
        %v2333 = vpop.f32.mrb[0].mxu0
        %2334 = vmatprep.mubr.bf16.mxu0 %v1508
        %2335 = vmatmul.mubr.bf16.gmra.mrb[0].mxu0 %v1507
        %v2336 = vpop.f32.mrb[0].mxu0
        %v2337 = vadd.f32 %v1836, %v2336
        %v2338 = vpop.f32.mrb[0].mxu0
        %v2339 = vpop.f32.mrb[0].mxu0
        %v2340 = vadd.f32 %v1836, %v2339
        %v2341 = vpop.f32.mrb[0].mxu0
        %2342 = vmatprep.mubr.bf16.mxu0 %v1517
        %2343 = vmatmul.mubr.bf16.gmra.mrb[0].mxu0 %v1516
        %v2344 = vpop.f32.mrb[0].mxu0
        %v2345 = vadd.f32 %v1836, %v2344
        %v2346 = vpop.f32.mrb[0].mxu0
        %v2347 = vpop.f32.mrb[0].mxu0
        %v2348 = vadd.f32 %v1836, %v2347
        %v2349 = vpop.f32.mrb[0].mxu0
        %2350 = vmatprep.mubr.bf16.mxu0 %v1526
        %2351 = vmatmul.mubr.bf16.gmra.mrb[0].mxu0 %v1525
        %v2352 = vpop.f32.mrb[0].mxu0
        %v2353 = vadd.f32 %v1836, %v2352
        %v2354 = vpop.f32.mrb[0].mxu0
        %v2355 = vpop.f32.mrb[0].mxu0
        %v2356 = vadd.f32 %v1836, %v2355
        %v2357 = vpop.f32.mrb[0].mxu0
        %2358 = vmatprep.mubr.bf16.mxu0 %v1535
        %2359 = vmatmul.mubr.bf16.gmra.mrb[0].mxu0 %v1534
        %v2360 = vpop.f32.mrb[0].mxu0
        %v2361 = vadd.f32 %v1836, %v2360
        %v2362 = vpop.f32.mrb[0].mxu0
        %v2363 = vpop.f32.mrb[0].mxu0
        %v2364 = vadd.f32 %v1836, %v2363
        %v2365 = vpop.f32.mrb[0].mxu0
        %2366 = vmatprep.mubr.bf16.mxu0 %v1544
        %2367 = vmatmul.mubr.bf16.gmra.mrb[0].mxu0 %v1543
        %v2368 = vpop.f32.mrb[0].mxu0
        %v2369 = vadd.f32 %v1836, %v2368
        %v2370 = vpop.f32.mrb[0].mxu0
        %v2371 = vpop.f32.mrb[0].mxu0
        %v2372 = vadd.f32 %v1836, %v2371
        %v2373 = vpop.f32.mrb[0].mxu0
        %2374 = vmatprep.mubr.bf16.mxu0 %v1553
        %2375 = vmatmul.mubr.bf16.gmra.mrb[0].mxu0 %v1552
        %v2376 = vpop.f32.mrb[0].mxu0
        %v2377 = vadd.f32 %v1836, %v2376
        %v2378 = vpop.f32.mrb[0].mxu0
        %v2379 = vpop.f32.mrb[0].mxu0
        %v2380 = vadd.f32 %v1836, %v2379
        %v2381 = vpop.f32.mrb[0].mxu0
        %2382 = vmatprep.mubr.bf16.mxu0 %v1562
        %2383 = vmatmul.mubr.bf16.gmra.mrb[0].mxu0 %v1561
        %v2384 = vpop.f32.mrb[0].mxu0
        %v2385 = vadd.f32 %v1836, %v2384
        %v2386 = vpop.f32.mrb[0].mxu0
        %v2387 = vpop.f32.mrb[0].mxu0
        %v2388 = vadd.f32 %v1836, %v2387
        %v2389 = vpop.f32.mrb[0].mxu0
        %2390 = vmatprep.mubr.bf16.mxu0 %v1571
        %2391 = vmatmul.mubr.bf16.gmra.mrb[0].mxu0 %v1570
        %v2392 = vpop.f32.mrb[0].mxu0
        %v2393 = vadd.f32 %v1836, %v2392
        %v2394 = vpop.f32.mrb[0].mxu0
        %v2395 = vpop.f32.mrb[0].mxu0
        %v2396 = vadd.f32 %v1836, %v2395
        %v2397 = vpop.f32.mrb[0].mxu0
        %2398 = vmatprep.mubr.bf16.mxu0 %v1580
        %2399 = vmatmul.mubr.bf16.gmra.mrb[0].mxu0 %v1579
        %v2400 = vpop.f32.mrb[0].mxu0
        %v2401 = vadd.f32 %v1836, %v2400
        %v2402 = vpop.f32.mrb[0].mxu0
        %v2403 = vpop.f32.mrb[0].mxu0
        %v2404 = vadd.f32 %v1836, %v2403
        %v2405 = vpop.f32.mrb[0].mxu0
        %2406 = vmatprep.mubr.bf16.mxu0 %v1589
        %2407 = vmatmul.mubr.bf16.gmra.mrb[0].mxu0 %v1588
        %v2408 = vpop.f32.mrb[0].mxu0
        %v2409 = vadd.f32 %v1836, %v2408
        %v2410 = vpop.f32.mrb[0].mxu0
        %v2411 = vpop.f32.mrb[0].mxu0
        %v2412 = vadd.f32 %v1836, %v2411
        %v2413 = vpop.f32.mrb[0].mxu0
        %2414 = vmatprep.mubr.bf16.mxu0 %v1598
        %2415 = vmatmul.mubr.bf16.gmra.mrb[0].mxu0 %v1597
        %v2416 = vpop.f32.mrb[0].mxu0
        %v2417 = vadd.f32 %v1836, %v2416
        %v2418 = vpop.f32.mrb[0].mxu0
        %v2419 = vpop.f32.mrb[0].mxu0
        %v2420 = vadd.f32 %v1836, %v2419
        %v2421 = vpop.f32.mrb[0].mxu0
        %2422 = vmatprep.mubr.bf16.mxu0 %v1607
        %2423 = vmatmul.mubr.bf16.gmra.mrb[0].mxu0 %v1606
        %v2424 = vpop.f32.mrb[0].mxu0
        %v2425 = vadd.f32 %v1836, %v2424
        %v2426 = vpop.f32.mrb[0].mxu0
        %v2427 = vpop.f32.mrb[0].mxu0
        %v2428 = vadd.f32 %v1836, %v2427
        %v2429 = vpop.f32.mrb[0].mxu0
        %2430 = vmatprep.mubr.bf16.mxu0 %v1616
        %2431 = vmatmul.mubr.bf16.gmra.mrb[0].mxu0 %v1615
        %v2432 = vpop.f32.mrb[0].mxu0
        %v2433 = vadd.f32 %v1836, %v2432
        %v2434 = vpop.f32.mrb[0].mxu0
        %v2435 = vpop.f32.mrb[0].mxu0
        %v2436 = vadd.f32 %v1836, %v2435
        %v2437 = vpop.f32.mrb[0].mxu0
        %2438 = vmatprep.mubr.bf16.mxu0 %v1625
        %2439 = vmatmul.mubr.bf16.gmra.mrb[0].mxu0 %v1624
        %v2440 = vpop.f32.mrb[0].mxu0
        %v2441 = vadd.f32 %v1836, %v2440
        %v2442 = vpop.f32.mrb[0].mxu0
        %v2443 = vpop.f32.mrb[0].mxu0
        %v2444 = vadd.f32 %v1836, %v2443
        %v2445 = vpop.f32.mrb[0].mxu0
        %2446 = vmatprep.mubr.bf16.mxu0 %v1634
        %2447 = vmatmul.mubr.bf16.gmra.mrb[0].mxu0 %v1633
        %v2448 = vpop.f32.mrb[0].mxu0
        %v2449 = vadd.f32 %v1836, %v2448
        %v2450 = vpop.f32.mrb[0].mxu0
        %v2451 = vpop.f32.mrb[0].mxu0
        %v2452 = vadd.f32 %v1836, %v2451
        %v2453 = vpop.f32.mrb[0].mxu0
        %2454 = vmatprep.mubr.bf16.mxu0 %v1643
        %2455 = vmatmul.mubr.bf16.gmra.mrb[0].mxu0 %v1642
        %v2456 = vpop.f32.mrb[0].mxu0
        %v2457 = vadd.f32 %v1836, %v2456
        %v2458 = vpop.f32.mrb[0].mxu0
        %v2459 = vpop.f32.mrb[0].mxu0
        %v2460 = vadd.f32 %v1836, %v2459
        %v2461 = vpop.f32.mrb[0].mxu0
        %2462 = vmatprep.mubr.bf16.mxu0 %v1652
        %2463 = vmatmul.mubr.bf16.gmra.mrb[0].mxu0 %v1651
        %v2464 = vpop.f32.mrb[0].mxu0
        %v2465 = vadd.f32 %v1836, %v2464
        %v2466 = vpop.f32.mrb[0].mxu0
        %v2467 = vpop.f32.mrb[0].mxu0
        %v2468 = vadd.f32 %v1836, %v2467
        %v2469 = vpop.f32.mrb[0].mxu0
        %2470 = vmatprep.mubr.bf16.mxu0 %v1661
        %2471 = vmatmul.mubr.bf16.gmra.mrb[0].mxu0 %v1660
        %v2472 = vpop.f32.mrb[0].mxu0
        %v2473 = vadd.f32 %v1836, %v2472
        %v2474 = vpop.f32.mrb[0].mxu0
        %v2475 = vpop.f32.mrb[0].mxu0
        %v2476 = vadd.f32 %v1836, %v2475
        %v2477 = vpop.f32.mrb[0].mxu0
        %2478 = vmatprep.mubr.bf16.mxu0 %v1670
        %2479 = vmatmul.mubr.bf16.gmra.mrb[0].mxu0 %v1669
        %v2480 = vpop.f32.mrb[0].mxu0
        %v2481 = vadd.f32 %v1836, %v2480
        %v2482 = vpop.f32.mrb[0].mxu0
        %v2483 = vpop.f32.mrb[0].mxu0
        %v2484 = vadd.f32 %v1836, %v2483
        %v2485 = vpop.f32.mrb[0].mxu0
        %2486 = vmatprep.mubr.bf16.mxu0 %v1679
        %2487 = vmatmul.mubr.bf16.gmra.mrb[0].mxu0 %v1678
        %v2488 = vpop.f32.mrb[0].mxu0
        %v2489 = vadd.f32 %v1836, %v2488
        %v2490 = vpop.f32.mrb[0].mxu0
        %v2491 = vpop.f32.mrb[0].mxu0
        %v2492 = vadd.f32 %v1836, %v2491
        %v2493 = vpop.f32.mrb[0].mxu0
        %2494 = vdwg.mxu0
        %2495 = vmatprep.subr.bf16.mxu0 0
        %2496 = vmatpush1.bf16.msra.mxu0 %v2142
        %2497 = vmatprep.subr.bf16.mxu0 0
        %2498 = vmatpush1.bf16.msra.mxu0 %v2143
        %2499 = vmatprep.subr.bf16.mxu0 0
        %2500 = vmatpush1.bf16.msra.mxu0 %v2144
        %2501 = vmatprep.subr.bf16.mxu0 0
        %2502 = vmatpush1.bf16.msra.mxu0 %v2145
        %2503 = vmatprep.subr.bf16.mxu0 0
        %2504 = vmatpush1.bf16.msra.mxu0 %v2146
        %2505 = vmatprep.subr.bf16.mxu0 0
        %2506 = vmatpush1.bf16.msra.mxu0 %v2147
        %2507 = vmatprep.subr.bf16.mxu0 0
        %2508 = vmatpush1.bf16.msra.mxu0 %v2148
        %2509 = vmatprep.subr.bf16.mxu0 0
        %2510 = vmatpush1.bf16.msra.mxu0 %v2149
        %2511 = vmatprep.subr.bf16.mxu0 0
        %2512 = vmatpush1.bf16.msra.mxu0 %v2150
        %2513 = vmatprep.subr.bf16.mxu0 0
        %2514 = vmatpush1.bf16.msra.mxu0 %v2151
        %2515 = vmatprep.subr.bf16.mxu0 0
        %2516 = vmatpush1.bf16.msra.mxu0 %v2152
        %2517 = vmatprep.subr.bf16.mxu0 0
        %2518 = vmatpush1.bf16.msra.mxu0 %v2153
        %2519 = vmatprep.subr.bf16.mxu0 0
        %2520 = vmatpush1.bf16.msra.mxu0 %v2154
        %2521 = vmatprep.subr.bf16.mxu0 0
        %2522 = vmatpush1.bf16.msra.mxu0 %v2155
        %2523 = vmatprep.subr.bf16.mxu0 0
        %2524 = vmatpush1.bf16.msra.mxu0 %v2156
        %2525 = vmatprep.subr.bf16.mxu0 0
        %2526 = vmatpush1.bf16.msra.mxu0 %v2157
        %2527 = vmatprep.mubr.bf16.mxu0 %v1474
        %2528 = vmatmul.mubr.bf16.gmra.mrb[0].mxu0 %v1473
        %v2529 = vpop.f32.mrb[0].mxu0
        %v2530 = vadd.f32 %v2305, %v2529
        %v2531 = vpop.f32.mrb[0].mxu0
        %v2532 = vpop.f32.mrb[0].mxu0
        %v2533 = vadd.f32 %v2308, %v2532
        %v2534 = vpop.f32.mrb[0].mxu0
        %2535 = vmatprep.mubr.bf16.mxu0 %v1483
        %2536 = vmatmul.mubr.bf16.gmra.mrb[0].mxu0 %v1482
        %v2537 = vpop.f32.mrb[0].mxu0
        %v2538 = vadd.f32 %v2313, %v2537
        %v2539 = vpop.f32.mrb[0].mxu0
        %v2540 = vpop.f32.mrb[0].mxu0
        %v2541 = vadd.f32 %v2316, %v2540
        %v2542 = vpop.f32.mrb[0].mxu0
        %2543 = vmatprep.mubr.bf16.mxu0 %v1492
        %2544 = vmatmul.mubr.bf16.gmra.mrb[0].mxu0 %v1491
        %v2545 = vpop.f32.mrb[0].mxu0
        %v2546 = vadd.f32 %v2321, %v2545
        %v2547 = vpop.f32.mrb[0].mxu0
        %v2548 = vpop.f32.mrb[0].mxu0
        %v2549 = vadd.f32 %v2324, %v2548
        %v2550 = vpop.f32.mrb[0].mxu0
        %2551 = vmatprep.mubr.bf16.mxu0 %v1501
        %2552 = vmatmul.mubr.bf16.gmra.mrb[0].mxu0 %v1500
        %v2553 = vpop.f32.mrb[0].mxu0
        %v2554 = vadd.f32 %v2329, %v2553
        %v2555 = vpop.f32.mrb[0].mxu0
        %v2556 = vpop.f32.mrb[0].mxu0
        %v2557 = vadd.f32 %v2332, %v2556
        %v2558 = vpop.f32.mrb[0].mxu0
        %2559 = vmatprep.mubr.bf16.mxu0 %v1510
        %2560 = vmatmul.mubr.bf16.gmra.mrb[0].mxu0 %v1509
        %v2561 = vpop.f32.mrb[0].mxu0
        %v2562 = vadd.f32 %v2337, %v2561
        %v2563 = vpop.f32.mrb[0].mxu0
        %v2564 = vpop.f32.mrb[0].mxu0
        %v2565 = vadd.f32 %v2340, %v2564
        %v2566 = vpop.f32.mrb[0].mxu0
        %2567 = vmatprep.mubr.bf16.mxu0 %v1519
        %2568 = vmatmul.mubr.bf16.gmra.mrb[0].mxu0 %v1518
        %v2569 = vpop.f32.mrb[0].mxu0
        %v2570 = vadd.f32 %v2345, %v2569
        %v2571 = vpop.f32.mrb[0].mxu0
        %v2572 = vpop.f32.mrb[0].mxu0
        %v2573 = vadd.f32 %v2348, %v2572
        %v2574 = vpop.f32.mrb[0].mxu0
        %2575 = vmatprep.mubr.bf16.mxu0 %v1528
        %2576 = vmatmul.mubr.bf16.gmra.mrb[0].mxu0 %v1527
        %v2577 = vpop.f32.mrb[0].mxu0
        %v2578 = vadd.f32 %v2353, %v2577
        %v2579 = vpop.f32.mrb[0].mxu0
        %v2580 = vpop.f32.mrb[0].mxu0
        %v2581 = vadd.f32 %v2356, %v2580
        %v2582 = vpop.f32.mrb[0].mxu0
        %2583 = vmatprep.mubr.bf16.mxu0 %v1537
        %2584 = vmatmul.mubr.bf16.gmra.mrb[0].mxu0 %v1536
        %v2585 = vpop.f32.mrb[0].mxu0
        %v2586 = vadd.f32 %v2361, %v2585
        %v2587 = vpop.f32.mrb[0].mxu0
        %v2588 = vpop.f32.mrb[0].mxu0
        %v2589 = vadd.f32 %v2364, %v2588
        %v2590 = vpop.f32.mrb[0].mxu0
        %2591 = vmatprep.mubr.bf16.mxu0 %v1546
        %2592 = vmatmul.mubr.bf16.gmra.mrb[0].mxu0 %v1545
        %v2593 = vpop.f32.mrb[0].mxu0
        %v2594 = vadd.f32 %v2369, %v2593
        %v2595 = vpop.f32.mrb[0].mxu0
        %v2596 = vpop.f32.mrb[0].mxu0
        %v2597 = vadd.f32 %v2372, %v2596
        %v2598 = vpop.f32.mrb[0].mxu0
        %2599 = vmatprep.mubr.bf16.mxu0 %v1555
        %2600 = vmatmul.mubr.bf16.gmra.mrb[0].mxu0 %v1554
        %v2601 = vpop.f32.mrb[0].mxu0
        %v2602 = vadd.f32 %v2377, %v2601
        %v2603 = vpop.f32.mrb[0].mxu0
        %v2604 = vpop.f32.mrb[0].mxu0
        %v2605 = vadd.f32 %v2380, %v2604
        %v2606 = vpop.f32.mrb[0].mxu0
        %2607 = vmatprep.mubr.bf16.mxu0 %v1564
        %2608 = vmatmul.mubr.bf16.gmra.mrb[0].mxu0 %v1563
        %v2609 = vpop.f32.mrb[0].mxu0
        %v2610 = vadd.f32 %v2385, %v2609
        %v2611 = vpop.f32.mrb[0].mxu0
        %v2612 = vpop.f32.mrb[0].mxu0
        %v2613 = vadd.f32 %v2388, %v2612
        %v2614 = vpop.f32.mrb[0].mxu0
        %2615 = vmatprep.mubr.bf16.mxu0 %v1573
        %2616 = vmatmul.mubr.bf16.gmra.mrb[0].mxu0 %v1572
        %v2617 = vpop.f32.mrb[0].mxu0
        %v2618 = vadd.f32 %v2393, %v2617
        %v2619 = vpop.f32.mrb[0].mxu0
        %v2620 = vpop.f32.mrb[0].mxu0
        %v2621 = vadd.f32 %v2396, %v2620
        %v2622 = vpop.f32.mrb[0].mxu0
        %2623 = vmatprep.mubr.bf16.mxu0 %v1582
        %2624 = vmatmul.mubr.bf16.gmra.mrb[0].mxu0 %v1581
        %v2625 = vpop.f32.mrb[0].mxu0
        %v2626 = vadd.f32 %v2401, %v2625
        %v2627 = vpop.f32.mrb[0].mxu0
        %v2628 = vpop.f32.mrb[0].mxu0
        %v2629 = vadd.f32 %v2404, %v2628
        %v2630 = vpop.f32.mrb[0].mxu0
        %2631 = vmatprep.mubr.bf16.mxu0 %v1591
        %2632 = vmatmul.mubr.bf16.gmra.mrb[0].mxu0 %v1590
        %v2633 = vpop.f32.mrb[0].mxu0
        %v2634 = vadd.f32 %v2409, %v2633
        %v2635 = vpop.f32.mrb[0].mxu0
        %v2636 = vpop.f32.mrb[0].mxu0
        %v2637 = vadd.f32 %v2412, %v2636
        %v2638 = vpop.f32.mrb[0].mxu0
        %2639 = vmatprep.mubr.bf16.mxu0 %v1600
        %2640 = vmatmul.mubr.bf16.gmra.mrb[0].mxu0 %v1599
        %v2641 = vpop.f32.mrb[0].mxu0
        %v2642 = vadd.f32 %v2417, %v2641
        %v2643 = vpop.f32.mrb[0].mxu0
        %v2644 = vpop.f32.mrb[0].mxu0
        %v2645 = vadd.f32 %v2420, %v2644
        %v2646 = vpop.f32.mrb[0].mxu0
        %2647 = vmatprep.mubr.bf16.mxu0 %v1609
        %2648 = vmatmul.mubr.bf16.gmra.mrb[0].mxu0 %v1608
        %v2649 = vpop.f32.mrb[0].mxu0
        %v2650 = vadd.f32 %v2425, %v2649
        %v2651 = vpop.f32.mrb[0].mxu0
        %v2652 = vpop.f32.mrb[0].mxu0
        %v2653 = vadd.f32 %v2428, %v2652
        %v2654 = vpop.f32.mrb[0].mxu0
        %2655 = vmatprep.mubr.bf16.mxu0 %v1618
        %2656 = vmatmul.mubr.bf16.gmra.mrb[0].mxu0 %v1617
        %v2657 = vpop.f32.mrb[0].mxu0
        %v2658 = vadd.f32 %v2433, %v2657
        %v2659 = vpop.f32.mrb[0].mxu0
        %v2660 = vpop.f32.mrb[0].mxu0
        %v2661 = vadd.f32 %v2436, %v2660
        %v2662 = vpop.f32.mrb[0].mxu0
        %2663 = vmatprep.mubr.bf16.mxu0 %v1627
        %2664 = vmatmul.mubr.bf16.gmra.mrb[0].mxu0 %v1626
        %v2665 = vpop.f32.mrb[0].mxu0
        %v2666 = vadd.f32 %v2441, %v2665
        %v2667 = vpop.f32.mrb[0].mxu0
        %v2668 = vpop.f32.mrb[0].mxu0
        %v2669 = vadd.f32 %v2444, %v2668
        %v2670 = vpop.f32.mrb[0].mxu0
        %2671 = vmatprep.mubr.bf16.mxu0 %v1636
        %2672 = vmatmul.mubr.bf16.gmra.mrb[0].mxu0 %v1635
        %v2673 = vpop.f32.mrb[0].mxu0
        %v2674 = vadd.f32 %v2449, %v2673
        %v2675 = vpop.f32.mrb[0].mxu0
        %v2676 = vpop.f32.mrb[0].mxu0
        %v2677 = vadd.f32 %v2452, %v2676
        %v2678 = vpop.f32.mrb[0].mxu0
        %2679 = vmatprep.mubr.bf16.mxu0 %v1645
        %2680 = vmatmul.mubr.bf16.gmra.mrb[0].mxu0 %v1644
        %v2681 = vpop.f32.mrb[0].mxu0
        %v2682 = vadd.f32 %v2457, %v2681
        %v2683 = vpop.f32.mrb[0].mxu0
        %v2684 = vpop.f32.mrb[0].mxu0
        %v2685 = vadd.f32 %v2460, %v2684
        %v2686 = vpop.f32.mrb[0].mxu0
        %2687 = vmatprep.mubr.bf16.mxu0 %v1654
        %2688 = vmatmul.mubr.bf16.gmra.mrb[0].mxu0 %v1653
        %v2689 = vpop.f32.mrb[0].mxu0
        %v2690 = vadd.f32 %v2465, %v2689
        %v2691 = vpop.f32.mrb[0].mxu0
        %v2692 = vpop.f32.mrb[0].mxu0
        %v2693 = vadd.f32 %v2468, %v2692
        %v2694 = vpop.f32.mrb[0].mxu0
        %2695 = vmatprep.mubr.bf16.mxu0 %v1663
        %2696 = vmatmul.mubr.bf16.gmra.mrb[0].mxu0 %v1662
        %v2697 = vpop.f32.mrb[0].mxu0
        %v2698 = vadd.f32 %v2473, %v2697
        %v2699 = vpop.f32.mrb[0].mxu0
        %v2700 = vpop.f32.mrb[0].mxu0
        %v2701 = vadd.f32 %v2476, %v2700
        %v2702 = vpop.f32.mrb[0].mxu0
        %2703 = vmatprep.mubr.bf16.mxu0 %v1672
        %2704 = vmatmul.mubr.bf16.gmra.mrb[0].mxu0 %v1671
        %v2705 = vpop.f32.mrb[0].mxu0
        %v2706 = vadd.f32 %v2481, %v2705
        %v2707 = vpop.f32.mrb[0].mxu0
        %v2708 = vpop.f32.mrb[0].mxu0
        %v2709 = vadd.f32 %v2484, %v2708
        %v2710 = vpop.f32.mrb[0].mxu0
        %2711 = vmatprep.mubr.bf16.mxu0 %v1681
        %2712 = vmatmul.mubr.bf16.gmra.mrb[0].mxu0 %v1680
        %v2713 = vpop.f32.mrb[0].mxu0
        %v2714 = vadd.f32 %v2489, %v2713
        %v2715 = vpop.f32.mrb[0].mxu0
        %v2716 = vpop.f32.mrb[0].mxu0
        %v2717 = vadd.f32 %v2492, %v2716
        %v2718 = vpop.f32.mrb[0].mxu0
        %2719 = vdwg.mxu0
        %2720 = vmatprep.subr.bf16.mxu0 0
        %2721 = vmatpush1.bf16.msra.mxu0 %v2158
        %2722 = vmatprep.subr.bf16.mxu0 0
        %2723 = vmatpush1.bf16.msra.mxu0 %v2159
        %2724 = vmatprep.subr.bf16.mxu0 0
        %2725 = vmatpush1.bf16.msra.mxu0 %v2160
        %2726 = vmatprep.subr.bf16.mxu0 0
        %2727 = vmatpush1.bf16.msra.mxu0 %v2161
        %2728 = vmatprep.subr.bf16.mxu0 0
        %2729 = vmatpush1.bf16.msra.mxu0 %v2162
        %2730 = vmatprep.subr.bf16.mxu0 0
        %2731 = vmatpush1.bf16.msra.mxu0 %v2163
        %2732 = vmatprep.subr.bf16.mxu0 0
        %2733 = vmatpush1.bf16.msra.mxu0 %v2164
        %2734 = vmatprep.subr.bf16.mxu0 0
        %2735 = vmatpush1.bf16.msra.mxu0 %v2165
        %2736 = vmatprep.subr.bf16.mxu0 0
        %2737 = vmatpush1.bf16.msra.mxu0 %v2166
        %2738 = vmatprep.subr.bf16.mxu0 0
        %2739 = vmatpush1.bf16.msra.mxu0 %v2167
        %2740 = vmatprep.subr.bf16.mxu0 0
        %2741 = vmatpush1.bf16.msra.mxu0 %v2168
        %2742 = vmatprep.subr.bf16.mxu0 0
        %2743 = vmatpush1.bf16.msra.mxu0 %v2169
        %2744 = vmatprep.subr.bf16.mxu0 0
        %2745 = vmatpush1.bf16.msra.mxu0 %v2170
        %2746 = vmatprep.subr.bf16.mxu0 0
        %2747 = vmatpush1.bf16.msra.mxu0 %v2171
        %2748 = vmatprep.subr.bf16.mxu0 0
        %2749 = vmatpush1.bf16.msra.mxu0 %v2172
        %2750 = vmatprep.subr.bf16.mxu0 0
        %2751 = vmatpush1.bf16.msra.mxu0 %v2173
        %2752 = vmatprep.mubr.bf16.mxu0 %v1476
        %2753 = vmatmul.mubr.bf16.gmra.mrb[0].mxu0 %v1475
        %v2754 = vpop.f32.mrb[0].mxu0
        %v2755 = vadd.f32 %v2530, %v2754
        %v2756 = vpop.f32.mrb[0].mxu0
        %v2757 = vpop.f32.mrb[0].mxu0
        %v2758 = vadd.f32 %v2533, %v2757
        %v2759 = vpop.f32.mrb[0].mxu0
        %2760 = vmatprep.mubr.bf16.mxu0 %v1485
        %2761 = vmatmul.mubr.bf16.gmra.mrb[0].mxu0 %v1484
        %v2762 = vpop.f32.mrb[0].mxu0
        %v2763 = vadd.f32 %v2538, %v2762
        %v2764 = vpop.f32.mrb[0].mxu0
        %v2765 = vpop.f32.mrb[0].mxu0
        %v2766 = vadd.f32 %v2541, %v2765
        %v2767 = vpop.f32.mrb[0].mxu0
        %2768 = vmatprep.mubr.bf16.mxu0 %v1494
        %2769 = vmatmul.mubr.bf16.gmra.mrb[0].mxu0 %v1493
        %v2770 = vpop.f32.mrb[0].mxu0
        %v2771 = vadd.f32 %v2546, %v2770
        %v2772 = vpop.f32.mrb[0].mxu0
        %v2773 = vpop.f32.mrb[0].mxu0
        %v2774 = vadd.f32 %v2549, %v2773
        %v2775 = vpop.f32.mrb[0].mxu0
        %2776 = vmatprep.mubr.bf16.mxu0 %v1503
        %2777 = vmatmul.mubr.bf16.gmra.mrb[0].mxu0 %v1502
        %v2778 = vpop.f32.mrb[0].mxu0
        %v2779 = vadd.f32 %v2554, %v2778
        %v2780 = vpop.f32.mrb[0].mxu0
        %v2781 = vpop.f32.mrb[0].mxu0
        %v2782 = vadd.f32 %v2557, %v2781
        %v2783 = vpop.f32.mrb[0].mxu0
        %2784 = vmatprep.mubr.bf16.mxu0 %v1512
        %2785 = vmatmul.mubr.bf16.gmra.mrb[0].mxu0 %v1511
        %v2786 = vpop.f32.mrb[0].mxu0
        %v2787 = vadd.f32 %v2562, %v2786
        %v2788 = vpop.f32.mrb[0].mxu0
        %v2789 = vpop.f32.mrb[0].mxu0
        %v2790 = vadd.f32 %v2565, %v2789
        %v2791 = vpop.f32.mrb[0].mxu0
        %2792 = vmatprep.mubr.bf16.mxu0 %v1521
        %2793 = vmatmul.mubr.bf16.gmra.mrb[0].mxu0 %v1520
        %v2794 = vpop.f32.mrb[0].mxu0
        %v2795 = vadd.f32 %v2570, %v2794
        %v2796 = vpop.f32.mrb[0].mxu0
        %v2797 = vpop.f32.mrb[0].mxu0
        %v2798 = vadd.f32 %v2573, %v2797
        %v2799 = vpop.f32.mrb[0].mxu0
        %2800 = vmatprep.mubr.bf16.mxu0 %v1530
        %2801 = vmatmul.mubr.bf16.gmra.mrb[0].mxu0 %v1529
        %v2802 = vpop.f32.mrb[0].mxu0
        %v2803 = vadd.f32 %v2578, %v2802
        %v2804 = vpop.f32.mrb[0].mxu0
        %v2805 = vpop.f32.mrb[0].mxu0
        %v2806 = vadd.f32 %v2581, %v2805
        %v2807 = vpop.f32.mrb[0].mxu0
        %2808 = vmatprep.mubr.bf16.mxu0 %v1539
        %2809 = vmatmul.mubr.bf16.gmra.mrb[0].mxu0 %v1538
        %v2810 = vpop.f32.mrb[0].mxu0
        %v2811 = vadd.f32 %v2586, %v2810
        %v2812 = vpop.f32.mrb[0].mxu0
        %v2813 = vpop.f32.mrb[0].mxu0
        %v2814 = vadd.f32 %v2589, %v2813
        %v2815 = vpop.f32.mrb[0].mxu0
        %2816 = vmatprep.mubr.bf16.mxu0 %v1548
        %2817 = vmatmul.mubr.bf16.gmra.mrb[0].mxu0 %v1547
        %v2818 = vpop.f32.mrb[0].mxu0
        %v2819 = vadd.f32 %v2594, %v2818
        %v2820 = vpop.f32.mrb[0].mxu0
        %v2821 = vpop.f32.mrb[0].mxu0
        %v2822 = vadd.f32 %v2597, %v2821
        %v2823 = vpop.f32.mrb[0].mxu0
        %2824 = vmatprep.mubr.bf16.mxu0 %v1557
        %2825 = vmatmul.mubr.bf16.gmra.mrb[0].mxu0 %v1556
        %v2826 = vpop.f32.mrb[0].mxu0
        %v2827 = vadd.f32 %v2602, %v2826
        %v2828 = vpop.f32.mrb[0].mxu0
        %v2829 = vpop.f32.mrb[0].mxu0
        %v2830 = vadd.f32 %v2605, %v2829
        %v2831 = vpop.f32.mrb[0].mxu0
        %2832 = vmatprep.mubr.bf16.mxu0 %v1566
        %2833 = vmatmul.mubr.bf16.gmra.mrb[0].mxu0 %v1565
        %v2834 = vpop.f32.mrb[0].mxu0
        %v2835 = vadd.f32 %v2610, %v2834
        %v2836 = vpop.f32.mrb[0].mxu0
        %v2837 = vpop.f32.mrb[0].mxu0
        %v2838 = vadd.f32 %v2613, %v2837
        %v2839 = vpop.f32.mrb[0].mxu0
        %2840 = vmatprep.mubr.bf16.mxu0 %v1575
        %2841 = vmatmul.mubr.bf16.gmra.mrb[0].mxu0 %v1574
        %v2842 = vpop.f32.mrb[0].mxu0
        %v2843 = vadd.f32 %v2618, %v2842
        %v2844 = vpop.f32.mrb[0].mxu0
        %v2845 = vpop.f32.mrb[0].mxu0
        %v2846 = vadd.f32 %v2621, %v2845
        %v2847 = vpop.f32.mrb[0].mxu0
        %2848 = vmatprep.mubr.bf16.mxu0 %v1584
        %2849 = vmatmul.mubr.bf16.gmra.mrb[0].mxu0 %v1583
        %v2850 = vpop.f32.mrb[0].mxu0
        %v2851 = vadd.f32 %v2626, %v2850
        %v2852 = vpop.f32.mrb[0].mxu0
        %v2853 = vpop.f32.mrb[0].mxu0
        %v2854 = vadd.f32 %v2629, %v2853
        %v2855 = vpop.f32.mrb[0].mxu0
        %2856 = vmatprep.mubr.bf16.mxu0 %v1593
        %2857 = vmatmul.mubr.bf16.gmra.mrb[0].mxu0 %v1592
        %v2858 = vpop.f32.mrb[0].mxu0
        %v2859 = vadd.f32 %v2634, %v2858
        %v2860 = vpop.f32.mrb[0].mxu0
        %v2861 = vpop.f32.mrb[0].mxu0
        %v2862 = vadd.f32 %v2637, %v2861
        %v2863 = vpop.f32.mrb[0].mxu0
        %2864 = vmatprep.mubr.bf16.mxu0 %v1602
        %2865 = vmatmul.mubr.bf16.gmra.mrb[0].mxu0 %v1601
        %v2866 = vpop.f32.mrb[0].mxu0
        %v2867 = vadd.f32 %v2642, %v2866
        %v2868 = vpop.f32.mrb[0].mxu0
        %v2869 = vpop.f32.mrb[0].mxu0
        %v2870 = vadd.f32 %v2645, %v2869
        %v2871 = vpop.f32.mrb[0].mxu0
        %2872 = vmatprep.mubr.bf16.mxu0 %v1611
        %2873 = vmatmul.mubr.bf16.gmra.mrb[0].mxu0 %v1610
        %v2874 = vpop.f32.mrb[0].mxu0
        %v2875 = vadd.f32 %v2650, %v2874
        %v2876 = vpop.f32.mrb[0].mxu0
        %v2877 = vpop.f32.mrb[0].mxu0
        %v2878 = vadd.f32 %v2653, %v2877
        %v2879 = vpop.f32.mrb[0].mxu0
        %2880 = vmatprep.mubr.bf16.mxu0 %v1620
        %2881 = vmatmul.mubr.bf16.gmra.mrb[0].mxu0 %v1619
        %v2882 = vpop.f32.mrb[0].mxu0
        %v2883 = vadd.f32 %v2658, %v2882
        %v2884 = vpop.f32.mrb[0].mxu0
        %v2885 = vpop.f32.mrb[0].mxu0
        %v2886 = vadd.f32 %v2661, %v2885
        %v2887 = vpop.f32.mrb[0].mxu0
        %2888 = vmatprep.mubr.bf16.mxu0 %v1629
        %2889 = vmatmul.mubr.bf16.gmra.mrb[0].mxu0 %v1628
        %v2890 = vpop.f32.mrb[0].mxu0
        %v2891 = vadd.f32 %v2666, %v2890
        %v2892 = vpop.f32.mrb[0].mxu0
        %v2893 = vpop.f32.mrb[0].mxu0
        %v2894 = vadd.f32 %v2669, %v2893
        %v2895 = vpop.f32.mrb[0].mxu0
        %2896 = vmatprep.mubr.bf16.mxu0 %v1638
        %2897 = vmatmul.mubr.bf16.gmra.mrb[0].mxu0 %v1637
        %v2898 = vpop.f32.mrb[0].mxu0
        %v2899 = vadd.f32 %v2674, %v2898
        %v2900 = vpop.f32.mrb[0].mxu0
        %v2901 = vpop.f32.mrb[0].mxu0
        %v2902 = vadd.f32 %v2677, %v2901
        %v2903 = vpop.f32.mrb[0].mxu0
        %2904 = vmatprep.mubr.bf16.mxu0 %v1647
        %2905 = vmatmul.mubr.bf16.gmra.mrb[0].mxu0 %v1646
        %v2906 = vpop.f32.mrb[0].mxu0
        %v2907 = vadd.f32 %v2682, %v2906
        %v2908 = vpop.f32.mrb[0].mxu0
        %v2909 = vpop.f32.mrb[0].mxu0
        %v2910 = vadd.f32 %v2685, %v2909
        %v2911 = vpop.f32.mrb[0].mxu0
        %2912 = vmatprep.mubr.bf16.mxu0 %v1656
        %2913 = vmatmul.mubr.bf16.gmra.mrb[0].mxu0 %v1655
        %v2914 = vpop.f32.mrb[0].mxu0
        %v2915 = vadd.f32 %v2690, %v2914
        %v2916 = vpop.f32.mrb[0].mxu0
        %v2917 = vpop.f32.mrb[0].mxu0
        %v2918 = vadd.f32 %v2693, %v2917
        %v2919 = vpop.f32.mrb[0].mxu0
        %2920 = vmatprep.mubr.bf16.mxu0 %v1665
        %2921 = vmatmul.mubr.bf16.gmra.mrb[0].mxu0 %v1664
        %v2922 = vpop.f32.mrb[0].mxu0
        %v2923 = vadd.f32 %v2698, %v2922
        %v2924 = vpop.f32.mrb[0].mxu0
        %v2925 = vpop.f32.mrb[0].mxu0
        %v2926 = vadd.f32 %v2701, %v2925
        %v2927 = vpop.f32.mrb[0].mxu0
        %2928 = vmatprep.mubr.bf16.mxu0 %v1674
        %2929 = vmatmul.mubr.bf16.gmra.mrb[0].mxu0 %v1673
        %v2930 = vpop.f32.mrb[0].mxu0
        %v2931 = vadd.f32 %v2706, %v2930
        %v2932 = vpop.f32.mrb[0].mxu0
        %v2933 = vpop.f32.mrb[0].mxu0
        %v2934 = vadd.f32 %v2709, %v2933
        %v2935 = vpop.f32.mrb[0].mxu0
        %2936 = vmatprep.mubr.bf16.mxu0 %v1683
        %2937 = vmatmul.mubr.bf16.gmra.mrb[0].mxu0 %v1682
        %v2938 = vpop.f32.mrb[0].mxu0
        %v2939 = vadd.f32 %v2714, %v2938
        %v2940 = vpop.f32.mrb[0].mxu0
        %v2941 = vpop.f32.mrb[0].mxu0
        %v2942 = vadd.f32 %v2717, %v2941
        %v2943 = vpop.f32.mrb[0].mxu0
        %2944 = vdwg.mxu0
        %2945 = vmatprep.subr.bf16.mxu0 0
        %2946 = vmatpush1.bf16.msra.mxu0 %v2174
        %2947 = vmatprep.subr.bf16.mxu0 0
        %2948 = vmatpush1.bf16.msra.mxu0 %v2175
        %2949 = vmatprep.subr.bf16.mxu0 0
        %2950 = vmatpush1.bf16.msra.mxu0 %v2176
        %2951 = vmatprep.subr.bf16.mxu0 0
        %2952 = vmatpush1.bf16.msra.mxu0 %v2177
        %2953 = vmatprep.subr.bf16.mxu0 0
        %2954 = vmatpush1.bf16.msra.mxu0 %v2178
        %2955 = vmatprep.subr.bf16.mxu0 0
        %2956 = vmatpush1.bf16.msra.mxu0 %v2179
        %2957 = vmatprep.subr.bf16.mxu0 0
        %2958 = vmatpush1.bf16.msra.mxu0 %v2180
        %2959 = vmatprep.subr.bf16.mxu0 0
        %2960 = vmatpush1.bf16.msra.mxu0 %v2181
        %2961 = vmatprep.subr.bf16.mxu0 0
        %2962 = vmatpush1.bf16.msra.mxu0 %v2182
        %2963 = vmatprep.subr.bf16.mxu0 0
        %2964 = vmatpush1.bf16.msra.mxu0 %v2183
        %2965 = vmatprep.subr.bf16.mxu0 0
        %2966 = vmatpush1.bf16.msra.mxu0 %v2184
        %2967 = vmatprep.subr.bf16.mxu0 0
        %2968 = vmatpush1.bf16.msra.mxu0 %v2185
        %2969 = vmatprep.subr.bf16.mxu0 0
        %2970 = vmatpush1.bf16.msra.mxu0 %v2186
        %2971 = vmatprep.subr.bf16.mxu0 0
        %2972 = vmatpush1.bf16.msra.mxu0 %v2187
        %2973 = vmatprep.subr.bf16.mxu0 0
        %2974 = vmatpush1.bf16.msra.mxu0 %v2188
        %2975 = vmatprep.subr.bf16.mxu0 0
        %2976 = vmatpush1.bf16.msra.mxu0 %v2189
        %2977 = vmatprep.mubr.bf16.mxu0 %v1478
        %2978 = vmatmul.mubr.bf16.gmra.mrb[0].mxu0 %v1477
        %v2979 = vpop.f32.mrb[0].mxu0
        %v2980 = vadd.f32 %v2755, %v2979
        %v2981 = vpop.f32.mrb[0].mxu0
        %v2982 = vpop.f32.mrb[0].mxu0
        %v2983 = vadd.f32 %v2758, %v2982
        %v2984 = vpop.f32.mrb[0].mxu0
        %2985 = vmatprep.mubr.bf16.mxu0 %v1487
        %2986 = vmatmul.mubr.bf16.gmra.mrb[0].mxu0 %v1486
        %v2987 = vpop.f32.mrb[0].mxu0
        %v2988 = vadd.f32 %v2763, %v2987
        %v2989 = vpop.f32.mrb[0].mxu0
        %v2990 = vpop.f32.mrb[0].mxu0
        %v2991 = vadd.f32 %v2766, %v2990
        %v2992 = vpop.f32.mrb[0].mxu0
        %2993 = vmatprep.mubr.bf16.mxu0 %v1496
        %2994 = vmatmul.mubr.bf16.gmra.mrb[0].mxu0 %v1495
        %v2995 = vpop.f32.mrb[0].mxu0
        %v2996 = vadd.f32 %v2771, %v2995
        %v2997 = vpop.f32.mrb[0].mxu0
        %v2998 = vpop.f32.mrb[0].mxu0
        %v2999 = vadd.f32 %v2774, %v2998
        %v3000 = vpop.f32.mrb[0].mxu0
        %3001 = vmatprep.mubr.bf16.mxu0 %v1505
        %3002 = vmatmul.mubr.bf16.gmra.mrb[0].mxu0 %v1504
        %v3003 = vpop.f32.mrb[0].mxu0
        %v3004 = vadd.f32 %v2779, %v3003
        %v3005 = vpop.f32.mrb[0].mxu0
        %v3006 = vpop.f32.mrb[0].mxu0
        %v3007 = vadd.f32 %v2782, %v3006
        %v3008 = vpop.f32.mrb[0].mxu0
        %3009 = vmatprep.mubr.bf16.mxu0 %v1514
        %3010 = vmatmul.mubr.bf16.gmra.mrb[0].mxu0 %v1513
        %v3011 = vpop.f32.mrb[0].mxu0
        %v3012 = vadd.f32 %v2787, %v3011
        %v3013 = vpop.f32.mrb[0].mxu0
        %v3014 = vpop.f32.mrb[0].mxu0
        %v3015 = vadd.f32 %v2790, %v3014
        %v3016 = vpop.f32.mrb[0].mxu0
        %3017 = vmatprep.mubr.bf16.mxu0 %v1523
        %3018 = vmatmul.mubr.bf16.gmra.mrb[0].mxu0 %v1522
        %v3019 = vpop.f32.mrb[0].mxu0
        %v3020 = vadd.f32 %v2795, %v3019
        %v3021 = vpop.f32.mrb[0].mxu0
        %v3022 = vpop.f32.mrb[0].mxu0
        %v3023 = vadd.f32 %v2798, %v3022
        %v3024 = vpop.f32.mrb[0].mxu0
        %3025 = vmatprep.mubr.bf16.mxu0 %v1532
        %3026 = vmatmul.mubr.bf16.gmra.mrb[0].mxu0 %v1531
        %v3027 = vpop.f32.mrb[0].mxu0
        %v3028 = vadd.f32 %v2803, %v3027
        %v3029 = vpop.f32.mrb[0].mxu0
        %v3030 = vpop.f32.mrb[0].mxu0
        %v3031 = vadd.f32 %v2806, %v3030
        %v3032 = vpop.f32.mrb[0].mxu0
        %3033 = vmatprep.mubr.bf16.mxu0 %v1541
        %3034 = vmatmul.mubr.bf16.gmra.mrb[0].mxu0 %v1540
        %v3035 = vpop.f32.mrb[0].mxu0
        %v3036 = vadd.f32 %v2811, %v3035
        %v3037 = vpop.f32.mrb[0].mxu0
        %v3038 = vpop.f32.mrb[0].mxu0
        %v3039 = vadd.f32 %v2814, %v3038
        %v3040 = vpop.f32.mrb[0].mxu0
        %3041 = vmatprep.mubr.bf16.mxu0 %v1550
        %3042 = vmatmul.mubr.bf16.gmra.mrb[0].mxu0 %v1549
        %v3043 = vpop.f32.mrb[0].mxu0
        %v3044 = vadd.f32 %v2819, %v3043
        %v3045 = vpop.f32.mrb[0].mxu0
        %v3046 = vpop.f32.mrb[0].mxu0
        %v3047 = vadd.f32 %v2822, %v3046
        %v3048 = vpop.f32.mrb[0].mxu0
        %3049 = vmatprep.mubr.bf16.mxu0 %v1559
        %3050 = vmatmul.mubr.bf16.gmra.mrb[0].mxu0 %v1558
        %v3051 = vpop.f32.mrb[0].mxu0
        %v3052 = vadd.f32 %v2827, %v3051
        %v3053 = vpop.f32.mrb[0].mxu0
        %v3054 = vpop.f32.mrb[0].mxu0
        %v3055 = vadd.f32 %v2830, %v3054
        %v3056 = vpop.f32.mrb[0].mxu0
        %3057 = vmatprep.mubr.bf16.mxu0 %v1568
        %3058 = vmatmul.mubr.bf16.gmra.mrb[0].mxu0 %v1567
        %v3059 = vpop.f32.mrb[0].mxu0
        %v3060 = vadd.f32 %v2835, %v3059
        %v3061 = vpop.f32.mrb[0].mxu0
        %v3062 = vpop.f32.mrb[0].mxu0
        %v3063 = vadd.f32 %v2838, %v3062
        %v3064 = vpop.f32.mrb[0].mxu0
        %3065 = vmatprep.mubr.bf16.mxu0 %v1577
        %3066 = vmatmul.mubr.bf16.gmra.mrb[0].mxu0 %v1576
        %v3067 = vpop.f32.mrb[0].mxu0
        %v3068 = vadd.f32 %v2843, %v3067
        %v3069 = vpop.f32.mrb[0].mxu0
        %v3070 = vpop.f32.mrb[0].mxu0
        %v3071 = vadd.f32 %v2846, %v3070
        %v3072 = vpop.f32.mrb[0].mxu0
        %3073 = vmatprep.mubr.bf16.mxu0 %v1586
        %3074 = vmatmul.mubr.bf16.gmra.mrb[0].mxu0 %v1585
        %v3075 = vpop.f32.mrb[0].mxu0
        %v3076 = vadd.f32 %v2851, %v3075
        %v3077 = vpop.f32.mrb[0].mxu0
        %v3078 = vpop.f32.mrb[0].mxu0
        %v3079 = vadd.f32 %v2854, %v3078
        %v3080 = vpop.f32.mrb[0].mxu0
        %3081 = vmatprep.mubr.bf16.mxu0 %v1595
        %3082 = vmatmul.mubr.bf16.gmra.mrb[0].mxu0 %v1594
        %v3083 = vpop.f32.mrb[0].mxu0
        %v3084 = vadd.f32 %v2859, %v3083
        %v3085 = vpop.f32.mrb[0].mxu0
        %v3086 = vpop.f32.mrb[0].mxu0
        %v3087 = vadd.f32 %v2862, %v3086
        %v3088 = vpop.f32.mrb[0].mxu0
        %3089 = vmatprep.mubr.bf16.mxu0 %v1604
        %3090 = vmatmul.mubr.bf16.gmra.mrb[0].mxu0 %v1603
        %v3091 = vpop.f32.mrb[0].mxu0
        %v3092 = vadd.f32 %v2867, %v3091
        %v3093 = vpop.f32.mrb[0].mxu0
        %v3094 = vpop.f32.mrb[0].mxu0
        %v3095 = vadd.f32 %v2870, %v3094
        %v3096 = vpop.f32.mrb[0].mxu0
        %3097 = vmatprep.mubr.bf16.mxu0 %v1613
        %3098 = vmatmul.mubr.bf16.gmra.mrb[0].mxu0 %v1612
        %v3099 = vpop.f32.mrb[0].mxu0
        %v3100 = vadd.f32 %v2875, %v3099
        %v3101 = vpop.f32.mrb[0].mxu0
        %v3102 = vpop.f32.mrb[0].mxu0
        %v3103 = vadd.f32 %v2878, %v3102
        %v3104 = vpop.f32.mrb[0].mxu0
        %3105 = vmatprep.mubr.bf16.mxu0 %v1622
        %3106 = vmatmul.mubr.bf16.gmra.mrb[0].mxu0 %v1621
        %v3107 = vpop.f32.mrb[0].mxu0
        %v3108 = vadd.f32 %v2883, %v3107
        %v3109 = vpop.f32.mrb[0].mxu0
        %v3110 = vpop.f32.mrb[0].mxu0
        %v3111 = vadd.f32 %v2886, %v3110
        %v3112 = vpop.f32.mrb[0].mxu0
        %3113 = vmatprep.mubr.bf16.mxu0 %v1631
        %3114 = vmatmul.mubr.bf16.gmra.mrb[0].mxu0 %v1630
        %v3115 = vpop.f32.mrb[0].mxu0
        %v3116 = vadd.f32 %v2891, %v3115
        %v3117 = vpop.f32.mrb[0].mxu0
        %v3118 = vpop.f32.mrb[0].mxu0
        %v3119 = vadd.f32 %v2894, %v3118
        %v3120 = vpop.f32.mrb[0].mxu0
        %3121 = vmatprep.mubr.bf16.mxu0 %v1640
        %3122 = vmatmul.mubr.bf16.gmra.mrb[0].mxu0 %v1639
        %v3123 = vpop.f32.mrb[0].mxu0
        %v3124 = vadd.f32 %v2899, %v3123
        %v3125 = vpop.f32.mrb[0].mxu0
        %v3126 = vpop.f32.mrb[0].mxu0
        %v3127 = vadd.f32 %v2902, %v3126
        %v3128 = vpop.f32.mrb[0].mxu0
        %3129 = vmatprep.mubr.bf16.mxu0 %v1649
        %3130 = vmatmul.mubr.bf16.gmra.mrb[0].mxu0 %v1648
        %v3131 = vpop.f32.mrb[0].mxu0
        %v3132 = vadd.f32 %v2907, %v3131
        %v3133 = vpop.f32.mrb[0].mxu0
        %v3134 = vpop.f32.mrb[0].mxu0
        %v3135 = vadd.f32 %v2910, %v3134
        %v3136 = vpop.f32.mrb[0].mxu0
        %3137 = vmatprep.mubr.bf16.mxu0 %v1658
        %3138 = vmatmul.mubr.bf16.gmra.mrb[0].mxu0 %v1657
        %v3139 = vpop.f32.mrb[0].mxu0
        %v3140 = vadd.f32 %v2915, %v3139
        %v3141 = vpop.f32.mrb[0].mxu0
        %v3142 = vpop.f32.mrb[0].mxu0
        %v3143 = vadd.f32 %v2918, %v3142
        %v3144 = vpop.f32.mrb[0].mxu0
        %3145 = vmatprep.mubr.bf16.mxu0 %v1667
        %3146 = vmatmul.mubr.bf16.gmra.mrb[0].mxu0 %v1666
        %v3147 = vpop.f32.mrb[0].mxu0
        %v3148 = vadd.f32 %v2923, %v3147
        %v3149 = vpop.f32.mrb[0].mxu0
        %v3150 = vpop.f32.mrb[0].mxu0
        %v3151 = vadd.f32 %v2926, %v3150
        %v3152 = vpop.f32.mrb[0].mxu0
        %3153 = vmatprep.mubr.bf16.mxu0 %v1676
        %3154 = vmatmul.mubr.bf16.gmra.mrb[0].mxu0 %v1675
        %v3155 = vpop.f32.mrb[0].mxu0
        %v3156 = vadd.f32 %v2931, %v3155
        %v3157 = vpop.f32.mrb[0].mxu0
        %v3158 = vpop.f32.mrb[0].mxu0
        %v3159 = vadd.f32 %v2934, %v3158
        %v3160 = vpop.f32.mrb[0].mxu0
        %3161 = vmatprep.mubr.bf16.mxu0 %v1685
        %3162 = vmatmul.mubr.bf16.gmra.mrb[0].mxu0 %v1684
        %v3163 = vpop.f32.mrb[0].mxu0
        %v3164 = vadd.f32 %v2939, %v3163
        %v3165 = vpop.f32.mrb[0].mxu0
        %v3166 = vpop.f32.mrb[0].mxu0
        %v3167 = vadd.f32 %v2942, %v3166
        %v3168 = vpop.f32.mrb[0].mxu0
        %3169 = vdwg.mxu0
        %3170 = vmatprep.subr.bf16.mxu0 0
        %3171 = vmatpush1.bf16.msra.mxu0 %v2190
        %3172 = vmatprep.subr.bf16.mxu0 0
        %3173 = vmatpush1.bf16.msra.mxu0 %v2191
        %3174 = vmatprep.subr.bf16.mxu0 0
        %3175 = vmatpush1.bf16.msra.mxu0 %v2192
        %3176 = vmatprep.subr.bf16.mxu0 0
        %3177 = vmatpush1.bf16.msra.mxu0 %v2193
        %3178 = vmatprep.subr.bf16.mxu0 0
        %3179 = vmatpush1.bf16.msra.mxu0 %v2194
        %3180 = vmatprep.subr.bf16.mxu0 0
        %3181 = vmatpush1.bf16.msra.mxu0 %v2195
        %3182 = vmatprep.subr.bf16.mxu0 0
        %3183 = vmatpush1.bf16.msra.mxu0 %v2196
        %3184 = vmatprep.subr.bf16.mxu0 0
        %3185 = vmatpush1.bf16.msra.mxu0 %v2197
        %3186 = vmatprep.subr.bf16.mxu0 0
        %3187 = vmatpush1.bf16.msra.mxu0 0
        %3188 = vmatprep.subr.bf16.mxu0 0
        %3189 = vmatpush1.bf16.msra.mxu0 0
        %3190 = vmatprep.subr.bf16.mxu0 0
        %3191 = vmatpush1.bf16.msra.mxu0 0
        %3192 = vmatprep.subr.bf16.mxu0 0
        %3193 = vmatpush1.bf16.msra.mxu0 0
        %3194 = vmatprep.subr.bf16.mxu0 0
        %3195 = vmatpush1.bf16.msra.mxu0 0
        %3196 = vmatprep.subr.bf16.mxu0 0
        %3197 = vmatpush1.bf16.msra.mxu0 0
        %3198 = vmatprep.subr.bf16.mxu0 0
        %3199 = vmatpush1.bf16.msra.mxu0 0
        %3200 = vmatprep.subr.bf16.mxu0 0
        %3201 = vmatpush1.bf16.msra.mxu0 0
        %3202 = vmatprep.mubr.bf16.mxu0 0
        %3203 = vmatmul.mubr.bf16.gmra.mrb[0].mxu0 %v1479
        %v3204 = vpop.f32.mrb[0].mxu0
        %v3205 = vadd.f32 %v2980, %v3204
        %v3206 = vpop.f32.mrb[0].mxu0
        %v3207 = vpop.f32.mrb[0].mxu0
        %v3208 = vadd.f32 %v2983, %v3207
        %v3209 = vpop.f32.mrb[0].mxu0
        %3210 = vmatprep.mubr.bf16.mxu0 0
        %3211 = vmatmul.mubr.bf16.gmra.mrb[0].mxu0 %v1488
        %v3212 = vpop.f32.mrb[0].mxu0
        %v3213 = vadd.f32 %v2988, %v3212
        %v3214 = vpop.f32.mrb[0].mxu0
        %v3215 = vpop.f32.mrb[0].mxu0
        %v3216 = vadd.f32 %v2991, %v3215
        %v3217 = vpop.f32.mrb[0].mxu0
        %3218 = vmatprep.mubr.bf16.mxu0 0
        %3219 = vmatmul.mubr.bf16.gmra.mrb[0].mxu0 %v1497
        %v3220 = vpop.f32.mrb[0].mxu0
        %v3221 = vadd.f32 %v2996, %v3220
        %v3222 = vpop.f32.mrb[0].mxu0
        %v3223 = vpop.f32.mrb[0].mxu0
        %v3224 = vadd.f32 %v2999, %v3223
        %v3225 = vpop.f32.mrb[0].mxu0
        %3226 = vmatprep.mubr.bf16.mxu0 0
        %3227 = vmatmul.mubr.bf16.gmra.mrb[0].mxu0 %v1506
        %v3228 = vpop.f32.mrb[0].mxu0
        %v3229 = vadd.f32 %v3004, %v3228
        %v3230 = vpop.f32.mrb[0].mxu0
        %v3231 = vpop.f32.mrb[0].mxu0
        %v3232 = vadd.f32 %v3007, %v3231
        %v3233 = vpop.f32.mrb[0].mxu0
        %3234 = vmatprep.mubr.bf16.mxu0 0
        %3235 = vmatmul.mubr.bf16.gmra.mrb[0].mxu0 %v1515
        %v3236 = vpop.f32.mrb[0].mxu0
        %v3237 = vadd.f32 %v3012, %v3236
        %v3238 = vpop.f32.mrb[0].mxu0
        %v3239 = vpop.f32.mrb[0].mxu0
        %v3240 = vadd.f32 %v3015, %v3239
        %v3241 = vpop.f32.mrb[0].mxu0
        %3242 = vmatprep.mubr.bf16.mxu0 0
        %3243 = vmatmul.mubr.bf16.gmra.mrb[0].mxu0 %v1524
        %v3244 = vpop.f32.mrb[0].mxu0
        %v3245 = vadd.f32 %v3020, %v3244
        %v3246 = vpop.f32.mrb[0].mxu0
        %v3247 = vpop.f32.mrb[0].mxu0
        %v3248 = vadd.f32 %v3023, %v3247
        %v3249 = vpop.f32.mrb[0].mxu0
        %3250 = vmatprep.mubr.bf16.mxu0 0
        %3251 = vmatmul.mubr.bf16.gmra.mrb[0].mxu0 %v1533
        %v3252 = vpop.f32.mrb[0].mxu0
        %v3253 = vadd.f32 %v3028, %v3252
        %v3254 = vpop.f32.mrb[0].mxu0
        %v3255 = vpop.f32.mrb[0].mxu0
        %v3256 = vadd.f32 %v3031, %v3255
        %v3257 = vpop.f32.mrb[0].mxu0
        %3258 = vmatprep.mubr.bf16.mxu0 0
        %3259 = vmatmul.mubr.bf16.gmra.mrb[0].mxu0 %v1542
        %v3260 = vpop.f32.mrb[0].mxu0
        %v3261 = vadd.f32 %v3036, %v3260
        %v3262 = vpop.f32.mrb[0].mxu0
        %v3263 = vpop.f32.mrb[0].mxu0
        %v3264 = vadd.f32 %v3039, %v3263
        %v3265 = vpop.f32.mrb[0].mxu0
        %3266 = vmatprep.mubr.bf16.mxu0 0
        %3267 = vmatmul.mubr.bf16.gmra.mrb[0].mxu0 %v1551
        %v3268 = vpop.f32.mrb[0].mxu0
        %v3269 = vadd.f32 %v3044, %v3268
        %v3270 = vpop.f32.mrb[0].mxu0
        %v3271 = vpop.f32.mrb[0].mxu0
        %v3272 = vadd.f32 %v3047, %v3271
        %v3273 = vpop.f32.mrb[0].mxu0
        %3274 = vmatprep.mubr.bf16.mxu0 0
        %3275 = vmatmul.mubr.bf16.gmra.mrb[0].mxu0 %v1560
        %v3276 = vpop.f32.mrb[0].mxu0
        %v3277 = vadd.f32 %v3052, %v3276
        %v3278 = vpop.f32.mrb[0].mxu0
        %v3279 = vpop.f32.mrb[0].mxu0
        %v3280 = vadd.f32 %v3055, %v3279
        %v3281 = vpop.f32.mrb[0].mxu0
        %3282 = vmatprep.mubr.bf16.mxu0 0
        %3283 = vmatmul.mubr.bf16.gmra.mrb[0].mxu0 %v1569
        %v3284 = vpop.f32.mrb[0].mxu0
        %v3285 = vadd.f32 %v3060, %v3284
        %v3286 = vpop.f32.mrb[0].mxu0
        %v3287 = vpop.f32.mrb[0].mxu0
        %v3288 = vadd.f32 %v3063, %v3287
        %v3289 = vpop.f32.mrb[0].mxu0
        %3290 = vmatprep.mubr.bf16.mxu0 0
        %3291 = vmatmul.mubr.bf16.gmra.mrb[0].mxu0 %v1578
        %v3292 = vpop.f32.mrb[0].mxu0
        %v3293 = vadd.f32 %v3068, %v3292
        %v3294 = vpop.f32.mrb[0].mxu0
        %v3295 = vpop.f32.mrb[0].mxu0
        %v3296 = vadd.f32 %v3071, %v3295
        %v3297 = vpop.f32.mrb[0].mxu0
        %3298 = vmatprep.mubr.bf16.mxu0 0
        %3299 = vmatmul.mubr.bf16.gmra.mrb[0].mxu0 %v1587
        %v3300 = vpop.f32.mrb[0].mxu0
        %v3301 = vadd.f32 %v3076, %v3300
        %v3302 = vpop.f32.mrb[0].mxu0
        %v3303 = vpop.f32.mrb[0].mxu0
        %v3304 = vadd.f32 %v3079, %v3303
        %v3305 = vpop.f32.mrb[0].mxu0
        %3306 = vmatprep.mubr.bf16.mxu0 0
        %3307 = vmatmul.mubr.bf16.gmra.mrb[0].mxu0 %v1596
        %v3308 = vpop.f32.mrb[0].mxu0
        %v3309 = vadd.f32 %v3084, %v3308
        %v3310 = vpop.f32.mrb[0].mxu0
        %v3311 = vpop.f32.mrb[0].mxu0
        %v3312 = vadd.f32 %v3087, %v3311
        %v3313 = vpop.f32.mrb[0].mxu0
        %3314 = vmatprep.mubr.bf16.mxu0 0
        %3315 = vmatmul.mubr.bf16.gmra.mrb[0].mxu0 %v1605
        %v3316 = vpop.f32.mrb[0].mxu0
        %v3317 = vadd.f32 %v3092, %v3316
        %v3318 = vpop.f32.mrb[0].mxu0
        %v3319 = vpop.f32.mrb[0].mxu0
        %v3320 = vadd.f32 %v3095, %v3319
        %v3321 = vpop.f32.mrb[0].mxu0
        %3322 = vmatprep.mubr.bf16.mxu0 0
        %3323 = vmatmul.mubr.bf16.gmra.mrb[0].mxu0 %v1614
        %v3324 = vpop.f32.mrb[0].mxu0
        %v3325 = vadd.f32 %v3100, %v3324
        %v3326 = vpop.f32.mrb[0].mxu0
        %v3327 = vpop.f32.mrb[0].mxu0
        %v3328 = vadd.f32 %v3103, %v3327
        %v3329 = vpop.f32.mrb[0].mxu0
        %3330 = vmatprep.mubr.bf16.mxu0 0
        %3331 = vmatmul.mubr.bf16.gmra.mrb[0].mxu0 %v1623
        %v3332 = vpop.f32.mrb[0].mxu0
        %v3333 = vadd.f32 %v3108, %v3332
        %v3334 = vpop.f32.mrb[0].mxu0
        %v3335 = vpop.f32.mrb[0].mxu0
        %v3336 = vadd.f32 %v3111, %v3335
        %v3337 = vpop.f32.mrb[0].mxu0
        %3338 = vmatprep.mubr.bf16.mxu0 0
        %3339 = vmatmul.mubr.bf16.gmra.mrb[0].mxu0 %v1632
        %v3340 = vpop.f32.mrb[0].mxu0
        %v3341 = vadd.f32 %v3116, %v3340
        %v3342 = vpop.f32.mrb[0].mxu0
        %v3343 = vpop.f32.mrb[0].mxu0
        %v3344 = vadd.f32 %v3119, %v3343
        %v3345 = vpop.f32.mrb[0].mxu0
        %3346 = vmatprep.mubr.bf16.mxu0 0
        %3347 = vmatmul.mubr.bf16.gmra.mrb[0].mxu0 %v1641
        %v3348 = vpop.f32.mrb[0].mxu0
        %v3349 = vadd.f32 %v3124, %v3348
        %v3350 = vpop.f32.mrb[0].mxu0
        %v3351 = vpop.f32.mrb[0].mxu0
        %v3352 = vadd.f32 %v3127, %v3351
        %v3353 = vpop.f32.mrb[0].mxu0
        %3354 = vmatprep.mubr.bf16.mxu0 0
        %3355 = vmatmul.mubr.bf16.gmra.mrb[0].mxu0 %v1650
        %v3356 = vpop.f32.mrb[0].mxu0
        %v3357 = vadd.f32 %v3132, %v3356
        %v3358 = vpop.f32.mrb[0].mxu0
        %v3359 = vpop.f32.mrb[0].mxu0
        %v3360 = vadd.f32 %v3135, %v3359
        %v3361 = vpop.f32.mrb[0].mxu0
        %3362 = vmatprep.mubr.bf16.mxu0 0
        %3363 = vmatmul.mubr.bf16.gmra.mrb[0].mxu0 %v1659
        %v3364 = vpop.f32.mrb[0].mxu0
        %v3365 = vadd.f32 %v3140, %v3364
        %v3366 = vpop.f32.mrb[0].mxu0
        %v3367 = vpop.f32.mrb[0].mxu0
        %v3368 = vadd.f32 %v3143, %v3367
        %v3369 = vpop.f32.mrb[0].mxu0
        %3370 = vmatprep.mubr.bf16.mxu0 0
        %3371 = vmatmul.mubr.bf16.gmra.mrb[0].mxu0 %v1668
        %v3372 = vpop.f32.mrb[0].mxu0
        %v3373 = vadd.f32 %v3148, %v3372
        %v3374 = vpop.f32.mrb[0].mxu0
        %v3375 = vpop.f32.mrb[0].mxu0
        %v3376 = vadd.f32 %v3151, %v3375
        %v3377 = vpop.f32.mrb[0].mxu0
        %3378 = vmatprep.mubr.bf16.mxu0 0
        %3379 = vmatmul.mubr.bf16.gmra.mrb[0].mxu0 %v1677
        %v3380 = vpop.f32.mrb[0].mxu0
        %v3381 = vadd.f32 %v3156, %v3380
        %v3382 = vpop.f32.mrb[0].mxu0
        %v3383 = vpop.f32.mrb[0].mxu0
        %v3384 = vadd.f32 %v3159, %v3383
        %v3385 = vpop.f32.mrb[0].mxu0
        %3386 = vmatprep.mubr.bf16.mxu0 0
        %3387 = vmatmul.mubr.bf16.gmra.mrb[0].mxu0 %v1686
        %v3388 = vpop.f32.mrb[0].mxu0
        %v3389 = vadd.f32 %v3164, %v3388
        %v3390 = vpop.f32.mrb[0].mxu0
        %v3391 = vpop.f32.mrb[0].mxu0
        %v3392 = vadd.f32 %v3167, %v3391
        %v3393 = vpop.f32.mrb[0].mxu0
        %3394 = vdwg.mxu0
        %v3395 = vmax.f32 %v3205, 0.0
        %v3396 = vmax.f32 %v3208, 0.0
        %v3397 = vmax.f32 %v3213, 0.0
        %v3398 = vmax.f32 %v3216, 0.0
        %v3399 = vmax.f32 %v3221, 0.0
        %v3400 = vmax.f32 %v3224, 0.0
        %v3401 = vmax.f32 %v3229, 0.0
        %v3402 = vmax.f32 %v3232, 0.0
        %v3403 = vmax.f32 %v3237, 0.0
        %v3404 = vmax.f32 %v3240, 0.0
        %v3405 = vmax.f32 %v3245, 0.0
        %v3406 = vmax.f32 %v3248, 0.0
        %v3407 = vmax.f32 %v3253, 0.0
        %v3408 = vmax.f32 %v3256, 0.0
        %v3409 = vmax.f32 %v3261, 0.0
        %v3410 = vmax.f32 %v3264, 0.0
        %v3411 = vmax.f32 %v3269, 0.0
        %v3412 = vmax.f32 %v3272, 0.0
        %v3413 = vmax.f32 %v3277, 0.0
        %v3414 = vmax.f32 %v3280, 0.0
        %v3415 = vmax.f32 %v3285, 0.0
        %v3416 = vmax.f32 %v3288, 0.0
        %v3417 = vmax.f32 %v3293, 0.0
        %v3418 = vmax.f32 %v3296, 0.0
        %v3419 = vmax.f32 %v3301, 0.0
        %v3420 = vmax.f32 %v3304, 0.0
        %v3421 = vmax.f32 %v3309, 0.0
        %v3422 = vmax.f32 %v3312, 0.0
        %v3423 = vmax.f32 %v3317, 0.0
        %v3424 = vmax.f32 %v3320, 0.0
        %v3425 = vmax.f32 %v3325, 0.0
        %v3426 = vmax.f32 %v3328, 0.0
        %v3427 = vmax.f32 %v3333, 0.0
        %v3428 = vmax.f32 %v3336, 0.0
        %v3429 = vmax.f32 %v3341, 0.0
        %v3430 = vmax.f32 %v3344, 0.0
        %v3431 = vmax.f32 %v3349, 0.0
        %v3432 = vmax.f32 %v3352, 0.0
        %v3433 = vmax.f32 %v3357, 0.0
        %v3434 = vmax.f32 %v3360, 0.0
        %v3435 = vmax.f32 %v3365, 0.0
        %v3436 = vmax.f32 %v3368, 0.0
        %v3437 = vmax.f32 %v3373, 0.0
        %v3438 = vmax.f32 %v3376, 0.0
        %v3439 = vmax.f32 %v3381, 0.0
        %v3440 = vmax.f32 %v3384, 0.0
        %v3441 = vmax.f32 %v3389, 0.0
        %v3442 = vmax.f32 %v3392, 0.0
        %v3443 = vld [vmem:[#allocation4] sm:$0xff]
        %v3444 = vld [vmem:[#allocation4 + $0x8] sm:$0xff]
        %v3445 = vld [vmem:[#allocation4 + $0x10] sm:$0xff]
        %v3446 = vld [vmem:[#allocation4 + $0x18] sm:$0xff]
        %v3447 = vld [vmem:[#allocation4 + $0x20] sm:$0xff]
        %v3448 = vld [vmem:[#allocation4 + $0x28] sm:$0xff]
        %v3449 = vld [vmem:[#allocation4 + $0x30] sm:$0xff]
        %v3450 = vld [vmem:[#allocation4 + $0x38] sm:$0xff]
        %v3451 = vld [vmem:[#allocation4 + $0x40] sm:$0xff]
        %v3452 = vld [vmem:[#allocation4 + $0x48] sm:$0xff]
        %v3453 = vld [vmem:[#allocation4 + $0x50] sm:$0xff]
        %v3454 = vld [vmem:[#allocation4 + $0x58] sm:$0xff]
        %v3455 = vld [vmem:[#allocation4 + $0x60] sm:$0xff]
        %v3456 = vld [vmem:[#allocation4 + $0x68] sm:$0xff]
        %v3457 = vld [vmem:[#allocation4 + $0x70] sm:$0xff]
        %v3458 = vld [vmem:[#allocation4 + $0x78] sm:$0xff]
        %v3459 = vld [vmem:[#allocation4 + $0x80] sm:$0xff]
        %v3460 = vld [vmem:[#allocation4 + $0x88] sm:$0xff]
        %v3461 = vld [vmem:[#allocation4 + $0x90] sm:$0xff]
        %v3462 = vld [vmem:[#allocation4 + $0x98] sm:$0xff]
        %v3463 = vld [vmem:[#allocation4 + $0xa0] sm:$0xff]
        %v3464 = vld [vmem:[#allocation4 + $0xa8] sm:$0xff]
        %v3465 = vld [vmem:[#allocation4 + $0xb0] sm:$0xff]
        %v3466 = vld [vmem:[#allocation4 + $0xb8] sm:$0xff]
        %v3467 = vld [vmem:[#allocation4 + $0xc0] sm:$0xff]
        %v3468 = vld [vmem:[#allocation4 + $0xc8] sm:$0xff]
        %v3469 = vld [vmem:[#allocation4 + $0xd0] sm:$0xff]
        %v3470 = vld [vmem:[#allocation4 + $0xd8] sm:$0xff]
        %v3471 = vld [vmem:[#allocation4 + $0xe0] sm:$0xff]
        %v3472 = vld [vmem:[#allocation4 + $0xe8] sm:$0xff]
        %v3473 = vld [vmem:[#allocation4 + $0xf0] sm:$0xff]
        %v3474 = vld [vmem:[#allocation4 + $0xf8] sm:$0xff]
        %v3475 = vld [vmem:[#allocation4 + $0x100] sm:$0xff]
        %v3476 = vld [vmem:[#allocation4 + $0x108] sm:$0xff]
        %v3477 = vld [vmem:[#allocation4 + $0x110] sm:$0xff]
        %v3478 = vld [vmem:[#allocation4 + $0x118] sm:$0xff]
        %v3479 = vld [vmem:[#allocation4 + $0x120] sm:$0xff]
        %v3480 = vld [vmem:[#allocation4 + $0x128] sm:$0xff]
        %v3481 = vld [vmem:[#allocation4 + $0x130] sm:$0xff]
        %v3482 = vld [vmem:[#allocation4 + $0x138] sm:$0xff]
        %v3483 = vld [vmem:[#allocation4 + $0x140] sm:$0xff]
        %v3484 = vld [vmem:[#allocation4 + $0x148] sm:$0xff]
        %v3485 = vld [vmem:[#allocation4 + $0x150] sm:$0xff]
        %v3486 = vld [vmem:[#allocation4 + $0x158] sm:$0xff]
        %v3487 = vld [vmem:[#allocation4 + $0x160] sm:$0xff]
        %v3488 = vld [vmem:[#allocation4 + $0x168] sm:$0xff]
        %v3489 = vld [vmem:[#allocation4 + $0x170] sm:$0xff]
        %v3490 = vld [vmem:[#allocation4 + $0x178] sm:$0xff]
        %v3491 = vmul.f32 %v3395, %v3443
        %v3492 = vmul.f32 %v3396, %v3444
        %v3493 = vmul.f32 %v3397, %v3445
        %v3494 = vmul.f32 %v3398, %v3446
        %v3495 = vmul.f32 %v3399, %v3447
        %v3496 = vmul.f32 %v3400, %v3448
        %v3497 = vmul.f32 %v3401, %v3449
        %v3498 = vmul.f32 %v3402, %v3450
        %v3499 = vmul.f32 %v3403, %v3451
        %v3500 = vmul.f32 %v3404, %v3452
        %v3501 = vmul.f32 %v3405, %v3453
        %v3502 = vmul.f32 %v3406, %v3454
        %v3503 = vmul.f32 %v3407, %v3455
        %v3504 = vmul.f32 %v3408, %v3456
        %v3505 = vmul.f32 %v3409, %v3457
        %v3506 = vmul.f32 %v3410, %v3458
        %v3507 = vmul.f32 %v3411, %v3459
        %v3508 = vmul.f32 %v3412, %v3460
        %v3509 = vmul.f32 %v3413, %v3461
        %v3510 = vmul.f32 %v3414, %v3462
        %v3511 = vmul.f32 %v3415, %v3463
        %v3512 = vmul.f32 %v3416, %v3464
        %v3513 = vmul.f32 %v3417, %v3465
        %v3514 = vmul.f32 %v3418, %v3466
        %v3515 = vmul.f32 %v3419, %v3467
        %v3516 = vmul.f32 %v3420, %v3468
        %v3517 = vmul.f32 %v3421, %v3469
        %v3518 = vmul.f32 %v3422, %v3470
        %v3519 = vmul.f32 %v3423, %v3471
        %v3520 = vmul.f32 %v3424, %v3472
        %v3521 = vmul.f32 %v3425, %v3473
        %v3522 = vmul.f32 %v3426, %v3474
        %v3523 = vmul.f32 %v3427, %v3475
        %v3524 = vmul.f32 %v3428, %v3476
        %v3525 = vmul.f32 %v3429, %v3477
        %v3526 = vmul.f32 %v3430, %v3478
        %v3527 = vmul.f32 %v3431, %v3479
        %v3528 = vmul.f32 %v3432, %v3480
        %v3529 = vmul.f32 %v3433, %v3481
        %v3530 = vmul.f32 %v3434, %v3482
        %v3531 = vmul.f32 %v3435, %v3483
        %v3532 = vmul.f32 %v3436, %v3484
        %v3533 = vmul.f32 %v3437, %v3485
        %v3534 = vmul.f32 %v3438, %v3486
        %v3535 = vmul.f32 %v3439, %v3487
        %v3536 = vmul.f32 %v3440, %v3488
        %v3537 = vmul.f32 %v3441, %v3489
        %v3538 = vmul.f32 %v3442, %v3490
        %3539 = vst [vmem:[#allocation2] sm:$0xff] 0.0
        %3540 = vst [vmem:[#allocation2 + $0x8] sm:$0xff] 0.0
        %3541 = vst [vmem:[#allocation2 + $0x10] sm:$0xff] 0.0
        %3542 = vst [vmem:[#allocation2 + $0x198] sm:$0xff] 0.0
        %3543 = vst [vmem:[#allocation2 + $0x1a0] sm:$0xff] 0.0
        %3544 = vst [vmem:[#allocation2 + $0x1a8] sm:$0xff] 0.0
        %3545 = vst [vmem:[#allocation2 + $0x18] sm:$0xff] %v3491
        %3546 = vst [vmem:[#allocation2 + $0x20] sm:$0xff] %v3492
        %3547 = vst [vmem:[#allocation2 + $0x28] sm:$0xff] %v3493
        %3548 = vst [vmem:[#allocation2 + $0x30] sm:$0xff] %v3494
        %3549 = vst [vmem:[#allocation2 + $0x38] sm:$0xff] %v3495
        %3550 = vst [vmem:[#allocation2 + $0x40] sm:$0xff] %v3496
        %3551 = vst [vmem:[#allocation2 + $0x48] sm:$0xff] %v3497
        %3552 = vst [vmem:[#allocation2 + $0x50] sm:$0xff] %v3498
        %3553 = vst [vmem:[#allocation2 + $0x58] sm:$0xff] %v3499
        %3554 = vst [vmem:[#allocation2 + $0x60] sm:$0xff] %v3500
        %3555 = vst [vmem:[#allocation2 + $0x68] sm:$0xff] %v3501
        %3556 = vst [vmem:[#allocation2 + $0x70] sm:$0xff] %v3502
        %3557 = vst [vmem:[#allocation2 + $0x78] sm:$0xff] %v3503
        %3558 = vst [vmem:[#allocation2 + $0x80] sm:$0xff] %v3504
        %3559 = vst [vmem:[#allocation2 + $0x88] sm:$0xff] %v3505
        %3560 = vst [vmem:[#allocation2 + $0x90] sm:$0xff] %v3506
        %3561 = vst [vmem:[#allocation2 + $0x98] sm:$0xff] %v3507
        %3562 = vst [vmem:[#allocation2 + $0xa0] sm:$0xff] %v3508
        %3563 = vst [vmem:[#allocation2 + $0xa8] sm:$0xff] %v3509
        %3564 = vst [vmem:[#allocation2 + $0xb0] sm:$0xff] %v3510
        %3565 = vst [vmem:[#allocation2 + $0xb8] sm:$0xff] %v3511
        %3566 = vst [vmem:[#allocation2 + $0xc0] sm:$0xff] %v3512
        %3567 = vst [vmem:[#allocation2 + $0xc8] sm:$0xff] %v3513
        %3568 = vst [vmem:[#allocation2 + $0xd0] sm:$0xff] %v3514
        %3569 = vst [vmem:[#allocation2 + $0xd8] sm:$0xff] %v3515
        %3570 = vst [vmem:[#allocation2 + $0xe0] sm:$0xff] %v3516
        %3571 = vst [vmem:[#allocation2 + $0xe8] sm:$0xff] %v3517
        %3572 = vst [vmem:[#allocation2 + $0xf0] sm:$0xff] %v3518
        %3573 = vst [vmem:[#allocation2 + $0xf8] sm:$0xff] %v3519
        %3574 = vst [vmem:[#allocation2 + $0x100] sm:$0xff] %v3520
        %3575 = vst [vmem:[#allocation2 + $0x108] sm:$0xff] %v3521
        %3576 = vst [vmem:[#allocation2 + $0x110] sm:$0xff] %v3522
        %3577 = vst [vmem:[#allocation2 + $0x118] sm:$0xff] %v3523
        %3578 = vst [vmem:[#allocation2 + $0x120] sm:$0xff] %v3524
        %3579 = vst [vmem:[#allocation2 + $0x128] sm:$0xff] %v3525
        %3580 = vst [vmem:[#allocation2 + $0x130] sm:$0xff] %v3526
        %3581 = vst [vmem:[#allocation2 + $0x138] sm:$0xff] %v3527
        %3582 = vst [vmem:[#allocation2 + $0x140] sm:$0xff] %v3528
        %3583 = vst [vmem:[#allocation2 + $0x148] sm:$0xff] %v3529
        %3584 = vst [vmem:[#allocation2 + $0x150] sm:$0xff] %v3530
        %3585 = vst [vmem:[#allocation2 + $0x158] sm:$0xff] %v3531
        %3586 = vst [vmem:[#allocation2 + $0x160] sm:$0xff] %v3532
        %3587 = vst [vmem:[#allocation2 + $0x168] sm:$0xff] %v3533
        %3588 = vst [vmem:[#allocation2 + $0x170] sm:$0xff] %v3534
        %3589 = vst [vmem:[#allocation2 + $0x178] sm:$0xff] %v3535
        %3590 = vst [vmem:[#allocation2 + $0x180] sm:$0xff] %v3536
        %3591 = vst [vmem:[#allocation2 + $0x188] sm:$0xff] %v3537
        %3592 = vst [vmem:[#allocation2 + $0x190] sm:$0xff] %v3538
        %v3593 = vld [vmem:[#allocation2] sm:$0xff]
        %v3594 = vld [vmem:[#allocation2 + $0x8] sm:$0xff]
        %v3595 = vld [vmem:[#allocation2 + $0x10] sm:$0xff]
        %v3596 = vld [vmem:[#allocation2 + $0x18] sm:$0xff]
        %v3597 = vld [vmem:[#allocation2 + $0x20] sm:$0xff]
        %v3598 = vld [vmem:[#allocation2 + $0x28] sm:$0xff]
        %v3599 = vld [vmem:[#allocation2 + $0x30] sm:$0xff]
        %v3600 = vld [vmem:[#allocation2 + $0x38] sm:$0xff]
        %v3601 = vld [vmem:[#allocation2 + $0x40] sm:$0xff]
        %v3602 = vld [vmem:[#allocation2 + $0x48] sm:$0xff]
        %v3603 = vld [vmem:[#allocation2 + $0x50] sm:$0xff]
        %v3604 = vld [vmem:[#allocation2 + $0x58] sm:$0xff]
        %v3605 = vld [vmem:[#allocation2 + $0x60] sm:$0xff]
        %v3606 = vld [vmem:[#allocation2 + $0x68] sm:$0xff]
        %v3607 = vld [vmem:[#allocation2 + $0x70] sm:$0xff]
        %v3608 = vld [vmem:[#allocation2 + $0x78] sm:$0xff]
        %v3609 = vld [vmem:[#allocation2 + $0x80] sm:$0xff]
        %v3610 = vld [vmem:[#allocation2 + $0x88] sm:$0xff]
        %v3611 = vld [vmem:[#allocation2 + $0x90] sm:$0xff]
        %v3612 = vld [vmem:[#allocation2 + $0x98] sm:$0xff]
        %v3613 = vld [vmem:[#allocation2 + $0xa0] sm:$0xff]
        %v3614 = vld [vmem:[#allocation2 + $0xa8] sm:$0xff]
        %v3615 = vld [vmem:[#allocation2 + $0xb0] sm:$0xff]
        %v3616 = vld [vmem:[#allocation2 + $0xb8] sm:$0xff]
        %v3617 = vld [vmem:[#allocation2 + $0xc0] sm:$0xff]
        %v3618 = vld [vmem:[#allocation2 + $0xc8] sm:$0xff]
        %v3619 = vld [vmem:[#allocation2 + $0xd0] sm:$0xff]
        %v3620 = vld [vmem:[#allocation2 + $0xd8] sm:$0xff]
        %v3621 = vld [vmem:[#allocation2 + $0xe0] sm:$0xff]
        %v3622 = vld [vmem:[#allocation2 + $0xe8] sm:$0xff]
        %v3623 = vld [vmem:[#allocation2 + $0xf0] sm:$0xff]
        %v3624 = vld [vmem:[#allocation2 + $0xf8] sm:$0xff]
        %v3625 = vld [vmem:[#allocation2 + $0x100] sm:$0xff]
        %v3626 = vld [vmem:[#allocation2 + $0x108] sm:$0xff]
        %v3627 = vld [vmem:[#allocation2 + $0x110] sm:$0xff]
        %v3628 = vld [vmem:[#allocation2 + $0x118] sm:$0xff]
        %v3629 = vld [vmem:[#allocation2 + $0x120] sm:$0xff]
        %v3630 = vld [vmem:[#allocation2 + $0x128] sm:$0xff]
        %v3631 = vld [vmem:[#allocation2 + $0x130] sm:$0xff]
        %v3632 = vld [vmem:[#allocation2 + $0x138] sm:$0xff]
        %v3633 = vld [vmem:[#allocation2 + $0x140] sm:$0xff]
        %v3634 = vld [vmem:[#allocation2 + $0x148] sm:$0xff]
        %v3635 = vld [vmem:[#allocation2 + $0x150] sm:$0xff]
        %v3636 = vld [vmem:[#allocation2 + $0x158] sm:$0xff]
        %v3637 = vld [vmem:[#allocation2 + $0x160] sm:$0xff]
        %v3638 = vld [vmem:[#allocation2 + $0x168] sm:$0xff]
        %v3639 = vld [vmem:[#allocation2 + $0x170] sm:$0xff]
        %v3640 = vld [vmem:[#allocation2 + $0x178] sm:$0xff]
        %v3641 = vrot.slane %v3593, 7
        %v3642 = vrot.slane %v3594, 7
        %v3643 = vrot.slane %v3595, 7
        %v3644 = vrot.slane %v3596, 7
        %v3645 = vrot.slane %v3597, 7
        %v3646 = vrot.slane %v3598, 7
        %v3647 = vrot.slane %v3599, 7
        %v3648 = vrot.slane %v3600, 7
        %v3649 = vrot.slane %v3601, 7
        %v3650 = vrot.slane %v3602, 7
        %v3651 = vrot.slane %v3603, 7
        %v3652 = vrot.slane %v3604, 7
        %v3653 = vrot.slane %v3605, 7
        %v3654 = vrot.slane %v3606, 7
        %v3655 = vrot.slane %v3607, 7
        %v3656 = vrot.slane %v3608, 7
        %v3657 = vrot.slane %v3609, 7
        %v3658 = vrot.slane %v3610, 7
        %v3659 = vrot.slane %v3611, 7
        %v3660 = vrot.slane %v3612, 7
        %v3661 = vrot.slane %v3613, 7
        %v3662 = vrot.slane %v3614, 7
        %v3663 = vrot.slane %v3615, 7
        %v3664 = vrot.slane %v3616, 7
        %v3665 = vrot.slane %v3617, 7
        %v3666 = vrot.slane %v3618, 7
        %v3667 = vrot.slane %v3619, 7
        %v3668 = vrot.slane %v3620, 7
        %v3669 = vrot.slane %v3621, 7
        %v3670 = vrot.slane %v3622, 7
        %v3671 = vrot.slane %v3623, 7
        %v3672 = vrot.slane %v3624, 7
        %v3673 = vrot.slane %v3625, 7
        %v3674 = vrot.slane %v3626, 7
        %v3675 = vrot.slane %v3627, 7
        %v3676 = vrot.slane %v3628, 7
        %v3677 = vrot.slane %v3629, 7
        %v3678 = vrot.slane %v3630, 7
        %v3679 = vrot.slane %v3631, 7
        %v3680 = vrot.slane %v3632, 7
        %v3681 = vrot.slane %v3633, 7
        %v3682 = vrot.slane %v3634, 7
        %v3683 = vrot.slane %v3635, 7
        %v3684 = vrot.slane %v3636, 7
        %v3685 = vrot.slane %v3637, 7
        %v3686 = vrot.slane %v3638, 7
        %v3687 = vrot.slane %v3639, 7
        %v3688 = vrot.slane %v3640, 7
        %vm3689 = vcmp.lt.s32.totalorder %v460, 1
        %v3690 = vsel %vm3689, %v3687, %v3688
        %v3691 = vsel %vm3689, %v3686, %v3687
        %v3692 = vsel %vm3689, %v3685, %v3686
        %v3693 = vsel %vm3689, %v3684, %v3685
        %v3694 = vsel %vm3689, %v3683, %v3684
        %v3695 = vsel %vm3689, %v3682, %v3683
        %v3696 = vsel %vm3689, %v3681, %v3682
        %v3697 = vsel %vm3689, %v3680, %v3681
        %v3698 = vsel %vm3689, %v3679, %v3680
        %v3699 = vsel %vm3689, %v3678, %v3679
        %v3700 = vsel %vm3689, %v3677, %v3678
        %v3701 = vsel %vm3689, %v3676, %v3677
        %v3702 = vsel %vm3689, %v3675, %v3676
        %v3703 = vsel %vm3689, %v3674, %v3675
        %v3704 = vsel %vm3689, %v3673, %v3674
        %v3705 = vsel %vm3689, %v3672, %v3673
        %v3706 = vsel %vm3689, %v3671, %v3672
        %v3707 = vsel %vm3689, %v3670, %v3671
        %v3708 = vsel %vm3689, %v3669, %v3670
        %v3709 = vsel %vm3689, %v3668, %v3669
        %v3710 = vsel %vm3689, %v3667, %v3668
        %v3711 = vsel %vm3689, %v3666, %v3667
        %v3712 = vsel %vm3689, %v3665, %v3666
        %v3713 = vsel %vm3689, %v3664, %v3665
        %v3714 = vsel %vm3689, %v3663, %v3664
        %v3715 = vsel %vm3689, %v3662, %v3663
        %v3716 = vsel %vm3689, %v3661, %v3662
        %v3717 = vsel %vm3689, %v3660, %v3661
        %v3718 = vsel %vm3689, %v3659, %v3660
        %v3719 = vsel %vm3689, %v3658, %v3659
        %v3720 = vsel %vm3689, %v3657, %v3658
        %v3721 = vsel %vm3689, %v3656, %v3657
        %v3722 = vsel %vm3689, %v3655, %v3656
        %v3723 = vsel %vm3689, %v3654, %v3655
        %v3724 = vsel %vm3689, %v3653, %v3654
        %v3725 = vsel %vm3689, %v3652, %v3653
        %v3726 = vsel %vm3689, %v3651, %v3652
        %v3727 = vsel %vm3689, %v3650, %v3651
        %v3728 = vsel %vm3689, %v3649, %v3650
        %v3729 = vsel %vm3689, %v3648, %v3649
        %v3730 = vsel %vm3689, %v3647, %v3648
        %v3731 = vsel %vm3689, %v3646, %v3647
        %v3732 = vsel %vm3689, %v3645, %v3646
        %v3733 = vsel %vm3689, %v3644, %v3645
        %v3734 = vsel %vm3689, %v3643, %v3644
        %v3735 = vsel %vm3689, %v3642, %v3643
        %v3736 = vsel %vm3689, %v3641, %v3642
        %v3737 = vsel %vm3689, %v3688, %v3641
        %v3738 = vpack.c.bf16 %v3736, %v3737
        %v3739 = vpack.c.bf16 %v3734, %v3735
        %v3740 = vpack.c.bf16 %v3732, %v3733
        %v3741 = vpack.c.bf16 %v3730, %v3731
        %v3742 = vpack.c.bf16 %v3728, %v3729
        %v3743 = vpack.c.bf16 %v3726, %v3727
        %v3744 = vpack.c.bf16 %v3724, %v3725
        %v3745 = vpack.c.bf16 %v3722, %v3723
        %v3746 = vpack.c.bf16 %v3720, %v3721
        %v3747 = vpack.c.bf16 %v3718, %v3719
        %v3748 = vpack.c.bf16 %v3716, %v3717
        %v3749 = vpack.c.bf16 %v3714, %v3715
        %v3750 = vpack.c.bf16 %v3712, %v3713
        %v3751 = vpack.c.bf16 %v3710, %v3711
        %v3752 = vpack.c.bf16 %v3708, %v3709
        %v3753 = vpack.c.bf16 %v3706, %v3707
        %v3754 = vpack.c.bf16 %v3704, %v3705
        %v3755 = vpack.c.bf16 %v3702, %v3703
        %v3756 = vpack.c.bf16 %v3700, %v3701
        %v3757 = vpack.c.bf16 %v3698, %v3699
        %v3758 = vpack.c.bf16 %v3696, %v3697
        %v3759 = vpack.c.bf16 %v3694, %v3695
        %v3760 = vpack.c.bf16 %v3692, %v3693
        %v3761 = vpack.c.bf16 %v3690, %v3691
        %3762 = vst [vmem:[#allocation3] sm:$0xff] %v3738
        %3763 = vst [vmem:[#allocation3 + $0x48] sm:$0xff] %v3739
        %3764 = vst [vmem:[#allocation3 + $0x90] sm:$0xff] %v3740
        %3765 = vst [vmem:[#allocation3 + $0xd8] sm:$0xff] %v3741
        %3766 = vst [vmem:[#allocation3 + $0x120] sm:$0xff] %v3742
        %3767 = vst [vmem:[#allocation3 + $0x168] sm:$0xff] %v3743
        %3768 = vst [vmem:[#allocation3 + $0x1b0] sm:$0xff] %v3744
        %3769 = vst [vmem:[#allocation3 + $0x1f8] sm:$0xff] %v3745
        %3770 = vst [vmem:[#allocation3 + $0x240] sm:$0xff] %v3746
        %3771 = vst [vmem:[#allocation3 + $0x288] sm:$0xff] %v3747
        %3772 = vst [vmem:[#allocation3 + $0x2d0] sm:$0xff] %v3748
        %3773 = vst [vmem:[#allocation3 + $0x318] sm:$0xff] %v3749
        %3774 = vst [vmem:[#allocation3 + $0x360] sm:$0xff] %v3750
        %3775 = vst [vmem:[#allocation3 + $0x3a8] sm:$0xff] %v3751
        %3776 = vst [vmem:[#allocation3 + $0x3f0] sm:$0xff] %v3752
        %3777 = vst [vmem:[#allocation3 + $0x438] sm:$0xff] %v3753
        %3778 = vst [vmem:[#allocation3 + $0x480] sm:$0xff] %v3754
        %3779 = vst [vmem:[#allocation3 + $0x4c8] sm:$0xff] %v3755
        %3780 = vst [vmem:[#allocation3 + $0x510] sm:$0xff] %v3756
        %3781 = vst [vmem:[#allocation3 + $0x558] sm:$0xff] %v3757
        %3782 = vst [vmem:[#allocation3 + $0x5a0] sm:$0xff] %v3758
        %3783 = vst [vmem:[#allocation3 + $0x5e8] sm:$0xff] %v3759
        %3784 = vst [vmem:[#allocation3 + $0x630] sm:$0xff] %v3760
        %3785 = vst [vmem:[#allocation3 + $0x678] sm:$0xff] %v3761
        %v3786 = vpack.c.bf16 %v3594, %v3593
        %v3787 = vpack.c.bf16 %v3596, %v3595
        %v3788 = vpack.c.bf16 %v3598, %v3597
        %v3789 = vpack.c.bf16 %v3600, %v3599
        %v3790 = vpack.c.bf16 %v3602, %v3601
        %v3791 = vpack.c.bf16 %v3604, %v3603
        %v3792 = vpack.c.bf16 %v3606, %v3605
        %v3793 = vpack.c.bf16 %v3608, %v3607
        %v3794 = vpack.c.bf16 %v3610, %v3609
        %v3795 = vpack.c.bf16 %v3612, %v3611
        %v3796 = vpack.c.bf16 %v3614, %v3613
        %v3797 = vpack.c.bf16 %v3616, %v3615
        %v3798 = vpack.c.bf16 %v3618, %v3617
        %v3799 = vpack.c.bf16 %v3620, %v3619
        %v3800 = vpack.c.bf16 %v3622, %v3621
        %v3801 = vpack.c.bf16 %v3624, %v3623
        %v3802 = vpack.c.bf16 %v3626, %v3625
        %v3803 = vpack.c.bf16 %v3628, %v3627
        %v3804 = vpack.c.bf16 %v3630, %v3629
        %v3805 = vpack.c.bf16 %v3632, %v3631
        %v3806 = vpack.c.bf16 %v3634, %v3633
        %v3807 = vpack.c.bf16 %v3636, %v3635
        %v3808 = vpack.c.bf16 %v3638, %v3637
        %v3809 = vpack.c.bf16 %v3640, %v3639
        %3810 = vst [vmem:[#allocation3 + $0x8] sm:$0xff] %v3786
        %3811 = vst [vmem:[#allocation3 + $0x50] sm:$0xff] %v3787
        %3812 = vst [vmem:[#allocation3 + $0x98] sm:$0xff] %v3788
        %3813 = vst [vmem:[#allocation3 + $0xe0] sm:$0xff] %v3789
        %3814 = vst [vmem:[#allocation3 + $0x128] sm:$0xff] %v3790
        %3815 = vst [vmem:[#allocation3 + $0x170] sm:$0xff] %v3791
        %3816 = vst [vmem:[#allocation3 + $0x1b8] sm:$0xff] %v3792
        %3817 = vst [vmem:[#allocation3 + $0x200] sm:$0xff] %v3793
        %3818 = vst [vmem:[#allocation3 + $0x248] sm:$0xff] %v3794
        %3819 = vst [vmem:[#allocation3 + $0x290] sm:$0xff] %v3795
        %3820 = vst [vmem:[#allocation3 + $0x2d8] sm:$0xff] %v3796
        %3821 = vst [vmem:[#allocation3 + $0x320] sm:$0xff] %v3797
        %3822 = vst [vmem:[#allocation3 + $0x368] sm:$0xff] %v3798
        %3823 = vst [vmem:[#allocation3 + $0x3b0] sm:$0xff] %v3799
        %3824 = vst [vmem:[#allocation3 + $0x3f8] sm:$0xff] %v3800
        %3825 = vst [vmem:[#allocation3 + $0x440] sm:$0xff] %v3801
        %3826 = vst [vmem:[#allocation3 + $0x488] sm:$0xff] %v3802
        %3827 = vst [vmem:[#allocation3 + $0x4d0] sm:$0xff] %v3803
        %3828 = vst [vmem:[#allocation3 + $0x518] sm:$0xff] %v3804
        %3829 = vst [vmem:[#allocation3 + $0x560] sm:$0xff] %v3805
        %3830 = vst [vmem:[#allocation3 + $0x5a8] sm:$0xff] %v3806
        %3831 = vst [vmem:[#allocation3 + $0x5f0] sm:$0xff] %v3807
        %3832 = vst [vmem:[#allocation3 + $0x638] sm:$0xff] %v3808
        %3833 = vst [vmem:[#allocation3 + $0x680] sm:$0xff] %v3809
        %v3834 = vrot.slane %v3593, 1
        %v3835 = vrot.slane %v3594, 1
        %v3836 = vrot.slane %v3595, 1
        %v3837 = vrot.slane %v3596, 1
        %v3838 = vrot.slane %v3597, 1
        %v3839 = vrot.slane %v3598, 1
        %v3840 = vrot.slane %v3599, 1
        %v3841 = vrot.slane %v3600, 1
        %v3842 = vrot.slane %v3601, 1
        %v3843 = vrot.slane %v3602, 1
        %v3844 = vrot.slane %v3603, 1
        %v3845 = vrot.slane %v3604, 1
        %v3846 = vrot.slane %v3605, 1
        %v3847 = vrot.slane %v3606, 1
        %v3848 = vrot.slane %v3607, 1
        %v3849 = vrot.slane %v3608, 1
        %v3850 = vrot.slane %v3609, 1
        %v3851 = vrot.slane %v3610, 1
        %v3852 = vrot.slane %v3611, 1
        %v3853 = vrot.slane %v3612, 1
        %v3854 = vrot.slane %v3613, 1
        %v3855 = vrot.slane %v3614, 1
        %v3856 = vrot.slane %v3615, 1
        %v3857 = vrot.slane %v3616, 1
        %v3858 = vrot.slane %v3617, 1
        %v3859 = vrot.slane %v3618, 1
        %v3860 = vrot.slane %v3619, 1
        %v3861 = vrot.slane %v3620, 1
        %v3862 = vrot.slane %v3621, 1
        %v3863 = vrot.slane %v3622, 1
        %v3864 = vrot.slane %v3623, 1
        %v3865 = vrot.slane %v3624, 1
        %v3866 = vrot.slane %v3625, 1
        %v3867 = vrot.slane %v3626, 1
        %v3868 = vrot.slane %v3627, 1
        %v3869 = vrot.slane %v3628, 1
        %v3870 = vrot.slane %v3629, 1
        %v3871 = vrot.slane %v3630, 1
        %v3872 = vrot.slane %v3631, 1
        %v3873 = vrot.slane %v3632, 1
        %v3874 = vrot.slane %v3633, 1
        %v3875 = vrot.slane %v3634, 1
        %v3876 = vrot.slane %v3635, 1
        %v3877 = vrot.slane %v3636, 1
        %v3878 = vrot.slane %v3637, 1
        %v3879 = vrot.slane %v3638, 1
        %v3880 = vrot.slane %v3639, 1
        %v3881 = vrot.slane %v3640, 1
        %v3882 = vsel %vm461, %v3880, %v3881
        %v3883 = vsel %vm461, %v3879, %v3880
        %v3884 = vsel %vm461, %v3878, %v3879
        %v3885 = vsel %vm461, %v3877, %v3878
        %v3886 = vsel %vm461, %v3876, %v3877
        %v3887 = vsel %vm461, %v3875, %v3876
        %v3888 = vsel %vm461, %v3874, %v3875
        %v3889 = vsel %vm461, %v3873, %v3874
        %v3890 = vsel %vm461, %v3872, %v3873
        %v3891 = vsel %vm461, %v3871, %v3872
        %v3892 = vsel %vm461, %v3870, %v3871
        %v3893 = vsel %vm461, %v3869, %v3870
        %v3894 = vsel %vm461, %v3868, %v3869
        %v3895 = vsel %vm461, %v3867, %v3868
        %v3896 = vsel %vm461, %v3866, %v3867
        %v3897 = vsel %vm461, %v3865, %v3866
        %v3898 = vsel %vm461, %v3864, %v3865
        %v3899 = vsel %vm461, %v3863, %v3864
        %v3900 = vsel %vm461, %v3862, %v3863
        %v3901 = vsel %vm461, %v3861, %v3862
        %v3902 = vsel %vm461, %v3860, %v3861
        %v3903 = vsel %vm461, %v3859, %v3860
        %v3904 = vsel %vm461, %v3858, %v3859
        %v3905 = vsel %vm461, %v3857, %v3858
        %v3906 = vsel %vm461, %v3856, %v3857
        %v3907 = vsel %vm461, %v3855, %v3856
        %v3908 = vsel %vm461, %v3854, %v3855
        %v3909 = vsel %vm461, %v3853, %v3854
        %v3910 = vsel %vm461, %v3852, %v3853
        %v3911 = vsel %vm461, %v3851, %v3852
        %v3912 = vsel %vm461, %v3850, %v3851
        %v3913 = vsel %vm461, %v3849, %v3850
        %v3914 = vsel %vm461, %v3848, %v3849
        %v3915 = vsel %vm461, %v3847, %v3848
        %v3916 = vsel %vm461, %v3846, %v3847
        %v3917 = vsel %vm461, %v3845, %v3846
        %v3918 = vsel %vm461, %v3844, %v3845
        %v3919 = vsel %vm461, %v3843, %v3844
        %v3920 = vsel %vm461, %v3842, %v3843
        %v3921 = vsel %vm461, %v3841, %v3842
        %v3922 = vsel %vm461, %v3840, %v3841
        %v3923 = vsel %vm461, %v3839, %v3840
        %v3924 = vsel %vm461, %v3838, %v3839
        %v3925 = vsel %vm461, %v3837, %v3838
        %v3926 = vsel %vm461, %v3836, %v3837
        %v3927 = vsel %vm461, %v3835, %v3836
        %v3928 = vsel %vm461, %v3834, %v3835
        %v3929 = vsel %vm461, %v3881, %v3834
        %v3930 = vpack.c.bf16 %v3927, %v3928
        %v3931 = vpack.c.bf16 %v3925, %v3926
        %v3932 = vpack.c.bf16 %v3923, %v3924
        %v3933 = vpack.c.bf16 %v3921, %v3922
        %v3934 = vpack.c.bf16 %v3919, %v3920
        %v3935 = vpack.c.bf16 %v3917, %v3918
        %v3936 = vpack.c.bf16 %v3915, %v3916
        %v3937 = vpack.c.bf16 %v3913, %v3914
        %v3938 = vpack.c.bf16 %v3911, %v3912
        %v3939 = vpack.c.bf16 %v3909, %v3910
        %v3940 = vpack.c.bf16 %v3907, %v3908
        %v3941 = vpack.c.bf16 %v3905, %v3906
        %v3942 = vpack.c.bf16 %v3903, %v3904
        %v3943 = vpack.c.bf16 %v3901, %v3902
        %v3944 = vpack.c.bf16 %v3899, %v3900
        %v3945 = vpack.c.bf16 %v3897, %v3898
        %v3946 = vpack.c.bf16 %v3895, %v3896
        %v3947 = vpack.c.bf16 %v3893, %v3894
        %v3948 = vpack.c.bf16 %v3891, %v3892
        %v3949 = vpack.c.bf16 %v3889, %v3890
        %v3950 = vpack.c.bf16 %v3887, %v3888
        %v3951 = vpack.c.bf16 %v3885, %v3886
        %v3952 = vpack.c.bf16 %v3883, %v3884
        %v3953 = vpack.c.bf16 %v3929, %v3882
        %3954 = vst [vmem:[#allocation3 + $0x10] sm:$0xff] %v3930
        %3955 = vst [vmem:[#allocation3 + $0x58] sm:$0xff] %v3931
        %3956 = vst [vmem:[#allocation3 + $0xa0] sm:$0xff] %v3932
        %3957 = vst [vmem:[#allocation3 + $0xe8] sm:$0xff] %v3933
        %3958 = vst [vmem:[#allocation3 + $0x130] sm:$0xff] %v3934
        %3959 = vst [vmem:[#allocation3 + $0x178] sm:$0xff] %v3935
        %3960 = vst [vmem:[#allocation3 + $0x1c0] sm:$0xff] %v3936
        %3961 = vst [vmem:[#allocation3 + $0x208] sm:$0xff] %v3937
        %3962 = vst [vmem:[#allocation3 + $0x250] sm:$0xff] %v3938
        %3963 = vst [vmem:[#allocation3 + $0x298] sm:$0xff] %v3939
        %3964 = vst [vmem:[#allocation3 + $0x2e0] sm:$0xff] %v3940
        %3965 = vst [vmem:[#allocation3 + $0x328] sm:$0xff] %v3941
        %3966 = vst [vmem:[#allocation3 + $0x370] sm:$0xff] %v3942
        %3967 = vst [vmem:[#allocation3 + $0x3b8] sm:$0xff] %v3943
        %3968 = vst [vmem:[#allocation3 + $0x400] sm:$0xff] %v3944
        %3969 = vst [vmem:[#allocation3 + $0x448] sm:$0xff] %v3945
        %3970 = vst [vmem:[#allocation3 + $0x490] sm:$0xff] %v3946
        %3971 = vst [vmem:[#allocation3 + $0x4d8] sm:$0xff] %v3947
        %3972 = vst [vmem:[#allocation3 + $0x520] sm:$0xff] %v3948
        %3973 = vst [vmem:[#allocation3 + $0x568] sm:$0xff] %v3949
        %3974 = vst [vmem:[#allocation3 + $0x5b0] sm:$0xff] %v3950
        %3975 = vst [vmem:[#allocation3 + $0x5f8] sm:$0xff] %v3951
        %3976 = vst [vmem:[#allocation3 + $0x640] sm:$0xff] %v3952
        %3977 = vst [vmem:[#allocation3 + $0x688] sm:$0xff] %v3953
        %v3978 = vld [vmem:[#allocation2 + $0x18] sm:$0xff]
        %v3979 = vld [vmem:[#allocation2 + $0x20] sm:$0xff]
        %v3980 = vld [vmem:[#allocation2 + $0x28] sm:$0xff]
        %v3981 = vld [vmem:[#allocation2 + $0x30] sm:$0xff]
        %v3982 = vld [vmem:[#allocation2 + $0x38] sm:$0xff]
        %v3983 = vld [vmem:[#allocation2 + $0x40] sm:$0xff]
        %v3984 = vld [vmem:[#allocation2 + $0x48] sm:$0xff]
        %v3985 = vld [vmem:[#allocation2 + $0x50] sm:$0xff]
        %v3986 = vld [vmem:[#allocation2 + $0x58] sm:$0xff]
        %v3987 = vld [vmem:[#allocation2 + $0x60] sm:$0xff]
        %v3988 = vld [vmem:[#allocation2 + $0x68] sm:$0xff]
        %v3989 = vld [vmem:[#allocation2 + $0x70] sm:$0xff]
        %v3990 = vld [vmem:[#allocation2 + $0x78] sm:$0xff]
        %v3991 = vld [vmem:[#allocation2 + $0x80] sm:$0xff]
        %v3992 = vld [vmem:[#allocation2 + $0x88] sm:$0xff]
        %v3993 = vld [vmem:[#allocation2 + $0x90] sm:$0xff]
        %v3994 = vld [vmem:[#allocation2 + $0x98] sm:$0xff]
        %v3995 = vld [vmem:[#allocation2 + $0xa0] sm:$0xff]
        %v3996 = vld [vmem:[#allocation2 + $0xa8] sm:$0xff]
        %v3997 = vld [vmem:[#allocation2 + $0xb0] sm:$0xff]
        %v3998 = vld [vmem:[#allocation2 + $0xb8] sm:$0xff]
        %v3999 = vld [vmem:[#allocation2 + $0xc0] sm:$0xff]
        %v4000 = vld [vmem:[#allocation2 + $0xc8] sm:$0xff]
        %v4001 = vld [vmem:[#allocation2 + $0xd0] sm:$0xff]
        %v4002 = vld [vmem:[#allocation2 + $0xd8] sm:$0xff]
        %v4003 = vld [vmem:[#allocation2 + $0xe0] sm:$0xff]
        %v4004 = vld [vmem:[#allocation2 + $0xe8] sm:$0xff]
        %v4005 = vld [vmem:[#allocation2 + $0xf0] sm:$0xff]
        %v4006 = vld [vmem:[#allocation2 + $0xf8] sm:$0xff]
        %v4007 = vld [vmem:[#allocation2 + $0x100] sm:$0xff]
        %v4008 = vld [vmem:[#allocation2 + $0x108] sm:$0xff]
        %v4009 = vld [vmem:[#allocation2 + $0x110] sm:$0xff]
        %v4010 = vld [vmem:[#allocation2 + $0x118] sm:$0xff]
        %v4011 = vld [vmem:[#allocation2 + $0x120] sm:$0xff]
        %v4012 = vld [vmem:[#allocation2 + $0x128] sm:$0xff]
        %v4013 = vld [vmem:[#allocation2 + $0x130] sm:$0xff]
        %v4014 = vld [vmem:[#allocation2 + $0x138] sm:$0xff]
        %v4015 = vld [vmem:[#allocation2 + $0x140] sm:$0xff]
        %v4016 = vld [vmem:[#allocation2 + $0x148] sm:$0xff]
        %v4017 = vld [vmem:[#allocation2 + $0x150] sm:$0xff]
        %v4018 = vld [vmem:[#allocation2 + $0x158] sm:$0xff]
        %v4019 = vld [vmem:[#allocation2 + $0x160] sm:$0xff]
        %v4020 = vld [vmem:[#allocation2 + $0x168] sm:$0xff]
        %v4021 = vld [vmem:[#allocation2 + $0x170] sm:$0xff]
        %v4022 = vld [vmem:[#allocation2 + $0x178] sm:$0xff]
        %v4023 = vld [vmem:[#allocation2 + $0x180] sm:$0xff]
        %v4024 = vld [vmem:[#allocation2 + $0x188] sm:$0xff]
        %v4025 = vld [vmem:[#allocation2 + $0x190] sm:$0xff]
        %v4026 = vrot.slane %v3978, 7
        %v4027 = vrot.slane %v3979, 7
        %v4028 = vrot.slane %v3980, 7
        %v4029 = vrot.slane %v3981, 7
        %v4030 = vrot.slane %v3982, 7
        %v4031 = vrot.slane %v3983, 7
        %v4032 = vrot.slane %v3984, 7
        %v4033 = vrot.slane %v3985, 7
        %v4034 = vrot.slane %v3986, 7
        %v4035 = vrot.slane %v3987, 7
        %v4036 = vrot.slane %v3988, 7
        %v4037 = vrot.slane %v3989, 7
        %v4038 = vrot.slane %v3990, 7
        %v4039 = vrot.slane %v3991, 7
        %v4040 = vrot.slane %v3992, 7
        %v4041 = vrot.slane %v3993, 7
        %v4042 = vrot.slane %v3994, 7
        %v4043 = vrot.slane %v3995, 7
        %v4044 = vrot.slane %v3996, 7
        %v4045 = vrot.slane %v3997, 7
        %v4046 = vrot.slane %v3998, 7
        %v4047 = vrot.slane %v3999, 7
        %v4048 = vrot.slane %v4000, 7
        %v4049 = vrot.slane %v4001, 7
        %v4050 = vrot.slane %v4002, 7
        %v4051 = vrot.slane %v4003, 7
        %v4052 = vrot.slane %v4004, 7
        %v4053 = vrot.slane %v4005, 7
        %v4054 = vrot.slane %v4006, 7
        %v4055 = vrot.slane %v4007, 7
        %v4056 = vrot.slane %v4008, 7
        %v4057 = vrot.slane %v4009, 7
        %v4058 = vrot.slane %v4010, 7
        %v4059 = vrot.slane %v4011, 7
        %v4060 = vrot.slane %v4012, 7
        %v4061 = vrot.slane %v4013, 7
        %v4062 = vrot.slane %v4014, 7
        %v4063 = vrot.slane %v4015, 7
        %v4064 = vrot.slane %v4016, 7
        %v4065 = vrot.slane %v4017, 7
        %v4066 = vrot.slane %v4018, 7
        %v4067 = vrot.slane %v4019, 7
        %v4068 = vrot.slane %v4020, 7
        %v4069 = vrot.slane %v4021, 7
        %v4070 = vrot.slane %v4022, 7
        %v4071 = vrot.slane %v4023, 7
        %v4072 = vrot.slane %v4024, 7
        %v4073 = vrot.slane %v4025, 7
        %v4074 = vsel %vm3689, %v4072, %v4073
        %v4075 = vsel %vm3689, %v4071, %v4072
        %v4076 = vsel %vm3689, %v4070, %v4071
        %v4077 = vsel %vm3689, %v4069, %v4070
        %v4078 = vsel %vm3689, %v4068, %v4069
        %v4079 = vsel %vm3689, %v4067, %v4068
        %v4080 = vsel %vm3689, %v4066, %v4067
        %v4081 = vsel %vm3689, %v4065, %v4066
        %v4082 = vsel %vm3689, %v4064, %v4065
        %v4083 = vsel %vm3689, %v4063, %v4064
        %v4084 = vsel %vm3689, %v4062, %v4063
        %v4085 = vsel %vm3689, %v4061, %v4062
        %v4086 = vsel %vm3689, %v4060, %v4061
        %v4087 = vsel %vm3689, %v4059, %v4060
        %v4088 = vsel %vm3689, %v4058, %v4059
        %v4089 = vsel %vm3689, %v4057, %v4058
        %v4090 = vsel %vm3689, %v4056, %v4057
        %v4091 = vsel %vm3689, %v4055, %v4056
        %v4092 = vsel %vm3689, %v4054, %v4055
        %v4093 = vsel %vm3689, %v4053, %v4054
        %v4094 = vsel %vm3689, %v4052, %v4053
        %v4095 = vsel %vm3689, %v4051, %v4052
        %v4096 = vsel %vm3689, %v4050, %v4051
        %v4097 = vsel %vm3689, %v4049, %v4050
        %v4098 = vsel %vm3689, %v4048, %v4049
        %v4099 = vsel %vm3689, %v4047, %v4048
        %v4100 = vsel %vm3689, %v4046, %v4047
        %v4101 = vsel %vm3689, %v4045, %v4046
        %v4102 = vsel %vm3689, %v4044, %v4045
        %v4103 = vsel %vm3689, %v4043, %v4044
        %v4104 = vsel %vm3689, %v4042, %v4043
        %v4105 = vsel %vm3689, %v4041, %v4042
        %v4106 = vsel %vm3689, %v4040, %v4041
        %v4107 = vsel %vm3689, %v4039, %v4040
        %v4108 = vsel %vm3689, %v4038, %v4039
        %v4109 = vsel %vm3689, %v4037, %v4038
        %v4110 = vsel %vm3689, %v4036, %v4037
        %v4111 = vsel %vm3689, %v4035, %v4036
        %v4112 = vsel %vm3689, %v4034, %v4035
        %v4113 = vsel %vm3689, %v4033, %v4034
        %v4114 = vsel %vm3689, %v4032, %v4033
        %v4115 = vsel %vm3689, %v4031, %v4032
        %v4116 = vsel %vm3689, %v4030, %v4031
        %v4117 = vsel %vm3689, %v4029, %v4030
        %v4118 = vsel %vm3689, %v4028, %v4029
        %v4119 = vsel %vm3689, %v4027, %v4028
        %v4120 = vsel %vm3689, %v4026, %v4027
        %v4121 = vsel %vm3689, %v4073, %v4026
        %v4122 = vpack.c.bf16 %v4120, %v4121
        %v4123 = vpack.c.bf16 %v4118, %v4119
        %v4124 = vpack.c.bf16 %v4116, %v4117
        %v4125 = vpack.c.bf16 %v4114, %v4115
        %v4126 = vpack.c.bf16 %v4112, %v4113
        %v4127 = vpack.c.bf16 %v4110, %v4111
        %v4128 = vpack.c.bf16 %v4108, %v4109
        %v4129 = vpack.c.bf16 %v4106, %v4107
        %v4130 = vpack.c.bf16 %v4104, %v4105
        %v4131 = vpack.c.bf16 %v4102, %v4103
        %v4132 = vpack.c.bf16 %v4100, %v4101
        %v4133 = vpack.c.bf16 %v4098, %v4099
        %v4134 = vpack.c.bf16 %v4096, %v4097
        %v4135 = vpack.c.bf16 %v4094, %v4095
        %v4136 = vpack.c.bf16 %v4092, %v4093
        %v4137 = vpack.c.bf16 %v4090, %v4091
        %v4138 = vpack.c.bf16 %v4088, %v4089
        %v4139 = vpack.c.bf16 %v4086, %v4087
        %v4140 = vpack.c.bf16 %v4084, %v4085
        %v4141 = vpack.c.bf16 %v4082, %v4083
        %v4142 = vpack.c.bf16 %v4080, %v4081
        %v4143 = vpack.c.bf16 %v4078, %v4079
        %v4144 = vpack.c.bf16 %v4076, %v4077
        %v4145 = vpack.c.bf16 %v4074, %v4075
        %4146 = vst [vmem:[#allocation3 + $0x18] sm:$0xff] %v4122
        %4147 = vst [vmem:[#allocation3 + $0x60] sm:$0xff] %v4123
        %4148 = vst [vmem:[#allocation3 + $0xa8] sm:$0xff] %v4124
        %4149 = vst [vmem:[#allocation3 + $0xf0] sm:$0xff] %v4125
        %4150 = vst [vmem:[#allocation3 + $0x138] sm:$0xff] %v4126
        %4151 = vst [vmem:[#allocation3 + $0x180] sm:$0xff] %v4127
        %4152 = vst [vmem:[#allocation3 + $0x1c8] sm:$0xff] %v4128
        %4153 = vst [vmem:[#allocation3 + $0x210] sm:$0xff] %v4129
        %4154 = vst [vmem:[#allocation3 + $0x258] sm:$0xff] %v4130
        %4155 = vst [vmem:[#allocation3 + $0x2a0] sm:$0xff] %v4131
        %4156 = vst [vmem:[#allocation3 + $0x2e8] sm:$0xff] %v4132
        %4157 = vst [vmem:[#allocation3 + $0x330] sm:$0xff] %v4133
        %4158 = vst [vmem:[#allocation3 + $0x378] sm:$0xff] %v4134
        %4159 = vst [vmem:[#allocation3 + $0x3c0] sm:$0xff] %v4135
        %4160 = vst [vmem:[#allocation3 + $0x408] sm:$0xff] %v4136
        %4161 = vst [vmem:[#allocation3 + $0x450] sm:$0xff] %v4137
        %4162 = vst [vmem:[#allocation3 + $0x498] sm:$0xff] %v4138
        %4163 = vst [vmem:[#allocation3 + $0x4e0] sm:$0xff] %v4139
        %4164 = vst [vmem:[#allocation3 + $0x528] sm:$0xff] %v4140
        %4165 = vst [vmem:[#allocation3 + $0x570] sm:$0xff] %v4141
        %4166 = vst [vmem:[#allocation3 + $0x5b8] sm:$0xff] %v4142
        %4167 = vst [vmem:[#allocation3 + $0x600] sm:$0xff] %v4143
        %4168 = vst [vmem:[#allocation3 + $0x648] sm:$0xff] %v4144
        %4169 = vst [vmem:[#allocation3 + $0x690] sm:$0xff] %v4145
        %v4170 = vpack.c.bf16 %v3979, %v3978
        %v4171 = vpack.c.bf16 %v3981, %v3980
        %v4172 = vpack.c.bf16 %v3983, %v3982
        %v4173 = vpack.c.bf16 %v3985, %v3984
        %v4174 = vpack.c.bf16 %v3987, %v3986
        %v4175 = vpack.c.bf16 %v3989, %v3988
        %v4176 = vpack.c.bf16 %v3991, %v3990
        %v4177 = vpack.c.bf16 %v3993, %v3992
        %v4178 = vpack.c.bf16 %v3995, %v3994
        %v4179 = vpack.c.bf16 %v3997, %v3996
        %v4180 = vpack.c.bf16 %v3999, %v3998
        %v4181 = vpack.c.bf16 %v4001, %v4000
        %v4182 = vpack.c.bf16 %v4003, %v4002
        %v4183 = vpack.c.bf16 %v4005, %v4004
        %v4184 = vpack.c.bf16 %v4007, %v4006
        %v4185 = vpack.c.bf16 %v4009, %v4008
        %v4186 = vpack.c.bf16 %v4011, %v4010
        %v4187 = vpack.c.bf16 %v4013, %v4012
        %v4188 = vpack.c.bf16 %v4015, %v4014
        %v4189 = vpack.c.bf16 %v4017, %v4016
        %v4190 = vpack.c.bf16 %v4019, %v4018
        %v4191 = vpack.c.bf16 %v4021, %v4020
        %v4192 = vpack.c.bf16 %v4023, %v4022
        %v4193 = vpack.c.bf16 %v4025, %v4024
        %4194 = vst [vmem:[#allocation3 + $0x20] sm:$0xff] %v4170
        %4195 = vst [vmem:[#allocation3 + $0x68] sm:$0xff] %v4171
        %4196 = vst [vmem:[#allocation3 + $0xb0] sm:$0xff] %v4172
        %4197 = vst [vmem:[#allocation3 + $0xf8] sm:$0xff] %v4173
        %4198 = vst [vmem:[#allocation3 + $0x140] sm:$0xff] %v4174
        %4199 = vst [vmem:[#allocation3 + $0x188] sm:$0xff] %v4175
        %4200 = vst [vmem:[#allocation3 + $0x1d0] sm:$0xff] %v4176
        %4201 = vst [vmem:[#allocation3 + $0x218] sm:$0xff] %v4177
        %4202 = vst [vmem:[#allocation3 + $0x260] sm:$0xff] %v4178
        %4203 = vst [vmem:[#allocation3 + $0x2a8] sm:$0xff] %v4179
        %4204 = vst [vmem:[#allocation3 + $0x2f0] sm:$0xff] %v4180
        %4205 = vst [vmem:[#allocation3 + $0x338] sm:$0xff] %v4181
        %4206 = vst [vmem:[#allocation3 + $0x380] sm:$0xff] %v4182
        %4207 = vst [vmem:[#allocation3 + $0x3c8] sm:$0xff] %v4183
        %4208 = vst [vmem:[#allocation3 + $0x410] sm:$0xff] %v4184
        %4209 = vst [vmem:[#allocation3 + $0x458] sm:$0xff] %v4185
        %4210 = vst [vmem:[#allocation3 + $0x4a0] sm:$0xff] %v4186
        %4211 = vst [vmem:[#allocation3 + $0x4e8] sm:$0xff] %v4187
        %4212 = vst [vmem:[#allocation3 + $0x530] sm:$0xff] %v4188
        %4213 = vst [vmem:[#allocation3 + $0x578] sm:$0xff] %v4189
        %4214 = vst [vmem:[#allocation3 + $0x5c0] sm:$0xff] %v4190
        %4215 = vst [vmem:[#allocation3 + $0x608] sm:$0xff] %v4191
        %4216 = vst [vmem:[#allocation3 + $0x650] sm:$0xff] %v4192
        %4217 = vst [vmem:[#allocation3 + $0x698] sm:$0xff] %v4193
        %v4218 = vrot.slane %v3978, 1
        %v4219 = vrot.slane %v3979, 1
        %v4220 = vrot.slane %v3980, 1
        %v4221 = vrot.slane %v3981, 1
        %v4222 = vrot.slane %v3982, 1
        %v4223 = vrot.slane %v3983, 1
        %v4224 = vrot.slane %v3984, 1
        %v4225 = vrot.slane %v3985, 1
        %v4226 = vrot.slane %v3986, 1
        %v4227 = vrot.slane %v3987, 1
        %v4228 = vrot.slane %v3988, 1
        %v4229 = vrot.slane %v3989, 1
        %v4230 = vrot.slane %v3990, 1
        %v4231 = vrot.slane %v3991, 1
        %v4232 = vrot.slane %v3992, 1
        %v4233 = vrot.slane %v3993, 1
        %v4234 = vrot.slane %v3994, 1
        %v4235 = vrot.slane %v3995, 1
        %v4236 = vrot.slane %v3996, 1
        %v4237 = vrot.slane %v3997, 1
        %v4238 = vrot.slane %v3998, 1
        %v4239 = vrot.slane %v3999, 1
        %v4240 = vrot.slane %v4000, 1
        %v4241 = vrot.slane %v4001, 1
        %v4242 = vrot.slane %v4002, 1
        %v4243 = vrot.slane %v4003, 1
        %v4244 = vrot.slane %v4004, 1
        %v4245 = vrot.slane %v4005, 1
        %v4246 = vrot.slane %v4006, 1
        %v4247 = vrot.slane %v4007, 1
        %v4248 = vrot.slane %v4008, 1
        %v4249 = vrot.slane %v4009, 1
        %v4250 = vrot.slane %v4010, 1
        %v4251 = vrot.slane %v4011, 1
        %v4252 = vrot.slane %v4012, 1
        %v4253 = vrot.slane %v4013, 1
        %v4254 = vrot.slane %v4014, 1
        %v4255 = vrot.slane %v4015, 1
        %v4256 = vrot.slane %v4016, 1
        %v4257 = vrot.slane %v4017, 1
        %v4258 = vrot.slane %v4018, 1
        %v4259 = vrot.slane %v4019, 1
        %v4260 = vrot.slane %v4020, 1
        %v4261 = vrot.slane %v4021, 1
        %v4262 = vrot.slane %v4022, 1
        %v4263 = vrot.slane %v4023, 1
        %v4264 = vrot.slane %v4024, 1
        %v4265 = vrot.slane %v4025, 1
        %v4266 = vsel %vm461, %v4264, %v4265
        %v4267 = vsel %vm461, %v4263, %v4264
        %v4268 = vsel %vm461, %v4262, %v4263
        %v4269 = vsel %vm461, %v4261, %v4262
        %v4270 = vsel %vm461, %v4260, %v4261
        %v4271 = vsel %vm461, %v4259, %v4260
        %v4272 = vsel %vm461, %v4258, %v4259
        %v4273 = vsel %vm461, %v4257, %v4258
        %v4274 = vsel %vm461, %v4256, %v4257
        %v4275 = vsel %vm461, %v4255, %v4256
        %v4276 = vsel %vm461, %v4254, %v4255
        %v4277 = vsel %vm461, %v4253, %v4254
        %v4278 = vsel %vm461, %v4252, %v4253
        %v4279 = vsel %vm461, %v4251, %v4252
        %v4280 = vsel %vm461, %v4250, %v4251
        %v4281 = vsel %vm461, %v4249, %v4250
        %v4282 = vsel %vm461, %v4248, %v4249
        %v4283 = vsel %vm461, %v4247, %v4248
        %v4284 = vsel %vm461, %v4246, %v4247
        %v4285 = vsel %vm461, %v4245, %v4246
        %v4286 = vsel %vm461, %v4244, %v4245
        %v4287 = vsel %vm461, %v4243, %v4244
        %v4288 = vsel %vm461, %v4242, %v4243
        %v4289 = vsel %vm461, %v4241, %v4242
        %v4290 = vsel %vm461, %v4240, %v4241
        %v4291 = vsel %vm461, %v4239, %v4240
        %v4292 = vsel %vm461, %v4238, %v4239
        %v4293 = vsel %vm461, %v4237, %v4238
        %v4294 = vsel %vm461, %v4236, %v4237
        %v4295 = vsel %vm461, %v4235, %v4236
        %v4296 = vsel %vm461, %v4234, %v4235
        %v4297 = vsel %vm461, %v4233, %v4234
        %v4298 = vsel %vm461, %v4232, %v4233
        %v4299 = vsel %vm461, %v4231, %v4232
        %v4300 = vsel %vm461, %v4230, %v4231
        %v4301 = vsel %vm461, %v4229, %v4230
        %v4302 = vsel %vm461, %v4228, %v4229
        %v4303 = vsel %vm461, %v4227, %v4228
        %v4304 = vsel %vm461, %v4226, %v4227
        %v4305 = vsel %vm461, %v4225, %v4226
        %v4306 = vsel %vm461, %v4224, %v4225
        %v4307 = vsel %vm461, %v4223, %v4224
        %v4308 = vsel %vm461, %v4222, %v4223
        %v4309 = vsel %vm461, %v4221, %v4222
        %v4310 = vsel %vm461, %v4220, %v4221
        %v4311 = vsel %vm461, %v4219, %v4220
        %v4312 = vsel %vm461, %v4218, %v4219
        %v4313 = vsel %vm461, %v4265, %v4218
        %v4314 = vpack.c.bf16 %v4311, %v4312
        %v4315 = vpack.c.bf16 %v4309, %v4310
        %v4316 = vpack.c.bf16 %v4307, %v4308
        %v4317 = vpack.c.bf16 %v4305, %v4306
        %v4318 = vpack.c.bf16 %v4303, %v4304
        %v4319 = vpack.c.bf16 %v4301, %v4302
        %v4320 = vpack.c.bf16 %v4299, %v4300
        %v4321 = vpack.c.bf16 %v4297, %v4298
        %v4322 = vpack.c.bf16 %v4295, %v4296
        %v4323 = vpack.c.bf16 %v4293, %v4294
        %v4324 = vpack.c.bf16 %v4291, %v4292
        %v4325 = vpack.c.bf16 %v4289, %v4290
        %v4326 = vpack.c.bf16 %v4287, %v4288
        %v4327 = vpack.c.bf16 %v4285, %v4286
        %v4328 = vpack.c.bf16 %v4283, %v4284
        %v4329 = vpack.c.bf16 %v4281, %v4282
        %v4330 = vpack.c.bf16 %v4279, %v4280
        %v4331 = vpack.c.bf16 %v4277, %v4278
        %v4332 = vpack.c.bf16 %v4275, %v4276
        %v4333 = vpack.c.bf16 %v4273, %v4274
        %v4334 = vpack.c.bf16 %v4271, %v4272
        %v4335 = vpack.c.bf16 %v4269, %v4270
        %v4336 = vpack.c.bf16 %v4267, %v4268
        %v4337 = vpack.c.bf16 %v4313, %v4266
        %4338 = vst [vmem:[#allocation3 + $0x28] sm:$0xff] %v4314
        %4339 = vst [vmem:[#allocation3 + $0x70] sm:$0xff] %v4315
        %4340 = vst [vmem:[#allocation3 + $0xb8] sm:$0xff] %v4316
        %4341 = vst [vmem:[#allocation3 + $0x100] sm:$0xff] %v4317
        %4342 = vst [vmem:[#allocation3 + $0x148] sm:$0xff] %v4318
        %4343 = vst [vmem:[#allocation3 + $0x190] sm:$0xff] %v4319
        %4344 = vst [vmem:[#allocation3 + $0x1d8] sm:$0xff] %v4320
        %4345 = vst [vmem:[#allocation3 + $0x220] sm:$0xff] %v4321
        %4346 = vst [vmem:[#allocation3 + $0x268] sm:$0xff] %v4322
        %4347 = vst [vmem:[#allocation3 + $0x2b0] sm:$0xff] %v4323
        %4348 = vst [vmem:[#allocation3 + $0x2f8] sm:$0xff] %v4324
        %4349 = vst [vmem:[#allocation3 + $0x340] sm:$0xff] %v4325
        %4350 = vst [vmem:[#allocation3 + $0x388] sm:$0xff] %v4326
        %4351 = vst [vmem:[#allocation3 + $0x3d0] sm:$0xff] %v4327
        %4352 = vst [vmem:[#allocation3 + $0x418] sm:$0xff] %v4328
        %4353 = vst [vmem:[#allocation3 + $0x460] sm:$0xff] %v4329
        %4354 = vst [vmem:[#allocation3 + $0x4a8] sm:$0xff] %v4330
        %4355 = vst [vmem:[#allocation3 + $0x4f0] sm:$0xff] %v4331
        %4356 = vst [vmem:[#allocation3 + $0x538] sm:$0xff] %v4332
        %4357 = vst [vmem:[#allocation3 + $0x580] sm:$0xff] %v4333
        %4358 = vst [vmem:[#allocation3 + $0x5c8] sm:$0xff] %v4334
        %4359 = vst [vmem:[#allocation3 + $0x610] sm:$0xff] %v4335
        %4360 = vst [vmem:[#allocation3 + $0x658] sm:$0xff] %v4336
        %4361 = vst [vmem:[#allocation3 + $0x6a0] sm:$0xff] %v4337
        %v4362 = vld [vmem:[#allocation2 + $0x30] sm:$0xff]
        %v4363 = vld [vmem:[#allocation2 + $0x38] sm:$0xff]
        %v4364 = vld [vmem:[#allocation2 + $0x40] sm:$0xff]
        %v4365 = vld [vmem:[#allocation2 + $0x48] sm:$0xff]
        %v4366 = vld [vmem:[#allocation2 + $0x50] sm:$0xff]
        %v4367 = vld [vmem:[#allocation2 + $0x58] sm:$0xff]
        %v4368 = vld [vmem:[#allocation2 + $0x60] sm:$0xff]
        %v4369 = vld [vmem:[#allocation2 + $0x68] sm:$0xff]
        %v4370 = vld [vmem:[#allocation2 + $0x70] sm:$0xff]
        %v4371 = vld [vmem:[#allocation2 + $0x78] sm:$0xff]
        %v4372 = vld [vmem:[#allocation2 + $0x80] sm:$0xff]
        %v4373 = vld [vmem:[#allocation2 + $0x88] sm:$0xff]
        %v4374 = vld [vmem:[#allocation2 + $0x90] sm:$0xff]
        %v4375 = vld [vmem:[#allocation2 + $0x98] sm:$0xff]
        %v4376 = vld [vmem:[#allocation2 + $0xa0] sm:$0xff]
        %v4377 = vld [vmem:[#allocation2 + $0xa8] sm:$0xff]
        %v4378 = vld [vmem:[#allocation2 + $0xb0] sm:$0xff]
        %v4379 = vld [vmem:[#allocation2 + $0xb8] sm:$0xff]
        %v4380 = vld [vmem:[#allocation2 + $0xc0] sm:$0xff]
        %v4381 = vld [vmem:[#allocation2 + $0xc8] sm:$0xff]
        %v4382 = vld [vmem:[#allocation2 + $0xd0] sm:$0xff]
        %v4383 = vld [vmem:[#allocation2 + $0xd8] sm:$0xff]
        %v4384 = vld [vmem:[#allocation2 + $0xe0] sm:$0xff]
        %v4385 = vld [vmem:[#allocation2 + $0xe8] sm:$0xff]
        %v4386 = vld [vmem:[#allocation2 + $0xf0] sm:$0xff]
        %v4387 = vld [vmem:[#allocation2 + $0xf8] sm:$0xff]
        %v4388 = vld [vmem:[#allocation2 + $0x100] sm:$0xff]
        %v4389 = vld [vmem:[#allocation2 + $0x108] sm:$0xff]
        %v4390 = vld [vmem:[#allocation2 + $0x110] sm:$0xff]
        %v4391 = vld [vmem:[#allocation2 + $0x118] sm:$0xff]
        %v4392 = vld [vmem:[#allocation2 + $0x120] sm:$0xff]
        %v4393 = vld [vmem:[#allocation2 + $0x128] sm:$0xff]
        %v4394 = vld [vmem:[#allocation2 + $0x130] sm:$0xff]
        %v4395 = vld [vmem:[#allocation2 + $0x138] sm:$0xff]
        %v4396 = vld [vmem:[#allocation2 + $0x140] sm:$0xff]
        %v4397 = vld [vmem:[#allocation2 + $0x148] sm:$0xff]
        %v4398 = vld [vmem:[#allocation2 + $0x150] sm:$0xff]
        %v4399 = vld [vmem:[#allocation2 + $0x158] sm:$0xff]
        %v4400 = vld [vmem:[#allocation2 + $0x160] sm:$0xff]
        %v4401 = vld [vmem:[#allocation2 + $0x168] sm:$0xff]
        %v4402 = vld [vmem:[#allocation2 + $0x170] sm:$0xff]
        %v4403 = vld [vmem:[#allocation2 + $0x178] sm:$0xff]
        %v4404 = vld [vmem:[#allocation2 + $0x180] sm:$0xff]
        %v4405 = vld [vmem:[#allocation2 + $0x188] sm:$0xff]
        %v4406 = vld [vmem:[#allocation2 + $0x190] sm:$0xff]
        %v4407 = vld [vmem:[#allocation2 + $0x198] sm:$0xff]
        %v4408 = vld [vmem:[#allocation2 + $0x1a0] sm:$0xff]
        %v4409 = vld [vmem:[#allocation2 + $0x1a8] sm:$0xff]
        %v4410 = vrot.slane %v4362, 7
        %v4411 = vrot.slane %v4363, 7
        %v4412 = vrot.slane %v4364, 7
        %v4413 = vrot.slane %v4365, 7
        %v4414 = vrot.slane %v4366, 7
        %v4415 = vrot.slane %v4367, 7
        %v4416 = vrot.slane %v4368, 7
        %v4417 = vrot.slane %v4369, 7
        %v4418 = vrot.slane %v4370, 7
        %v4419 = vrot.slane %v4371, 7
        %v4420 = vrot.slane %v4372, 7
        %v4421 = vrot.slane %v4373, 7
        %v4422 = vrot.slane %v4374, 7
        %v4423 = vrot.slane %v4375, 7
        %v4424 = vrot.slane %v4376, 7
        %v4425 = vrot.slane %v4377, 7
        %v4426 = vrot.slane %v4378, 7
        %v4427 = vrot.slane %v4379, 7
        %v4428 = vrot.slane %v4380, 7
        %v4429 = vrot.slane %v4381, 7
        %v4430 = vrot.slane %v4382, 7
        %v4431 = vrot.slane %v4383, 7
        %v4432 = vrot.slane %v4384, 7
        %v4433 = vrot.slane %v4385, 7
        %v4434 = vrot.slane %v4386, 7
        %v4435 = vrot.slane %v4387, 7
        %v4436 = vrot.slane %v4388, 7
        %v4437 = vrot.slane %v4389, 7
        %v4438 = vrot.slane %v4390, 7
        %v4439 = vrot.slane %v4391, 7
        %v4440 = vrot.slane %v4392, 7
        %v4441 = vrot.slane %v4393, 7
        %v4442 = vrot.slane %v4394, 7
        %v4443 = vrot.slane %v4395, 7
        %v4444 = vrot.slane %v4396, 7
        %v4445 = vrot.slane %v4397, 7
        %v4446 = vrot.slane %v4398, 7
        %v4447 = vrot.slane %v4399, 7
        %v4448 = vrot.slane %v4400, 7
        %v4449 = vrot.slane %v4401, 7
        %v4450 = vrot.slane %v4402, 7
        %v4451 = vrot.slane %v4403, 7
        %v4452 = vrot.slane %v4404, 7
        %v4453 = vrot.slane %v4405, 7
        %v4454 = vrot.slane %v4406, 7
        %v4455 = vrot.slane %v4407, 7
        %v4456 = vrot.slane %v4408, 7
        %v4457 = vrot.slane %v4409, 7
        %v4458 = vsel %vm3689, %v4456, %v4457
        %v4459 = vsel %vm3689, %v4455, %v4456
        %v4460 = vsel %vm3689, %v4454, %v4455
        %v4461 = vsel %vm3689, %v4453, %v4454
        %v4462 = vsel %vm3689, %v4452, %v4453
        %v4463 = vsel %vm3689, %v4451, %v4452
        %v4464 = vsel %vm3689, %v4450, %v4451
        %v4465 = vsel %vm3689, %v4449, %v4450
        %v4466 = vsel %vm3689, %v4448, %v4449
        %v4467 = vsel %vm3689, %v4447, %v4448
        %v4468 = vsel %vm3689, %v4446, %v4447
        %v4469 = vsel %vm3689, %v4445, %v4446
        %v4470 = vsel %vm3689, %v4444, %v4445
        %v4471 = vsel %vm3689, %v4443, %v4444
        %v4472 = vsel %vm3689, %v4442, %v4443
        %v4473 = vsel %vm3689, %v4441, %v4442
        %v4474 = vsel %vm3689, %v4440, %v4441
        %v4475 = vsel %vm3689, %v4439, %v4440
        %v4476 = vsel %vm3689, %v4438, %v4439
        %v4477 = vsel %vm3689, %v4437, %v4438
        %v4478 = vsel %vm3689, %v4436, %v4437
        %v4479 = vsel %vm3689, %v4435, %v4436
        %v4480 = vsel %vm3689, %v4434, %v4435
        %v4481 = vsel %vm3689, %v4433, %v4434
        %v4482 = vsel %vm3689, %v4432, %v4433
        %v4483 = vsel %vm3689, %v4431, %v4432
        %v4484 = vsel %vm3689, %v4430, %v4431
        %v4485 = vsel %vm3689, %v4429, %v4430
        %v4486 = vsel %vm3689, %v4428, %v4429
        %v4487 = vsel %vm3689, %v4427, %v4428
        %v4488 = vsel %vm3689, %v4426, %v4427
        %v4489 = vsel %vm3689, %v4425, %v4426
        %v4490 = vsel %vm3689, %v4424, %v4425
        %v4491 = vsel %vm3689, %v4423, %v4424
        %v4492 = vsel %vm3689, %v4422, %v4423
        %v4493 = vsel %vm3689, %v4421, %v4422
        %v4494 = vsel %vm3689, %v4420, %v4421
        %v4495 = vsel %vm3689, %v4419, %v4420
        %v4496 = vsel %vm3689, %v4418, %v4419
        %v4497 = vsel %vm3689, %v4417, %v4418
        %v4498 = vsel %vm3689, %v4416, %v4417
        %v4499 = vsel %vm3689, %v4415, %v4416
        %v4500 = vsel %vm3689, %v4414, %v4415
        %v4501 = vsel %vm3689, %v4413, %v4414
        %v4502 = vsel %vm3689, %v4412, %v4413
        %v4503 = vsel %vm3689, %v4411, %v4412
        %v4504 = vsel %vm3689, %v4410, %v4411
        %v4505 = vsel %vm3689, %v4457, %v4410
        %v4506 = vpack.c.bf16 %v4504, %v4505
        %v4507 = vpack.c.bf16 %v4502, %v4503
        %v4508 = vpack.c.bf16 %v4500, %v4501
        %v4509 = vpack.c.bf16 %v4498, %v4499
        %v4510 = vpack.c.bf16 %v4496, %v4497
        %v4511 = vpack.c.bf16 %v4494, %v4495
        %v4512 = vpack.c.bf16 %v4492, %v4493
        %v4513 = vpack.c.bf16 %v4490, %v4491
        %v4514 = vpack.c.bf16 %v4488, %v4489
        %v4515 = vpack.c.bf16 %v4486, %v4487
        %v4516 = vpack.c.bf16 %v4484, %v4485
        %v4517 = vpack.c.bf16 %v4482, %v4483
        %v4518 = vpack.c.bf16 %v4480, %v4481
        %v4519 = vpack.c.bf16 %v4478, %v4479
        %v4520 = vpack.c.bf16 %v4476, %v4477
        %v4521 = vpack.c.bf16 %v4474, %v4475
        %v4522 = vpack.c.bf16 %v4472, %v4473
        %v4523 = vpack.c.bf16 %v4470, %v4471
        %v4524 = vpack.c.bf16 %v4468, %v4469
        %v4525 = vpack.c.bf16 %v4466, %v4467
        %v4526 = vpack.c.bf16 %v4464, %v4465
        %v4527 = vpack.c.bf16 %v4462, %v4463
        %v4528 = vpack.c.bf16 %v4460, %v4461
        %v4529 = vpack.c.bf16 %v4458, %v4459
        %4530 = vst [vmem:[#allocation3 + $0x30] sm:$0xff] %v4506
        %4531 = vst [vmem:[#allocation3 + $0x78] sm:$0xff] %v4507
        %4532 = vst [vmem:[#allocation3 + $0xc0] sm:$0xff] %v4508
        %4533 = vst [vmem:[#allocation3 + $0x108] sm:$0xff] %v4509
        %4534 = vst [vmem:[#allocation3 + $0x150] sm:$0xff] %v4510
        %4535 = vst [vmem:[#allocation3 + $0x198] sm:$0xff] %v4511
        %4536 = vst [vmem:[#allocation3 + $0x1e0] sm:$0xff] %v4512
        %4537 = vst [vmem:[#allocation3 + $0x228] sm:$0xff] %v4513
        %4538 = vst [vmem:[#allocation3 + $0x270] sm:$0xff] %v4514
        %4539 = vst [vmem:[#allocation3 + $0x2b8] sm:$0xff] %v4515
        %4540 = vst [vmem:[#allocation3 + $0x300] sm:$0xff] %v4516
        %4541 = vst [vmem:[#allocation3 + $0x348] sm:$0xff] %v4517
        %4542 = vst [vmem:[#allocation3 + $0x390] sm:$0xff] %v4518
        %4543 = vst [vmem:[#allocation3 + $0x3d8] sm:$0xff] %v4519
        %4544 = vst [vmem:[#allocation3 + $0x420] sm:$0xff] %v4520
        %4545 = vst [vmem:[#allocation3 + $0x468] sm:$0xff] %v4521
        %4546 = vst [vmem:[#allocation3 + $0x4b0] sm:$0xff] %v4522
        %4547 = vst [vmem:[#allocation3 + $0x4f8] sm:$0xff] %v4523
        %4548 = vst [vmem:[#allocation3 + $0x540] sm:$0xff] %v4524
        %4549 = vst [vmem:[#allocation3 + $0x588] sm:$0xff] %v4525
        %4550 = vst [vmem:[#allocation3 + $0x5d0] sm:$0xff] %v4526
        %4551 = vst [vmem:[#allocation3 + $0x618] sm:$0xff] %v4527
        %4552 = vst [vmem:[#allocation3 + $0x660] sm:$0xff] %v4528
        %4553 = vst [vmem:[#allocation3 + $0x6a8] sm:$0xff] %v4529
        %v4554 = vpack.c.bf16 %v4363, %v4362
        %v4555 = vpack.c.bf16 %v4365, %v4364
        %v4556 = vpack.c.bf16 %v4367, %v4366
        %v4557 = vpack.c.bf16 %v4369, %v4368
        %v4558 = vpack.c.bf16 %v4371, %v4370
        %v4559 = vpack.c.bf16 %v4373, %v4372
        %v4560 = vpack.c.bf16 %v4375, %v4374
        %v4561 = vpack.c.bf16 %v4377, %v4376
        %v4562 = vpack.c.bf16 %v4379, %v4378
        %v4563 = vpack.c.bf16 %v4381, %v4380
        %v4564 = vpack.c.bf16 %v4383, %v4382
        %v4565 = vpack.c.bf16 %v4385, %v4384
        %v4566 = vpack.c.bf16 %v4387, %v4386
        %v4567 = vpack.c.bf16 %v4389, %v4388
        %v4568 = vpack.c.bf16 %v4391, %v4390
        %v4569 = vpack.c.bf16 %v4393, %v4392
        %v4570 = vpack.c.bf16 %v4395, %v4394
        %v4571 = vpack.c.bf16 %v4397, %v4396
        %v4572 = vpack.c.bf16 %v4399, %v4398
        %v4573 = vpack.c.bf16 %v4401, %v4400
        %v4574 = vpack.c.bf16 %v4403, %v4402
        %v4575 = vpack.c.bf16 %v4405, %v4404
        %v4576 = vpack.c.bf16 %v4407, %v4406
        %v4577 = vpack.c.bf16 %v4409, %v4408
        %4578 = vst [vmem:[#allocation3 + $0x38] sm:$0xff] %v4554
        %4579 = vst [vmem:[#allocation3 + $0x80] sm:$0xff] %v4555
        %4580 = vst [vmem:[#allocation3 + $0xc8] sm:$0xff] %v4556
        %4581 = vst [vmem:[#allocation3 + $0x110] sm:$0xff] %v4557
        %4582 = vst [vmem:[#allocation3 + $0x158] sm:$0xff] %v4558
        %4583 = vst [vmem:[#allocation3 + $0x1a0] sm:$0xff] %v4559
        %4584 = vst [vmem:[#allocation3 + $0x1e8] sm:$0xff] %v4560
        %4585 = vst [vmem:[#allocation3 + $0x230] sm:$0xff] %v4561
        %4586 = vst [vmem:[#allocation3 + $0x278] sm:$0xff] %v4562
        %4587 = vst [vmem:[#allocation3 + $0x2c0] sm:$0xff] %v4563
        %4588 = vst [vmem:[#allocation3 + $0x308] sm:$0xff] %v4564
        %4589 = vst [vmem:[#allocation3 + $0x350] sm:$0xff] %v4565
        %4590 = vst [vmem:[#allocation3 + $0x398] sm:$0xff] %v4566
        %4591 = vst [vmem:[#allocation3 + $0x3e0] sm:$0xff] %v4567
        %4592 = vst [vmem:[#allocation3 + $0x428] sm:$0xff] %v4568
        %4593 = vst [vmem:[#allocation3 + $0x470] sm:$0xff] %v4569
        %4594 = vst [vmem:[#allocation3 + $0x4b8] sm:$0xff] %v4570
        %4595 = vst [vmem:[#allocation3 + $0x500] sm:$0xff] %v4571
        %4596 = vst [vmem:[#allocation3 + $0x548] sm:$0xff] %v4572
        %4597 = vst [vmem:[#allocation3 + $0x590] sm:$0xff] %v4573
        %4598 = vst [vmem:[#allocation3 + $0x5d8] sm:$0xff] %v4574
        %4599 = vst [vmem:[#allocation3 + $0x620] sm:$0xff] %v4575
        %4600 = vst [vmem:[#allocation3 + $0x668] sm:$0xff] %v4576
        %4601 = vst [vmem:[#allocation3 + $0x6b0] sm:$0xff] %v4577
        %v4602 = vrot.slane %v4362, 1
        %v4603 = vrot.slane %v4363, 1
        %v4604 = vrot.slane %v4364, 1
        %v4605 = vrot.slane %v4365, 1
        %v4606 = vrot.slane %v4366, 1
        %v4607 = vrot.slane %v4367, 1
        %v4608 = vrot.slane %v4368, 1
        %v4609 = vrot.slane %v4369, 1
        %v4610 = vrot.slane %v4370, 1
        %v4611 = vrot.slane %v4371, 1
        %v4612 = vrot.slane %v4372, 1
        %v4613 = vrot.slane %v4373, 1
        %v4614 = vrot.slane %v4374, 1
        %v4615 = vrot.slane %v4375, 1
        %v4616 = vrot.slane %v4376, 1
        %v4617 = vrot.slane %v4377, 1
        %v4618 = vrot.slane %v4378, 1
        %v4619 = vrot.slane %v4379, 1
        %v4620 = vrot.slane %v4380, 1
        %v4621 = vrot.slane %v4381, 1
        %v4622 = vrot.slane %v4382, 1
        %v4623 = vrot.slane %v4383, 1
        %v4624 = vrot.slane %v4384, 1
        %v4625 = vrot.slane %v4385, 1
        %v4626 = vrot.slane %v4386, 1
        %v4627 = vrot.slane %v4387, 1
        %v4628 = vrot.slane %v4388, 1
        %v4629 = vrot.slane %v4389, 1
        %v4630 = vrot.slane %v4390, 1
        %v4631 = vrot.slane %v4391, 1
        %v4632 = vrot.slane %v4392, 1
        %v4633 = vrot.slane %v4393, 1
        %v4634 = vrot.slane %v4394, 1
        %v4635 = vrot.slane %v4395, 1
        %v4636 = vrot.slane %v4396, 1
        %v4637 = vrot.slane %v4397, 1
        %v4638 = vrot.slane %v4398, 1
        %v4639 = vrot.slane %v4399, 1
        %v4640 = vrot.slane %v4400, 1
        %v4641 = vrot.slane %v4401, 1
        %v4642 = vrot.slane %v4402, 1
        %v4643 = vrot.slane %v4403, 1
        %v4644 = vrot.slane %v4404, 1
        %v4645 = vrot.slane %v4405, 1
        %v4646 = vrot.slane %v4406, 1
        %v4647 = vrot.slane %v4407, 1
        %v4648 = vrot.slane %v4408, 1
        %v4649 = vrot.slane %v4409, 1
        %v4650 = vsel %vm461, %v4648, %v4649
        %v4651 = vsel %vm461, %v4647, %v4648
        %v4652 = vsel %vm461, %v4646, %v4647
        %v4653 = vsel %vm461, %v4645, %v4646
        %v4654 = vsel %vm461, %v4644, %v4645
        %v4655 = vsel %vm461, %v4643, %v4644
        %v4656 = vsel %vm461, %v4642, %v4643
        %v4657 = vsel %vm461, %v4641, %v4642
        %v4658 = vsel %vm461, %v4640, %v4641
        %v4659 = vsel %vm461, %v4639, %v4640
        %v4660 = vsel %vm461, %v4638, %v4639
        %v4661 = vsel %vm461, %v4637, %v4638
        %v4662 = vsel %vm461, %v4636, %v4637
        %v4663 = vsel %vm461, %v4635, %v4636
        %v4664 = vsel %vm461, %v4634, %v4635
        %v4665 = vsel %vm461, %v4633, %v4634
        %v4666 = vsel %vm461, %v4632, %v4633
        %v4667 = vsel %vm461, %v4631, %v4632
        %v4668 = vsel %vm461, %v4630, %v4631
        %v4669 = vsel %vm461, %v4629, %v4630
        %v4670 = vsel %vm461, %v4628, %v4629
        %v4671 = vsel %vm461, %v4627, %v4628
        %v4672 = vsel %vm461, %v4626, %v4627
        %v4673 = vsel %vm461, %v4625, %v4626
        %v4674 = vsel %vm461, %v4624, %v4625
        %v4675 = vsel %vm461, %v4623, %v4624
        %v4676 = vsel %vm461, %v4622, %v4623
        %v4677 = vsel %vm461, %v4621, %v4622
        %v4678 = vsel %vm461, %v4620, %v4621
        %v4679 = vsel %vm461, %v4619, %v4620
        %v4680 = vsel %vm461, %v4618, %v4619
        %v4681 = vsel %vm461, %v4617, %v4618
        %v4682 = vsel %vm461, %v4616, %v4617
        %v4683 = vsel %vm461, %v4615, %v4616
        %v4684 = vsel %vm461, %v4614, %v4615
        %v4685 = vsel %vm461, %v4613, %v4614
        %v4686 = vsel %vm461, %v4612, %v4613
        %v4687 = vsel %vm461, %v4611, %v4612
        %v4688 = vsel %vm461, %v4610, %v4611
        %v4689 = vsel %vm461, %v4609, %v4610
        %v4690 = vsel %vm461, %v4608, %v4609
        %v4691 = vsel %vm461, %v4607, %v4608
        %v4692 = vsel %vm461, %v4606, %v4607
        %v4693 = vsel %vm461, %v4605, %v4606
        %v4694 = vsel %vm461, %v4604, %v4605
        %v4695 = vsel %vm461, %v4603, %v4604
        %v4696 = vsel %vm461, %v4602, %v4603
        %v4697 = vsel %vm461, %v4649, %v4602
        %v4698 = vpack.c.bf16 %v4695, %v4696
        %v4699 = vpack.c.bf16 %v4693, %v4694
        %v4700 = vpack.c.bf16 %v4691, %v4692
        %v4701 = vpack.c.bf16 %v4689, %v4690
        %v4702 = vpack.c.bf16 %v4687, %v4688
        %v4703 = vpack.c.bf16 %v4685, %v4686
        %v4704 = vpack.c.bf16 %v4683, %v4684
        %v4705 = vpack.c.bf16 %v4681, %v4682
        %v4706 = vpack.c.bf16 %v4679, %v4680
        %v4707 = vpack.c.bf16 %v4677, %v4678
        %v4708 = vpack.c.bf16 %v4675, %v4676
        %v4709 = vpack.c.bf16 %v4673, %v4674
        %v4710 = vpack.c.bf16 %v4671, %v4672
        %v4711 = vpack.c.bf16 %v4669, %v4670
        %v4712 = vpack.c.bf16 %v4667, %v4668
        %v4713 = vpack.c.bf16 %v4665, %v4666
        %v4714 = vpack.c.bf16 %v4663, %v4664
        %v4715 = vpack.c.bf16 %v4661, %v4662
        %v4716 = vpack.c.bf16 %v4659, %v4660
        %v4717 = vpack.c.bf16 %v4657, %v4658
        %v4718 = vpack.c.bf16 %v4655, %v4656
        %v4719 = vpack.c.bf16 %v4653, %v4654
        %v4720 = vpack.c.bf16 %v4651, %v4652
        %v4721 = vpack.c.bf16 %v4697, %v4650
        %4722 = vst [vmem:[#allocation3 + $0x40] sm:$0xff] %v4698
        %4723 = vst [vmem:[#allocation3 + $0x88] sm:$0xff] %v4699
        %4724 = vst [vmem:[#allocation3 + $0xd0] sm:$0xff] %v4700
        %4725 = vst [vmem:[#allocation3 + $0x118] sm:$0xff] %v4701
        %4726 = vst [vmem:[#allocation3 + $0x160] sm:$0xff] %v4702
        %4727 = vst [vmem:[#allocation3 + $0x1a8] sm:$0xff] %v4703
        %4728 = vst [vmem:[#allocation3 + $0x1f0] sm:$0xff] %v4704
        %4729 = vst [vmem:[#allocation3 + $0x238] sm:$0xff] %v4705
        %4730 = vst [vmem:[#allocation3 + $0x280] sm:$0xff] %v4706
        %4731 = vst [vmem:[#allocation3 + $0x2c8] sm:$0xff] %v4707
        %4732 = vst [vmem:[#allocation3 + $0x310] sm:$0xff] %v4708
        %4733 = vst [vmem:[#allocation3 + $0x358] sm:$0xff] %v4709
        %4734 = vst [vmem:[#allocation3 + $0x3a0] sm:$0xff] %v4710
        %4735 = vst [vmem:[#allocation3 + $0x3e8] sm:$0xff] %v4711
        %4736 = vst [vmem:[#allocation3 + $0x430] sm:$0xff] %v4712
        %4737 = vst [vmem:[#allocation3 + $0x478] sm:$0xff] %v4713
        %4738 = vst [vmem:[#allocation3 + $0x4c0] sm:$0xff] %v4714
        %4739 = vst [vmem:[#allocation3 + $0x508] sm:$0xff] %v4715
        %4740 = vst [vmem:[#allocation3 + $0x550] sm:$0xff] %v4716
        %4741 = vst [vmem:[#allocation3 + $0x598] sm:$0xff] %v4717
        %4742 = vst [vmem:[#allocation3 + $0x5e0] sm:$0xff] %v4718
        %4743 = vst [vmem:[#allocation3 + $0x628] sm:$0xff] %v4719
        %4744 = vst [vmem:[#allocation3 + $0x670] sm:$0xff] %v4720
        %4745 = vst [vmem:[#allocation3 + $0x6b8] sm:$0xff] %v4721
        %v4746 = vld [vmem:[#allocation3] sm:$0xff]
        %v4747 = vld [vmem:[#allocation3 + $0x8] sm:$0xff]
        %v4748 = vld [vmem:[#allocation3 + $0x10] sm:$0xff]
        %v4749 = vld [vmem:[#allocation3 + $0x18] sm:$0xff]
        %v4750 = vld [vmem:[#allocation3 + $0x20] sm:$0xff]
        %v4751 = vld [vmem:[#allocation3 + $0x28] sm:$0xff]
        %v4752 = vld [vmem:[#allocation3 + $0x30] sm:$0xff]
        %v4753 = vld [vmem:[#allocation3 + $0x38] sm:$0xff]
        %v4754 = vld [vmem:[#allocation3 + $0x40] sm:$0xff]
        %v4755 = vld [vmem:[#allocation3 + $0x48] sm:$0xff]
        %v4756 = vld [vmem:[#allocation3 + $0x50] sm:$0xff]
        %v4757 = vld [vmem:[#allocation3 + $0x58] sm:$0xff]
        %v4758 = vld [vmem:[#allocation3 + $0x60] sm:$0xff]
        %v4759 = vld [vmem:[#allocation3 + $0x68] sm:$0xff]
        %v4760 = vld [vmem:[#allocation3 + $0x70] sm:$0xff]
        %v4761 = vld [vmem:[#allocation3 + $0x78] sm:$0xff]
        %v4762 = vld [vmem:[#allocation3 + $0x80] sm:$0xff]
        %v4763 = vld [vmem:[#allocation3 + $0x88] sm:$0xff]
        %v4764 = vld [vmem:[#allocation3 + $0x90] sm:$0xff]
        %v4765 = vld [vmem:[#allocation3 + $0x98] sm:$0xff]
        %v4766 = vld [vmem:[#allocation3 + $0xa0] sm:$0xff]
        %v4767 = vld [vmem:[#allocation3 + $0xa8] sm:$0xff]
        %v4768 = vld [vmem:[#allocation3 + $0xb0] sm:$0xff]
        %v4769 = vld [vmem:[#allocation3 + $0xb8] sm:$0xff]
        %v4770 = vld [vmem:[#allocation3 + $0xc0] sm:$0xff]
        %v4771 = vld [vmem:[#allocation3 + $0xc8] sm:$0xff]
        %v4772 = vld [vmem:[#allocation3 + $0xd0] sm:$0xff]
        %v4773 = vld [vmem:[#allocation3 + $0xd8] sm:$0xff]
        %v4774 = vld [vmem:[#allocation3 + $0xe0] sm:$0xff]
        %v4775 = vld [vmem:[#allocation3 + $0xe8] sm:$0xff]
        %v4776 = vld [vmem:[#allocation3 + $0xf0] sm:$0xff]
        %v4777 = vld [vmem:[#allocation3 + $0xf8] sm:$0xff]
        %v4778 = vld [vmem:[#allocation3 + $0x100] sm:$0xff]
        %v4779 = vld [vmem:[#allocation3 + $0x108] sm:$0xff]
        %v4780 = vld [vmem:[#allocation3 + $0x110] sm:$0xff]
        %v4781 = vld [vmem:[#allocation3 + $0x118] sm:$0xff]
        %v4782 = vld [vmem:[#allocation3 + $0x120] sm:$0xff]
        %v4783 = vld [vmem:[#allocation3 + $0x128] sm:$0xff]
        %v4784 = vld [vmem:[#allocation3 + $0x130] sm:$0xff]
        %v4785 = vld [vmem:[#allocation3 + $0x138] sm:$0xff]
        %v4786 = vld [vmem:[#allocation3 + $0x140] sm:$0xff]
        %v4787 = vld [vmem:[#allocation3 + $0x148] sm:$0xff]
        %v4788 = vld [vmem:[#allocation3 + $0x150] sm:$0xff]
        %v4789 = vld [vmem:[#allocation3 + $0x158] sm:$0xff]
        %v4790 = vld [vmem:[#allocation3 + $0x160] sm:$0xff]
        %v4791 = vld [vmem:[#allocation3 + $0x168] sm:$0xff]
        %v4792 = vld [vmem:[#allocation3 + $0x170] sm:$0xff]
        %v4793 = vld [vmem:[#allocation3 + $0x178] sm:$0xff]
        %v4794 = vld [vmem:[#allocation3 + $0x180] sm:$0xff]
        %v4795 = vld [vmem:[#allocation3 + $0x188] sm:$0xff]
        %v4796 = vld [vmem:[#allocation3 + $0x190] sm:$0xff]
        %v4797 = vld [vmem:[#allocation3 + $0x198] sm:$0xff]
        %v4798 = vld [vmem:[#allocation3 + $0x1a0] sm:$0xff]
        %v4799 = vld [vmem:[#allocation3 + $0x1a8] sm:$0xff]
        %v4800 = vld [vmem:[#allocation3 + $0x1b0] sm:$0xff]
        %v4801 = vld [vmem:[#allocation3 + $0x1b8] sm:$0xff]
        %v4802 = vld [vmem:[#allocation3 + $0x1c0] sm:$0xff]
        %v4803 = vld [vmem:[#allocation3 + $0x1c8] sm:$0xff]
        %v4804 = vld [vmem:[#allocation3 + $0x1d0] sm:$0xff]
        %v4805 = vld [vmem:[#allocation3 + $0x1d8] sm:$0xff]
        %v4806 = vld [vmem:[#allocation3 + $0x1e0] sm:$0xff]
        %v4807 = vld [vmem:[#allocation3 + $0x1e8] sm:$0xff]
        %v4808 = vld [vmem:[#allocation3 + $0x1f0] sm:$0xff]
        %v4809 = vld [vmem:[#allocation3 + $0x1f8] sm:$0xff]
        %v4810 = vld [vmem:[#allocation3 + $0x200] sm:$0xff]
        %v4811 = vld [vmem:[#allocation3 + $0x208] sm:$0xff]
        %v4812 = vld [vmem:[#allocation3 + $0x210] sm:$0xff]
        %v4813 = vld [vmem:[#allocation3 + $0x218] sm:$0xff]
        %v4814 = vld [vmem:[#allocation3 + $0x220] sm:$0xff]
        %v4815 = vld [vmem:[#allocation3 + $0x228] sm:$0xff]
        %v4816 = vld [vmem:[#allocation3 + $0x230] sm:$0xff]
        %v4817 = vld [vmem:[#allocation3 + $0x238] sm:$0xff]
        %v4818 = vld [vmem:[#allocation3 + $0x240] sm:$0xff]
        %v4819 = vld [vmem:[#allocation3 + $0x248] sm:$0xff]
        %v4820 = vld [vmem:[#allocation3 + $0x250] sm:$0xff]
        %v4821 = vld [vmem:[#allocation3 + $0x258] sm:$0xff]
        %v4822 = vld [vmem:[#allocation3 + $0x260] sm:$0xff]
        %v4823 = vld [vmem:[#allocation3 + $0x268] sm:$0xff]
        %v4824 = vld [vmem:[#allocation3 + $0x270] sm:$0xff]
        %v4825 = vld [vmem:[#allocation3 + $0x278] sm:$0xff]
        %v4826 = vld [vmem:[#allocation3 + $0x280] sm:$0xff]
        %v4827 = vld [vmem:[#allocation3 + $0x288] sm:$0xff]
        %v4828 = vld [vmem:[#allocation3 + $0x290] sm:$0xff]
        %v4829 = vld [vmem:[#allocation3 + $0x298] sm:$0xff]
        %v4830 = vld [vmem:[#allocation3 + $0x2a0] sm:$0xff]
        %v4831 = vld [vmem:[#allocation3 + $0x2a8] sm:$0xff]
        %v4832 = vld [vmem:[#allocation3 + $0x2b0] sm:$0xff]
        %v4833 = vld [vmem:[#allocation3 + $0x2b8] sm:$0xff]
        %v4834 = vld [vmem:[#allocation3 + $0x2c0] sm:$0xff]
        %v4835 = vld [vmem:[#allocation3 + $0x2c8] sm:$0xff]
        %v4836 = vld [vmem:[#allocation3 + $0x2d0] sm:$0xff]
        %v4837 = vld [vmem:[#allocation3 + $0x2d8] sm:$0xff]
        %v4838 = vld [vmem:[#allocation3 + $0x2e0] sm:$0xff]
        %v4839 = vld [vmem:[#allocation3 + $0x2e8] sm:$0xff]
        %v4840 = vld [vmem:[#allocation3 + $0x2f0] sm:$0xff]
        %v4841 = vld [vmem:[#allocation3 + $0x2f8] sm:$0xff]
        %v4842 = vld [vmem:[#allocation3 + $0x300] sm:$0xff]
        %v4843 = vld [vmem:[#allocation3 + $0x308] sm:$0xff]
        %v4844 = vld [vmem:[#allocation3 + $0x310] sm:$0xff]
        %v4845 = vld [vmem:[#allocation3 + $0x318] sm:$0xff]
        %v4846 = vld [vmem:[#allocation3 + $0x320] sm:$0xff]
        %v4847 = vld [vmem:[#allocation3 + $0x328] sm:$0xff]
        %v4848 = vld [vmem:[#allocation3 + $0x330] sm:$0xff]
        %v4849 = vld [vmem:[#allocation3 + $0x338] sm:$0xff]
        %v4850 = vld [vmem:[#allocation3 + $0x340] sm:$0xff]
        %v4851 = vld [vmem:[#allocation3 + $0x348] sm:$0xff]
        %v4852 = vld [vmem:[#allocation3 + $0x350] sm:$0xff]
        %v4853 = vld [vmem:[#allocation3 + $0x358] sm:$0xff]
        %v4854 = vld [vmem:[#allocation3 + $0x360] sm:$0xff]
        %v4855 = vld [vmem:[#allocation3 + $0x368] sm:$0xff]
        %v4856 = vld [vmem:[#allocation3 + $0x370] sm:$0xff]
        %v4857 = vld [vmem:[#allocation3 + $0x378] sm:$0xff]
        %v4858 = vld [vmem:[#allocation3 + $0x380] sm:$0xff]
        %v4859 = vld [vmem:[#allocation3 + $0x388] sm:$0xff]
        %v4860 = vld [vmem:[#allocation3 + $0x390] sm:$0xff]
        %v4861 = vld [vmem:[#allocation3 + $0x398] sm:$0xff]
        %v4862 = vld [vmem:[#allocation3 + $0x3a0] sm:$0xff]
        %v4863 = vld [vmem:[#allocation3 + $0x3a8] sm:$0xff]
        %v4864 = vld [vmem:[#allocation3 + $0x3b0] sm:$0xff]
        %v4865 = vld [vmem:[#allocation3 + $0x3b8] sm:$0xff]
        %v4866 = vld [vmem:[#allocation3 + $0x3c0] sm:$0xff]
        %v4867 = vld [vmem:[#allocation3 + $0x3c8] sm:$0xff]
        %v4868 = vld [vmem:[#allocation3 + $0x3d0] sm:$0xff]
        %v4869 = vld [vmem:[#allocation3 + $0x3d8] sm:$0xff]
        %v4870 = vld [vmem:[#allocation3 + $0x3e0] sm:$0xff]
        %v4871 = vld [vmem:[#allocation3 + $0x3e8] sm:$0xff]
        %v4872 = vld [vmem:[#allocation3 + $0x3f0] sm:$0xff]
        %v4873 = vld [vmem:[#allocation3 + $0x3f8] sm:$0xff]
        %v4874 = vld [vmem:[#allocation3 + $0x400] sm:$0xff]
        %v4875 = vld [vmem:[#allocation3 + $0x408] sm:$0xff]
        %v4876 = vld [vmem:[#allocation3 + $0x410] sm:$0xff]
        %v4877 = vld [vmem:[#allocation3 + $0x418] sm:$0xff]
        %v4878 = vld [vmem:[#allocation3 + $0x420] sm:$0xff]
        %v4879 = vld [vmem:[#allocation3 + $0x428] sm:$0xff]
        %v4880 = vld [vmem:[#allocation3 + $0x430] sm:$0xff]
        %v4881 = vld [vmem:[#allocation3 + $0x438] sm:$0xff]
        %v4882 = vld [vmem:[#allocation3 + $0x440] sm:$0xff]
        %v4883 = vld [vmem:[#allocation3 + $0x448] sm:$0xff]
        %v4884 = vld [vmem:[#allocation3 + $0x450] sm:$0xff]
        %v4885 = vld [vmem:[#allocation3 + $0x458] sm:$0xff]
        %v4886 = vld [vmem:[#allocation3 + $0x460] sm:$0xff]
        %v4887 = vld [vmem:[#allocation3 + $0x468] sm:$0xff]
        %v4888 = vld [vmem:[#allocation3 + $0x470] sm:$0xff]
        %v4889 = vld [vmem:[#allocation3 + $0x478] sm:$0xff]
        %v4890 = vld [vmem:[#allocation3 + $0x480] sm:$0xff]
        %v4891 = vld [vmem:[#allocation3 + $0x488] sm:$0xff]
        %v4892 = vld [vmem:[#allocation3 + $0x490] sm:$0xff]
        %v4893 = vld [vmem:[#allocation3 + $0x498] sm:$0xff]
        %v4894 = vld [vmem:[#allocation3 + $0x4a0] sm:$0xff]
        %v4895 = vld [vmem:[#allocation3 + $0x4a8] sm:$0xff]
        %v4896 = vld [vmem:[#allocation3 + $0x4b0] sm:$0xff]
        %v4897 = vld [vmem:[#allocation3 + $0x4b8] sm:$0xff]
        %v4898 = vld [vmem:[#allocation3 + $0x4c0] sm:$0xff]
        %v4899 = vld [vmem:[#allocation3 + $0x4c8] sm:$0xff]
        %v4900 = vld [vmem:[#allocation3 + $0x4d0] sm:$0xff]
        %v4901 = vld [vmem:[#allocation3 + $0x4d8] sm:$0xff]
        %v4902 = vld [vmem:[#allocation3 + $0x4e0] sm:$0xff]
        %v4903 = vld [vmem:[#allocation3 + $0x4e8] sm:$0xff]
        %v4904 = vld [vmem:[#allocation3 + $0x4f0] sm:$0xff]
        %v4905 = vld [vmem:[#allocation3 + $0x4f8] sm:$0xff]
        %v4906 = vld [vmem:[#allocation3 + $0x500] sm:$0xff]
        %v4907 = vld [vmem:[#allocation3 + $0x508] sm:$0xff]
        %v4908 = vld [vmem:[#allocation3 + $0x510] sm:$0xff]
        %v4909 = vld [vmem:[#allocation3 + $0x518] sm:$0xff]
        %v4910 = vld [vmem:[#allocation3 + $0x520] sm:$0xff]
        %v4911 = vld [vmem:[#allocation3 + $0x528] sm:$0xff]
        %v4912 = vld [vmem:[#allocation3 + $0x530] sm:$0xff]
        %v4913 = vld [vmem:[#allocation3 + $0x538] sm:$0xff]
        %v4914 = vld [vmem:[#allocation3 + $0x540] sm:$0xff]
        %v4915 = vld [vmem:[#allocation3 + $0x548] sm:$0xff]
        %v4916 = vld [vmem:[#allocation3 + $0x550] sm:$0xff]
        %v4917 = vld [vmem:[#allocation3 + $0x558] sm:$0xff]
        %v4918 = vld [vmem:[#allocation3 + $0x560] sm:$0xff]
        %v4919 = vld [vmem:[#allocation3 + $0x568] sm:$0xff]
        %v4920 = vld [vmem:[#allocation3 + $0x570] sm:$0xff]
        %v4921 = vld [vmem:[#allocation3 + $0x578] sm:$0xff]
        %v4922 = vld [vmem:[#allocation3 + $0x580] sm:$0xff]
        %v4923 = vld [vmem:[#allocation3 + $0x588] sm:$0xff]
        %v4924 = vld [vmem:[#allocation3 + $0x590] sm:$0xff]
        %v4925 = vld [vmem:[#allocation3 + $0x598] sm:$0xff]
        %v4926 = vld [vmem:[#allocation3 + $0x5a0] sm:$0xff]
        %v4927 = vld [vmem:[#allocation3 + $0x5a8] sm:$0xff]
        %v4928 = vld [vmem:[#allocation3 + $0x5b0] sm:$0xff]
        %v4929 = vld [vmem:[#allocation3 + $0x5b8] sm:$0xff]
        %v4930 = vld [vmem:[#allocation3 + $0x5c0] sm:$0xff]
        %v4931 = vld [vmem:[#allocation3 + $0x5c8] sm:$0xff]
        %v4932 = vld [vmem:[#allocation3 + $0x5d0] sm:$0xff]
        %v4933 = vld [vmem:[#allocation3 + $0x5d8] sm:$0xff]
        %v4934 = vld [vmem:[#allocation3 + $0x5e0] sm:$0xff]
        %v4935 = vld [vmem:[#allocation3 + $0x5e8] sm:$0xff]
        %v4936 = vld [vmem:[#allocation3 + $0x5f0] sm:$0xff]
        %v4937 = vld [vmem:[#allocation3 + $0x5f8] sm:$0xff]
        %v4938 = vld [vmem:[#allocation3 + $0x600] sm:$0xff]
        %v4939 = vld [vmem:[#allocation3 + $0x608] sm:$0xff]
        %v4940 = vld [vmem:[#allocation3 + $0x610] sm:$0xff]
        %v4941 = vld [vmem:[#allocation3 + $0x618] sm:$0xff]
        %v4942 = vld [vmem:[#allocation3 + $0x620] sm:$0xff]
        %v4943 = vld [vmem:[#allocation3 + $0x628] sm:$0xff]
        %v4944 = vld [vmem:[#allocation3 + $0x630] sm:$0xff]
        %v4945 = vld [vmem:[#allocation3 + $0x638] sm:$0xff]
        %v4946 = vld [vmem:[#allocation3 + $0x640] sm:$0xff]
        %v4947 = vld [vmem:[#allocation3 + $0x648] sm:$0xff]
        %v4948 = vld [vmem:[#allocation3 + $0x650] sm:$0xff]
        %v4949 = vld [vmem:[#allocation3 + $0x658] sm:$0xff]
        %v4950 = vld [vmem:[#allocation3 + $0x660] sm:$0xff]
        %v4951 = vld [vmem:[#allocation3 + $0x668] sm:$0xff]
        %v4952 = vld [vmem:[#allocation3 + $0x670] sm:$0xff]
        %v4953 = vld [vmem:[#allocation3 + $0x678] sm:$0xff]
        %v4954 = vld [vmem:[#allocation3 + $0x680] sm:$0xff]
        %v4955 = vld [vmem:[#allocation3 + $0x688] sm:$0xff]
        %v4956 = vld [vmem:[#allocation3 + $0x690] sm:$0xff]
        %v4957 = vld [vmem:[#allocation3 + $0x698] sm:$0xff]
        %v4958 = vld [vmem:[#allocation3 + $0x6a0] sm:$0xff]
        %v4959 = vld [vmem:[#allocation3 + $0x6a8] sm:$0xff]
        %v4960 = vld [vmem:[#allocation3 + $0x6b0] sm:$0xff]
        %v4961 = vld [vmem:[#allocation3 + $0x6b8] sm:$0xff]
        %v4962 = vld [vmem:[#allocation10] sm:$0xf]
        %v4963 = vld [vmem:[#allocation10 + $0x4] sm:$0xf]
        %v4964 = vld [vmem:[#allocation10 + $0x8] sm:$0xf]
        %v4965 = vld [vmem:[#allocation10 + $0xc] sm:$0xf]
        %v4966 = vld [vmem:[#allocation10 + $0x10] sm:$0xf]
        %v4967 = vld [vmem:[#allocation10 + $0x14] sm:$0xf]
        %v4968 = vld [vmem:[#allocation10 + $0x18] sm:$0xf]
        %v4969 = vld [vmem:[#allocation10 + $0x1c] sm:$0xf]
        %v4970 = vld [vmem:[#allocation10 + $0x20] sm:$0xf]
        %v4971 = vld [vmem:[#allocation10 + $0x24] sm:$0xf]
        %v4972 = vld [vmem:[#allocation10 + $0x28] sm:$0xf]
        %v4973 = vld [vmem:[#allocation10 + $0x2c] sm:$0xf]
        %v4974 = vld [vmem:[#allocation10 + $0x30] sm:$0xf]
        %v4975 = vld [vmem:[#allocation10 + $0x34] sm:$0xf]
        %v4976 = vld [vmem:[#allocation10 + $0x38] sm:$0xf]
        %v4977 = vld [vmem:[#allocation10 + $0x3c] sm:$0xf]
        %v4978 = vld [vmem:[#allocation10 + $0x40] sm:$0xf]
        %v4979 = vld [vmem:[#allocation10 + $0x44] sm:$0xf]
        %v4980 = vld [vmem:[#allocation10 + $0x48] sm:$0xf]
        %v4981 = vld [vmem:[#allocation10 + $0x4c] sm:$0xf]
        %v4982 = vld [vmem:[#allocation10 + $0x50] sm:$0xf]
        %v4983 = vld [vmem:[#allocation10 + $0x54] sm:$0xf]
        %v4984 = vld [vmem:[#allocation10 + $0x58] sm:$0xf]
        %v4985 = vld [vmem:[#allocation10 + $0x5c] sm:$0xf]
        %v4986 = vld [vmem:[#allocation10 + $0x60] sm:$0xf]
        %v4987 = vld [vmem:[#allocation10 + $0x64] sm:$0xf]
        %v4988 = vld [vmem:[#allocation10 + $0x68] sm:$0xf]
        %v4989 = vld [vmem:[#allocation10 + $0x6c] sm:$0xf]
        %v4990 = vld [vmem:[#allocation10 + $0x70] sm:$0xf]
        %v4991 = vld [vmem:[#allocation10 + $0x74] sm:$0xf]
        %v4992 = vld [vmem:[#allocation10 + $0x78] sm:$0xf]
        %v4993 = vld [vmem:[#allocation10 + $0x7c] sm:$0xf]
        %v4994 = vld [vmem:[#allocation10 + $0x80] sm:$0xf]
        %v4995 = vld [vmem:[#allocation10 + $0x84] sm:$0xf]
        %v4996 = vld [vmem:[#allocation10 + $0x88] sm:$0xf]
        %v4997 = vld [vmem:[#allocation10 + $0x8c] sm:$0xf]
        %v4998 = vld [vmem:[#allocation10 + $0x90] sm:$0xf]
        %v4999 = vld [vmem:[#allocation10 + $0x94] sm:$0xf]
        %v5000 = vld [vmem:[#allocation10 + $0x98] sm:$0xf]
        %v5001 = vld [vmem:[#allocation10 + $0x9c] sm:$0xf]
        %v5002 = vld [vmem:[#allocation10 + $0xa0] sm:$0xf]
        %v5003 = vld [vmem:[#allocation10 + $0xa4] sm:$0xf]
        %v5004 = vld [vmem:[#allocation10 + $0xa8] sm:$0xf]
        %v5005 = vld [vmem:[#allocation10 + $0xac] sm:$0xf]
        %v5006 = vld [vmem:[#allocation10 + $0xb0] sm:$0xf]
        %v5007 = vld [vmem:[#allocation10 + $0xb4] sm:$0xf]
        %v5008 = vld [vmem:[#allocation10 + $0xb8] sm:$0xf]
        %v5009 = vld [vmem:[#allocation10 + $0xbc] sm:$0xf]
        %v5010 = vld [vmem:[#allocation10 + $0xc0] sm:$0xf]
        %v5011 = vld [vmem:[#allocation10 + $0xc4] sm:$0xf]
        %v5012 = vld [vmem:[#allocation10 + $0xc8] sm:$0xf]
        %v5013 = vld [vmem:[#allocation10 + $0xcc] sm:$0xf]
        %v5014 = vld [vmem:[#allocation10 + $0xd0] sm:$0xf]
        %v5015 = vld [vmem:[#allocation10 + $0xd4] sm:$0xf]
        %v5016 = vld [vmem:[#allocation10 + $0xd8] sm:$0xf]
        %v5017 = vld [vmem:[#allocation10 + $0xdc] sm:$0xf]
        %v5018 = vld [vmem:[#allocation10 + $0xe0] sm:$0xf]
        %v5019 = vld [vmem:[#allocation10 + $0xe4] sm:$0xf]
        %v5020 = vld [vmem:[#allocation10 + $0xe8] sm:$0xf]
        %v5021 = vld [vmem:[#allocation10 + $0xec] sm:$0xf]
        %v5022 = vld [vmem:[#allocation10 + $0xf0] sm:$0xf]
        %v5023 = vld [vmem:[#allocation10 + $0xf4] sm:$0xf]
        %v5024 = vld [vmem:[#allocation10 + $0xf8] sm:$0xf]
        %v5025 = vld [vmem:[#allocation10 + $0xfc] sm:$0xf]
        %v5026 = vld [vmem:[#allocation10 + $0x100] sm:$0xf]
        %v5027 = vld [vmem:[#allocation10 + $0x104] sm:$0xf]
        %v5028 = vld [vmem:[#allocation10 + $0x108] sm:$0xf]
        %v5029 = vld [vmem:[#allocation10 + $0x10c] sm:$0xf]
        %v5030 = vld [vmem:[#allocation10 + $0x110] sm:$0xf]
        %v5031 = vld [vmem:[#allocation10 + $0x114] sm:$0xf]
        %v5032 = vld [vmem:[#allocation10 + $0x118] sm:$0xf]
        %v5033 = vld [vmem:[#allocation10 + $0x11c] sm:$0xf]
        %v5034 = vld [vmem:[#allocation10 + $0x120] sm:$0xf]
        %v5035 = vld [vmem:[#allocation10 + $0x124] sm:$0xf]
        %v5036 = vld [vmem:[#allocation10 + $0x128] sm:$0xf]
        %v5037 = vld [vmem:[#allocation10 + $0x12c] sm:$0xf]
        %v5038 = vld [vmem:[#allocation10 + $0x130] sm:$0xf]
        %v5039 = vld [vmem:[#allocation10 + $0x134] sm:$0xf]
        %v5040 = vld [vmem:[#allocation10 + $0x138] sm:$0xf]
        %v5041 = vld [vmem:[#allocation10 + $0x13c] sm:$0xf]
        %v5042 = vld [vmem:[#allocation10 + $0x140] sm:$0xf]
        %v5043 = vld [vmem:[#allocation10 + $0x144] sm:$0xf]
        %v5044 = vld [vmem:[#allocation10 + $0x148] sm:$0xf]
        %v5045 = vld [vmem:[#allocation10 + $0x14c] sm:$0xf]
        %v5046 = vld [vmem:[#allocation10 + $0x150] sm:$0xf]
        %v5047 = vld [vmem:[#allocation10 + $0x154] sm:$0xf]
        %v5048 = vld [vmem:[#allocation10 + $0x158] sm:$0xf]
        %v5049 = vld [vmem:[#allocation10 + $0x15c] sm:$0xf]
        %v5050 = vld [vmem:[#allocation10 + $0x160] sm:$0xf]
        %v5051 = vld [vmem:[#allocation10 + $0x164] sm:$0xf]
        %v5052 = vld [vmem:[#allocation10 + $0x168] sm:$0xf]
        %v5053 = vld [vmem:[#allocation10 + $0x16c] sm:$0xf]
        %v5054 = vld [vmem:[#allocation10 + $0x170] sm:$0xf]
        %v5055 = vld [vmem:[#allocation10 + $0x174] sm:$0xf]
        %v5056 = vld [vmem:[#allocation10 + $0x178] sm:$0xf]
        %v5057 = vld [vmem:[#allocation10 + $0x17c] sm:$0xf]
        %v5058 = vld [vmem:[#allocation10 + $0x180] sm:$0xf]
        %v5059 = vld [vmem:[#allocation10 + $0x184] sm:$0xf]
        %v5060 = vld [vmem:[#allocation10 + $0x188] sm:$0xf]
        %v5061 = vld [vmem:[#allocation10 + $0x18c] sm:$0xf]
        %v5062 = vld [vmem:[#allocation10 + $0x190] sm:$0xf]
        %v5063 = vld [vmem:[#allocation10 + $0x194] sm:$0xf]
        %v5064 = vld [vmem:[#allocation10 + $0x198] sm:$0xf]
        %v5065 = vld [vmem:[#allocation10 + $0x19c] sm:$0xf]
        %v5066 = vld [vmem:[#allocation10 + $0x1a0] sm:$0xf]
        %v5067 = vld [vmem:[#allocation10 + $0x1a4] sm:$0xf]
        %v5068 = vld [vmem:[#allocation10 + $0x1a8] sm:$0xf]
        %v5069 = vld [vmem:[#allocation10 + $0x1ac] sm:$0xf]
        %v5070 = vld [vmem:[#allocation10 + $0x1b0] sm:$0xf]
        %v5071 = vld [vmem:[#allocation10 + $0x1b4] sm:$0xf]
        %v5072 = vld [vmem:[#allocation10 + $0x1b8] sm:$0xf]
        %v5073 = vld [vmem:[#allocation10 + $0x1bc] sm:$0xf]
        %v5074 = vld [vmem:[#allocation10 + $0x1c0] sm:$0xf]
        %v5075 = vld [vmem:[#allocation10 + $0x1c4] sm:$0xf]
        %v5076 = vld [vmem:[#allocation10 + $0x1c8] sm:$0xf]
        %v5077 = vld [vmem:[#allocation10 + $0x1cc] sm:$0xf]
        %v5078 = vld [vmem:[#allocation10 + $0x1d0] sm:$0xf]
        %v5079 = vld [vmem:[#allocation10 + $0x1d4] sm:$0xf]
        %v5080 = vld [vmem:[#allocation10 + $0x1d8] sm:$0xf]
        %v5081 = vld [vmem:[#allocation10 + $0x1dc] sm:$0xf]
        %v5082 = vld [vmem:[#allocation10 + $0x1e0] sm:$0xf]
        %v5083 = vld [vmem:[#allocation10 + $0x1e4] sm:$0xf]
        %v5084 = vld [vmem:[#allocation10 + $0x1e8] sm:$0xf]
        %v5085 = vld [vmem:[#allocation10 + $0x1ec] sm:$0xf]
        %v5086 = vld [vmem:[#allocation10 + $0x1f0] sm:$0xf]
        %v5087 = vld [vmem:[#allocation10 + $0x1f4] sm:$0xf]
        %v5088 = vld [vmem:[#allocation10 + $0x1f8] sm:$0xf]
        %v5089 = vld [vmem:[#allocation10 + $0x1fc] sm:$0xf]
        %v5090 = vld [vmem:[#allocation10 + $0x200] sm:$0xf]
        %v5091 = vld [vmem:[#allocation10 + $0x204] sm:$0xf]
        %v5092 = vld [vmem:[#allocation10 + $0x208] sm:$0xf]
        %v5093 = vld [vmem:[#allocation10 + $0x20c] sm:$0xf]
        %v5094 = vld [vmem:[#allocation10 + $0x210] sm:$0xf]
        %v5095 = vld [vmem:[#allocation10 + $0x214] sm:$0xf]
        %v5096 = vld [vmem:[#allocation10 + $0x218] sm:$0xf]
        %v5097 = vld [vmem:[#allocation10 + $0x21c] sm:$0xf]
        %v5098 = vld [vmem:[#allocation10 + $0x220] sm:$0xf]
        %v5099 = vld [vmem:[#allocation10 + $0x224] sm:$0xf]
        %v5100 = vld [vmem:[#allocation10 + $0x228] sm:$0xf]
        %v5101 = vld [vmem:[#allocation10 + $0x22c] sm:$0xf]
        %v5102 = vld [vmem:[#allocation10 + $0x230] sm:$0xf]
        %v5103 = vld [vmem:[#allocation10 + $0x234] sm:$0xf]
        %v5104 = vld [vmem:[#allocation10 + $0x238] sm:$0xf]
        %v5105 = vld [vmem:[#allocation10 + $0x23c] sm:$0xf]
        %v5106 = vld [vmem:[%s5] sm:$0x1]
        %v5108 = vlaneseq
        %v5109 = vshrl.u32 %v5108, 7
        %v5110 = vsub.s32 0, %v5109
        %v5111 = vrot.slane %v5106, %v5110
        %v5257 = vunpack.c.l.b16 %v4962
        %v5258 = vunpack.c.l.b16 %v4963
        %v5259 = vunpack.c.l.b16 %v4964
        %v5260 = vunpack.c.l.b16 %v4965
        %v5261 = vunpack.c.l.b16 %v4966
        %v5262 = vunpack.c.l.b16 %v4967
        %v5263 = vunpack.c.l.b16 %v4968
        %v5264 = vunpack.c.l.b16 %v4969
        %v5265 = vunpack.c.l.b16 %v4970
        %v5266 = vunpack.c.l.b16 %v4971
        %v5267 = vunpack.c.l.b16 %v4972
        %v5268 = vunpack.c.l.b16 %v4973
        %v5269 = vunpack.c.l.b16 %v4974
        %v5270 = vunpack.c.l.b16 %v4975
        %v5271 = vunpack.c.l.b16 %v4976
        %v5272 = vunpack.c.l.b16 %v4977
        %v5273 = vunpack.c.l.b16 %v4978
        %v5274 = vunpack.c.l.b16 %v4979
        %v5275 = vunpack.c.l.b16 %v4980
        %v5276 = vunpack.c.l.b16 %v4981
        %v5277 = vunpack.c.l.b16 %v4982
        %v5278 = vunpack.c.l.b16 %v4983
        %v5279 = vunpack.c.l.b16 %v4984
        %v5280 = vunpack.c.l.b16 %v4985
        %v5281 = vunpack.c.l.b16 %v4986
        %v5282 = vunpack.c.l.b16 %v4987
        %v5283 = vunpack.c.l.b16 %v4988
        %v5284 = vunpack.c.l.b16 %v4989
        %v5285 = vunpack.c.l.b16 %v4990
        %v5286 = vunpack.c.l.b16 %v4991
        %v5287 = vunpack.c.l.b16 %v4992
        %v5288 = vunpack.c.l.b16 %v4993
        %v5289 = vunpack.c.l.b16 %v4994
        %v5290 = vunpack.c.l.b16 %v4995
        %v5291 = vunpack.c.l.b16 %v4996
        %v5292 = vunpack.c.l.b16 %v4997
        %v5293 = vunpack.c.l.b16 %v4998
        %v5294 = vunpack.c.l.b16 %v4999
        %v5295 = vunpack.c.l.b16 %v5000
        %v5296 = vunpack.c.l.b16 %v5001
        %v5297 = vunpack.c.l.b16 %v5002
        %v5298 = vunpack.c.l.b16 %v5003
        %v5299 = vunpack.c.l.b16 %v5004
        %v5300 = vunpack.c.l.b16 %v5005
        %v5301 = vunpack.c.l.b16 %v5006
        %v5302 = vunpack.c.l.b16 %v5007
        %v5303 = vunpack.c.l.b16 %v5008
        %v5304 = vunpack.c.l.b16 %v5009
        %v5305 = vunpack.c.l.b16 %v5010
        %v5306 = vunpack.c.l.b16 %v5011
        %v5307 = vunpack.c.l.b16 %v5012
        %v5308 = vunpack.c.l.b16 %v5013
        %v5309 = vunpack.c.l.b16 %v5014
        %v5310 = vunpack.c.l.b16 %v5015
        %v5311 = vunpack.c.l.b16 %v5016
        %v5312 = vunpack.c.l.b16 %v5017
        %v5313 = vunpack.c.l.b16 %v5018
        %v5314 = vunpack.c.l.b16 %v5019
        %v5315 = vunpack.c.l.b16 %v5020
        %v5316 = vunpack.c.l.b16 %v5021
        %v5317 = vunpack.c.l.b16 %v5022
        %v5318 = vunpack.c.l.b16 %v5023
        %v5319 = vunpack.c.l.b16 %v5024
        %v5320 = vunpack.c.l.b16 %v5025
        %v5321 = vunpack.c.l.b16 %v5026
        %v5322 = vunpack.c.l.b16 %v5027
        %v5323 = vunpack.c.l.b16 %v5028
        %v5324 = vunpack.c.l.b16 %v5029
        %v5325 = vunpack.c.l.b16 %v5030
        %v5326 = vunpack.c.l.b16 %v5031
        %v5327 = vunpack.c.l.b16 %v5032
        %v5328 = vunpack.c.l.b16 %v5033
        %v5329 = vunpack.c.l.b16 %v5034
        %v5330 = vunpack.c.l.b16 %v5035
        %v5331 = vunpack.c.l.b16 %v5036
        %v5332 = vunpack.c.l.b16 %v5037
        %v5333 = vunpack.c.l.b16 %v5038
        %v5334 = vunpack.c.l.b16 %v5039
        %v5335 = vunpack.c.l.b16 %v5040
        %v5336 = vunpack.c.l.b16 %v5041
        %v5337 = vunpack.c.l.b16 %v5042
        %v5338 = vunpack.c.l.b16 %v5043
        %v5339 = vunpack.c.l.b16 %v5044
        %v5340 = vunpack.c.l.b16 %v5045
        %v5341 = vunpack.c.l.b16 %v5046
        %v5342 = vunpack.c.l.b16 %v5047
        %v5343 = vunpack.c.l.b16 %v5048
        %v5344 = vunpack.c.l.b16 %v5049
        %v5345 = vunpack.c.l.b16 %v5050
        %v5346 = vunpack.c.l.b16 %v5051
        %v5347 = vunpack.c.l.b16 %v5052
        %v5348 = vunpack.c.l.b16 %v5053
        %v5349 = vunpack.c.l.b16 %v5054
        %v5350 = vunpack.c.l.b16 %v5055
        %v5351 = vunpack.c.l.b16 %v5056
        %v5352 = vunpack.c.l.b16 %v5057
        %v5353 = vunpack.c.l.b16 %v5058
        %v5354 = vunpack.c.l.b16 %v5059
        %v5355 = vunpack.c.l.b16 %v5060
        %v5356 = vunpack.c.l.b16 %v5061
        %v5357 = vunpack.c.l.b16 %v5062
        %v5358 = vunpack.c.l.b16 %v5063
        %v5359 = vunpack.c.l.b16 %v5064
        %v5360 = vunpack.c.l.b16 %v5065
        %v5361 = vunpack.c.l.b16 %v5066
        %v5362 = vunpack.c.l.b16 %v5067
        %v5363 = vunpack.c.l.b16 %v5068
        %v5364 = vunpack.c.l.b16 %v5069
        %v5365 = vunpack.c.l.b16 %v5070
        %v5366 = vunpack.c.l.b16 %v5071
        %v5367 = vunpack.c.l.b16 %v5072
        %v5368 = vunpack.c.l.b16 %v5073
        %v5369 = vunpack.c.l.b16 %v5074
        %v5370 = vunpack.c.l.b16 %v5075
        %v5371 = vunpack.c.l.b16 %v5076
        %v5372 = vunpack.c.l.b16 %v5077
        %v5373 = vunpack.c.l.b16 %v5078
        %v5374 = vunpack.c.l.b16 %v5079
        %v5375 = vunpack.c.l.b16 %v5080
        %v5376 = vunpack.c.l.b16 %v5081
        %v5377 = vunpack.c.l.b16 %v5082
        %v5378 = vunpack.c.l.b16 %v5083
        %v5379 = vunpack.c.l.b16 %v5084
        %v5380 = vunpack.c.l.b16 %v5085
        %v5381 = vunpack.c.l.b16 %v5086
        %v5382 = vunpack.c.l.b16 %v5087
        %v5383 = vunpack.c.l.b16 %v5088
        %v5384 = vunpack.c.l.b16 %v5089
        %v5385 = vunpack.c.l.b16 %v5090
        %v5386 = vunpack.c.l.b16 %v5091
        %v5387 = vunpack.c.l.b16 %v5092
        %v5388 = vunpack.c.l.b16 %v5093
        %v5389 = vunpack.c.l.b16 %v5094
        %v5390 = vunpack.c.l.b16 %v5095
        %v5391 = vunpack.c.l.b16 %v5096
        %v5392 = vunpack.c.l.b16 %v5097
        %v5393 = vunpack.c.l.b16 %v5098
        %v5394 = vunpack.c.l.b16 %v5099
        %v5395 = vunpack.c.l.b16 %v5100
        %v5396 = vunpack.c.l.b16 %v5101
        %v5397 = vunpack.c.l.b16 %v5102
        %v5398 = vunpack.c.l.b16 %v5103
        %v5399 = vunpack.c.l.b16 %v5104
        %v5400 = vunpack.c.l.b16 %v5105
        %v5401 = vpack.c.b16 %v5258, %v5257
        %v5402 = vpack.c.b16 %v5260, %v5259
        %v5403 = vpack.c.b16 %v5262, %v5261
        %v5404 = vpack.c.b16 %v5264, %v5263
        %v5405 = vpack.c.b16 %v5266, %v5265
        %v5406 = vpack.c.b16 %v5268, %v5267
        %v5407 = vpack.c.b16 %v5270, %v5269
        %v5408 = vpack.c.b16 %v5272, %v5271
        %v5409 = vpack.c.b16 %v5274, %v5273
        %v5410 = vpack.c.b16 %v5276, %v5275
        %v5411 = vpack.c.b16 %v5278, %v5277
        %v5412 = vpack.c.b16 %v5280, %v5279
        %v5413 = vpack.c.b16 %v5282, %v5281
        %v5414 = vpack.c.b16 %v5284, %v5283
        %v5415 = vpack.c.b16 %v5286, %v5285
        %v5416 = vpack.c.b16 %v5288, %v5287
        %v5417 = vpack.c.b16 %v5290, %v5289
        %v5418 = vpack.c.b16 %v5292, %v5291
        %v5419 = vpack.c.b16 %v5294, %v5293
        %v5420 = vpack.c.b16 %v5296, %v5295
        %v5421 = vpack.c.b16 %v5298, %v5297
        %v5422 = vpack.c.b16 %v5300, %v5299
        %v5423 = vpack.c.b16 %v5302, %v5301
        %v5424 = vpack.c.b16 %v5304, %v5303
        %v5425 = vpack.c.b16 %v5306, %v5305
        %v5426 = vpack.c.b16 %v5308, %v5307
        %v5427 = vpack.c.b16 %v5310, %v5309
        %v5428 = vpack.c.b16 %v5312, %v5311
        %v5429 = vpack.c.b16 %v5314, %v5313
        %v5430 = vpack.c.b16 %v5316, %v5315
        %v5431 = vpack.c.b16 %v5318, %v5317
        %v5432 = vpack.c.b16 %v5320, %v5319
        %v5433 = vpack.c.b16 %v5322, %v5321
        %v5434 = vpack.c.b16 %v5324, %v5323
        %v5435 = vpack.c.b16 %v5326, %v5325
        %v5436 = vpack.c.b16 %v5328, %v5327
        %v5437 = vpack.c.b16 %v5330, %v5329
        %v5438 = vpack.c.b16 %v5332, %v5331
        %v5439 = vpack.c.b16 %v5334, %v5333
        %v5440 = vpack.c.b16 %v5336, %v5335
        %v5441 = vpack.c.b16 %v5338, %v5337
        %v5442 = vpack.c.b16 %v5340, %v5339
        %v5443 = vpack.c.b16 %v5342, %v5341
        %v5444 = vpack.c.b16 %v5344, %v5343
        %v5445 = vpack.c.b16 %v5346, %v5345
        %v5446 = vpack.c.b16 %v5348, %v5347
        %v5447 = vpack.c.b16 %v5350, %v5349
        %v5448 = vpack.c.b16 %v5352, %v5351
        %v5449 = vpack.c.b16 %v5354, %v5353
        %v5450 = vpack.c.b16 %v5356, %v5355
        %v5451 = vpack.c.b16 %v5358, %v5357
        %v5452 = vpack.c.b16 %v5360, %v5359
        %v5453 = vpack.c.b16 %v5362, %v5361
        %v5454 = vpack.c.b16 %v5364, %v5363
        %v5455 = vpack.c.b16 %v5366, %v5365
        %v5456 = vpack.c.b16 %v5368, %v5367
        %v5457 = vpack.c.b16 %v5370, %v5369
        %v5458 = vpack.c.b16 %v5372, %v5371
        %v5459 = vpack.c.b16 %v5374, %v5373
        %v5460 = vpack.c.b16 %v5376, %v5375
        %v5461 = vpack.c.b16 %v5378, %v5377
        %v5462 = vpack.c.b16 %v5380, %v5379
        %v5463 = vpack.c.b16 %v5382, %v5381
        %v5464 = vpack.c.b16 %v5384, %v5383
        %v5465 = vpack.c.b16 %v5386, %v5385
        %v5466 = vpack.c.b16 %v5388, %v5387
        %v5467 = vpack.c.b16 %v5390, %v5389
        %v5468 = vpack.c.b16 %v5392, %v5391
        %v5469 = vpack.c.b16 %v5394, %v5393
        %v5470 = vpack.c.b16 %v5396, %v5395
        %v5471 = vpack.c.b16 %v5398, %v5397
        %v5472 = vpack.c.b16 %v5400, %v5399
        %5545 = vmatprep.subr.bf16.mxu0 0
        %5546 = vmatpush1.bf16.msra.mxu0 %v5401
        %5547 = vmatprep.subr.bf16.mxu0 0
        %5548 = vmatpush1.bf16.msra.mxu0 %v5402
        %5549 = vmatprep.subr.bf16.mxu0 0
        %5550 = vmatpush1.bf16.msra.mxu0 %v5403
        %5551 = vmatprep.subr.bf16.mxu0 0
        %5552 = vmatpush1.bf16.msra.mxu0 %v5404
        %5553 = vmatprep.subr.bf16.mxu0 0
        %5554 = vmatpush1.bf16.msra.mxu0 %v5405
        %5555 = vmatprep.subr.bf16.mxu0 0
        %5556 = vmatpush1.bf16.msra.mxu0 %v5406
        %5557 = vmatprep.subr.bf16.mxu0 0
        %5558 = vmatpush1.bf16.msra.mxu0 %v5407
        %5559 = vmatprep.subr.bf16.mxu0 0
        %5560 = vmatpush1.bf16.msra.mxu0 %v5408
        %5561 = vmatprep.subr.bf16.mxu0 0
        %5562 = vmatpush1.bf16.msra.mxu0 %v5409
        %5563 = vmatprep.subr.bf16.mxu0 0
        %5564 = vmatpush1.bf16.msra.mxu0 %v5410
        %5565 = vmatprep.subr.bf16.mxu0 0
        %5566 = vmatpush1.bf16.msra.mxu0 %v5411
        %5567 = vmatprep.subr.bf16.mxu0 0
        %5568 = vmatpush1.bf16.msra.mxu0 %v5412
        %5569 = vmatprep.subr.bf16.mxu0 0
        %5570 = vmatpush1.bf16.msra.mxu0 %v5413
        %5571 = vmatprep.subr.bf16.mxu0 0
        %5572 = vmatpush1.bf16.msra.mxu0 %v5414
        %5573 = vmatprep.subr.bf16.mxu0 0
        %5574 = vmatpush1.bf16.msra.mxu0 %v5415
        %5575 = vmatprep.subr.bf16.mxu0 0
        %5576 = vmatpush1.bf16.msra.mxu0 %v5416
        %5577 = vmatprep.mubr.bf16.mxu0 %v4747
        %5578 = vmatmul.mubr.bf16.gmra.mrb[0].mxu0 %v4746
        %v5579 = vpop.f32.mrb[0].mxu0
        %v5580 = vadd.f32 %v5111, %v5579
        %v5581 = vpop.f32.mrb[0].mxu0
        %v5582 = vpop.f32.mrb[0].mxu0
        %v5583 = vadd.f32 %v5111, %v5582
        %v5584 = vpop.f32.mrb[0].mxu0
        %5585 = vmatprep.mubr.bf16.mxu0 %v4756
        %5586 = vmatmul.mubr.bf16.gmra.mrb[0].mxu0 %v4755
        %v5587 = vpop.f32.mrb[0].mxu0
        %v5588 = vadd.f32 %v5111, %v5587
        %v5589 = vpop.f32.mrb[0].mxu0
        %v5590 = vpop.f32.mrb[0].mxu0
        %v5591 = vadd.f32 %v5111, %v5590
        %v5592 = vpop.f32.mrb[0].mxu0
        %5593 = vmatprep.mubr.bf16.mxu0 %v4765
        %5594 = vmatmul.mubr.bf16.gmra.mrb[0].mxu0 %v4764
        %v5595 = vpop.f32.mrb[0].mxu0
        %v5596 = vadd.f32 %v5111, %v5595
        %v5597 = vpop.f32.mrb[0].mxu0
        %v5598 = vpop.f32.mrb[0].mxu0
        %v5599 = vadd.f32 %v5111, %v5598
        %v5600 = vpop.f32.mrb[0].mxu0
        %5601 = vmatprep.mubr.bf16.mxu0 %v4774
        %5602 = vmatmul.mubr.bf16.gmra.mrb[0].mxu0 %v4773
        %v5603 = vpop.f32.mrb[0].mxu0
        %v5604 = vadd.f32 %v5111, %v5603
        %v5605 = vpop.f32.mrb[0].mxu0
        %v5606 = vpop.f32.mrb[0].mxu0
        %v5607 = vadd.f32 %v5111, %v5606
        %v5608 = vpop.f32.mrb[0].mxu0
        %5609 = vmatprep.mubr.bf16.mxu0 %v4783
        %5610 = vmatmul.mubr.bf16.gmra.mrb[0].mxu0 %v4782
        %v5611 = vpop.f32.mrb[0].mxu0
        %v5612 = vadd.f32 %v5111, %v5611
        %v5613 = vpop.f32.mrb[0].mxu0
        %v5614 = vpop.f32.mrb[0].mxu0
        %v5615 = vadd.f32 %v5111, %v5614
        %v5616 = vpop.f32.mrb[0].mxu0
        %5617 = vmatprep.mubr.bf16.mxu0 %v4792
        %5618 = vmatmul.mubr.bf16.gmra.mrb[0].mxu0 %v4791
        %v5619 = vpop.f32.mrb[0].mxu0
        %v5620 = vadd.f32 %v5111, %v5619
        %v5621 = vpop.f32.mrb[0].mxu0
        %v5622 = vpop.f32.mrb[0].mxu0
        %v5623 = vadd.f32 %v5111, %v5622
        %v5624 = vpop.f32.mrb[0].mxu0
        %5625 = vmatprep.mubr.bf16.mxu0 %v4801
        %5626 = vmatmul.mubr.bf16.gmra.mrb[0].mxu0 %v4800
        %v5627 = vpop.f32.mrb[0].mxu0
        %v5628 = vadd.f32 %v5111, %v5627
        %v5629 = vpop.f32.mrb[0].mxu0
        %v5630 = vpop.f32.mrb[0].mxu0
        %v5631 = vadd.f32 %v5111, %v5630
        %v5632 = vpop.f32.mrb[0].mxu0
        %5633 = vmatprep.mubr.bf16.mxu0 %v4810
        %5634 = vmatmul.mubr.bf16.gmra.mrb[0].mxu0 %v4809
        %v5635 = vpop.f32.mrb[0].mxu0
        %v5636 = vadd.f32 %v5111, %v5635
        %v5637 = vpop.f32.mrb[0].mxu0
        %v5638 = vpop.f32.mrb[0].mxu0
        %v5639 = vadd.f32 %v5111, %v5638
        %v5640 = vpop.f32.mrb[0].mxu0
        %5641 = vmatprep.mubr.bf16.mxu0 %v4819
        %5642 = vmatmul.mubr.bf16.gmra.mrb[0].mxu0 %v4818
        %v5643 = vpop.f32.mrb[0].mxu0
        %v5644 = vadd.f32 %v5111, %v5643
        %v5645 = vpop.f32.mrb[0].mxu0
        %v5646 = vpop.f32.mrb[0].mxu0
        %v5647 = vadd.f32 %v5111, %v5646
        %v5648 = vpop.f32.mrb[0].mxu0
        %5649 = vmatprep.mubr.bf16.mxu0 %v4828
        %5650 = vmatmul.mubr.bf16.gmra.mrb[0].mxu0 %v4827
        %v5651 = vpop.f32.mrb[0].mxu0
        %v5652 = vadd.f32 %v5111, %v5651
        %v5653 = vpop.f32.mrb[0].mxu0
        %v5654 = vpop.f32.mrb[0].mxu0
        %v5655 = vadd.f32 %v5111, %v5654
        %v5656 = vpop.f32.mrb[0].mxu0
        %5657 = vmatprep.mubr.bf16.mxu0 %v4837
        %5658 = vmatmul.mubr.bf16.gmra.mrb[0].mxu0 %v4836
        %v5659 = vpop.f32.mrb[0].mxu0
        %v5660 = vadd.f32 %v5111, %v5659
        %v5661 = vpop.f32.mrb[0].mxu0
        %v5662 = vpop.f32.mrb[0].mxu0
        %v5663 = vadd.f32 %v5111, %v5662
        %v5664 = vpop.f32.mrb[0].mxu0
        %5665 = vmatprep.mubr.bf16.mxu0 %v4846
        %5666 = vmatmul.mubr.bf16.gmra.mrb[0].mxu0 %v4845
        %v5667 = vpop.f32.mrb[0].mxu0
        %v5668 = vadd.f32 %v5111, %v5667
        %v5669 = vpop.f32.mrb[0].mxu0
        %v5670 = vpop.f32.mrb[0].mxu0
        %v5671 = vadd.f32 %v5111, %v5670
        %v5672 = vpop.f32.mrb[0].mxu0
        %5673 = vmatprep.mubr.bf16.mxu0 %v4855
        %5674 = vmatmul.mubr.bf16.gmra.mrb[0].mxu0 %v4854
        %v5675 = vpop.f32.mrb[0].mxu0
        %v5676 = vadd.f32 %v5111, %v5675
        %v5677 = vpop.f32.mrb[0].mxu0
        %v5678 = vpop.f32.mrb[0].mxu0
        %v5679 = vadd.f32 %v5111, %v5678
        %v5680 = vpop.f32.mrb[0].mxu0
        %5681 = vmatprep.mubr.bf16.mxu0 %v4864
        %5682 = vmatmul.mubr.bf16.gmra.mrb[0].mxu0 %v4863
        %v5683 = vpop.f32.mrb[0].mxu0
        %v5684 = vadd.f32 %v5111, %v5683
        %v5685 = vpop.f32.mrb[0].mxu0
        %v5686 = vpop.f32.mrb[0].mxu0
        %v5687 = vadd.f32 %v5111, %v5686
        %v5688 = vpop.f32.mrb[0].mxu0
        %5689 = vmatprep.mubr.bf16.mxu0 %v4873
        %5690 = vmatmul.mubr.bf16.gmra.mrb[0].mxu0 %v4872
        %v5691 = vpop.f32.mrb[0].mxu0
        %v5692 = vadd.f32 %v5111, %v5691
        %v5693 = vpop.f32.mrb[0].mxu0
        %v5694 = vpop.f32.mrb[0].mxu0
        %v5695 = vadd.f32 %v5111, %v5694
        %v5696 = vpop.f32.mrb[0].mxu0
        %5697 = vmatprep.mubr.bf16.mxu0 %v4882
        %5698 = vmatmul.mubr.bf16.gmra.mrb[0].mxu0 %v4881
        %v5699 = vpop.f32.mrb[0].mxu0
        %v5700 = vadd.f32 %v5111, %v5699
        %v5701 = vpop.f32.mrb[0].mxu0
        %v5702 = vpop.f32.mrb[0].mxu0
        %v5703 = vadd.f32 %v5111, %v5702
        %v5704 = vpop.f32.mrb[0].mxu0
        %5705 = vmatprep.mubr.bf16.mxu0 %v4891
        %5706 = vmatmul.mubr.bf16.gmra.mrb[0].mxu0 %v4890
        %v5707 = vpop.f32.mrb[0].mxu0
        %v5708 = vadd.f32 %v5111, %v5707
        %v5709 = vpop.f32.mrb[0].mxu0
        %v5710 = vpop.f32.mrb[0].mxu0
        %v5711 = vadd.f32 %v5111, %v5710
        %v5712 = vpop.f32.mrb[0].mxu0
        %5713 = vmatprep.mubr.bf16.mxu0 %v4900
        %5714 = vmatmul.mubr.bf16.gmra.mrb[0].mxu0 %v4899
        %v5715 = vpop.f32.mrb[0].mxu0
        %v5716 = vadd.f32 %v5111, %v5715
        %v5717 = vpop.f32.mrb[0].mxu0
        %v5718 = vpop.f32.mrb[0].mxu0
        %v5719 = vadd.f32 %v5111, %v5718
        %v5720 = vpop.f32.mrb[0].mxu0
        %5721 = vmatprep.mubr.bf16.mxu0 %v4909
        %5722 = vmatmul.mubr.bf16.gmra.mrb[0].mxu0 %v4908
        %v5723 = vpop.f32.mrb[0].mxu0
        %v5724 = vadd.f32 %v5111, %v5723
        %v5725 = vpop.f32.mrb[0].mxu0
        %v5726 = vpop.f32.mrb[0].mxu0
        %v5727 = vadd.f32 %v5111, %v5726
        %v5728 = vpop.f32.mrb[0].mxu0
        %5729 = vmatprep.mubr.bf16.mxu0 %v4918
        %5730 = vmatmul.mubr.bf16.gmra.mrb[0].mxu0 %v4917
        %v5731 = vpop.f32.mrb[0].mxu0
        %v5732 = vadd.f32 %v5111, %v5731
        %v5733 = vpop.f32.mrb[0].mxu0
        %v5734 = vpop.f32.mrb[0].mxu0
        %v5735 = vadd.f32 %v5111, %v5734
        %v5736 = vpop.f32.mrb[0].mxu0
        %5737 = vmatprep.mubr.bf16.mxu0 %v4927
        %5738 = vmatmul.mubr.bf16.gmra.mrb[0].mxu0 %v4926
        %v5739 = vpop.f32.mrb[0].mxu0
        %v5740 = vadd.f32 %v5111, %v5739
        %v5741 = vpop.f32.mrb[0].mxu0
        %v5742 = vpop.f32.mrb[0].mxu0
        %v5743 = vadd.f32 %v5111, %v5742
        %v5744 = vpop.f32.mrb[0].mxu0
        %5745 = vmatprep.mubr.bf16.mxu0 %v4936
        %5746 = vmatmul.mubr.bf16.gmra.mrb[0].mxu0 %v4935
        %v5747 = vpop.f32.mrb[0].mxu0
        %v5748 = vadd.f32 %v5111, %v5747
        %v5749 = vpop.f32.mrb[0].mxu0
        %v5750 = vpop.f32.mrb[0].mxu0
        %v5751 = vadd.f32 %v5111, %v5750
        %v5752 = vpop.f32.mrb[0].mxu0
        %5753 = vmatprep.mubr.bf16.mxu0 %v4945
        %5754 = vmatmul.mubr.bf16.gmra.mrb[0].mxu0 %v4944
        %v5755 = vpop.f32.mrb[0].mxu0
        %v5756 = vadd.f32 %v5111, %v5755
        %v5757 = vpop.f32.mrb[0].mxu0
        %v5758 = vpop.f32.mrb[0].mxu0
        %v5759 = vadd.f32 %v5111, %v5758
        %v5760 = vpop.f32.mrb[0].mxu0
        %5761 = vmatprep.mubr.bf16.mxu0 %v4954
        %5762 = vmatmul.mubr.bf16.gmra.mrb[0].mxu0 %v4953
        %v5763 = vpop.f32.mrb[0].mxu0
        %v5764 = vadd.f32 %v5111, %v5763
        %v5765 = vpop.f32.mrb[0].mxu0
        %v5766 = vpop.f32.mrb[0].mxu0
        %v5767 = vadd.f32 %v5111, %v5766
        %v5768 = vpop.f32.mrb[0].mxu0
        %5769 = vdwg.mxu0
        %5770 = vmatprep.subr.bf16.mxu0 0
        %5771 = vmatpush1.bf16.msra.mxu0 %v5417
        %5772 = vmatprep.subr.bf16.mxu0 0
        %5773 = vmatpush1.bf16.msra.mxu0 %v5418
        %5774 = vmatprep.subr.bf16.mxu0 0
        %5775 = vmatpush1.bf16.msra.mxu0 %v5419
        %5776 = vmatprep.subr.bf16.mxu0 0
        %5777 = vmatpush1.bf16.msra.mxu0 %v5420
        %5778 = vmatprep.subr.bf16.mxu0 0
        %5779 = vmatpush1.bf16.msra.mxu0 %v5421
        %5780 = vmatprep.subr.bf16.mxu0 0
        %5781 = vmatpush1.bf16.msra.mxu0 %v5422
        %5782 = vmatprep.subr.bf16.mxu0 0
        %5783 = vmatpush1.bf16.msra.mxu0 %v5423
        %5784 = vmatprep.subr.bf16.mxu0 0
        %5785 = vmatpush1.bf16.msra.mxu0 %v5424
        %5786 = vmatprep.subr.bf16.mxu0 0
        %5787 = vmatpush1.bf16.msra.mxu0 %v5425
        %5788 = vmatprep.subr.bf16.mxu0 0
        %5789 = vmatpush1.bf16.msra.mxu0 %v5426
        %5790 = vmatprep.subr.bf16.mxu0 0
        %5791 = vmatpush1.bf16.msra.mxu0 %v5427
        %5792 = vmatprep.subr.bf16.mxu0 0
        %5793 = vmatpush1.bf16.msra.mxu0 %v5428
        %5794 = vmatprep.subr.bf16.mxu0 0
        %5795 = vmatpush1.bf16.msra.mxu0 %v5429
        %5796 = vmatprep.subr.bf16.mxu0 0
        %5797 = vmatpush1.bf16.msra.mxu0 %v5430
        %5798 = vmatprep.subr.bf16.mxu0 0
        %5799 = vmatpush1.bf16.msra.mxu0 %v5431
        %5800 = vmatprep.subr.bf16.mxu0 0
        %5801 = vmatpush1.bf16.msra.mxu0 %v5432
        %5802 = vmatprep.mubr.bf16.mxu0 %v4749
        %5803 = vmatmul.mubr.bf16.gmra.mrb[0].mxu0 %v4748
        %v5804 = vpop.f32.mrb[0].mxu0
        %v5805 = vadd.f32 %v5580, %v5804
        %v5806 = vpop.f32.mrb[0].mxu0
        %v5807 = vpop.f32.mrb[0].mxu0
        %v5808 = vadd.f32 %v5583, %v5807
        %v5809 = vpop.f32.mrb[0].mxu0
        %5810 = vmatprep.mubr.bf16.mxu0 %v4758
        %5811 = vmatmul.mubr.bf16.gmra.mrb[0].mxu0 %v4757
        %v5812 = vpop.f32.mrb[0].mxu0
        %v5813 = vadd.f32 %v5588, %v5812
        %v5814 = vpop.f32.mrb[0].mxu0
        %v5815 = vpop.f32.mrb[0].mxu0
        %v5816 = vadd.f32 %v5591, %v5815
        %v5817 = vpop.f32.mrb[0].mxu0
        %5818 = vmatprep.mubr.bf16.mxu0 %v4767
        %5819 = vmatmul.mubr.bf16.gmra.mrb[0].mxu0 %v4766
        %v5820 = vpop.f32.mrb[0].mxu0
        %v5821 = vadd.f32 %v5596, %v5820
        %v5822 = vpop.f32.mrb[0].mxu0
        %v5823 = vpop.f32.mrb[0].mxu0
        %v5824 = vadd.f32 %v5599, %v5823
        %v5825 = vpop.f32.mrb[0].mxu0
        %5826 = vmatprep.mubr.bf16.mxu0 %v4776
        %5827 = vmatmul.mubr.bf16.gmra.mrb[0].mxu0 %v4775
        %v5828 = vpop.f32.mrb[0].mxu0
        %v5829 = vadd.f32 %v5604, %v5828
        %v5830 = vpop.f32.mrb[0].mxu0
        %v5831 = vpop.f32.mrb[0].mxu0
        %v5832 = vadd.f32 %v5607, %v5831
        %v5833 = vpop.f32.mrb[0].mxu0
        %5834 = vmatprep.mubr.bf16.mxu0 %v4785
        %5835 = vmatmul.mubr.bf16.gmra.mrb[0].mxu0 %v4784
        %v5836 = vpop.f32.mrb[0].mxu0
        %v5837 = vadd.f32 %v5612, %v5836
        %v5838 = vpop.f32.mrb[0].mxu0
        %v5839 = vpop.f32.mrb[0].mxu0
        %v5840 = vadd.f32 %v5615, %v5839
        %v5841 = vpop.f32.mrb[0].mxu0
        %5842 = vmatprep.mubr.bf16.mxu0 %v4794
        %5843 = vmatmul.mubr.bf16.gmra.mrb[0].mxu0 %v4793
        %v5844 = vpop.f32.mrb[0].mxu0
        %v5845 = vadd.f32 %v5620, %v5844
        %v5846 = vpop.f32.mrb[0].mxu0
        %v5847 = vpop.f32.mrb[0].mxu0
        %v5848 = vadd.f32 %v5623, %v5847
        %v5849 = vpop.f32.mrb[0].mxu0
        %5850 = vmatprep.mubr.bf16.mxu0 %v4803
        %5851 = vmatmul.mubr.bf16.gmra.mrb[0].mxu0 %v4802
        %v5852 = vpop.f32.mrb[0].mxu0
        %v5853 = vadd.f32 %v5628, %v5852
        %v5854 = vpop.f32.mrb[0].mxu0
        %v5855 = vpop.f32.mrb[0].mxu0
        %v5856 = vadd.f32 %v5631, %v5855
        %v5857 = vpop.f32.mrb[0].mxu0
        %5858 = vmatprep.mubr.bf16.mxu0 %v4812
        %5859 = vmatmul.mubr.bf16.gmra.mrb[0].mxu0 %v4811
        %v5860 = vpop.f32.mrb[0].mxu0
        %v5861 = vadd.f32 %v5636, %v5860
        %v5862 = vpop.f32.mrb[0].mxu0
        %v5863 = vpop.f32.mrb[0].mxu0
        %v5864 = vadd.f32 %v5639, %v5863
        %v5865 = vpop.f32.mrb[0].mxu0
        %5866 = vmatprep.mubr.bf16.mxu0 %v4821
        %5867 = vmatmul.mubr.bf16.gmra.mrb[0].mxu0 %v4820
        %v5868 = vpop.f32.mrb[0].mxu0
        %v5869 = vadd.f32 %v5644, %v5868
        %v5870 = vpop.f32.mrb[0].mxu0
        %v5871 = vpop.f32.mrb[0].mxu0
        %v5872 = vadd.f32 %v5647, %v5871
        %v5873 = vpop.f32.mrb[0].mxu0
        %5874 = vmatprep.mubr.bf16.mxu0 %v4830
        %5875 = vmatmul.mubr.bf16.gmra.mrb[0].mxu0 %v4829
        %v5876 = vpop.f32.mrb[0].mxu0
        %v5877 = vadd.f32 %v5652, %v5876
        %v5878 = vpop.f32.mrb[0].mxu0
        %v5879 = vpop.f32.mrb[0].mxu0
        %v5880 = vadd.f32 %v5655, %v5879
        %v5881 = vpop.f32.mrb[0].mxu0
        %5882 = vmatprep.mubr.bf16.mxu0 %v4839
        %5883 = vmatmul.mubr.bf16.gmra.mrb[0].mxu0 %v4838
        %v5884 = vpop.f32.mrb[0].mxu0
        %v5885 = vadd.f32 %v5660, %v5884
        %v5886 = vpop.f32.mrb[0].mxu0
        %v5887 = vpop.f32.mrb[0].mxu0
        %v5888 = vadd.f32 %v5663, %v5887
        %v5889 = vpop.f32.mrb[0].mxu0
        %5890 = vmatprep.mubr.bf16.mxu0 %v4848
        %5891 = vmatmul.mubr.bf16.gmra.mrb[0].mxu0 %v4847
        %v5892 = vpop.f32.mrb[0].mxu0
        %v5893 = vadd.f32 %v5668, %v5892
        %v5894 = vpop.f32.mrb[0].mxu0
        %v5895 = vpop.f32.mrb[0].mxu0
        %v5896 = vadd.f32 %v5671, %v5895
        %v5897 = vpop.f32.mrb[0].mxu0
        %5898 = vmatprep.mubr.bf16.mxu0 %v4857
        %5899 = vmatmul.mubr.bf16.gmra.mrb[0].mxu0 %v4856
        %v5900 = vpop.f32.mrb[0].mxu0
        %v5901 = vadd.f32 %v5676, %v5900
        %v5902 = vpop.f32.mrb[0].mxu0
        %v5903 = vpop.f32.mrb[0].mxu0
        %v5904 = vadd.f32 %v5679, %v5903
        %v5905 = vpop.f32.mrb[0].mxu0
        %5906 = vmatprep.mubr.bf16.mxu0 %v4866
        %5907 = vmatmul.mubr.bf16.gmra.mrb[0].mxu0 %v4865
        %v5908 = vpop.f32.mrb[0].mxu0
        %v5909 = vadd.f32 %v5684, %v5908
        %v5910 = vpop.f32.mrb[0].mxu0
        %v5911 = vpop.f32.mrb[0].mxu0
        %v5912 = vadd.f32 %v5687, %v5911
        %v5913 = vpop.f32.mrb[0].mxu0
        %5914 = vmatprep.mubr.bf16.mxu0 %v4875
        %5915 = vmatmul.mubr.bf16.gmra.mrb[0].mxu0 %v4874
        %v5916 = vpop.f32.mrb[0].mxu0
        %v5917 = vadd.f32 %v5692, %v5916
        %v5918 = vpop.f32.mrb[0].mxu0
        %v5919 = vpop.f32.mrb[0].mxu0
        %v5920 = vadd.f32 %v5695, %v5919
        %v5921 = vpop.f32.mrb[0].mxu0
        %5922 = vmatprep.mubr.bf16.mxu0 %v4884
        %5923 = vmatmul.mubr.bf16.gmra.mrb[0].mxu0 %v4883
        %v5924 = vpop.f32.mrb[0].mxu0
        %v5925 = vadd.f32 %v5700, %v5924
        %v5926 = vpop.f32.mrb[0].mxu0
        %v5927 = vpop.f32.mrb[0].mxu0
        %v5928 = vadd.f32 %v5703, %v5927
        %v5929 = vpop.f32.mrb[0].mxu0
        %5930 = vmatprep.mubr.bf16.mxu0 %v4893
        %5931 = vmatmul.mubr.bf16.gmra.mrb[0].mxu0 %v4892
        %v5932 = vpop.f32.mrb[0].mxu0
        %v5933 = vadd.f32 %v5708, %v5932
        %v5934 = vpop.f32.mrb[0].mxu0
        %v5935 = vpop.f32.mrb[0].mxu0
        %v5936 = vadd.f32 %v5711, %v5935
        %v5937 = vpop.f32.mrb[0].mxu0
        %5938 = vmatprep.mubr.bf16.mxu0 %v4902
        %5939 = vmatmul.mubr.bf16.gmra.mrb[0].mxu0 %v4901
        %v5940 = vpop.f32.mrb[0].mxu0
        %v5941 = vadd.f32 %v5716, %v5940
        %v5942 = vpop.f32.mrb[0].mxu0
        %v5943 = vpop.f32.mrb[0].mxu0
        %v5944 = vadd.f32 %v5719, %v5943
        %v5945 = vpop.f32.mrb[0].mxu0
        %5946 = vmatprep.mubr.bf16.mxu0 %v4911
        %5947 = vmatmul.mubr.bf16.gmra.mrb[0].mxu0 %v4910
        %v5948 = vpop.f32.mrb[0].mxu0
        %v5949 = vadd.f32 %v5724, %v5948
        %v5950 = vpop.f32.mrb[0].mxu0
        %v5951 = vpop.f32.mrb[0].mxu0
        %v5952 = vadd.f32 %v5727, %v5951
        %v5953 = vpop.f32.mrb[0].mxu0
        %5954 = vmatprep.mubr.bf16.mxu0 %v4920
        %5955 = vmatmul.mubr.bf16.gmra.mrb[0].mxu0 %v4919
        %v5956 = vpop.f32.mrb[0].mxu0
        %v5957 = vadd.f32 %v5732, %v5956
        %v5958 = vpop.f32.mrb[0].mxu0
        %v5959 = vpop.f32.mrb[0].mxu0
        %v5960 = vadd.f32 %v5735, %v5959
        %v5961 = vpop.f32.mrb[0].mxu0
        %5962 = vmatprep.mubr.bf16.mxu0 %v4929
        %5963 = vmatmul.mubr.bf16.gmra.mrb[0].mxu0 %v4928
        %v5964 = vpop.f32.mrb[0].mxu0
        %v5965 = vadd.f32 %v5740, %v5964
        %v5966 = vpop.f32.mrb[0].mxu0
        %v5967 = vpop.f32.mrb[0].mxu0
        %v5968 = vadd.f32 %v5743, %v5967
        %v5969 = vpop.f32.mrb[0].mxu0
        %5970 = vmatprep.mubr.bf16.mxu0 %v4938
        %5971 = vmatmul.mubr.bf16.gmra.mrb[0].mxu0 %v4937
        %v5972 = vpop.f32.mrb[0].mxu0
        %v5973 = vadd.f32 %v5748, %v5972
        %v5974 = vpop.f32.mrb[0].mxu0
        %v5975 = vpop.f32.mrb[0].mxu0
        %v5976 = vadd.f32 %v5751, %v5975
        %v5977 = vpop.f32.mrb[0].mxu0
        %5978 = vmatprep.mubr.bf16.mxu0 %v4947
        %5979 = vmatmul.mubr.bf16.gmra.mrb[0].mxu0 %v4946
        %v5980 = vpop.f32.mrb[0].mxu0
        %v5981 = vadd.f32 %v5756, %v5980
        %v5982 = vpop.f32.mrb[0].mxu0
        %v5983 = vpop.f32.mrb[0].mxu0
        %v5984 = vadd.f32 %v5759, %v5983
        %v5985 = vpop.f32.mrb[0].mxu0
        %5986 = vmatprep.mubr.bf16.mxu0 %v4956
        %5987 = vmatmul.mubr.bf16.gmra.mrb[0].mxu0 %v4955
        %v5988 = vpop.f32.mrb[0].mxu0
        %v5989 = vadd.f32 %v5764, %v5988
        %v5990 = vpop.f32.mrb[0].mxu0
        %v5991 = vpop.f32.mrb[0].mxu0
        %v5992 = vadd.f32 %v5767, %v5991
        %v5993 = vpop.f32.mrb[0].mxu0
        %5994 = vdwg.mxu0
        %5995 = vmatprep.subr.bf16.mxu0 0
        %5996 = vmatpush1.bf16.msra.mxu0 %v5433
        %5997 = vmatprep.subr.bf16.mxu0 0
        %5998 = vmatpush1.bf16.msra.mxu0 %v5434
        %5999 = vmatprep.subr.bf16.mxu0 0
        %6000 = vmatpush1.bf16.msra.mxu0 %v5435
        %6001 = vmatprep.subr.bf16.mxu0 0
        %6002 = vmatpush1.bf16.msra.mxu0 %v5436
        %6003 = vmatprep.subr.bf16.mxu0 0
        %6004 = vmatpush1.bf16.msra.mxu0 %v5437
        %6005 = vmatprep.subr.bf16.mxu0 0
        %6006 = vmatpush1.bf16.msra.mxu0 %v5438
        %6007 = vmatprep.subr.bf16.mxu0 0
        %6008 = vmatpush1.bf16.msra.mxu0 %v5439
        %6009 = vmatprep.subr.bf16.mxu0 0
        %6010 = vmatpush1.bf16.msra.mxu0 %v5440
        %6011 = vmatprep.subr.bf16.mxu0 0
        %6012 = vmatpush1.bf16.msra.mxu0 %v5441
        %6013 = vmatprep.subr.bf16.mxu0 0
        %6014 = vmatpush1.bf16.msra.mxu0 %v5442
        %6015 = vmatprep.subr.bf16.mxu0 0
        %6016 = vmatpush1.bf16.msra.mxu0 %v5443
        %6017 = vmatprep.subr.bf16.mxu0 0
        %6018 = vmatpush1.bf16.msra.mxu0 %v5444
        %6019 = vmatprep.subr.bf16.mxu0 0
        %6020 = vmatpush1.bf16.msra.mxu0 %v5445
        %6021 = vmatprep.subr.bf16.mxu0 0
        %6022 = vmatpush1.bf16.msra.mxu0 %v5446
        %6023 = vmatprep.subr.bf16.mxu0 0
        %6024 = vmatpush1.bf16.msra.mxu0 %v5447
        %6025 = vmatprep.subr.bf16.mxu0 0
        %6026 = vmatpush1.bf16.msra.mxu0 %v5448
        %6027 = vmatprep.mubr.bf16.mxu0 %v4751
        %6028 = vmatmul.mubr.bf16.gmra.mrb[0].mxu0 %v4750
        %v6029 = vpop.f32.mrb[0].mxu0
        %v6030 = vadd.f32 %v5805, %v6029
        %v6031 = vpop.f32.mrb[0].mxu0
        %v6032 = vpop.f32.mrb[0].mxu0
        %v6033 = vadd.f32 %v5808, %v6032
        %v6034 = vpop.f32.mrb[0].mxu0
        %6035 = vmatprep.mubr.bf16.mxu0 %v4760
        %6036 = vmatmul.mubr.bf16.gmra.mrb[0].mxu0 %v4759
        %v6037 = vpop.f32.mrb[0].mxu0
        %v6038 = vadd.f32 %v5813, %v6037
        %v6039 = vpop.f32.mrb[0].mxu0
        %v6040 = vpop.f32.mrb[0].mxu0
        %v6041 = vadd.f32 %v5816, %v6040
        %v6042 = vpop.f32.mrb[0].mxu0
        %6043 = vmatprep.mubr.bf16.mxu0 %v4769
        %6044 = vmatmul.mubr.bf16.gmra.mrb[0].mxu0 %v4768
        %v6045 = vpop.f32.mrb[0].mxu0
        %v6046 = vadd.f32 %v5821, %v6045
        %v6047 = vpop.f32.mrb[0].mxu0
        %v6048 = vpop.f32.mrb[0].mxu0
        %v6049 = vadd.f32 %v5824, %v6048
        %v6050 = vpop.f32.mrb[0].mxu0
        %6051 = vmatprep.mubr.bf16.mxu0 %v4778
        %6052 = vmatmul.mubr.bf16.gmra.mrb[0].mxu0 %v4777
        %v6053 = vpop.f32.mrb[0].mxu0
        %v6054 = vadd.f32 %v5829, %v6053
        %v6055 = vpop.f32.mrb[0].mxu0
        %v6056 = vpop.f32.mrb[0].mxu0
        %v6057 = vadd.f32 %v5832, %v6056
        %v6058 = vpop.f32.mrb[0].mxu0
        %6059 = vmatprep.mubr.bf16.mxu0 %v4787
        %6060 = vmatmul.mubr.bf16.gmra.mrb[0].mxu0 %v4786
        %v6061 = vpop.f32.mrb[0].mxu0
        %v6062 = vadd.f32 %v5837, %v6061
        %v6063 = vpop.f32.mrb[0].mxu0
        %v6064 = vpop.f32.mrb[0].mxu0
        %v6065 = vadd.f32 %v5840, %v6064
        %v6066 = vpop.f32.mrb[0].mxu0
        %6067 = vmatprep.mubr.bf16.mxu0 %v4796
        %6068 = vmatmul.mubr.bf16.gmra.mrb[0].mxu0 %v4795
        %v6069 = vpop.f32.mrb[0].mxu0
        %v6070 = vadd.f32 %v5845, %v6069
        %v6071 = vpop.f32.mrb[0].mxu0
        %v6072 = vpop.f32.mrb[0].mxu0
        %v6073 = vadd.f32 %v5848, %v6072
        %v6074 = vpop.f32.mrb[0].mxu0
        %6075 = vmatprep.mubr.bf16.mxu0 %v4805
        %6076 = vmatmul.mubr.bf16.gmra.mrb[0].mxu0 %v4804
        %v6077 = vpop.f32.mrb[0].mxu0
        %v6078 = vadd.f32 %v5853, %v6077
        %v6079 = vpop.f32.mrb[0].mxu0
        %v6080 = vpop.f32.mrb[0].mxu0
        %v6081 = vadd.f32 %v5856, %v6080
        %v6082 = vpop.f32.mrb[0].mxu0
        %6083 = vmatprep.mubr.bf16.mxu0 %v4814
        %6084 = vmatmul.mubr.bf16.gmra.mrb[0].mxu0 %v4813
        %v6085 = vpop.f32.mrb[0].mxu0
        %v6086 = vadd.f32 %v5861, %v6085
        %v6087 = vpop.f32.mrb[0].mxu0
        %v6088 = vpop.f32.mrb[0].mxu0
        %v6089 = vadd.f32 %v5864, %v6088
        %v6090 = vpop.f32.mrb[0].mxu0
        %6091 = vmatprep.mubr.bf16.mxu0 %v4823
        %6092 = vmatmul.mubr.bf16.gmra.mrb[0].mxu0 %v4822
        %v6093 = vpop.f32.mrb[0].mxu0
        %v6094 = vadd.f32 %v5869, %v6093
        %v6095 = vpop.f32.mrb[0].mxu0
        %v6096 = vpop.f32.mrb[0].mxu0
        %v6097 = vadd.f32 %v5872, %v6096
        %v6098 = vpop.f32.mrb[0].mxu0
        %6099 = vmatprep.mubr.bf16.mxu0 %v4832
        %6100 = vmatmul.mubr.bf16.gmra.mrb[0].mxu0 %v4831
        %v6101 = vpop.f32.mrb[0].mxu0
        %v6102 = vadd.f32 %v5877, %v6101
        %v6103 = vpop.f32.mrb[0].mxu0
        %v6104 = vpop.f32.mrb[0].mxu0
        %v6105 = vadd.f32 %v5880, %v6104
        %v6106 = vpop.f32.mrb[0].mxu0
        %6107 = vmatprep.mubr.bf16.mxu0 %v4841
        %6108 = vmatmul.mubr.bf16.gmra.mrb[0].mxu0 %v4840
        %v6109 = vpop.f32.mrb[0].mxu0
        %v6110 = vadd.f32 %v5885, %v6109
        %v6111 = vpop.f32.mrb[0].mxu0
        %v6112 = vpop.f32.mrb[0].mxu0
        %v6113 = vadd.f32 %v5888, %v6112
        %v6114 = vpop.f32.mrb[0].mxu0
        %6115 = vmatprep.mubr.bf16.mxu0 %v4850
        %6116 = vmatmul.mubr.bf16.gmra.mrb[0].mxu0 %v4849
        %v6117 = vpop.f32.mrb[0].mxu0
        %v6118 = vadd.f32 %v5893, %v6117
        %v6119 = vpop.f32.mrb[0].mxu0
        %v6120 = vpop.f32.mrb[0].mxu0
        %v6121 = vadd.f32 %v5896, %v6120
        %v6122 = vpop.f32.mrb[0].mxu0
        %6123 = vmatprep.mubr.bf16.mxu0 %v4859
        %6124 = vmatmul.mubr.bf16.gmra.mrb[0].mxu0 %v4858
        %v6125 = vpop.f32.mrb[0].mxu0
        %v6126 = vadd.f32 %v5901, %v6125
        %v6127 = vpop.f32.mrb[0].mxu0
        %v6128 = vpop.f32.mrb[0].mxu0
        %v6129 = vadd.f32 %v5904, %v6128
        %v6130 = vpop.f32.mrb[0].mxu0
        %6131 = vmatprep.mubr.bf16.mxu0 %v4868
        %6132 = vmatmul.mubr.bf16.gmra.mrb[0].mxu0 %v4867
        %v6133 = vpop.f32.mrb[0].mxu0
        %v6134 = vadd.f32 %v5909, %v6133
        %v6135 = vpop.f32.mrb[0].mxu0
        %v6136 = vpop.f32.mrb[0].mxu0
        %v6137 = vadd.f32 %v5912, %v6136
        %v6138 = vpop.f32.mrb[0].mxu0
        %6139 = vmatprep.mubr.bf16.mxu0 %v4877
        %6140 = vmatmul.mubr.bf16.gmra.mrb[0].mxu0 %v4876
        %v6141 = vpop.f32.mrb[0].mxu0
        %v6142 = vadd.f32 %v5917, %v6141
        %v6143 = vpop.f32.mrb[0].mxu0
        %v6144 = vpop.f32.mrb[0].mxu0
        %v6145 = vadd.f32 %v5920, %v6144
        %v6146 = vpop.f32.mrb[0].mxu0
        %6147 = vmatprep.mubr.bf16.mxu0 %v4886
        %6148 = vmatmul.mubr.bf16.gmra.mrb[0].mxu0 %v4885
        %v6149 = vpop.f32.mrb[0].mxu0
        %v6150 = vadd.f32 %v5925, %v6149
        %v6151 = vpop.f32.mrb[0].mxu0
        %v6152 = vpop.f32.mrb[0].mxu0
        %v6153 = vadd.f32 %v5928, %v6152
        %v6154 = vpop.f32.mrb[0].mxu0
        %6155 = vmatprep.mubr.bf16.mxu0 %v4895
        %6156 = vmatmul.mubr.bf16.gmra.mrb[0].mxu0 %v4894
        %v6157 = vpop.f32.mrb[0].mxu0
        %v6158 = vadd.f32 %v5933, %v6157
        %v6159 = vpop.f32.mrb[0].mxu0
        %v6160 = vpop.f32.mrb[0].mxu0
        %v6161 = vadd.f32 %v5936, %v6160
        %v6162 = vpop.f32.mrb[0].mxu0
        %6163 = vmatprep.mubr.bf16.mxu0 %v4904
        %6164 = vmatmul.mubr.bf16.gmra.mrb[0].mxu0 %v4903
        %v6165 = vpop.f32.mrb[0].mxu0
        %v6166 = vadd.f32 %v5941, %v6165
        %v6167 = vpop.f32.mrb[0].mxu0
        %v6168 = vpop.f32.mrb[0].mxu0
        %v6169 = vadd.f32 %v5944, %v6168
        %v6170 = vpop.f32.mrb[0].mxu0
        %6171 = vmatprep.mubr.bf16.mxu0 %v4913
        %6172 = vmatmul.mubr.bf16.gmra.mrb[0].mxu0 %v4912
        %v6173 = vpop.f32.mrb[0].mxu0
        %v6174 = vadd.f32 %v5949, %v6173
        %v6175 = vpop.f32.mrb[0].mxu0
        %v6176 = vpop.f32.mrb[0].mxu0
        %v6177 = vadd.f32 %v5952, %v6176
        %v6178 = vpop.f32.mrb[0].mxu0
        %6179 = vmatprep.mubr.bf16.mxu0 %v4922
        %6180 = vmatmul.mubr.bf16.gmra.mrb[0].mxu0 %v4921
        %v6181 = vpop.f32.mrb[0].mxu0
        %v6182 = vadd.f32 %v5957, %v6181
        %v6183 = vpop.f32.mrb[0].mxu0
        %v6184 = vpop.f32.mrb[0].mxu0
        %v6185 = vadd.f32 %v5960, %v6184
        %v6186 = vpop.f32.mrb[0].mxu0
        %6187 = vmatprep.mubr.bf16.mxu0 %v4931
        %6188 = vmatmul.mubr.bf16.gmra.mrb[0].mxu0 %v4930
        %v6189 = vpop.f32.mrb[0].mxu0
        %v6190 = vadd.f32 %v5965, %v6189
        %v6191 = vpop.f32.mrb[0].mxu0
        %v6192 = vpop.f32.mrb[0].mxu0
        %v6193 = vadd.f32 %v5968, %v6192
        %v6194 = vpop.f32.mrb[0].mxu0
        %6195 = vmatprep.mubr.bf16.mxu0 %v4940
        %6196 = vmatmul.mubr.bf16.gmra.mrb[0].mxu0 %v4939
        %v6197 = vpop.f32.mrb[0].mxu0
        %v6198 = vadd.f32 %v5973, %v6197
        %v6199 = vpop.f32.mrb[0].mxu0
        %v6200 = vpop.f32.mrb[0].mxu0
        %v6201 = vadd.f32 %v5976, %v6200
        %v6202 = vpop.f32.mrb[0].mxu0
        %6203 = vmatprep.mubr.bf16.mxu0 %v4949
        %6204 = vmatmul.mubr.bf16.gmra.mrb[0].mxu0 %v4948
        %v6205 = vpop.f32.mrb[0].mxu0
        %v6206 = vadd.f32 %v5981, %v6205
        %v6207 = vpop.f32.mrb[0].mxu0
        %v6208 = vpop.f32.mrb[0].mxu0
        %v6209 = vadd.f32 %v5984, %v6208
        %v6210 = vpop.f32.mrb[0].mxu0
        %6211 = vmatprep.mubr.bf16.mxu0 %v4958
        %6212 = vmatmul.mubr.bf16.gmra.mrb[0].mxu0 %v4957
        %v6213 = vpop.f32.mrb[0].mxu0
        %v6214 = vadd.f32 %v5989, %v6213
        %v6215 = vpop.f32.mrb[0].mxu0
        %v6216 = vpop.f32.mrb[0].mxu0
        %v6217 = vadd.f32 %v5992, %v6216
        %v6218 = vpop.f32.mrb[0].mxu0
        %6219 = vdwg.mxu0
        %6220 = vmatprep.subr.bf16.mxu0 0
        %6221 = vmatpush1.bf16.msra.mxu0 %v5449
        %6222 = vmatprep.subr.bf16.mxu0 0
        %6223 = vmatpush1.bf16.msra.mxu0 %v5450
        %6224 = vmatprep.subr.bf16.mxu0 0
        %6225 = vmatpush1.bf16.msra.mxu0 %v5451
        %6226 = vmatprep.subr.bf16.mxu0 0
        %6227 = vmatpush1.bf16.msra.mxu0 %v5452
        %6228 = vmatprep.subr.bf16.mxu0 0
        %6229 = vmatpush1.bf16.msra.mxu0 %v5453
        %6230 = vmatprep.subr.bf16.mxu0 0
        %6231 = vmatpush1.bf16.msra.mxu0 %v5454
        %6232 = vmatprep.subr.bf16.mxu0 0
        %6233 = vmatpush1.bf16.msra.mxu0 %v5455
        %6234 = vmatprep.subr.bf16.mxu0 0
        %6235 = vmatpush1.bf16.msra.mxu0 %v5456
        %6236 = vmatprep.subr.bf16.mxu0 0
        %6237 = vmatpush1.bf16.msra.mxu0 %v5457
        %6238 = vmatprep.subr.bf16.mxu0 0
        %6239 = vmatpush1.bf16.msra.mxu0 %v5458
        %6240 = vmatprep.subr.bf16.mxu0 0
        %6241 = vmatpush1.bf16.msra.mxu0 %v5459
        %6242 = vmatprep.subr.bf16.mxu0 0
        %6243 = vmatpush1.bf16.msra.mxu0 %v5460
        %6244 = vmatprep.subr.bf16.mxu0 0
        %6245 = vmatpush1.bf16.msra.mxu0 %v5461
        %6246 = vmatprep.subr.bf16.mxu0 0
        %6247 = vmatpush1.bf16.msra.mxu0 %v5462
        %6248 = vmatprep.subr.bf16.mxu0 0
        %6249 = vmatpush1.bf16.msra.mxu0 %v5463
        %6250 = vmatprep.subr.bf16.mxu0 0
        %6251 = vmatpush1.bf16.msra.mxu0 %v5464
        %6252 = vmatprep.mubr.bf16.mxu0 %v4753
        %6253 = vmatmul.mubr.bf16.gmra.mrb[0].mxu0 %v4752
        %v6254 = vpop.f32.mrb[0].mxu0
        %v6255 = vadd.f32 %v6030, %v6254
        %v6256 = vpop.f32.mrb[0].mxu0
        %v6257 = vpop.f32.mrb[0].mxu0
        %v6258 = vadd.f32 %v6033, %v6257
        %v6259 = vpop.f32.mrb[0].mxu0
        %6260 = vmatprep.mubr.bf16.mxu0 %v4762
        %6261 = vmatmul.mubr.bf16.gmra.mrb[0].mxu0 %v4761
        %v6262 = vpop.f32.mrb[0].mxu0
        %v6263 = vadd.f32 %v6038, %v6262
        %v6264 = vpop.f32.mrb[0].mxu0
        %v6265 = vpop.f32.mrb[0].mxu0
        %v6266 = vadd.f32 %v6041, %v6265
        %v6267 = vpop.f32.mrb[0].mxu0
        %6268 = vmatprep.mubr.bf16.mxu0 %v4771
        %6269 = vmatmul.mubr.bf16.gmra.mrb[0].mxu0 %v4770
        %v6270 = vpop.f32.mrb[0].mxu0
        %v6271 = vadd.f32 %v6046, %v6270
        %v6272 = vpop.f32.mrb[0].mxu0
        %v6273 = vpop.f32.mrb[0].mxu0
        %v6274 = vadd.f32 %v6049, %v6273
        %v6275 = vpop.f32.mrb[0].mxu0
        %6276 = vmatprep.mubr.bf16.mxu0 %v4780
        %6277 = vmatmul.mubr.bf16.gmra.mrb[0].mxu0 %v4779
        %v6278 = vpop.f32.mrb[0].mxu0
        %v6279 = vadd.f32 %v6054, %v6278
        %v6280 = vpop.f32.mrb[0].mxu0
        %v6281 = vpop.f32.mrb[0].mxu0
        %v6282 = vadd.f32 %v6057, %v6281
        %v6283 = vpop.f32.mrb[0].mxu0
        %6284 = vmatprep.mubr.bf16.mxu0 %v4789
        %6285 = vmatmul.mubr.bf16.gmra.mrb[0].mxu0 %v4788
        %v6286 = vpop.f32.mrb[0].mxu0
        %v6287 = vadd.f32 %v6062, %v6286
        %v6288 = vpop.f32.mrb[0].mxu0
        %v6289 = vpop.f32.mrb[0].mxu0
        %v6290 = vadd.f32 %v6065, %v6289
        %v6291 = vpop.f32.mrb[0].mxu0
        %6292 = vmatprep.mubr.bf16.mxu0 %v4798
        %6293 = vmatmul.mubr.bf16.gmra.mrb[0].mxu0 %v4797
        %v6294 = vpop.f32.mrb[0].mxu0
        %v6295 = vadd.f32 %v6070, %v6294
        %v6296 = vpop.f32.mrb[0].mxu0
        %v6297 = vpop.f32.mrb[0].mxu0
        %v6298 = vadd.f32 %v6073, %v6297
        %v6299 = vpop.f32.mrb[0].mxu0
        %6300 = vmatprep.mubr.bf16.mxu0 %v4807
        %6301 = vmatmul.mubr.bf16.gmra.mrb[0].mxu0 %v4806
        %v6302 = vpop.f32.mrb[0].mxu0
        %v6303 = vadd.f32 %v6078, %v6302
        %v6304 = vpop.f32.mrb[0].mxu0
        %v6305 = vpop.f32.mrb[0].mxu0
        %v6306 = vadd.f32 %v6081, %v6305
        %v6307 = vpop.f32.mrb[0].mxu0
        %6308 = vmatprep.mubr.bf16.mxu0 %v4816
        %6309 = vmatmul.mubr.bf16.gmra.mrb[0].mxu0 %v4815
        %v6310 = vpop.f32.mrb[0].mxu0
        %v6311 = vadd.f32 %v6086, %v6310
        %v6312 = vpop.f32.mrb[0].mxu0
        %v6313 = vpop.f32.mrb[0].mxu0
        %v6314 = vadd.f32 %v6089, %v6313
        %v6315 = vpop.f32.mrb[0].mxu0
        %6316 = vmatprep.mubr.bf16.mxu0 %v4825
        %6317 = vmatmul.mubr.bf16.gmra.mrb[0].mxu0 %v4824
        %v6318 = vpop.f32.mrb[0].mxu0
        %v6319 = vadd.f32 %v6094, %v6318
        %v6320 = vpop.f32.mrb[0].mxu0
        %v6321 = vpop.f32.mrb[0].mxu0
        %v6322 = vadd.f32 %v6097, %v6321
        %v6323 = vpop.f32.mrb[0].mxu0
        %6324 = vmatprep.mubr.bf16.mxu0 %v4834
        %6325 = vmatmul.mubr.bf16.gmra.mrb[0].mxu0 %v4833
        %v6326 = vpop.f32.mrb[0].mxu0
        %v6327 = vadd.f32 %v6102, %v6326
        %v6328 = vpop.f32.mrb[0].mxu0
        %v6329 = vpop.f32.mrb[0].mxu0
        %v6330 = vadd.f32 %v6105, %v6329
        %v6331 = vpop.f32.mrb[0].mxu0
        %6332 = vmatprep.mubr.bf16.mxu0 %v4843
        %6333 = vmatmul.mubr.bf16.gmra.mrb[0].mxu0 %v4842
        %v6334 = vpop.f32.mrb[0].mxu0
        %v6335 = vadd.f32 %v6110, %v6334
        %v6336 = vpop.f32.mrb[0].mxu0
        %v6337 = vpop.f32.mrb[0].mxu0
        %v6338 = vadd.f32 %v6113, %v6337
        %v6339 = vpop.f32.mrb[0].mxu0
        %6340 = vmatprep.mubr.bf16.mxu0 %v4852
        %6341 = vmatmul.mubr.bf16.gmra.mrb[0].mxu0 %v4851
        %v6342 = vpop.f32.mrb[0].mxu0
        %v6343 = vadd.f32 %v6118, %v6342
        %v6344 = vpop.f32.mrb[0].mxu0
        %v6345 = vpop.f32.mrb[0].mxu0
        %v6346 = vadd.f32 %v6121, %v6345
        %v6347 = vpop.f32.mrb[0].mxu0
        %6348 = vmatprep.mubr.bf16.mxu0 %v4861
        %6349 = vmatmul.mubr.bf16.gmra.mrb[0].mxu0 %v4860
        %v6350 = vpop.f32.mrb[0].mxu0
        %v6351 = vadd.f32 %v6126, %v6350
        %v6352 = vpop.f32.mrb[0].mxu0
        %v6353 = vpop.f32.mrb[0].mxu0
        %v6354 = vadd.f32 %v6129, %v6353
        %v6355 = vpop.f32.mrb[0].mxu0
        %6356 = vmatprep.mubr.bf16.mxu0 %v4870
        %6357 = vmatmul.mubr.bf16.gmra.mrb[0].mxu0 %v4869
        %v6358 = vpop.f32.mrb[0].mxu0
        %v6359 = vadd.f32 %v6134, %v6358
        %v6360 = vpop.f32.mrb[0].mxu0
        %v6361 = vpop.f32.mrb[0].mxu0
        %v6362 = vadd.f32 %v6137, %v6361
        %v6363 = vpop.f32.mrb[0].mxu0
        %6364 = vmatprep.mubr.bf16.mxu0 %v4879
        %6365 = vmatmul.mubr.bf16.gmra.mrb[0].mxu0 %v4878
        %v6366 = vpop.f32.mrb[0].mxu0
        %v6367 = vadd.f32 %v6142, %v6366
        %v6368 = vpop.f32.mrb[0].mxu0
        %v6369 = vpop.f32.mrb[0].mxu0
        %v6370 = vadd.f32 %v6145, %v6369
        %v6371 = vpop.f32.mrb[0].mxu0
        %6372 = vmatprep.mubr.bf16.mxu0 %v4888
        %6373 = vmatmul.mubr.bf16.gmra.mrb[0].mxu0 %v4887
        %v6374 = vpop.f32.mrb[0].mxu0
        %v6375 = vadd.f32 %v6150, %v6374
        %v6376 = vpop.f32.mrb[0].mxu0
        %v6377 = vpop.f32.mrb[0].mxu0
        %v6378 = vadd.f32 %v6153, %v6377
        %v6379 = vpop.f32.mrb[0].mxu0
        %6380 = vmatprep.mubr.bf16.mxu0 %v4897
        %6381 = vmatmul.mubr.bf16.gmra.mrb[0].mxu0 %v4896
        %v6382 = vpop.f32.mrb[0].mxu0
        %v6383 = vadd.f32 %v6158, %v6382
        %v6384 = vpop.f32.mrb[0].mxu0
        %v6385 = vpop.f32.mrb[0].mxu0
        %v6386 = vadd.f32 %v6161, %v6385
        %v6387 = vpop.f32.mrb[0].mxu0
        %6388 = vmatprep.mubr.bf16.mxu0 %v4906
        %6389 = vmatmul.mubr.bf16.gmra.mrb[0].mxu0 %v4905
        %v6390 = vpop.f32.mrb[0].mxu0
        %v6391 = vadd.f32 %v6166, %v6390
        %v6392 = vpop.f32.mrb[0].mxu0
        %v6393 = vpop.f32.mrb[0].mxu0
        %v6394 = vadd.f32 %v6169, %v6393
        %v6395 = vpop.f32.mrb[0].mxu0
        %6396 = vmatprep.mubr.bf16.mxu0 %v4915
        %6397 = vmatmul.mubr.bf16.gmra.mrb[0].mxu0 %v4914
        %v6398 = vpop.f32.mrb[0].mxu0
        %v6399 = vadd.f32 %v6174, %v6398
        %v6400 = vpop.f32.mrb[0].mxu0
        %v6401 = vpop.f32.mrb[0].mxu0
        %v6402 = vadd.f32 %v6177, %v6401
        %v6403 = vpop.f32.mrb[0].mxu0
        %6404 = vmatprep.mubr.bf16.mxu0 %v4924
        %6405 = vmatmul.mubr.bf16.gmra.mrb[0].mxu0 %v4923
        %v6406 = vpop.f32.mrb[0].mxu0
        %v6407 = vadd.f32 %v6182, %v6406
        %v6408 = vpop.f32.mrb[0].mxu0
        %v6409 = vpop.f32.mrb[0].mxu0
        %v6410 = vadd.f32 %v6185, %v6409
        %v6411 = vpop.f32.mrb[0].mxu0
        %6412 = vmatprep.mubr.bf16.mxu0 %v4933
        %6413 = vmatmul.mubr.bf16.gmra.mrb[0].mxu0 %v4932
        %v6414 = vpop.f32.mrb[0].mxu0
        %v6415 = vadd.f32 %v6190, %v6414
        %v6416 = vpop.f32.mrb[0].mxu0
        %v6417 = vpop.f32.mrb[0].mxu0
        %v6418 = vadd.f32 %v6193, %v6417
        %v6419 = vpop.f32.mrb[0].mxu0
        %6420 = vmatprep.mubr.bf16.mxu0 %v4942
        %6421 = vmatmul.mubr.bf16.gmra.mrb[0].mxu0 %v4941
        %v6422 = vpop.f32.mrb[0].mxu0
        %v6423 = vadd.f32 %v6198, %v6422
        %v6424 = vpop.f32.mrb[0].mxu0
        %v6425 = vpop.f32.mrb[0].mxu0
        %v6426 = vadd.f32 %v6201, %v6425
        %v6427 = vpop.f32.mrb[0].mxu0
        %6428 = vmatprep.mubr.bf16.mxu0 %v4951
        %6429 = vmatmul.mubr.bf16.gmra.mrb[0].mxu0 %v4950
        %v6430 = vpop.f32.mrb[0].mxu0
        %v6431 = vadd.f32 %v6206, %v6430
        %v6432 = vpop.f32.mrb[0].mxu0
        %v6433 = vpop.f32.mrb[0].mxu0
        %v6434 = vadd.f32 %v6209, %v6433
        %v6435 = vpop.f32.mrb[0].mxu0
        %6436 = vmatprep.mubr.bf16.mxu0 %v4960
        %6437 = vmatmul.mubr.bf16.gmra.mrb[0].mxu0 %v4959
        %v6438 = vpop.f32.mrb[0].mxu0
        %v6439 = vadd.f32 %v6214, %v6438
        %v6440 = vpop.f32.mrb[0].mxu0
        %v6441 = vpop.f32.mrb[0].mxu0
        %v6442 = vadd.f32 %v6217, %v6441
        %v6443 = vpop.f32.mrb[0].mxu0
        %6444 = vdwg.mxu0
        %6445 = vmatprep.subr.bf16.mxu0 0
        %6446 = vmatpush1.bf16.msra.mxu0 %v5465
        %6447 = vmatprep.subr.bf16.mxu0 0
        %6448 = vmatpush1.bf16.msra.mxu0 %v5466
        %6449 = vmatprep.subr.bf16.mxu0 0
        %6450 = vmatpush1.bf16.msra.mxu0 %v5467
        %6451 = vmatprep.subr.bf16.mxu0 0
        %6452 = vmatpush1.bf16.msra.mxu0 %v5468
        %6453 = vmatprep.subr.bf16.mxu0 0
        %6454 = vmatpush1.bf16.msra.mxu0 %v5469
        %6455 = vmatprep.subr.bf16.mxu0 0
        %6456 = vmatpush1.bf16.msra.mxu0 %v5470
        %6457 = vmatprep.subr.bf16.mxu0 0
        %6458 = vmatpush1.bf16.msra.mxu0 %v5471
        %6459 = vmatprep.subr.bf16.mxu0 0
        %6460 = vmatpush1.bf16.msra.mxu0 %v5472
        %6461 = vmatprep.subr.bf16.mxu0 0
        %6462 = vmatpush1.bf16.msra.mxu0 0
        %6463 = vmatprep.subr.bf16.mxu0 0
        %6464 = vmatpush1.bf16.msra.mxu0 0
        %6465 = vmatprep.subr.bf16.mxu0 0
        %6466 = vmatpush1.bf16.msra.mxu0 0
        %6467 = vmatprep.subr.bf16.mxu0 0
        %6468 = vmatpush1.bf16.msra.mxu0 0
        %6469 = vmatprep.subr.bf16.mxu0 0
        %6470 = vmatpush1.bf16.msra.mxu0 0
        %6471 = vmatprep.subr.bf16.mxu0 0
        %6472 = vmatpush1.bf16.msra.mxu0 0
        %6473 = vmatprep.subr.bf16.mxu0 0
        %6474 = vmatpush1.bf16.msra.mxu0 0
        %6475 = vmatprep.subr.bf16.mxu0 0
        %6476 = vmatpush1.bf16.msra.mxu0 0
        %6477 = vmatprep.mubr.bf16.mxu0 0
        %6478 = vmatmul.mubr.bf16.gmra.mrb[0].mxu0 %v4754
        %v6479 = vpop.f32.mrb[0].mxu0
        %v6480 = vadd.f32 %v6255, %v6479
        %v6481 = vpop.f32.mrb[0].mxu0
        %v6482 = vpop.f32.mrb[0].mxu0
        %v6483 = vadd.f32 %v6258, %v6482
        %v6484 = vpop.f32.mrb[0].mxu0
        %6485 = vmatprep.mubr.bf16.mxu0 0
        %6486 = vmatmul.mubr.bf16.gmra.mrb[0].mxu0 %v4763
        %v6487 = vpop.f32.mrb[0].mxu0
        %v6488 = vadd.f32 %v6263, %v6487
        %v6489 = vpop.f32.mrb[0].mxu0
        %v6490 = vpop.f32.mrb[0].mxu0
        %v6491 = vadd.f32 %v6266, %v6490
        %v6492 = vpop.f32.mrb[0].mxu0
        %6493 = vmatprep.mubr.bf16.mxu0 0
        %6494 = vmatmul.mubr.bf16.gmra.mrb[0].mxu0 %v4772
        %v6495 = vpop.f32.mrb[0].mxu0
        %v6496 = vadd.f32 %v6271, %v6495
        %v6497 = vpop.f32.mrb[0].mxu0
        %v6498 = vpop.f32.mrb[0].mxu0
        %v6499 = vadd.f32 %v6274, %v6498
        %v6500 = vpop.f32.mrb[0].mxu0
        %6501 = vmatprep.mubr.bf16.mxu0 0
        %6502 = vmatmul.mubr.bf16.gmra.mrb[0].mxu0 %v4781
        %v6503 = vpop.f32.mrb[0].mxu0
        %v6504 = vadd.f32 %v6279, %v6503
        %v6505 = vpop.f32.mrb[0].mxu0
        %v6506 = vpop.f32.mrb[0].mxu0
        %v6507 = vadd.f32 %v6282, %v6506
        %v6508 = vpop.f32.mrb[0].mxu0
        %6509 = vmatprep.mubr.bf16.mxu0 0
        %6510 = vmatmul.mubr.bf16.gmra.mrb[0].mxu0 %v4790
        %v6511 = vpop.f32.mrb[0].mxu0
        %v6512 = vadd.f32 %v6287, %v6511
        %v6513 = vpop.f32.mrb[0].mxu0
        %v6514 = vpop.f32.mrb[0].mxu0
        %v6515 = vadd.f32 %v6290, %v6514
        %v6516 = vpop.f32.mrb[0].mxu0
        %6517 = vmatprep.mubr.bf16.mxu0 0
        %6518 = vmatmul.mubr.bf16.gmra.mrb[0].mxu0 %v4799
        %v6519 = vpop.f32.mrb[0].mxu0
        %v6520 = vadd.f32 %v6295, %v6519
        %v6521 = vpop.f32.mrb[0].mxu0
        %v6522 = vpop.f32.mrb[0].mxu0
        %v6523 = vadd.f32 %v6298, %v6522
        %v6524 = vpop.f32.mrb[0].mxu0
        %6525 = vmatprep.mubr.bf16.mxu0 0
        %6526 = vmatmul.mubr.bf16.gmra.mrb[0].mxu0 %v4808
        %v6527 = vpop.f32.mrb[0].mxu0
        %v6528 = vadd.f32 %v6303, %v6527
        %v6529 = vpop.f32.mrb[0].mxu0
        %v6530 = vpop.f32.mrb[0].mxu0
        %v6531 = vadd.f32 %v6306, %v6530
        %v6532 = vpop.f32.mrb[0].mxu0
        %6533 = vmatprep.mubr.bf16.mxu0 0
        %6534 = vmatmul.mubr.bf16.gmra.mrb[0].mxu0 %v4817
        %v6535 = vpop.f32.mrb[0].mxu0
        %v6536 = vadd.f32 %v6311, %v6535
        %v6537 = vpop.f32.mrb[0].mxu0
        %v6538 = vpop.f32.mrb[0].mxu0
        %v6539 = vadd.f32 %v6314, %v6538
        %v6540 = vpop.f32.mrb[0].mxu0
        %6541 = vmatprep.mubr.bf16.mxu0 0
        %6542 = vmatmul.mubr.bf16.gmra.mrb[0].mxu0 %v4826
        %v6543 = vpop.f32.mrb[0].mxu0
        %v6544 = vadd.f32 %v6319, %v6543
        %v6545 = vpop.f32.mrb[0].mxu0
        %v6546 = vpop.f32.mrb[0].mxu0
        %v6547 = vadd.f32 %v6322, %v6546
        %v6548 = vpop.f32.mrb[0].mxu0
        %6549 = vmatprep.mubr.bf16.mxu0 0
        %6550 = vmatmul.mubr.bf16.gmra.mrb[0].mxu0 %v4835
        %v6551 = vpop.f32.mrb[0].mxu0
        %v6552 = vadd.f32 %v6327, %v6551
        %v6553 = vpop.f32.mrb[0].mxu0
        %v6554 = vpop.f32.mrb[0].mxu0
        %v6555 = vadd.f32 %v6330, %v6554
        %v6556 = vpop.f32.mrb[0].mxu0
        %6557 = vmatprep.mubr.bf16.mxu0 0
        %6558 = vmatmul.mubr.bf16.gmra.mrb[0].mxu0 %v4844
        %v6559 = vpop.f32.mrb[0].mxu0
        %v6560 = vadd.f32 %v6335, %v6559
        %v6561 = vpop.f32.mrb[0].mxu0
        %v6562 = vpop.f32.mrb[0].mxu0
        %v6563 = vadd.f32 %v6338, %v6562
        %v6564 = vpop.f32.mrb[0].mxu0
        %6565 = vmatprep.mubr.bf16.mxu0 0
        %6566 = vmatmul.mubr.bf16.gmra.mrb[0].mxu0 %v4853
        %v6567 = vpop.f32.mrb[0].mxu0
        %v6568 = vadd.f32 %v6343, %v6567
        %v6569 = vpop.f32.mrb[0].mxu0
        %v6570 = vpop.f32.mrb[0].mxu0
        %v6571 = vadd.f32 %v6346, %v6570
        %v6572 = vpop.f32.mrb[0].mxu0
        %6573 = vmatprep.mubr.bf16.mxu0 0
        %6574 = vmatmul.mubr.bf16.gmra.mrb[0].mxu0 %v4862
        %v6575 = vpop.f32.mrb[0].mxu0
        %v6576 = vadd.f32 %v6351, %v6575
        %v6577 = vpop.f32.mrb[0].mxu0
        %v6578 = vpop.f32.mrb[0].mxu0
        %v6579 = vadd.f32 %v6354, %v6578
        %v6580 = vpop.f32.mrb[0].mxu0
        %6581 = vmatprep.mubr.bf16.mxu0 0
        %6582 = vmatmul.mubr.bf16.gmra.mrb[0].mxu0 %v4871
        %v6583 = vpop.f32.mrb[0].mxu0
        %v6584 = vadd.f32 %v6359, %v6583
        %v6585 = vpop.f32.mrb[0].mxu0
        %v6586 = vpop.f32.mrb[0].mxu0
        %v6587 = vadd.f32 %v6362, %v6586
        %v6588 = vpop.f32.mrb[0].mxu0
        %6589 = vmatprep.mubr.bf16.mxu0 0
        %6590 = vmatmul.mubr.bf16.gmra.mrb[0].mxu0 %v4880
        %v6591 = vpop.f32.mrb[0].mxu0
        %v6592 = vadd.f32 %v6367, %v6591
        %v6593 = vpop.f32.mrb[0].mxu0
        %v6594 = vpop.f32.mrb[0].mxu0
        %v6595 = vadd.f32 %v6370, %v6594
        %v6596 = vpop.f32.mrb[0].mxu0
        %6597 = vmatprep.mubr.bf16.mxu0 0
        %6598 = vmatmul.mubr.bf16.gmra.mrb[0].mxu0 %v4889
        %v6599 = vpop.f32.mrb[0].mxu0
        %v6600 = vadd.f32 %v6375, %v6599
        %v6601 = vpop.f32.mrb[0].mxu0
        %v6602 = vpop.f32.mrb[0].mxu0
        %v6603 = vadd.f32 %v6378, %v6602
        %v6604 = vpop.f32.mrb[0].mxu0
        %6605 = vmatprep.mubr.bf16.mxu0 0
        %6606 = vmatmul.mubr.bf16.gmra.mrb[0].mxu0 %v4898
        %v6607 = vpop.f32.mrb[0].mxu0
        %v6608 = vadd.f32 %v6383, %v6607
        %v6609 = vpop.f32.mrb[0].mxu0
        %v6610 = vpop.f32.mrb[0].mxu0
        %v6611 = vadd.f32 %v6386, %v6610
        %v6612 = vpop.f32.mrb[0].mxu0
        %6613 = vmatprep.mubr.bf16.mxu0 0
        %6614 = vmatmul.mubr.bf16.gmra.mrb[0].mxu0 %v4907
        %v6615 = vpop.f32.mrb[0].mxu0
        %v6616 = vadd.f32 %v6391, %v6615
        %v6617 = vpop.f32.mrb[0].mxu0
        %v6618 = vpop.f32.mrb[0].mxu0
        %v6619 = vadd.f32 %v6394, %v6618
        %v6620 = vpop.f32.mrb[0].mxu0
        %6621 = vmatprep.mubr.bf16.mxu0 0
        %6622 = vmatmul.mubr.bf16.gmra.mrb[0].mxu0 %v4916
        %v6623 = vpop.f32.mrb[0].mxu0
        %v6624 = vadd.f32 %v6399, %v6623
        %v6625 = vpop.f32.mrb[0].mxu0
        %v6626 = vpop.f32.mrb[0].mxu0
        %v6627 = vadd.f32 %v6402, %v6626
        %v6628 = vpop.f32.mrb[0].mxu0
        %6629 = vmatprep.mubr.bf16.mxu0 0
        %6630 = vmatmul.mubr.bf16.gmra.mrb[0].mxu0 %v4925
        %v6631 = vpop.f32.mrb[0].mxu0
        %v6632 = vadd.f32 %v6407, %v6631
        %v6633 = vpop.f32.mrb[0].mxu0
        %v6634 = vpop.f32.mrb[0].mxu0
        %v6635 = vadd.f32 %v6410, %v6634
        %v6636 = vpop.f32.mrb[0].mxu0
        %6637 = vmatprep.mubr.bf16.mxu0 0
        %6638 = vmatmul.mubr.bf16.gmra.mrb[0].mxu0 %v4934
        %v6639 = vpop.f32.mrb[0].mxu0
        %v6640 = vadd.f32 %v6415, %v6639
        %v6641 = vpop.f32.mrb[0].mxu0
        %v6642 = vpop.f32.mrb[0].mxu0
        %v6643 = vadd.f32 %v6418, %v6642
        %v6644 = vpop.f32.mrb[0].mxu0
        %6645 = vmatprep.mubr.bf16.mxu0 0
        %6646 = vmatmul.mubr.bf16.gmra.mrb[0].mxu0 %v4943
        %v6647 = vpop.f32.mrb[0].mxu0
        %v6648 = vadd.f32 %v6423, %v6647
        %v6649 = vpop.f32.mrb[0].mxu0
        %v6650 = vpop.f32.mrb[0].mxu0
        %v6651 = vadd.f32 %v6426, %v6650
        %v6652 = vpop.f32.mrb[0].mxu0
        %6653 = vmatprep.mubr.bf16.mxu0 0
        %6654 = vmatmul.mubr.bf16.gmra.mrb[0].mxu0 %v4952
        %v6655 = vpop.f32.mrb[0].mxu0
        %v6656 = vadd.f32 %v6431, %v6655
        %v6657 = vpop.f32.mrb[0].mxu0
        %v6658 = vpop.f32.mrb[0].mxu0
        %v6659 = vadd.f32 %v6434, %v6658
        %v6660 = vpop.f32.mrb[0].mxu0
        %6661 = vmatprep.mubr.bf16.mxu0 0
        %6662 = vmatmul.mubr.bf16.gmra.mrb[0].mxu0 %v4961
        %v6663 = vpop.f32.mrb[0].mxu0
        %v6664 = vadd.f32 %v6439, %v6663
        %v6665 = vpop.f32.mrb[0].mxu0
        %v6666 = vpop.f32.mrb[0].mxu0
        %v6667 = vadd.f32 %v6442, %v6666
        %v6668 = vpop.f32.mrb[0].mxu0
        %6669 = vdwg.mxu0
        %v6670 = vld [vmem:[%s277 + $0x18] sm:$0xff]
        %v6671 = vld [vmem:[%s277 + $0x20] sm:$0xff]
        %v6672 = vld [vmem:[%s277 + $0x28] sm:$0xff]
        %v6673 = vld [vmem:[%s277 + $0x30] sm:$0xff]
        %v6674 = vld [vmem:[%s277 + $0x38] sm:$0xff]
        %v6675 = vld [vmem:[%s277 + $0x40] sm:$0xff]
        %v6676 = vld [vmem:[%s277 + $0x48] sm:$0xff]
        %v6677 = vld [vmem:[%s277 + $0x50] sm:$0xff]
        %v6678 = vld [vmem:[%s277 + $0x58] sm:$0xff]
        %v6679 = vld [vmem:[%s277 + $0x60] sm:$0xff]
        %v6680 = vld [vmem:[%s277 + $0x68] sm:$0xff]
        %v6681 = vld [vmem:[%s277 + $0x70] sm:$0xff]
        %v6682 = vld [vmem:[%s277 + $0x78] sm:$0xff]
        %v6683 = vld [vmem:[%s277 + $0x80] sm:$0xff]
        %v6684 = vld [vmem:[%s277 + $0x88] sm:$0xff]
        %v6685 = vld [vmem:[%s277 + $0x90] sm:$0xff]
        %v6686 = vld [vmem:[%s277 + $0x98] sm:$0xff]
        %v6687 = vld [vmem:[%s277 + $0xa0] sm:$0xff]
        %v6688 = vld [vmem:[%s277 + $0xa8] sm:$0xff]
        %v6689 = vld [vmem:[%s277 + $0xb0] sm:$0xff]
        %v6690 = vld [vmem:[%s277 + $0xb8] sm:$0xff]
        %v6691 = vld [vmem:[%s277 + $0xc0] sm:$0xff]
        %v6692 = vld [vmem:[%s277 + $0xc8] sm:$0xff]
        %v6693 = vld [vmem:[%s277 + $0xd0] sm:$0xff]
        %v6694 = vld [vmem:[%s277 + $0xd8] sm:$0xff]
        %v6695 = vld [vmem:[%s277 + $0xe0] sm:$0xff]
        %v6696 = vld [vmem:[%s277 + $0xe8] sm:$0xff]
        %v6697 = vld [vmem:[%s277 + $0xf0] sm:$0xff]
        %v6698 = vld [vmem:[%s277 + $0xf8] sm:$0xff]
        %v6699 = vld [vmem:[%s277 + $0x100] sm:$0xff]
        %v6700 = vld [vmem:[%s277 + $0x108] sm:$0xff]
        %v6701 = vld [vmem:[%s277 + $0x110] sm:$0xff]
        %v6702 = vld [vmem:[%s277 + $0x118] sm:$0xff]
        %v6703 = vld [vmem:[%s277 + $0x120] sm:$0xff]
        %v6704 = vld [vmem:[%s277 + $0x128] sm:$0xff]
        %v6705 = vld [vmem:[%s277 + $0x130] sm:$0xff]
        %v6706 = vld [vmem:[%s277 + $0x138] sm:$0xff]
        %v6707 = vld [vmem:[%s277 + $0x140] sm:$0xff]
        %v6708 = vld [vmem:[%s277 + $0x148] sm:$0xff]
        %v6709 = vld [vmem:[%s277 + $0x150] sm:$0xff]
        %v6710 = vld [vmem:[%s277 + $0x158] sm:$0xff]
        %v6711 = vld [vmem:[%s277 + $0x160] sm:$0xff]
        %v6712 = vld [vmem:[%s277 + $0x168] sm:$0xff]
        %v6713 = vld [vmem:[%s277 + $0x170] sm:$0xff]
        %v6714 = vld [vmem:[%s277 + $0x178] sm:$0xff]
        %v6715 = vld [vmem:[%s277 + $0x180] sm:$0xff]
        %v6716 = vld [vmem:[%s277 + $0x188] sm:$0xff]
        %v6717 = vld [vmem:[%s277 + $0x190] sm:$0xff]
        %v6718 = vrot.slane %v6670, 1
        %v6719 = vrot.slane %v6671, 1
        %v6720 = vrot.slane %v6672, 1
        %v6721 = vrot.slane %v6673, 1
        %v6722 = vrot.slane %v6674, 1
        %v6723 = vrot.slane %v6675, 1
        %v6724 = vrot.slane %v6676, 1
        %v6725 = vrot.slane %v6677, 1
        %v6726 = vrot.slane %v6678, 1
        %v6727 = vrot.slane %v6679, 1
        %v6728 = vrot.slane %v6680, 1
        %v6729 = vrot.slane %v6681, 1
        %v6730 = vrot.slane %v6682, 1
        %v6731 = vrot.slane %v6683, 1
        %v6732 = vrot.slane %v6684, 1
        %v6733 = vrot.slane %v6685, 1
        %v6734 = vrot.slane %v6686, 1
        %v6735 = vrot.slane %v6687, 1
        %v6736 = vrot.slane %v6688, 1
        %v6737 = vrot.slane %v6689, 1
        %v6738 = vrot.slane %v6690, 1
        %v6739 = vrot.slane %v6691, 1
        %v6740 = vrot.slane %v6692, 1
        %v6741 = vrot.slane %v6693, 1
        %v6742 = vrot.slane %v6694, 1
        %v6743 = vrot.slane %v6695, 1
        %v6744 = vrot.slane %v6696, 1
        %v6745 = vrot.slane %v6697, 1
        %v6746 = vrot.slane %v6698, 1
        %v6747 = vrot.slane %v6699, 1
        %v6748 = vrot.slane %v6700, 1
        %v6749 = vrot.slane %v6701, 1
        %v6750 = vrot.slane %v6702, 1
        %v6751 = vrot.slane %v6703, 1
        %v6752 = vrot.slane %v6704, 1
        %v6753 = vrot.slane %v6705, 1
        %v6754 = vrot.slane %v6706, 1
        %v6755 = vrot.slane %v6707, 1
        %v6756 = vrot.slane %v6708, 1
        %v6757 = vrot.slane %v6709, 1
        %v6758 = vrot.slane %v6710, 1
        %v6759 = vrot.slane %v6711, 1
        %v6760 = vrot.slane %v6712, 1
        %v6761 = vrot.slane %v6713, 1
        %v6762 = vrot.slane %v6714, 1
        %v6763 = vrot.slane %v6715, 1
        %v6764 = vrot.slane %v6716, 1
        %v6765 = vrot.slane %v6717, 1
        %v6766 = vsel %vm461, %v6764, %v6765
        %v6767 = vsel %vm461, %v6763, %v6764
        %v6768 = vsel %vm461, %v6762, %v6763
        %v6769 = vsel %vm461, %v6761, %v6762
        %v6770 = vsel %vm461, %v6760, %v6761
        %v6771 = vsel %vm461, %v6759, %v6760
        %v6772 = vsel %vm461, %v6758, %v6759
        %v6773 = vsel %vm461, %v6757, %v6758
        %v6774 = vsel %vm461, %v6756, %v6757
        %v6775 = vsel %vm461, %v6755, %v6756
        %v6776 = vsel %vm461, %v6754, %v6755
        %v6777 = vsel %vm461, %v6753, %v6754
        %v6778 = vsel %vm461, %v6752, %v6753
        %v6779 = vsel %vm461, %v6751, %v6752
        %v6780 = vsel %vm461, %v6750, %v6751
        %v6781 = vsel %vm461, %v6749, %v6750
        %v6782 = vsel %vm461, %v6748, %v6749
        %v6783 = vsel %vm461, %v6747, %v6748
        %v6784 = vsel %vm461, %v6746, %v6747
        %v6785 = vsel %vm461, %v6745, %v6746
        %v6786 = vsel %vm461, %v6744, %v6745
        %v6787 = vsel %vm461, %v6743, %v6744
        %v6788 = vsel %vm461, %v6742, %v6743
        %v6789 = vsel %vm461, %v6741, %v6742
        %v6790 = vsel %vm461, %v6740, %v6741
        %v6791 = vsel %vm461, %v6739, %v6740
        %v6792 = vsel %vm461, %v6738, %v6739
        %v6793 = vsel %vm461, %v6737, %v6738
        %v6794 = vsel %vm461, %v6736, %v6737
        %v6795 = vsel %vm461, %v6735, %v6736
        %v6796 = vsel %vm461, %v6734, %v6735
        %v6797 = vsel %vm461, %v6733, %v6734
        %v6798 = vsel %vm461, %v6732, %v6733
        %v6799 = vsel %vm461, %v6731, %v6732
        %v6800 = vsel %vm461, %v6730, %v6731
        %v6801 = vsel %vm461, %v6729, %v6730
        %v6802 = vsel %vm461, %v6728, %v6729
        %v6803 = vsel %vm461, %v6727, %v6728
        %v6804 = vsel %vm461, %v6726, %v6727
        %v6805 = vsel %vm461, %v6725, %v6726
        %v6806 = vsel %vm461, %v6724, %v6725
        %v6807 = vsel %vm461, %v6723, %v6724
        %v6808 = vsel %vm461, %v6722, %v6723
        %v6809 = vsel %vm461, %v6721, %v6722
        %v6810 = vsel %vm461, %v6720, %v6721
        %v6811 = vsel %vm461, %v6719, %v6720
        %v6812 = vsel %vm461, %v6718, %v6719
        %v6813 = vsel %vm461, %v6765, %v6718
        %v6814 = vadd.f32 %v6480, %v6812
        %v6815 = vadd.f32 %v6483, %v6811
        %v6816 = vadd.f32 %v6488, %v6810
        %v6817 = vadd.f32 %v6491, %v6809
        %v6818 = vadd.f32 %v6496, %v6808
        %v6819 = vadd.f32 %v6499, %v6807
        %v6820 = vadd.f32 %v6504, %v6806
        %v6821 = vadd.f32 %v6507, %v6805
        %v6822 = vadd.f32 %v6512, %v6804
        %v6823 = vadd.f32 %v6515, %v6803
        %v6824 = vadd.f32 %v6520, %v6802
        %v6825 = vadd.f32 %v6523, %v6801
        %v6826 = vadd.f32 %v6528, %v6800
        %v6827 = vadd.f32 %v6531, %v6799
        %v6828 = vadd.f32 %v6536, %v6798
        %v6829 = vadd.f32 %v6539, %v6797
        %v6830 = vadd.f32 %v6544, %v6796
        %v6831 = vadd.f32 %v6547, %v6795
        %v6832 = vadd.f32 %v6552, %v6794
        %v6833 = vadd.f32 %v6555, %v6793
        %v6834 = vadd.f32 %v6560, %v6792
        %v6835 = vadd.f32 %v6563, %v6791
        %v6836 = vadd.f32 %v6568, %v6790
        %v6837 = vadd.f32 %v6571, %v6789
        %v6838 = vadd.f32 %v6576, %v6788
        %v6839 = vadd.f32 %v6579, %v6787
        %v6840 = vadd.f32 %v6584, %v6786
        %v6841 = vadd.f32 %v6587, %v6785
        %v6842 = vadd.f32 %v6592, %v6784
        %v6843 = vadd.f32 %v6595, %v6783
        %v6844 = vadd.f32 %v6600, %v6782
        %v6845 = vadd.f32 %v6603, %v6781
        %v6846 = vadd.f32 %v6608, %v6780
        %v6847 = vadd.f32 %v6611, %v6779
        %v6848 = vadd.f32 %v6616, %v6778
        %v6849 = vadd.f32 %v6619, %v6777
        %v6850 = vadd.f32 %v6624, %v6776
        %v6851 = vadd.f32 %v6627, %v6775
        %v6852 = vadd.f32 %v6632, %v6774
        %v6853 = vadd.f32 %v6635, %v6773
        %v6854 = vadd.f32 %v6640, %v6772
        %v6855 = vadd.f32 %v6643, %v6771
        %v6856 = vadd.f32 %v6648, %v6770
        %v6857 = vadd.f32 %v6651, %v6769
        %v6858 = vadd.f32 %v6656, %v6768
        %v6859 = vadd.f32 %v6659, %v6767
        %v6860 = vadd.f32 %v6664, %v6766
        %v6861 = vadd.f32 %v6667, %v6813
        %v6862 = vmax.f32 %v6814, 0.0
        %v6863 = vmax.f32 %v6815, 0.0
        %v6864 = vmax.f32 %v6816, 0.0
        %v6865 = vmax.f32 %v6817, 0.0
        %v6866 = vmax.f32 %v6818, 0.0
        %v6867 = vmax.f32 %v6819, 0.0
        %v6868 = vmax.f32 %v6820, 0.0
        %v6869 = vmax.f32 %v6821, 0.0
        %v6870 = vmax.f32 %v6822, 0.0
        %v6871 = vmax.f32 %v6823, 0.0
        %v6872 = vmax.f32 %v6824, 0.0
        %v6873 = vmax.f32 %v6825, 0.0
        %v6874 = vmax.f32 %v6826, 0.0
        %v6875 = vmax.f32 %v6827, 0.0
        %v6876 = vmax.f32 %v6828, 0.0
        %v6877 = vmax.f32 %v6829, 0.0
        %v6878 = vmax.f32 %v6830, 0.0
        %v6879 = vmax.f32 %v6831, 0.0
        %v6880 = vmax.f32 %v6832, 0.0
        %v6881 = vmax.f32 %v6833, 0.0
        %v6882 = vmax.f32 %v6834, 0.0
        %v6883 = vmax.f32 %v6835, 0.0
        %v6884 = vmax.f32 %v6836, 0.0
        %v6885 = vmax.f32 %v6837, 0.0
        %v6886 = vmax.f32 %v6838, 0.0
        %v6887 = vmax.f32 %v6839, 0.0
        %v6888 = vmax.f32 %v6840, 0.0
        %v6889 = vmax.f32 %v6841, 0.0
        %v6890 = vmax.f32 %v6842, 0.0
        %v6891 = vmax.f32 %v6843, 0.0
        %v6892 = vmax.f32 %v6844, 0.0
        %v6893 = vmax.f32 %v6845, 0.0
        %v6894 = vmax.f32 %v6846, 0.0
        %v6895 = vmax.f32 %v6847, 0.0
        %v6896 = vmax.f32 %v6848, 0.0
        %v6897 = vmax.f32 %v6849, 0.0
        %v6898 = vmax.f32 %v6850, 0.0
        %v6899 = vmax.f32 %v6851, 0.0
        %v6900 = vmax.f32 %v6852, 0.0
        %v6901 = vmax.f32 %v6853, 0.0
        %v6902 = vmax.f32 %v6854, 0.0
        %v6903 = vmax.f32 %v6855, 0.0
        %v6904 = vmax.f32 %v6856, 0.0
        %v6905 = vmax.f32 %v6857, 0.0
        %v6906 = vmax.f32 %v6858, 0.0
        %v6907 = vmax.f32 %v6859, 0.0
        %v6908 = vmax.f32 %v6860, 0.0
        %v6909 = vmax.f32 %v6861, 0.0
        %6910 = vst [vmem:[%s313] sm:$0xff] %v6862
        %6911 = vst [vmem:[%s313 + $0x8] sm:$0xff] %v6863
        %6912 = vst [vmem:[%s313 + $0x10] sm:$0xff] %v6864
        %6913 = vst [vmem:[%s313 + $0x18] sm:$0xff] %v6865
        %6914 = vst [vmem:[%s313 + $0x20] sm:$0xff] %v6866
        %6915 = vst [vmem:[%s313 + $0x28] sm:$0xff] %v6867
        %6916 = vst [vmem:[%s313 + $0x30] sm:$0xff] %v6868
        %6917 = vst [vmem:[%s313 + $0x38] sm:$0xff] %v6869
        %6918 = vst [vmem:[%s313 + $0x40] sm:$0xff] %v6870
        %6919 = vst [vmem:[%s313 + $0x48] sm:$0xff] %v6871
        %6920 = vst [vmem:[%s313 + $0x50] sm:$0xff] %v6872
        %6921 = vst [vmem:[%s313 + $0x58] sm:$0xff] %v6873
        %6922 = vst [vmem:[%s313 + $0x60] sm:$0xff] %v6874
        %6923 = vst [vmem:[%s313 + $0x68] sm:$0xff] %v6875
        %6924 = vst [vmem:[%s313 + $0x70] sm:$0xff] %v6876
        %6925 = vst [vmem:[%s313 + $0x78] sm:$0xff] %v6877
        %6926 = vst [vmem:[%s313 + $0x80] sm:$0xff] %v6878
        %6927 = vst [vmem:[%s313 + $0x88] sm:$0xff] %v6879
        %6928 = vst [vmem:[%s313 + $0x90] sm:$0xff] %v6880
        %6929 = vst [vmem:[%s313 + $0x98] sm:$0xff] %v6881
        %6930 = vst [vmem:[%s313 + $0xa0] sm:$0xff] %v6882
        %6931 = vst [vmem:[%s313 + $0xa8] sm:$0xff] %v6883
        %6932 = vst [vmem:[%s313 + $0xb0] sm:$0xff] %v6884
        %6933 = vst [vmem:[%s313 + $0xb8] sm:$0xff] %v6885
        %6934 = vst [vmem:[%s313 + $0xc0] sm:$0xff] %v6886
        %6935 = vst [vmem:[%s313 + $0xc8] sm:$0xff] %v6887
        %6936 = vst [vmem:[%s313 + $0xd0] sm:$0xff] %v6888
        %6937 = vst [vmem:[%s313 + $0xd8] sm:$0xff] %v6889
        %6938 = vst [vmem:[%s313 + $0xe0] sm:$0xff] %v6890
        %6939 = vst [vmem:[%s313 + $0xe8] sm:$0xff] %v6891
        %6940 = vst [vmem:[%s313 + $0xf0] sm:$0xff] %v6892
        %6941 = vst [vmem:[%s313 + $0xf8] sm:$0xff] %v6893
        %6942 = vst [vmem:[%s313 + $0x100] sm:$0xff] %v6894
        %6943 = vst [vmem:[%s313 + $0x108] sm:$0xff] %v6895
        %6944 = vst [vmem:[%s313 + $0x110] sm:$0xff] %v6896
        %6945 = vst [vmem:[%s313 + $0x118] sm:$0xff] %v6897
        %6946 = vst [vmem:[%s313 + $0x120] sm:$0xff] %v6898
        %6947 = vst [vmem:[%s313 + $0x128] sm:$0xff] %v6899
        %6948 = vst [vmem:[%s313 + $0x130] sm:$0xff] %v6900
        %6949 = vst [vmem:[%s313 + $0x138] sm:$0xff] %v6901
        %6950 = vst [vmem:[%s313 + $0x140] sm:$0xff] %v6902
        %6951 = vst [vmem:[%s313 + $0x148] sm:$0xff] %v6903
        %6952 = vst [vmem:[%s313 + $0x150] sm:$0xff] %v6904
        %6953 = vst [vmem:[%s313 + $0x158] sm:$0xff] %v6905
        %6954 = vst [vmem:[%s313 + $0x160] sm:$0xff] %v6906
        %6955 = vst [vmem:[%s313 + $0x168] sm:$0xff] %v6907
        %6956 = vst [vmem:[%s313 + $0x170] sm:$0xff] %v6908
        %6957 = vst [vmem:[%s313 + $0x178] sm:$0xff] %v6909
        %s6958 = sand.u32 %s164, 1
        %s6959 = scalar_lea.sflag [#allocation6], %s6958
        %s6960 = sand.u32 %s164, 1
        %s6961 = smul.addr %s6960, 384
        %s6962 = scalar_lea.vmem [#allocation12], %s6961
        // Predicated region
        $region61: #{tpu_custom_call.1} parent=43 // pred_check
          %p6963 = pneg %p174
        $region62: #{tpu_custom_call.1} parent=43 // pred_check_branch
          %6965 = sbr.rel (%p6963) target = $region64
        $region63: #{tpu_custom_call.1} parent=43 // pred_region
          %s6967 = ssub.s32 6144, 6144
          %6968 = vsyncadd %s6959, %s6967
          %s6969 = smul.addr %s25, 48
          %s6970 = smul.addr %s6969, 128
          %s6971 = scalar_lea.hbm %s6, %s6970
          %s6972 = sshll.u32 %s6962, 4
          %s6973 = int_to_ptr.vmem [resolvable:$true] %s6972
          %6978 = dma.vmem_to_hbm [thread:$0]  %s6973, 6144, %s6971, %s6959, 128, 128, 8
        $region64: #{tpu_custom_call.1} parent=43 // pred_fallthru
          _
      $region44: #{tpu_custom_call.1} parent=5 // pred_fallthru
        _
      %p6979 = scmp.le.s32.totalorder 2, %s20
      // Predicated region
      $region65: #{tpu_custom_call.1} parent=5 // pred_check
        %p6980 = pneg %p6979
      $region66: #{tpu_custom_call.1} parent=5 // pred_check_branch
        %6982 = sbr.rel (%p6980) target = $region68
      $region67: #{tpu_custom_call.1} parent=5 // pred_region
        %s6983 = ssub.s32 %s20, 2
        // Predicated region
        $region69: #{tpu_custom_call.1} parent=67 // pred_check
          %p6984 = pneg %p180
        $region70: #{tpu_custom_call.1} parent=67 // pred_check_branch
          %6986 = sbr.rel (%p6984) target = $region72
        $region71: #{tpu_custom_call.1} parent=67 // pred_region
          %s6987 = sand.u32 %s165, 1
          %s6988 = scalar_lea.sflag [#allocation6], %s6987
          %s6989 = sand.u32 %s165, 1
          %s6990 = smul.addr %s6989, 384
          %s6991 = scalar_lea.vmem [#allocation12], %s6990
          %6992 = dma.done %s6988, 6144
        $region72: #{tpu_custom_call.1} parent=67 // pred_fallthru
          _
      $region68: #{tpu_custom_call.1} parent=5 // pred_fallthru
        _
    $region6: #{tpu_custom_call.1} parent=1 // loop_footer
      %s24 = sadd.s32 1, %s20
    $region7: #{tpu_custom_call.1} parent=1 // loop_footer_branch
      %19 = sbr.rel target = $region3
    $region8: #{tpu_custom_call.1} parent=1 // loop_exit
      _
    %6993 = vsyncpa [#allocation5], 1
    %s6994 = scalar_lea.sflag [#allocation5], 1
    %6995 = vsyncpa %s6994, 1
    %6996 = vsyncpa [#allocation8], 1
    %s6997 = scalar_lea.sflag [#allocation8], 1
    %6998 = vsyncpa %s6997, 1
    %6999 = vsyncpa [#allocation11], 1
    %7000 = vsyncpa [#allocation6], 1
    %s7001 = scalar_lea.sflag [#allocation6], 1
    %7002 = vsyncpa %s7001, 1

</llo_original>
